<compile_context>
chip_gen: v7x
topology: tpu7x:2x2x1
jax: 0.10.0
libtpu: 0.0.40
codegen_flags: <defaults>
</compile_context>

<pallas_src>
import functools

import jax
import jax.numpy as jnp
import numpy as np
from jax import lax
from jax.experimental import pallas as pl
from jax.experimental.pallas import tpu as pltpu


# ----------------------------- Pallas helpers -------------------------------

def _full_spec(a):
    """BlockSpec covering the whole array (grid has a single step)."""
    nd = a.ndim
    return pl.BlockSpec(a.shape, lambda *_, _nd=nd: (0,) * _nd)


def _conv1d_im2col(x, w_flat, k):
    """x: [B, L, Ci], w_flat: [k*Ci, Co] -> [B*L, Co] f32 ('same' padding).

    One MXU matmul per conv instead of k tiny matmuls + VALU adds.
    """
    B, L, Ci = x.shape
    p = (k - 1) // 2
    zeros = jnp.zeros((B, p, Ci), x.dtype)
    xp = jnp.concatenate([zeros, x, zeros], axis=1)                 # [B, L+2p, Ci]
    cols = jnp.concatenate([xp[:, i:i + L, :] for i in range(k)], axis=-1)
    return jnp.dot(cols.reshape(B * L, k * Ci), w_flat,
                   preferred_element_type=jnp.float32)


def _maxpool3_same(x):
    """MaxPool1d(kernel=3, stride=1, pad=1, ceil_mode=True) over axis 1 of [B,L,C]."""
    B, L, C = x.shape
    neg = jnp.full((B, 1, C), -jnp.inf, x.dtype)
    xp = jnp.concatenate([neg, x, neg], axis=1)
    return jnp.maximum(jnp.maximum(xp[:, 0:L], xp[:, 1:L + 1]), xp[:, 2:L + 2])


# ------------------------------ Inception kernel ----------------------------

def inception_kernel(x_ref, wfused_ref, w2b_ref, w3b_ref, w4_ref,
                     s_pre_ref, t_pre_ref, s_post_ref, t_post_ref,
                     out_ref, *, splits):
    c1, c2r, c3, c3r, c5, cp = splits
    B, L, cin = x_ref.shape
    x = x_ref[...]                                   # [B, L, Cin] (bf16)
    x2d = x.reshape(B * L, cin)

    # fused 1x1 convs: branch1 + branch2-reduce + branch3-reduce in one matmul,
    # one packed BN+ReLU over all their channels.
    pre = jnp.dot(x2d, wfused_ref[...], preferred_element_type=jnp.float32)
    pre = jnp.maximum(pre * s_pre_ref[...] + t_pre_ref[...], 0.0)

    b1 = pre[:, 0:c1]
    r2 = pre[:, c1:c1 + c2r].astype(x.dtype)
    r3 = pre[:, c1 + c2r:c1 + c2r + c3r].astype(x.dtype)

    # branch2: 3-tap conv as a single im2col matmul, then BN+ReLU.
    b2 = _conv1d_im2col(r2.reshape(B, L, c2r), w2b_ref[...], 3)
    b2 = jnp.maximum(b2 * s_post_ref[:, 0:c3] + t_post_ref[:, 0:c3], 0.0)

    # branch3: 7-tap conv as a single im2col matmul, then BN+ReLU.
    b3 = _conv1d_im2col(r3.reshape(B, L, c3r), w3b_ref[...], 7)
    b3 = jnp.maximum(b3 * s_post_ref[:, c3:c3 + c5] + t_post_ref[:, c3:c3 + c5], 0.0)

    # branch4: maxpool(3, s=1, p=1) -> 1x1 conv -> BN+ReLU.
    xp = _maxpool3_same(x).reshape(B * L, cin)
    b4 = jnp.dot(xp, w4_ref[...], preferred_element_type=jnp.float32)
    b4 = jnp.maximum(b4 * s_post_ref[:, c3 + c5:] + t_post_ref[:, c3 + c5:], 0.0)

    # write each branch straight into the output slab (no final concat).
    out_ref[:, :, 0:c1] = b1.reshape(B, L, c1).astype(out_ref.dtype)
    out_ref[:, :, c1:c1 + c3] = b2.reshape(B, L, c3).astype(out_ref.dtype)
    out_ref[:, :, c1 + c3:c1 + c3 + c5] = b3.reshape(B, L, c5).astype(out_ref.dtype)
    out_ref[:, :, c1 + c3 + c5:] = b4.reshape(B, L, cp).astype(out_ref.dtype)


def inception_pallas(x_nlc, kp):
    """x_nlc: [B, L, Cin]; kp: kernel-layout params. Returns [B, L, Cout] f32."""
    B, L, _ = x_nlc.shape
    wfused, w2b, w3b, w4 = kp["wfused"], kp["w2b"], kp["w3b"], kp["w4"]
    c3, c5, cp = w2b.shape[1], w3b.shape[1], w4.shape[1]
    c2r, c3r = w2b.shape[0] // 3, w3b.shape[0] // 7
    c1 = wfused.shape[1] - c2r - c3r
    splits = (c1, c2r, c3, c3r, c5, cp)
    c_out = c1 + c3 + c5 + cp

    x_bf = x_nlc.astype(jnp.bfloat16)   # bf16 MXU feed, half the HBM->VMEM bytes
    ordered = [wfused, w2b, w3b, w4,
               kp["s_pre"], kp["t_pre"], kp["s_post"], kp["t_post"]]

    return pl.pallas_call(
        functools.partial(inception_kernel, splits=splits),
        out_shape=jax.ShapeDtypeStruct((B, L, c_out), jnp.float32),
        grid=(1,),                                   # whole batch in one step
        in_specs=[_full_spec(x_bf)] + [_full_spec(a) for a in ordered],
        out_specs=pl.BlockSpec((B, L, c_out), lambda *_: (0, 0, 0)),
        compiler_params=pltpu.CompilerParams(
            dimension_semantics=("arbitrary",)),
    )(x_bf, *ordered)


# --------------------------- fused linear kernel -----------------------------

def linear_kernel(x_ref, w_ref, s_ref, b_ref, out_ref, *, relu):
    y = jnp.dot(x_ref[...], w_ref[...], preferred_element_type=jnp.float32)
    y = y * s_ref[...] + b_ref[...]
    if relu:
        y = jnp.maximum(y, 0.0)
    out_ref[...] = y.astype(out_ref.dtype)


def linear_pallas(x, w, scale, bias, *, relu):
    """y = maybe_relu((x @ w) * scale + bias); x:[M,K], w:[K,N], scale/bias:[N]."""
    M, _ = x.shape
    N = w.shape[1]
    args = (x, w, scale.reshape(1, N).astype(jnp.float32),
            bias.reshape(1, N).astype(jnp.float32))
    return pl.pallas_call(
        functools.partial(linear_kernel, relu=relu),
        out_shape=jax.ShapeDtypeStruct((M, N), jnp.float32),
        grid=(1,),
        in_specs=[_full_spec(a) for a in args],
        out_specs=pl.BlockSpec((M, N), lambda *_: (0, 0)),
        compiler_params=pltpu.CompilerParams(
            dimension_semantics=("arbitrary",)),
    )(*args)


# ----------------------------- GRU (plain JAX) -------------------------------
# TODO(synk): sequential GRU recurrence kept in plain JAX (lax.scan); no useful
# Pallas mapping at this size.

def gru_last_hidden(x, w_ih, w_hh, b_ih, b_hh):
    """x: [B, T, D]; returns final hidden state [B, H] (torch nn.GRU equations)."""
    B = x.shape[0]
    H = w_hh.shape[1]

    def step(h, x_t):
        gi = x_t @ w_ih.T + b_ih
        gh = h @ w_hh.T + b_hh
        i_r, i_z, i_n = gi[:, :H], gi[:, H:2 * H], gi[:, 2 * H:]
        h_r, h_z, h_n = gh[:, :H], gh[:, H:2 * H], gh[:, 2 * H:]
        r = jax.nn.sigmoid(i_r + h_r)
        z = jax.nn.sigmoid(i_z + h_z)
        n = jnp.tanh(i_n + r * h_n)
        return (1.0 - z) * n + z * h, None

    h0 = jnp.zeros((B, H), jnp.float32)
    h_final, _ = lax.scan(step, h0, jnp.swapaxes(x, 0, 1))
    return h_final


# ------------------------- parameter construction ----------------------------

def _bn_affine(key, c, eps=1e-3):
    """Folded inference-mode BatchNorm1d(eps=1e-3) -> per-channel scale/shift."""
    k1, k2, k3, k4 = jax.random.split(key, 4)
    gamma = 1.0 + 0.1 * jax.random.normal(k1, (c,), jnp.float32)
    beta = 0.1 * jax.random.normal(k2, (c,), jnp.float32)
    mean = 0.1 * jax.random.normal(k3, (c,), jnp.float32)
    var = 1.0 + 0.2 * jnp.abs(jax.random.normal(k4, (c,), jnp.float32))
    scale = gamma / jnp.sqrt(var + eps)
    shift = beta - mean * scale
    return scale, shift


def make_inception_params(key, cin, ch1x1, ch3x3red, ch3x3, ch5x5red, ch5x5, pool_proj):
    keys = jax.random.split(key, 12)

    def conv_w(k, co, ci, kk):
        w = jax.random.normal(k, (co, ci, kk), jnp.float32) / np.sqrt(ci * kk)
        return w.astype(jnp.bfloat16)           # weights stored / streamed in bf16

    w1 = conv_w(keys[0], ch1x1, cin, 1)
    w2a = conv_w(keys[1], ch3x3red, cin, 1)
    w2b = conv_w(keys[2], ch3x3, ch3x3red, 3)
    w3a = conv_w(keys[3], ch5x5red, cin, 1)
    w3b = conv_w(keys[4], ch5x5, ch5x5red, 7)
    w4 = conv_w(keys[5], pool_proj, cin, 1)

    s1, t1 = _bn_affine(keys[6], ch1x1)
    s2a, t2a = _bn_affine(keys[7], ch3x3red)
    s2b, t2b = _bn_affine(keys[8], ch3x3)
    s3a, t3a = _bn_affine(keys[9], ch5x5red)
    s3b, t3b = _bn_affine(keys[10], ch5x5)
    s4, t4 = _bn_affine(keys[11], pool_proj)

    torch_p = {"w1": w1.astype(jnp.float32), "w2a": w2a.astype(jnp.float32),
               "w2b": w2b.astype(jnp.float32), "w3a": w3a.astype(jnp.float32),
               "w3b": w3b.astype(jnp.float32), "w4": w4.astype(jnp.float32),
               "s1": s1, "t1": t1, "s2a": s2a, "t2a": t2a, "s2b": s2b, "t2b": t2b,
               "s3a": s3a, "t3a": t3a, "s3b": s3b, "t3b": t3b, "s4": s4, "t4": t4}

    def k1x1(w):      # torch [Co, Ci, 1] -> [Ci, Co]
        return jnp.transpose(w[:, :, 0], (1, 0))

    def kflat(w):     # torch [Co, Ci, K] -> im2col weight [K*Ci, Co]
        co, ci, kk = w.shape
        return jnp.transpose(w, (2, 1, 0)).reshape(kk * ci, co)

    kernel_p = {
        "wfused": jnp.concatenate([k1x1(w1), k1x1(w2a), k1x1(w3a)], axis=1),
        "w2b": kflat(w2b), "w3b": kflat(w3b), "w4": k1x1(w4),
        "s_pre": jnp.concatenate([s1, s2a, s3a]).reshape(1, -1),
        "t_pre": jnp.concatenate([t1, t2a, t3a]).reshape(1, -1),
        "s_post": jnp.concatenate([s2b, s3b, s4]).reshape(1, -1),
        "t_post": jnp.concatenate([t2b, t3b, t4]).reshape(1, -1),
    }
    return torch_p, kernel_p


def make_all_params(key, obs_dim, fnl_dim, num_dim, lag):
    obs_time, fnl_time = lag * 4, lag * 4 - 2
    ks = jax.random.split(key, 12)

    obs_t, obs_k = make_inception_params(ks[0], obs_dim, 64, 96, 128, 16, 32, 32)
    fnl_t, fnl_k = make_inception_params(ks[1], fnl_dim, 64, 96, 128, 16, 32, 32)
    sec_t, sec_k = make_inception_params(ks[2], 512, 128, 192, 256, 32, 64, 64)

    # fnl_resize: BasicConv1d(fnl_time -> obs_time, k=1) on the transposed tensor.
    wr = jax.random.normal(ks[3], (obs_time, fnl_time, 1), jnp.float32) / np.sqrt(fnl_time)
    sr, tr = _bn_affine(ks[4], obs_time)

    # GRU(num_dim -> num_dim), single layer, batch_first.
    H = num_dim
    w_ih = jax.random.normal(ks[5], (3 * H, num_dim), jnp.float32) / np.sqrt(num_dim)
    w_hh = jax.random.normal(ks[6], (3 * H, H), jnp.float32) / np.sqrt(H)
    b_ih = 0.1 * jax.random.normal(ks[7], (3 * H,), jnp.float32)
    b_hh = 0.1 * jax.random.normal(ks[8], (3 * H,), jnp.float32)

    # FC head (added_point=True -> 2*num_dim extra features; reg=False -> 4 outputs).
    d1 = 512 * obs_time + 2 * num_dim
    w_fc1 = jax.random.normal(ks[9], (d1, 256), jnp.float32) / np.sqrt(d1)
    b_fc1 = 0.1 * jax.random.normal(ks[10], (256,), jnp.float32)
    kf2a, kf2b = jax.random.split(ks[11])
    w_fc2 = jax.random.normal(kf2a, (256, 4), jnp.float32) / np.sqrt(256.0)
    b_fc2 = 0.1 * jax.random.normal(kf2b, (4,), jnp.float32)

    return {"obs_t": obs_t, "obs_k": obs_k, "fnl_t": fnl_t, "fnl_k": fnl_k,
            "sec_t": sec_t, "sec_k": sec_k,
            "wr_t": wr, "wr_k": jnp.transpose(wr[:, :, 0], (1, 0)), "sr": sr, "tr": tr,
            "w_ih": w_ih, "w_hh": w_hh, "b_ih": b_ih, "b_hh": b_hh,
            "w_fc1_k": w_fc1, "b_fc1": b_fc1, "w_fc2_k": w_fc2, "b_fc2": b_fc2}


# ------------------------- full model forward (Pallas) -----------------------

def model_forward_pallas(x_obs_ncw, x_fnl_ncw, x_num, point_num, P):
    B = x_obs_ncw.shape[0]

    # Inception stage 1 (kernels work in NLC layout).
    o_nlc = inception_pallas(jnp.transpose(x_obs_ncw, (0, 2, 1)), P["obs_k"])   # [B, To, 256]
    f_nlc = inception_pallas(jnp.transpose(x_fnl_ncw, (0, 2, 1)), P["fnl_k"])   # [B, Tf, 256]

    # fnl_resize: 1x1 conv over the time axis (torch: transpose -> conv -> transpose).
    C = f_nlc.shape[2]
    To = P["wr_k"].shape[1]
    f_rows = jnp.transpose(f_nlc, (0, 2, 1)).reshape(B * C, f_nlc.shape[1])     # [(b,c), Tf]
    f_rs = linear_pallas(f_rows, P["wr_k"], P["sr"], P["tr"], relu=True)        # [(b,c), To]
    f_rs_nlc = jnp.transpose(f_rs.reshape(B, C, To), (0, 2, 1))                 # [B, To, 256]

    # torch.cat along channel dim (NCW dim=1 == NLC last axis).
    x_nlc = jnp.concatenate([o_nlc, f_rs_nlc], axis=-1)                         # [B, To, 512]
    y_nlc = inception_pallas(x_nlc, P["sec_k"])                                 # [B, To, 512]

    # flatten exactly like torch .view(B, -1) on the NCW tensor.
    x_flat = jnp.transpose(y_nlc, (0, 2, 1)).reshape(B, -1)                     # [B, 512*To]

    # GRU last hidden state + point_num features.
    h = gru_last_hidden(x_num, P["w_ih"], P["w_hh"], P["b_ih"], P["b_hh"])
    h = jnp.concatenate([h, point_num], axis=1)
    x_full = jnp.concatenate([x_flat, h], axis=1)

    # fc1 (+ReLU) and fc2 as fused Pallas matmuls.  Dropout = identity (eval).
    z = linear_pallas(x_full, P["w_fc1_k"], jnp.ones((256,), jnp.float32),
                      P["b_fc1"], relu=True)
    z = linear_pallas(z, P["w_fc2_k"], jnp.ones((P["w_fc2_k"].shape[1],), jnp.float32),
                      P["b_fc2"], relu=False)
    return z


# ------------------------------ JAX reference --------------------------------

def _ref_basic_conv(x_ncw, w, scale, shift, pad):
    y = lax.conv_general_dilated(x_ncw, w, window_strides=(1,), padding=[(pad, pad)],
                                 dimension_numbers=("NCH", "OIH", "NCH"))
    y = y * scale.reshape(1, -1, 1) + shift.reshape(1, -1, 1)
    return jnp.maximum(y, 0.0)


def inception_ref(x_ncw, p):
    b1 = _ref_basic_conv(x_ncw, p["w1"], p["s1"], p["t1"], 0)
    r2 = _ref_basic_conv(x_ncw, p["w2a"], p["s2a"], p["t2a"], 0)
    b2 = _ref_basic_conv(r2, p["w2b"], p["s2b"], p["t2b"], 1)
    r3 = _ref_basic_conv(x_ncw, p["w3a"], p["s3a"], p["t3a"], 0)
    b3 = _ref_basic_conv(r3, p["w3b"], p["s3b"], p["t3b"], 3)
    xp = lax.reduce_window(x_ncw, -jnp.inf, lax.max,
                           window_dimensions=(1, 1, 3), window_strides=(1, 1, 1),
                           padding=[(0, 0), (0, 0), (1, 1)])
    b4 = _ref_basic_conv(xp, p["w4"], p["s4"], p["t4"], 0)
    return jnp.concatenate([b1, b2, b3, b4], axis=1)


def model_forward_ref(x_obs_ncw, x_fnl_ncw, x_num, point_num, P):
    B = x_obs_ncw.shape[0]
    o = inception_ref(x_obs_ncw, P["obs_t"])                 # [B, 256, To]
    f = inception_ref(x_fnl_ncw, P["fnl_t"])                 # [B, 256, Tf]
    f = jnp.transpose(f, (0, 2, 1))                          # [B, Tf, 256]
    f = _ref_basic_conv(f, P["wr_t"], P["sr"], P["tr"], 0)   # [B, To, 256]
    f = jnp.transpose(f, (0, 2, 1))                          # [B, 256, To]
    x = jnp.concatenate([o, f], axis=1)                      # [B, 512, To]
    x = inception_ref(x, P["sec_t"])                         # [B, 512, To]
    x = x.reshape(B, -1)
    h = gru_last_hidden(x_num, P["w_ih"], P["w_hh"], P["b_ih"], P["b_hh"])
    h = jnp.concatenate([h, point_num], axis=1)
    x = jnp.concatenate([x, h], axis=1)
    x = jnp.maximum(x @ P["w_fc1_k"] + P["b_fc1"], 0.0)
    return x @ P["w_fc2_k"] + P["b_fc2"]


# ---------------------------------- main --------------------------------------

if __name__ == "__main__":
    B, obs_dim, fnl_dim, num_dim, lag, seq = 2, 5, 7, 8, 2, 6
    obs_time, fnl_time = lag * 4, lag * 4 - 2

    root = jax.random.PRNGKey(0)
    kx1, kx2, kx3, kx4, kparams = jax.random.split(root, 5)

    # round inputs to bf16-representable values so the bf16 kernel path and the
    # f32 reference start from identical stage-1 inputs.
    x_obs = jax.random.normal(kx1, (B, obs_dim, obs_time), jnp.float32)
    x_obs = x_obs.astype(jnp.bfloat16).astype(jnp.float32)
    x_fnl = jax.random.normal(kx2, (B, fnl_dim, fnl_time), jnp.float32)
    x_fnl = x_fnl.astype(jnp.bfloat16).astype(jnp.float32)
    x_num = jax.random.normal(kx3, (B, seq, num_dim), jnp.float32)
    point_num = jax.random.normal(kx4, (B, num_dim), jnp.float32)

    P = make_all_params(kparams, obs_dim, fnl_dim, num_dim, lag)

    out = jax.jit(model_forward_pallas)(x_obs, x_fnl, x_num, point_num, P)
    out = jax.block_until_ready(out)

    ref = jax.block_until_ready(model_forward_ref(x_obs, x_fnl, x_num, point_num, P))

    # bf16 matmul operands inside the inception kernels -> slightly looser tol.
    np.testing.assert_allclose(np.asarray(out), np.asarray(ref), rtol=2e-2, atol=2e-2)
    print("KERNEL_OK")
</pallas_src>

<mosaic_0001>
module attributes {stable_mosaic.version = 11 : i64} {
  func.func @inception_kernel(%arg0: i32, %arg1: memref<2x6x7xbf16, #tpu.memory_space<vmem>>, %arg2: memref<7x176xbf16, #tpu.memory_space<vmem>>, %arg3: memref<288x128xbf16, #tpu.memory_space<vmem>>, %arg4: memref<112x32xbf16, #tpu.memory_space<vmem>>, %arg5: memref<7x32xbf16, #tpu.memory_space<vmem>>, %arg6: memref<1x176xf32, #tpu.memory_space<vmem>>, %arg7: memref<1x176xf32, #tpu.memory_space<vmem>>, %arg8: memref<1x192xf32, #tpu.memory_space<vmem>>, %arg9: memref<1x192xf32, #tpu.memory_space<vmem>>, %arg10: memref<2x6x256xf32, #tpu.memory_space<vmem>>) attributes {dimension_semantics = [#tpu.dimension_semantics<arbitrary>], iteration_bounds = array<i64: 1>, scalar_prefetch = 0 : i64, scratch_operands = 0 : i64, tpu.core_type = #tpu.core_type<tc>, window_params = [{pipeline_mode = #tpu.pipeline_mode<synchronous>, transform_indices = @transform_0, window_bounds = array<i64: 2, 6, 7>}, {pipeline_mode = #tpu.pipeline_mode<synchronous>, transform_indices = @transform_1, window_bounds = array<i64: 7, 176>}, {pipeline_mode = #tpu.pipeline_mode<synchronous>, transform_indices = @transform_2, window_bounds = array<i64: 288, 128>}, {pipeline_mode = #tpu.pipeline_mode<synchronous>, transform_indices = @transform_3, window_bounds = array<i64: 112, 32>}, {pipeline_mode = #tpu.pipeline_mode<synchronous>, transform_indices = @transform_4, window_bounds = array<i64: 7, 32>}, {pipeline_mode = #tpu.pipeline_mode<synchronous>, transform_indices = @transform_5, window_bounds = array<i64: 1, 176>}, {pipeline_mode = #tpu.pipeline_mode<synchronous>, transform_indices = @transform_6, window_bounds = array<i64: 1, 176>}, {pipeline_mode = #tpu.pipeline_mode<synchronous>, transform_indices = @transform_7, window_bounds = array<i64: 1, 192>}, {pipeline_mode = #tpu.pipeline_mode<synchronous>, transform_indices = @transform_8, window_bounds = array<i64: 1, 192>}, {pipeline_mode = #tpu.pipeline_mode<synchronous>, transform_indices = @transform_9, window_bounds = array<i64: 2, 6, 256>}]} {
    %c0 = arith.constant 0 : index
    %c0_0 = arith.constant 0 : index
    %c0_1 = arith.constant 0 : index
    %0 = vector.load %arg1[%c0, %c0_0, %c0_1] : memref<2x6x7xbf16, #tpu.memory_space<vmem>>, vector<2x6x7xbf16>
    %1 = vector.shape_cast %0 : vector<2x6x7xbf16> to vector<12x7xbf16>
    %c0_2 = arith.constant 0 : index
    %c0_3 = arith.constant 0 : index
    %2 = vector.load %arg2[%c0_2, %c0_3] : memref<7x176xbf16, #tpu.memory_space<vmem>>, vector<7x176xbf16>
    %cst = arith.constant dense<0.000000e+00> : vector<12x176xf32>
    %3 = tpu.matmul %1, %2, %cst {dimension_numbers = #tpu.dot_dimension_numbers<[1], [0], [0], [1], [0, 0, 1, 1], [], []>} : vector<12x7xbf16>, vector<7x176xbf16>, vector<12x176xf32> -> vector<12x176xf32>
    %c0_4 = arith.constant 0 : index
    %c0_5 = arith.constant 0 : index
    %4 = vector.load %arg6[%c0_4, %c0_5] : memref<1x176xf32, #tpu.memory_space<vmem>>, vector<1x176xf32>
    %5 = vector.broadcast %4 : vector<1x176xf32> to vector<12x176xf32>
    %6 = arith.mulf %3, %5 : vector<12x176xf32>
    %c0_6 = arith.constant 0 : index
    %c0_7 = arith.constant 0 : index
    %7 = vector.load %arg7[%c0_6, %c0_7] : memref<1x176xf32, #tpu.memory_space<vmem>>, vector<1x176xf32>
    %8 = vector.broadcast %7 : vector<1x176xf32> to vector<12x176xf32>
    %9 = arith.addf %6, %8 : vector<12x176xf32>
    %cst_8 = arith.constant 0.000000e+00 : f32
    %10 = vector.broadcast %cst_8 : f32 to vector<12x176xf32>
    %11 = arith.maximumf %9, %10 : vector<12x176xf32>
    %12 = vector.extract_strided_slice %11 {offsets = [0, 0], sizes = [12, 64], strides = [1, 1]} : vector<12x176xf32> to vector<12x64xf32>
    %13 = vector.extract_strided_slice %11 {offsets = [0, 64], sizes = [12, 96], strides = [1, 1]} : vector<12x176xf32> to vector<12x96xf32>
    %14 = arith.truncf %13 : vector<12x96xf32> to vector<12x96xbf16>
    %15 = vector.extract_strided_slice %11 {offsets = [0, 160], sizes = [12, 16], strides = [1, 1]} : vector<12x176xf32> to vector<12x16xf32>
    %16 = arith.truncf %15 : vector<12x16xf32> to vector<12x16xbf16>
    %17 = vector.shape_cast %14 : vector<12x96xbf16> to vector<2x6x96xbf16>
    %c0_9 = arith.constant 0 : index
    %c0_10 = arith.constant 0 : index
    %18 = vector.load %arg3[%c0_9, %c0_10] : memref<288x128xbf16, #tpu.memory_space<vmem>>, vector<288x128xbf16>
    %cst_11 = arith.constant 0.000000e+00 : bf16
    %19 = vector.broadcast %cst_11 : bf16 to vector<2x1x96xbf16>
    %20 = tpu.concatenate %19, %17, %19 in 1 : vector<2x1x96xbf16>, vector<2x6x96xbf16>, vector<2x1x96xbf16> -> vector<2x8x96xbf16>
    %21 = vector.extract_strided_slice %20 {offsets = [0, 0, 0], sizes = [2, 6, 96], strides = [1, 1, 1]} : vector<2x8x96xbf16> to vector<2x6x96xbf16>
    %22 = vector.extract_strided_slice %20 {offsets = [0, 1, 0], sizes = [2, 6, 96], strides = [1, 1, 1]} : vector<2x8x96xbf16> to vector<2x6x96xbf16>
    %23 = vector.extract_strided_slice %20 {offsets = [0, 2, 0], sizes = [2, 6, 96], strides = [1, 1, 1]} : vector<2x8x96xbf16> to vector<2x6x96xbf16>
    %24 = tpu.concatenate %21, %22, %23 in 2 : vector<2x6x96xbf16>, vector<2x6x96xbf16>, vector<2x6x96xbf16> -> vector<2x6x288xbf16>
    %25 = vector.shape_cast %24 : vector<2x6x288xbf16> to vector<12x288xbf16>
    %cst_12 = arith.constant dense<0.000000e+00> : vector<12x128xf32>
    %26 = tpu.matmul %25, %18, %cst_12 {dimension_numbers = #tpu.dot_dimension_numbers<[1], [0], [0], [1], [0, 0, 1, 1], [], []>} : vector<12x288xbf16>, vector<288x128xbf16>, vector<12x128xf32> -> vector<12x128xf32>
    %c0_13 = arith.constant 0 : index
    %c0_14 = arith.constant 0 : index
    %27 = vector.load %arg8[%c0_13, %c0_14] : memref<1x192xf32, #tpu.memory_space<vmem>>, vector<1x128xf32>
    %28 = vector.broadcast %27 : vector<1x128xf32> to vector<12x128xf32>
    %29 = arith.mulf %26, %28 : vector<12x128xf32>
    %c0_15 = arith.constant 0 : index
    %c0_16 = arith.constant 0 : index
    %30 = vector.load %arg9[%c0_15, %c0_16] : memref<1x192xf32, #tpu.memory_space<vmem>>, vector<1x128xf32>
    %31 = vector.broadcast %30 : vector<1x128xf32> to vector<12x128xf32>
    %32 = arith.addf %29, %31 : vector<12x128xf32>
    %cst_17 = arith.constant 0.000000e+00 : f32
    %33 = vector.broadcast %cst_17 : f32 to vector<12x128xf32>
    %34 = arith.maximumf %32, %33 : vector<12x128xf32>
    %35 = vector.shape_cast %16 : vector<12x16xbf16> to vector<2x6x16xbf16>
    %c0_18 = arith.constant 0 : index
    %c0_19 = arith.constant 0 : index
    %36 = vector.load %arg4[%c0_18, %c0_19] : memref<112x32xbf16, #tpu.memory_space<vmem>>, vector<112x32xbf16>
    %cst_20 = arith.constant 0.000000e+00 : bf16
    %37 = vector.broadcast %cst_20 : bf16 to vector<2x3x16xbf16>
    %38 = tpu.concatenate %37, %35, %37 in 1 : vector<2x3x16xbf16>, vector<2x6x16xbf16>, vector<2x3x16xbf16> -> vector<2x12x16xbf16>
    %39 = vector.extract_strided_slice %38 {offsets = [0, 0, 0], sizes = [2, 6, 16], strides = [1, 1, 1]} : vector<2x12x16xbf16> to vector<2x6x16xbf16>
    %40 = vector.extract_strided_slice %38 {offsets = [0, 1, 0], sizes = [2, 6, 16], strides = [1, 1, 1]} : vector<2x12x16xbf16> to vector<2x6x16xbf16>
    %41 = vector.extract_strided_slice %38 {offsets = [0, 2, 0], sizes = [2, 6, 16], strides = [1, 1, 1]} : vector<2x12x16xbf16> to vector<2x6x16xbf16>
    %42 = vector.extract_strided_slice %38 {offsets = [0, 3, 0], sizes = [2, 6, 16], strides = [1, 1, 1]} : vector<2x12x16xbf16> to vector<2x6x16xbf16>
    %43 = vector.extract_strided_slice %38 {offsets = [0, 4, 0], sizes = [2, 6, 16], strides = [1, 1, 1]} : vector<2x12x16xbf16> to vector<2x6x16xbf16>
    %44 = vector.extract_strided_slice %38 {offsets = [0, 5, 0], sizes = [2, 6, 16], strides = [1, 1, 1]} : vector<2x12x16xbf16> to vector<2x6x16xbf16>
    %45 = vector.extract_strided_slice %38 {offsets = [0, 6, 0], sizes = [2, 6, 16], strides = [1, 1, 1]} : vector<2x12x16xbf16> to vector<2x6x16xbf16>
    %46 = tpu.concatenate %39, %40, %41, %42, %43, %44, %45 in 2 : vector<2x6x16xbf16>, vector<2x6x16xbf16>, vector<2x6x16xbf16>, vector<2x6x16xbf16>, vector<2x6x16xbf16>, vector<2x6x16xbf16>, vector<2x6x16xbf16> -> vector<2x6x112xbf16>
    %47 = vector.shape_cast %46 : vector<2x6x112xbf16> to vector<12x112xbf16>
    %cst_21 = arith.constant dense<0.000000e+00> : vector<12x32xf32>
    %48 = tpu.matmul %47, %36, %cst_21 {dimension_numbers = #tpu.dot_dimension_numbers<[1], [0], [0], [1], [0, 0, 1, 1], [], []>} : vector<12x112xbf16>, vector<112x32xbf16>, vector<12x32xf32> -> vector<12x32xf32>
    %c0_22 = arith.constant 0 : index
    %c128 = arith.constant 128 : index
    %49 = vector.load %arg8[%c0_22, %c128] : memref<1x192xf32, #tpu.memory_space<vmem>>, vector<1x32xf32>
    %50 = vector.broadcast %49 : vector<1x32xf32> to vector<12x32xf32>
    %51 = arith.mulf %48, %50 : vector<12x32xf32>
    %c0_23 = arith.constant 0 : index
    %c128_24 = arith.constant 128 : index
    %52 = vector.load %arg9[%c0_23, %c128_24] : memref<1x192xf32, #tpu.memory_space<vmem>>, vector<1x32xf32>
    %53 = vector.broadcast %52 : vector<1x32xf32> to vector<12x32xf32>
    %54 = arith.addf %51, %53 : vector<12x32xf32>
    %cst_25 = arith.constant 0.000000e+00 : f32
    %55 = vector.broadcast %cst_25 : f32 to vector<12x32xf32>
    %56 = arith.maximumf %54, %55 : vector<12x32xf32>
    %cst_26 = arith.constant 0xFF80 : bf16
    %57 = vector.broadcast %cst_26 : bf16 to vector<2x1x7xbf16>
    %58 = tpu.concatenate %57, %0, %57 in 1 : vector<2x1x7xbf16>, vector<2x6x7xbf16>, vector<2x1x7xbf16> -> vector<2x8x7xbf16>
    %59 = vector.extract_strided_slice %58 {offsets = [0, 0, 0], sizes = [2, 6, 7], strides = [1, 1, 1]} : vector<2x8x7xbf16> to vector<2x6x7xbf16>
    %60 = vector.extract_strided_slice %58 {offsets = [0, 1, 0], sizes = [2, 6, 7], strides = [1, 1, 1]} : vector<2x8x7xbf16> to vector<2x6x7xbf16>
    %61 = arith.maximumf %59, %60 : vector<2x6x7xbf16>
    %62 = vector.extract_strided_slice %58 {offsets = [0, 2, 0], sizes = [2, 6, 7], strides = [1, 1, 1]} : vector<2x8x7xbf16> to vector<2x6x7xbf16>
    %63 = arith.maximumf %61, %62 : vector<2x6x7xbf16>
    %64 = vector.shape_cast %63 : vector<2x6x7xbf16> to vector<12x7xbf16>
    %c0_27 = arith.constant 0 : index
    %c0_28 = arith.constant 0 : index
    %65 = vector.load %arg5[%c0_27, %c0_28] : memref<7x32xbf16, #tpu.memory_space<vmem>>, vector<7x32xbf16>
    %cst_29 = arith.constant dense<0.000000e+00> : vector<12x32xf32>
    %66 = tpu.matmul %64, %65, %cst_29 {dimension_numbers = #tpu.dot_dimension_numbers<[1], [0], [0], [1], [0, 0, 1, 1], [], []>} : vector<12x7xbf16>, vector<7x32xbf16>, vector<12x32xf32> -> vector<12x32xf32>
    %c0_30 = arith.constant 0 : index
    %c160 = arith.constant 160 : index
    %67 = vector.load %arg8[%c0_30, %c160] : memref<1x192xf32, #tpu.memory_space<vmem>>, vector<1x32xf32>
    %68 = vector.broadcast %67 : vector<1x32xf32> to vector<12x32xf32>
    %69 = arith.mulf %66, %68 : vector<12x32xf32>
    %c0_31 = arith.constant 0 : index
    %c160_32 = arith.constant 160 : index
    %70 = vector.load %arg9[%c0_31, %c160_32] : memref<1x192xf32, #tpu.memory_space<vmem>>, vector<1x32xf32>
    %71 = vector.broadcast %70 : vector<1x32xf32> to vector<12x32xf32>
    %72 = arith.addf %69, %71 : vector<12x32xf32>
    %cst_33 = arith.constant 0.000000e+00 : f32
    %73 = vector.broadcast %cst_33 : f32 to vector<12x32xf32>
    %74 = arith.maximumf %72, %73 : vector<12x32xf32>
    %75 = vector.shape_cast %12 : vector<12x64xf32> to vector<2x6x64xf32>
    %c0_34 = arith.constant 0 : index
    %c0_35 = arith.constant 0 : index
    %c0_36 = arith.constant 0 : index
    %76 = vector.load %arg10[%c0_34, %c0_35, %c0_36] : memref<2x6x256xf32, #tpu.memory_space<vmem>>, vector<2x6x64xf32>
    tpu.vector_store %arg10[%c0_34, %c0_35, %c0_36], %75 {strides = array<i32>} : memref<2x6x256xf32, #tpu.memory_space<vmem>>, vector<2x6x64xf32>,
    %77 = vector.shape_cast %34 : vector<12x128xf32> to vector<2x6x128xf32>
    %c0_37 = arith.constant 0 : index
    %c0_38 = arith.constant 0 : index
    %c64 = arith.constant 64 : index
    %78 = vector.load %arg10[%c0_37, %c0_38, %c64] : memref<2x6x256xf32, #tpu.memory_space<vmem>>, vector<2x6x128xf32>
    tpu.vector_store %arg10[%c0_37, %c0_38, %c64], %77 {strides = array<i32>} : memref<2x6x256xf32, #tpu.memory_space<vmem>>, vector<2x6x128xf32>,
    %79 = vector.shape_cast %56 : vector<12x32xf32> to vector<2x6x32xf32>
    %c0_39 = arith.constant 0 : index
    %c0_40 = arith.constant 0 : index
    %c192 = arith.constant 192 : index
    %80 = vector.load %arg10[%c0_39, %c0_40, %c192] : memref<2x6x256xf32, #tpu.memory_space<vmem>>, vector<2x6x32xf32>
    tpu.vector_store %arg10[%c0_39, %c0_40, %c192], %79 {strides = array<i32>} : memref<2x6x256xf32, #tpu.memory_space<vmem>>, vector<2x6x32xf32>,
    %81 = vector.shape_cast %74 : vector<12x32xf32> to vector<2x6x32xf32>
    %c0_41 = arith.constant 0 : index
    %c0_42 = arith.constant 0 : index
    %c224 = arith.constant 224 : index
    %82 = vector.load %arg10[%c0_41, %c0_42, %c224] : memref<2x6x256xf32, #tpu.memory_space<vmem>>, vector<2x6x32xf32>
    tpu.vector_store %arg10[%c0_41, %c0_42, %c224], %81 {strides = array<i32>} : memref<2x6x256xf32, #tpu.memory_space<vmem>>, vector<2x6x32xf32>,
    return
  }
  func.func @transform_0(%arg0: i32) -> (i32, i32, i32) {
    %c0_i32 = arith.constant 0 : i32
    %c0_i32_0 = arith.constant 0 : i32
    %c0_i32_1 = arith.constant 0 : i32
    %c0_i32_2 = arith.constant 0 : i32
    return %c0_i32, %c0_i32_0, %c0_i32_1 : i32, i32, i32
  }
  func.func @transform_1(%arg0: i32) -> (i32, i32) {
    %c0_i32 = arith.constant 0 : i32
    %c0_i32_0 = arith.constant 0 : i32
    %c0_i32_1 = arith.constant 0 : i32
    return %c0_i32, %c0_i32_0 : i32, i32
  }
  func.func @transform_2(%arg0: i32) -> (i32, i32) {
    %c0_i32 = arith.constant 0 : i32
    %c0_i32_0 = arith.constant 0 : i32
    %c0_i32_1 = arith.constant 0 : i32
    return %c0_i32, %c0_i32_0 : i32, i32
  }
  func.func @transform_3(%arg0: i32) -> (i32, i32) {
    %c0_i32 = arith.constant 0 : i32
    %c0_i32_0 = arith.constant 0 : i32
    %c0_i32_1 = arith.constant 0 : i32
    return %c0_i32, %c0_i32_0 : i32, i32
  }
  func.func @transform_4(%arg0: i32) -> (i32, i32) {
    %c0_i32 = arith.constant 0 : i32
    %c0_i32_0 = arith.constant 0 : i32
    %c0_i32_1 = arith.constant 0 : i32
    return %c0_i32, %c0_i32_0 : i32, i32
  }
  func.func @transform_5(%arg0: i32) -> (i32, i32) {
    %c0_i32 = arith.constant 0 : i32
    %c0_i32_0 = arith.constant 0 : i32
    %c0_i32_1 = arith.constant 0 : i32
    return %c0_i32, %c0_i32_0 : i32, i32
  }
  func.func @transform_6(%arg0: i32) -> (i32, i32) {
    %c0_i32 = arith.constant 0 : i32
    %c0_i32_0 = arith.constant 0 : i32
    %c0_i32_1 = arith.constant 0 : i32
    return %c0_i32, %c0_i32_0 : i32, i32
  }
  func.func @transform_7(%arg0: i32) -> (i32, i32) {
    %c0_i32 = arith.constant 0 : i32
    %c0_i32_0 = arith.constant 0 : i32
    %c0_i32_1 = arith.constant 0 : i32
    return %c0_i32, %c0_i32_0 : i32, i32
  }
  func.func @transform_8(%arg0: i32) -> (i32, i32) {
    %c0_i32 = arith.constant 0 : i32
    %c0_i32_0 = arith.constant 0 : i32
    %c0_i32_1 = arith.constant 0 : i32
    return %c0_i32, %c0_i32_0 : i32, i32
  }
  func.func @transform_9(%arg0: i32) -> (i32, i32, i32) {
    %c0_i32 = arith.constant 0 : i32
    %c0_i32_0 = arith.constant 0 : i32
    %c0_i32_1 = arith.constant 0 : i32
    %c0_i32_2 = arith.constant 0 : i32
    return %c0_i32, %c0_i32_0, %c0_i32_1 : i32, i32, i32
  }
}

module attributes {stable_mosaic.version = 11 : i64} {
  func.func @linear_kernel(%arg0: i32, %arg1: memref<512x6xf32, #tpu.memory_space<vmem>>, %arg2: memref<6x8xf32, #tpu.memory_space<vmem>>, %arg3: memref<1x8xf32, #tpu.memory_space<vmem>>, %arg4: memref<1x8xf32, #tpu.memory_space<vmem>>, %arg5: memref<512x8xf32, #tpu.memory_space<vmem>>) attributes {dimension_semantics = [#tpu.dimension_semantics<arbitrary>], iteration_bounds = array<i64: 1>, scalar_prefetch = 0 : i64, scratch_operands = 0 : i64, tpu.core_type = #tpu.core_type<tc>, window_params = [{pipeline_mode = #tpu.pipeline_mode<synchronous>, transform_indices = @transform_0, window_bounds = array<i64: 512, 6>}, {pipeline_mode = #tpu.pipeline_mode<synchronous>, transform_indices = @transform_1, window_bounds = array<i64: 6, 8>}, {pipeline_mode = #tpu.pipeline_mode<synchronous>, transform_indices = @transform_2, window_bounds = array<i64: 1, 8>}, {pipeline_mode = #tpu.pipeline_mode<synchronous>, transform_indices = @transform_3, window_bounds = array<i64: 1, 8>}, {pipeline_mode = #tpu.pipeline_mode<synchronous>, transform_indices = @transform_4, window_bounds = array<i64: 512, 8>}]} {
    %c0 = arith.constant 0 : index
    %c0_0 = arith.constant 0 : index
    %0 = vector.load %arg1[%c0, %c0_0] : memref<512x6xf32, #tpu.memory_space<vmem>>, vector<512x6xf32>
    %c0_1 = arith.constant 0 : index
    %c0_2 = arith.constant 0 : index
    %1 = vector.load %arg2[%c0_1, %c0_2] : memref<6x8xf32, #tpu.memory_space<vmem>>, vector<6x8xf32>
    %cst = arith.constant dense<0.000000e+00> : vector<512x8xf32>
    %2 = tpu.matmul %0, %1, %cst {dimension_numbers = #tpu.dot_dimension_numbers<[1], [0], [0], [1], [0, 0, 1, 1], [], []>} : vector<512x6xf32>, vector<6x8xf32>, vector<512x8xf32> -> vector<512x8xf32>
    %c0_3 = arith.constant 0 : index
    %c0_4 = arith.constant 0 : index
    %3 = vector.load %arg3[%c0_3, %c0_4] : memref<1x8xf32, #tpu.memory_space<vmem>>, vector<1x8xf32>
    %4 = vector.broadcast %3 : vector<1x8xf32> to vector<512x8xf32>
    %5 = arith.mulf %2, %4 : vector<512x8xf32>
    %c0_5 = arith.constant 0 : index
    %c0_6 = arith.constant 0 : index
    %6 = vector.load %arg4[%c0_5, %c0_6] : memref<1x8xf32, #tpu.memory_space<vmem>>, vector<1x8xf32>
    %7 = vector.broadcast %6 : vector<1x8xf32> to vector<512x8xf32>
    %8 = arith.addf %5, %7 : vector<512x8xf32>
    %cst_7 = arith.constant 0.000000e+00 : f32
    %9 = vector.broadcast %cst_7 : f32 to vector<512x8xf32>
    %10 = arith.maximumf %8, %9 : vector<512x8xf32>
    %c0_8 = arith.constant 0 : index
    %c0_9 = arith.constant 0 : index
    %11 = vector.load %arg5[%c0_8, %c0_9] : memref<512x8xf32, #tpu.memory_space<vmem>>, vector<512x8xf32>
    tpu.vector_store %arg5[%c0_8, %c0_9], %10 {strides = array<i32>} : memref<512x8xf32, #tpu.memory_space<vmem>>, vector<512x8xf32>,
    return
  }
  func.func @transform_0(%arg0: i32) -> (i32, i32) {
    %c0_i32 = arith.constant 0 : i32
    %c0_i32_0 = arith.constant 0 : i32
    %c0_i32_1 = arith.constant 0 : i32
    return %c0_i32, %c0_i32_0 : i32, i32
  }
  func.func @transform_1(%arg0: i32) -> (i32, i32) {
    %c0_i32 = arith.constant 0 : i32
    %c0_i32_0 = arith.constant 0 : i32
    %c0_i32_1 = arith.constant 0 : i32
    return %c0_i32, %c0_i32_0 : i32, i32
  }
  func.func @transform_2(%arg0: i32) -> (i32, i32) {
    %c0_i32 = arith.constant 0 : i32
    %c0_i32_0 = arith.constant 0 : i32
    %c0_i32_1 = arith.constant 0 : i32
    return %c0_i32, %c0_i32_0 : i32, i32
  }
  func.func @transform_3(%arg0: i32) -> (i32, i32) {
    %c0_i32 = arith.constant 0 : i32
    %c0_i32_0 = arith.constant 0 : i32
    %c0_i32_1 = arith.constant 0 : i32
    return %c0_i32, %c0_i32_0 : i32, i32
  }
  func.func @transform_4(%arg0: i32) -> (i32, i32) {
    %c0_i32 = arith.constant 0 : i32
    %c0_i32_0 = arith.constant 0 : i32
    %c0_i32_1 = arith.constant 0 : i32
    return %c0_i32, %c0_i32_0 : i32, i32
  }
}

module attributes {stable_mosaic.version = 11 : i64} {
  func.func @inception_kernel(%arg0: i32, %arg1: memref<2x8x5xbf16, #tpu.memory_space<vmem>>, %arg2: memref<5x176xbf16, #tpu.memory_space<vmem>>, %arg3: memref<288x128xbf16, #tpu.memory_space<vmem>>, %arg4: memref<112x32xbf16, #tpu.memory_space<vmem>>, %arg5: memref<5x32xbf16, #tpu.memory_space<vmem>>, %arg6: memref<1x176xf32, #tpu.memory_space<vmem>>, %arg7: memref<1x176xf32, #tpu.memory_space<vmem>>, %arg8: memref<1x192xf32, #tpu.memory_space<vmem>>, %arg9: memref<1x192xf32, #tpu.memory_space<vmem>>, %arg10: memref<2x8x256xf32, #tpu.memory_space<vmem>>) attributes {dimension_semantics = [#tpu.dimension_semantics<arbitrary>], iteration_bounds = array<i64: 1>, scalar_prefetch = 0 : i64, scratch_operands = 0 : i64, tpu.core_type = #tpu.core_type<tc>, window_params = [{pipeline_mode = #tpu.pipeline_mode<synchronous>, transform_indices = @transform_0, window_bounds = array<i64: 2, 8, 5>}, {pipeline_mode = #tpu.pipeline_mode<synchronous>, transform_indices = @transform_1, window_bounds = array<i64: 5, 176>}, {pipeline_mode = #tpu.pipeline_mode<synchronous>, transform_indices = @transform_2, window_bounds = array<i64: 288, 128>}, {pipeline_mode = #tpu.pipeline_mode<synchronous>, transform_indices = @transform_3, window_bounds = array<i64: 112, 32>}, {pipeline_mode = #tpu.pipeline_mode<synchronous>, transform_indices = @transform_4, window_bounds = array<i64: 5, 32>}, {pipeline_mode = #tpu.pipeline_mode<synchronous>, transform_indices = @transform_5, window_bounds = array<i64: 1, 176>}, {pipeline_mode = #tpu.pipeline_mode<synchronous>, transform_indices = @transform_6, window_bounds = array<i64: 1, 176>}, {pipeline_mode = #tpu.pipeline_mode<synchronous>, transform_indices = @transform_7, window_bounds = array<i64: 1, 192>}, {pipeline_mode = #tpu.pipeline_mode<synchronous>, transform_indices = @transform_8, window_bounds = array<i64: 1, 192>}, {pipeline_mode = #tpu.pipeline_mode<synchronous>, transform_indices = @transform_9, window_bounds = array<i64: 2, 8, 256>}]} {
    %c0 = arith.constant 0 : index
    %c0_0 = arith.constant 0 : index
    %c0_1 = arith.constant 0 : index
    %0 = vector.load %arg1[%c0, %c0_0, %c0_1] : memref<2x8x5xbf16, #tpu.memory_space<vmem>>, vector<2x8x5xbf16>
    %1 = vector.shape_cast %0 : vector<2x8x5xbf16> to vector<16x5xbf16>
    %c0_2 = arith.constant 0 : index
    %c0_3 = arith.constant 0 : index
    %2 = vector.load %arg2[%c0_2, %c0_3] : memref<5x176xbf16, #tpu.memory_space<vmem>>, vector<5x176xbf16>
    %cst = arith.constant dense<0.000000e+00> : vector<16x176xf32>
    %3 = tpu.matmul %1, %2, %cst {dimension_numbers = #tpu.dot_dimension_numbers<[1], [0], [0], [1], [0, 0, 1, 1], [], []>} : vector<16x5xbf16>, vector<5x176xbf16>, vector<16x176xf32> -> vector<16x176xf32>
    %c0_4 = arith.constant 0 : index
    %c0_5 = arith.constant 0 : index
    %4 = vector.load %arg6[%c0_4, %c0_5] : memref<1x176xf32, #tpu.memory_space<vmem>>, vector<1x176xf32>
    %5 = vector.broadcast %4 : vector<1x176xf32> to vector<16x176xf32>
    %6 = arith.mulf %3, %5 : vector<16x176xf32>
    %c0_6 = arith.constant 0 : index
    %c0_7 = arith.constant 0 : index
    %7 = vector.load %arg7[%c0_6, %c0_7] : memref<1x176xf32, #tpu.memory_space<vmem>>, vector<1x176xf32>
    %8 = vector.broadcast %7 : vector<1x176xf32> to vector<16x176xf32>
    %9 = arith.addf %6, %8 : vector<16x176xf32>
    %cst_8 = arith.constant 0.000000e+00 : f32
    %10 = vector.broadcast %cst_8 : f32 to vector<16x176xf32>
    %11 = arith.maximumf %9, %10 : vector<16x176xf32>
    %12 = vector.extract_strided_slice %11 {offsets = [0, 0], sizes = [16, 64], strides = [1, 1]} : vector<16x176xf32> to vector<16x64xf32>
    %13 = vector.extract_strided_slice %11 {offsets = [0, 64], sizes = [16, 96], strides = [1, 1]} : vector<16x176xf32> to vector<16x96xf32>
    %14 = arith.truncf %13 : vector<16x96xf32> to vector<16x96xbf16>
    %15 = vector.extract_strided_slice %11 {offsets = [0, 160], sizes = [16, 16], strides = [1, 1]} : vector<16x176xf32> to vector<16x16xf32>
    %16 = arith.truncf %15 : vector<16x16xf32> to vector<16x16xbf16>
    %17 = vector.shape_cast %14 : vector<16x96xbf16> to vector<2x8x96xbf16>
    %c0_9 = arith.constant 0 : index
    %c0_10 = arith.constant 0 : index
    %18 = vector.load %arg3[%c0_9, %c0_10] : memref<288x128xbf16, #tpu.memory_space<vmem>>, vector<288x128xbf16>
    %cst_11 = arith.constant 0.000000e+00 : bf16
    %19 = vector.broadcast %cst_11 : bf16 to vector<2x1x96xbf16>
    %20 = tpu.concatenate %19, %17, %19 in 1 : vector<2x1x96xbf16>, vector<2x8x96xbf16>, vector<2x1x96xbf16> -> vector<2x10x96xbf16>
    %21 = vector.extract_strided_slice %20 {offsets = [0, 0, 0], sizes = [2, 8, 96], strides = [1, 1, 1]} : vector<2x10x96xbf16> to vector<2x8x96xbf16>
    %22 = vector.extract_strided_slice %20 {offsets = [0, 1, 0], sizes = [2, 8, 96], strides = [1, 1, 1]} : vector<2x10x96xbf16> to vector<2x8x96xbf16>
    %23 = vector.extract_strided_slice %20 {offsets = [0, 2, 0], sizes = [2, 8, 96], strides = [1, 1, 1]} : vector<2x10x96xbf16> to vector<2x8x96xbf16>
    %24 = tpu.concatenate %21, %22, %23 in 2 : vector<2x8x96xbf16>, vector<2x8x96xbf16>, vector<2x8x96xbf16> -> vector<2x8x288xbf16>
    %25 = vector.shape_cast %24 : vector<2x8x288xbf16> to vector<16x288xbf16>
    %cst_12 = arith.constant dense<0.000000e+00> : vector<16x128xf32>
    %26 = tpu.matmul %25, %18, %cst_12 {dimension_numbers = #tpu.dot_dimension_numbers<[1], [0], [0], [1], [0, 0, 1, 1], [], []>} : vector<16x288xbf16>, vector<288x128xbf16>, vector<16x128xf32> -> vector<16x128xf32>
    %c0_13 = arith.constant 0 : index
    %c0_14 = arith.constant 0 : index
    %27 = vector.load %arg8[%c0_13, %c0_14] : memref<1x192xf32, #tpu.memory_space<vmem>>, vector<1x128xf32>
    %28 = vector.broadcast %27 : vector<1x128xf32> to vector<16x128xf32>
    %29 = arith.mulf %26, %28 : vector<16x128xf32>
    %c0_15 = arith.constant 0 : index
    %c0_16 = arith.constant 0 : index
    %30 = vector.load %arg9[%c0_15, %c0_16] : memref<1x192xf32, #tpu.memory_space<vmem>>, vector<1x128xf32>
    %31 = vector.broadcast %30 : vector<1x128xf32> to vector<16x128xf32>
    %32 = arith.addf %29, %31 : vector<16x128xf32>
    %cst_17 = arith.constant 0.000000e+00 : f32
    %33 = vector.broadcast %cst_17 : f32 to vector<16x128xf32>
    %34 = arith.maximumf %32, %33 : vector<16x128xf32>
    %35 = vector.shape_cast %16 : vector<16x16xbf16> to vector<2x8x16xbf16>
    %c0_18 = arith.constant 0 : index
    %c0_19 = arith.constant 0 : index
    %36 = vector.load %arg4[%c0_18, %c0_19] : memref<112x32xbf16, #tpu.memory_space<vmem>>, vector<112x32xbf16>
    %cst_20 = arith.constant 0.000000e+00 : bf16
    %37 = vector.broadcast %cst_20 : bf16 to vector<2x3x16xbf16>
    %38 = tpu.concatenate %37, %35, %37 in 1 : vector<2x3x16xbf16>, vector<2x8x16xbf16>, vector<2x3x16xbf16> -> vector<2x14x16xbf16>
    %39 = vector.extract_strided_slice %38 {offsets = [0, 0, 0], sizes = [2, 8, 16], strides = [1, 1, 1]} : vector<2x14x16xbf16> to vector<2x8x16xbf16>
    %40 = vector.extract_strided_slice %38 {offsets = [0, 1, 0], sizes = [2, 8, 16], strides = [1, 1, 1]} : vector<2x14x16xbf16> to vector<2x8x16xbf16>
    %41 = vector.extract_strided_slice %38 {offsets = [0, 2, 0], sizes = [2, 8, 16], strides = [1, 1, 1]} : vector<2x14x16xbf16> to vector<2x8x16xbf16>
    %42 = vector.extract_strided_slice %38 {offsets = [0, 3, 0], sizes = [2, 8, 16], strides = [1, 1, 1]} : vector<2x14x16xbf16> to vector<2x8x16xbf16>
    %43 = vector.extract_strided_slice %38 {offsets = [0, 4, 0], sizes = [2, 8, 16], strides = [1, 1, 1]} : vector<2x14x16xbf16> to vector<2x8x16xbf16>
    %44 = vector.extract_strided_slice %38 {offsets = [0, 5, 0], sizes = [2, 8, 16], strides = [1, 1, 1]} : vector<2x14x16xbf16> to vector<2x8x16xbf16>
    %45 = vector.extract_strided_slice %38 {offsets = [0, 6, 0], sizes = [2, 8, 16], strides = [1, 1, 1]} : vector<2x14x16xbf16> to vector<2x8x16xbf16>
    %46 = tpu.concatenate %39, %40, %41, %42, %43, %44, %45 in 2 : vector<2x8x16xbf16>, vector<2x8x16xbf16>, vector<2x8x16xbf16>, vector<2x8x16xbf16>, vector<2x8x16xbf16>, vector<2x8x16xbf16>, vector<2x8x16xbf16> -> vector<2x8x112xbf16>
    %47 = vector.shape_cast %46 : vector<2x8x112xbf16> to vector<16x112xbf16>
    %cst_21 = arith.constant dense<0.000000e+00> : vector<16x32xf32>
    %48 = tpu.matmul %47, %36, %cst_21 {dimension_numbers = #tpu.dot_dimension_numbers<[1], [0], [0], [1], [0, 0, 1, 1], [], []>} : vector<16x112xbf16>, vector<112x32xbf16>, vector<16x32xf32> -> vector<16x32xf32>
    %c0_22 = arith.constant 0 : index
    %c128 = arith.constant 128 : index
    %49 = vector.load %arg8[%c0_22, %c128] : memref<1x192xf32, #tpu.memory_space<vmem>>, vector<1x32xf32>
    %50 = vector.broadcast %49 : vector<1x32xf32> to vector<16x32xf32>
    %51 = arith.mulf %48, %50 : vector<16x32xf32>
    %c0_23 = arith.constant 0 : index
    %c128_24 = arith.constant 128 : index
    %52 = vector.load %arg9[%c0_23, %c128_24] : memref<1x192xf32, #tpu.memory_space<vmem>>, vector<1x32xf32>
    %53 = vector.broadcast %52 : vector<1x32xf32> to vector<16x32xf32>
    %54 = arith.addf %51, %53 : vector<16x32xf32>
    %cst_25 = arith.constant 0.000000e+00 : f32
    %55 = vector.broadcast %cst_25 : f32 to vector<16x32xf32>
    %56 = arith.maximumf %54, %55 : vector<16x32xf32>
    %cst_26 = arith.constant 0xFF80 : bf16
    %57 = vector.broadcast %cst_26 : bf16 to vector<2x1x5xbf16>
    %58 = tpu.concatenate %57, %0, %57 in 1 : vector<2x1x5xbf16>, vector<2x8x5xbf16>, vector<2x1x5xbf16> -> vector<2x10x5xbf16>
    %59 = vector.extract_strided_slice %58 {offsets = [0, 0, 0], sizes = [2, 8, 5], strides = [1, 1, 1]} : vector<2x10x5xbf16> to vector<2x8x5xbf16>
    %60 = vector.extract_strided_slice %58 {offsets = [0, 1, 0], sizes = [2, 8, 5], strides = [1, 1, 1]} : vector<2x10x5xbf16> to vector<2x8x5xbf16>
    %61 = arith.maximumf %59, %60 : vector<2x8x5xbf16>
    %62 = vector.extract_strided_slice %58 {offsets = [0, 2, 0], sizes = [2, 8, 5], strides = [1, 1, 1]} : vector<2x10x5xbf16> to vector<2x8x5xbf16>
    %63 = arith.maximumf %61, %62 : vector<2x8x5xbf16>
    %64 = vector.shape_cast %63 : vector<2x8x5xbf16> to vector<16x5xbf16>
    %c0_27 = arith.constant 0 : index
    %c0_28 = arith.constant 0 : index
    %65 = vector.load %arg5[%c0_27, %c0_28] : memref<5x32xbf16, #tpu.memory_space<vmem>>, vector<5x32xbf16>
    %cst_29 = arith.constant dense<0.000000e+00> : vector<16x32xf32>
    %66 = tpu.matmul %64, %65, %cst_29 {dimension_numbers = #tpu.dot_dimension_numbers<[1], [0], [0], [1], [0, 0, 1, 1], [], []>} : vector<16x5xbf16>, vector<5x32xbf16>, vector<16x32xf32> -> vector<16x32xf32>
    %c0_30 = arith.constant 0 : index
    %c160 = arith.constant 160 : index
    %67 = vector.load %arg8[%c0_30, %c160] : memref<1x192xf32, #tpu.memory_space<vmem>>, vector<1x32xf32>
    %68 = vector.broadcast %67 : vector<1x32xf32> to vector<16x32xf32>
    %69 = arith.mulf %66, %68 : vector<16x32xf32>
    %c0_31 = arith.constant 0 : index
    %c160_32 = arith.constant 160 : index
    %70 = vector.load %arg9[%c0_31, %c160_32] : memref<1x192xf32, #tpu.memory_space<vmem>>, vector<1x32xf32>
    %71 = vector.broadcast %70 : vector<1x32xf32> to vector<16x32xf32>
    %72 = arith.addf %69, %71 : vector<16x32xf32>
    %cst_33 = arith.constant 0.000000e+00 : f32
    %73 = vector.broadcast %cst_33 : f32 to vector<16x32xf32>
    %74 = arith.maximumf %72, %73 : vector<16x32xf32>
    %75 = vector.shape_cast %12 : vector<16x64xf32> to vector<2x8x64xf32>
    %c0_34 = arith.constant 0 : index
    %c0_35 = arith.constant 0 : index
    %c0_36 = arith.constant 0 : index
    %76 = vector.load %arg10[%c0_34, %c0_35, %c0_36] : memref<2x8x256xf32, #tpu.memory_space<vmem>>, vector<2x8x64xf32>
    tpu.vector_store %arg10[%c0_34, %c0_35, %c0_36], %75 {strides = array<i32>} : memref<2x8x256xf32, #tpu.memory_space<vmem>>, vector<2x8x64xf32>,
    %77 = vector.shape_cast %34 : vector<16x128xf32> to vector<2x8x128xf32>
    %c0_37 = arith.constant 0 : index
    %c0_38 = arith.constant 0 : index
    %c64 = arith.constant 64 : index
    %78 = vector.load %arg10[%c0_37, %c0_38, %c64] : memref<2x8x256xf32, #tpu.memory_space<vmem>>, vector<2x8x128xf32>
    tpu.vector_store %arg10[%c0_37, %c0_38, %c64], %77 {strides = array<i32>} : memref<2x8x256xf32, #tpu.memory_space<vmem>>, vector<2x8x128xf32>,
    %79 = vector.shape_cast %56 : vector<16x32xf32> to vector<2x8x32xf32>
    %c0_39 = arith.constant 0 : index
    %c0_40 = arith.constant 0 : index
    %c192 = arith.constant 192 : index
    %80 = vector.load %arg10[%c0_39, %c0_40, %c192] : memref<2x8x256xf32, #tpu.memory_space<vmem>>, vector<2x8x32xf32>
    tpu.vector_store %arg10[%c0_39, %c0_40, %c192], %79 {strides = array<i32>} : memref<2x8x256xf32, #tpu.memory_space<vmem>>, vector<2x8x32xf32>,
    %81 = vector.shape_cast %74 : vector<16x32xf32> to vector<2x8x32xf32>
    %c0_41 = arith.constant 0 : index
    %c0_42 = arith.constant 0 : index
    %c224 = arith.constant 224 : index
    %82 = vector.load %arg10[%c0_41, %c0_42, %c224] : memref<2x8x256xf32, #tpu.memory_space<vmem>>, vector<2x8x32xf32>
    tpu.vector_store %arg10[%c0_41, %c0_42, %c224], %81 {strides = array<i32>} : memref<2x8x256xf32, #tpu.memory_space<vmem>>, vector<2x8x32xf32>,
    return
  }
  func.func @transform_0(%arg0: i32) -> (i32, i32, i32) {
    %c0_i32 = arith.constant 0 : i32
    %c0_i32_0 = arith.constant 0 : i32
    %c0_i32_1 = arith.constant 0 : i32
    %c0_i32_2 = arith.constant 0 : i32
    return %c0_i32, %c0_i32_0, %c0_i32_1 : i32, i32, i32
  }
  func.func @transform_1(%arg0: i32) -> (i32, i32) {
    %c0_i32 = arith.constant 0 : i32
    %c0_i32_0 = arith.constant 0 : i32
    %c0_i32_1 = arith.constant 0 : i32
    return %c0_i32, %c0_i32_0 : i32, i32
  }
  func.func @transform_2(%arg0: i32) -> (i32, i32) {
    %c0_i32 = arith.constant 0 : i32
    %c0_i32_0 = arith.constant 0 : i32
    %c0_i32_1 = arith.constant 0 : i32
    return %c0_i32, %c0_i32_0 : i32, i32
  }
  func.func @transform_3(%arg0: i32) -> (i32, i32) {
    %c0_i32 = arith.constant 0 : i32
    %c0_i32_0 = arith.constant 0 : i32
    %c0_i32_1 = arith.constant 0 : i32
    return %c0_i32, %c0_i32_0 : i32, i32
  }
  func.func @transform_4(%arg0: i32) -> (i32, i32) {
    %c0_i32 = arith.constant 0 : i32
    %c0_i32_0 = arith.constant 0 : i32
    %c0_i32_1 = arith.constant 0 : i32
    return %c0_i32, %c0_i32_0 : i32, i32
  }
  func.func @transform_5(%arg0: i32) -> (i32, i32) {
    %c0_i32 = arith.constant 0 : i32
    %c0_i32_0 = arith.constant 0 : i32
    %c0_i32_1 = arith.constant 0 : i32
    return %c0_i32, %c0_i32_0 : i32, i32
  }
  func.func @transform_6(%arg0: i32) -> (i32, i32) {
    %c0_i32 = arith.constant 0 : i32
    %c0_i32_0 = arith.constant 0 : i32
    %c0_i32_1 = arith.constant 0 : i32
    return %c0_i32, %c0_i32_0 : i32, i32
  }
  func.func @transform_7(%arg0: i32) -> (i32, i32) {
    %c0_i32 = arith.constant 0 : i32
    %c0_i32_0 = arith.constant 0 : i32
    %c0_i32_1 = arith.constant 0 : i32
    return %c0_i32, %c0_i32_0 : i32, i32
  }
  func.func @transform_8(%arg0: i32) -> (i32, i32) {
    %c0_i32 = arith.constant 0 : i32
    %c0_i32_0 = arith.constant 0 : i32
    %c0_i32_1 = arith.constant 0 : i32
    return %c0_i32, %c0_i32_0 : i32, i32
  }
  func.func @transform_9(%arg0: i32) -> (i32, i32, i32) {
    %c0_i32 = arith.constant 0 : i32
    %c0_i32_0 = arith.constant 0 : i32
    %c0_i32_1 = arith.constant 0 : i32
    %c0_i32_2 = arith.constant 0 : i32
    return %c0_i32, %c0_i32_0, %c0_i32_1 : i32, i32, i32
  }
}

module attributes {stable_mosaic.version = 11 : i64} {
  func.func @inception_kernel(%arg0: i32, %arg1: memref<2x8x512xbf16, #tpu.memory_space<vmem>>, %arg2: memref<512x352xbf16, #tpu.memory_space<vmem>>, %arg3: memref<576x256xbf16, #tpu.memory_space<vmem>>, %arg4: memref<224x64xbf16, #tpu.memory_space<vmem>>, %arg5: memref<512x64xbf16, #tpu.memory_space<vmem>>, %arg6: memref<1x352xf32, #tpu.memory_space<vmem>>, %arg7: memref<1x352xf32, #tpu.memory_space<vmem>>, %arg8: memref<1x384xf32, #tpu.memory_space<vmem>>, %arg9: memref<1x384xf32, #tpu.memory_space<vmem>>, %arg10: memref<2x8x512xf32, #tpu.memory_space<vmem>>) attributes {dimension_semantics = [#tpu.dimension_semantics<arbitrary>], iteration_bounds = array<i64: 1>, scalar_prefetch = 0 : i64, scratch_operands = 0 : i64, tpu.core_type = #tpu.core_type<tc>, window_params = [{pipeline_mode = #tpu.pipeline_mode<synchronous>, transform_indices = @transform_0, window_bounds = array<i64: 2, 8, 512>}, {pipeline_mode = #tpu.pipeline_mode<synchronous>, transform_indices = @transform_1, window_bounds = array<i64: 512, 352>}, {pipeline_mode = #tpu.pipeline_mode<synchronous>, transform_indices = @transform_2, window_bounds = array<i64: 576, 256>}, {pipeline_mode = #tpu.pipeline_mode<synchronous>, transform_indices = @transform_3, window_bounds = array<i64: 224, 64>}, {pipeline_mode = #tpu.pipeline_mode<synchronous>, transform_indices = @transform_4, window_bounds = array<i64: 512, 64>}, {pipeline_mode = #tpu.pipeline_mode<synchronous>, transform_indices = @transform_5, window_bounds = array<i64: 1, 352>}, {pipeline_mode = #tpu.pipeline_mode<synchronous>, transform_indices = @transform_6, window_bounds = array<i64: 1, 352>}, {pipeline_mode = #tpu.pipeline_mode<synchronous>, transform_indices = @transform_7, window_bounds = array<i64: 1, 384>}, {pipeline_mode = #tpu.pipeline_mode<synchronous>, transform_indices = @transform_8, window_bounds = array<i64: 1, 384>}, {pipeline_mode = #tpu.pipeline_mode<synchronous>, transform_indices = @transform_9, window_bounds = array<i64: 2, 8, 512>}]} {
    %c0 = arith.constant 0 : index
    %c0_0 = arith.constant 0 : index
    %c0_1 = arith.constant 0 : index
    %0 = vector.load %arg1[%c0, %c0_0, %c0_1] : memref<2x8x512xbf16, #tpu.memory_space<vmem>>, vector<2x8x512xbf16>
    %1 = vector.shape_cast %0 : vector<2x8x512xbf16> to vector<16x512xbf16>
    %c0_2 = arith.constant 0 : index
    %c0_3 = arith.constant 0 : index
    %2 = vector.load %arg2[%c0_2, %c0_3] : memref<512x352xbf16, #tpu.memory_space<vmem>>, vector<512x352xbf16>
    %cst = arith.constant dense<0.000000e+00> : vector<16x352xf32>
    %3 = tpu.matmul %1, %2, %cst {dimension_numbers = #tpu.dot_dimension_numbers<[1], [0], [0], [1], [0, 0, 1, 1], [], []>} : vector<16x512xbf16>, vector<512x352xbf16>, vector<16x352xf32> -> vector<16x352xf32>
    %c0_4 = arith.constant 0 : index
    %c0_5 = arith.constant 0 : index
    %4 = vector.load %arg6[%c0_4, %c0_5] : memref<1x352xf32, #tpu.memory_space<vmem>>, vector<1x352xf32>
    %5 = vector.broadcast %4 : vector<1x352xf32> to vector<16x352xf32>
    %6 = arith.mulf %3, %5 : vector<16x352xf32>
    %c0_6 = arith.constant 0 : index
    %c0_7 = arith.constant 0 : index
    %7 = vector.load %arg7[%c0_6, %c0_7] : memref<1x352xf32, #tpu.memory_space<vmem>>, vector<1x352xf32>
    %8 = vector.broadcast %7 : vector<1x352xf32> to vector<16x352xf32>
    %9 = arith.addf %6, %8 : vector<16x352xf32>
    %cst_8 = arith.constant 0.000000e+00 : f32
    %10 = vector.broadcast %cst_8 : f32 to vector<16x352xf32>
    %11 = arith.maximumf %9, %10 : vector<16x352xf32>
    %12 = vector.extract_strided_slice %11 {offsets = [0, 0], sizes = [16, 128], strides = [1, 1]} : vector<16x352xf32> to vector<16x128xf32>
    %13 = vector.extract_strided_slice %11 {offsets = [0, 128], sizes = [16, 192], strides = [1, 1]} : vector<16x352xf32> to vector<16x192xf32>
    %14 = arith.truncf %13 : vector<16x192xf32> to vector<16x192xbf16>
    %15 = vector.extract_strided_slice %11 {offsets = [0, 320], sizes = [16, 32], strides = [1, 1]} : vector<16x352xf32> to vector<16x32xf32>
    %16 = arith.truncf %15 : vector<16x32xf32> to vector<16x32xbf16>
    %17 = vector.shape_cast %14 : vector<16x192xbf16> to vector<2x8x192xbf16>
    %c0_9 = arith.constant 0 : index
    %c0_10 = arith.constant 0 : index
    %18 = vector.load %arg3[%c0_9, %c0_10] : memref<576x256xbf16, #tpu.memory_space<vmem>>, vector<576x256xbf16>
    %cst_11 = arith.constant 0.000000e+00 : bf16
    %19 = vector.broadcast %cst_11 : bf16 to vector<2x1x192xbf16>
    %20 = tpu.concatenate %19, %17, %19 in 1 : vector<2x1x192xbf16>, vector<2x8x192xbf16>, vector<2x1x192xbf16> -> vector<2x10x192xbf16>
    %21 = vector.extract_strided_slice %20 {offsets = [0, 0, 0], sizes = [2, 8, 192], strides = [1, 1, 1]} : vector<2x10x192xbf16> to vector<2x8x192xbf16>
    %22 = vector.extract_strided_slice %20 {offsets = [0, 1, 0], sizes = [2, 8, 192], strides = [1, 1, 1]} : vector<2x10x192xbf16> to vector<2x8x192xbf16>
    %23 = vector.extract_strided_slice %20 {offsets = [0, 2, 0], sizes = [2, 8, 192], strides = [1, 1, 1]} : vector<2x10x192xbf16> to vector<2x8x192xbf16>
    %24 = tpu.concatenate %21, %22, %23 in 2 : vector<2x8x192xbf16>, vector<2x8x192xbf16>, vector<2x8x192xbf16> -> vector<2x8x576xbf16>
    %25 = vector.shape_cast %24 : vector<2x8x576xbf16> to vector<16x576xbf16>
    %cst_12 = arith.constant dense<0.000000e+00> : vector<16x256xf32>
    %26 = tpu.matmul %25, %18, %cst_12 {dimension_numbers = #tpu.dot_dimension_numbers<[1], [0], [0], [1], [0, 0, 1, 1], [], []>} : vector<16x576xbf16>, vector<576x256xbf16>, vector<16x256xf32> -> vector<16x256xf32>
    %c0_13 = arith.constant 0 : index
    %c0_14 = arith.constant 0 : index
    %27 = vector.load %arg8[%c0_13, %c0_14] : memref<1x384xf32, #tpu.memory_space<vmem>>, vector<1x256xf32>
    %28 = vector.broadcast %27 : vector<1x256xf32> to vector<16x256xf32>
    %29 = arith.mulf %26, %28 : vector<16x256xf32>
    %c0_15 = arith.constant 0 : index
    %c0_16 = arith.constant 0 : index
    %30 = vector.load %arg9[%c0_15, %c0_16] : memref<1x384xf32, #tpu.memory_space<vmem>>, vector<1x256xf32>
    %31 = vector.broadcast %30 : vector<1x256xf32> to vector<16x256xf32>
    %32 = arith.addf %29, %31 : vector<16x256xf32>
    %cst_17 = arith.constant 0.000000e+00 : f32
    %33 = vector.broadcast %cst_17 : f32 to vector<16x256xf32>
    %34 = arith.maximumf %32, %33 : vector<16x256xf32>
    %35 = vector.shape_cast %16 : vector<16x32xbf16> to vector<2x8x32xbf16>
    %c0_18 = arith.constant 0 : index
    %c0_19 = arith.constant 0 : index
    %36 = vector.load %arg4[%c0_18, %c0_19] : memref<224x64xbf16, #tpu.memory_space<vmem>>, vector<224x64xbf16>
    %cst_20 = arith.constant 0.000000e+00 : bf16
    %37 = vector.broadcast %cst_20 : bf16 to vector<2x3x32xbf16>
    %38 = tpu.concatenate %37, %35, %37 in 1 : vector<2x3x32xbf16>, vector<2x8x32xbf16>, vector<2x3x32xbf16> -> vector<2x14x32xbf16>
    %39 = vector.extract_strided_slice %38 {offsets = [0, 0, 0], sizes = [2, 8, 32], strides = [1, 1, 1]} : vector<2x14x32xbf16> to vector<2x8x32xbf16>
    %40 = vector.extract_strided_slice %38 {offsets = [0, 1, 0], sizes = [2, 8, 32], strides = [1, 1, 1]} : vector<2x14x32xbf16> to vector<2x8x32xbf16>
    %41 = vector.extract_strided_slice %38 {offsets = [0, 2, 0], sizes = [2, 8, 32], strides = [1, 1, 1]} : vector<2x14x32xbf16> to vector<2x8x32xbf16>
    %42 = vector.extract_strided_slice %38 {offsets = [0, 3, 0], sizes = [2, 8, 32], strides = [1, 1, 1]} : vector<2x14x32xbf16> to vector<2x8x32xbf16>
    %43 = vector.extract_strided_slice %38 {offsets = [0, 4, 0], sizes = [2, 8, 32], strides = [1, 1, 1]} : vector<2x14x32xbf16> to vector<2x8x32xbf16>
    %44 = vector.extract_strided_slice %38 {offsets = [0, 5, 0], sizes = [2, 8, 32], strides = [1, 1, 1]} : vector<2x14x32xbf16> to vector<2x8x32xbf16>
    %45 = vector.extract_strided_slice %38 {offsets = [0, 6, 0], sizes = [2, 8, 32], strides = [1, 1, 1]} : vector<2x14x32xbf16> to vector<2x8x32xbf16>
    %46 = tpu.concatenate %39, %40, %41, %42, %43, %44, %45 in 2 : vector<2x8x32xbf16>, vector<2x8x32xbf16>, vector<2x8x32xbf16>, vector<2x8x32xbf16>, vector<2x8x32xbf16>, vector<2x8x32xbf16>, vector<2x8x32xbf16> -> vector<2x8x224xbf16>
    %47 = vector.shape_cast %46 : vector<2x8x224xbf16> to vector<16x224xbf16>
    %cst_21 = arith.constant dense<0.000000e+00> : vector<16x64xf32>
    %48 = tpu.matmul %47, %36, %cst_21 {dimension_numbers = #tpu.dot_dimension_numbers<[1], [0], [0], [1], [0, 0, 1, 1], [], []>} : vector<16x224xbf16>, vector<224x64xbf16>, vector<16x64xf32> -> vector<16x64xf32>
    %c0_22 = arith.constant 0 : index
    %c256 = arith.constant 256 : index
    %49 = vector.load %arg8[%c0_22, %c256] : memref<1x384xf32, #tpu.memory_space<vmem>>, vector<1x64xf32>
    %50 = vector.broadcast %49 : vector<1x64xf32> to vector<16x64xf32>
    %51 = arith.mulf %48, %50 : vector<16x64xf32>
    %c0_23 = arith.constant 0 : index
    %c256_24 = arith.constant 256 : index
    %52 = vector.load %arg9[%c0_23, %c256_24] : memref<1x384xf32, #tpu.memory_space<vmem>>, vector<1x64xf32>
    %53 = vector.broadcast %52 : vector<1x64xf32> to vector<16x64xf32>
    %54 = arith.addf %51, %53 : vector<16x64xf32>
    %cst_25 = arith.constant 0.000000e+00 : f32
    %55 = vector.broadcast %cst_25 : f32 to vector<16x64xf32>
    %56 = arith.maximumf %54, %55 : vector<16x64xf32>
    %cst_26 = arith.constant 0xFF80 : bf16
    %57 = vector.broadcast %cst_26 : bf16 to vector<2x1x512xbf16>
    %58 = tpu.concatenate %57, %0, %57 in 1 : vector<2x1x512xbf16>, vector<2x8x512xbf16>, vector<2x1x512xbf16> -> vector<2x10x512xbf16>
    %59 = vector.extract_strided_slice %58 {offsets = [0, 0, 0], sizes = [2, 8, 512], strides = [1, 1, 1]} : vector<2x10x512xbf16> to vector<2x8x512xbf16>
    %60 = vector.extract_strided_slice %58 {offsets = [0, 1, 0], sizes = [2, 8, 512], strides = [1, 1, 1]} : vector<2x10x512xbf16> to vector<2x8x512xbf16>
    %61 = arith.maximumf %59, %60 : vector<2x8x512xbf16>
    %62 = vector.extract_strided_slice %58 {offsets = [0, 2, 0], sizes = [2, 8, 512], strides = [1, 1, 1]} : vector<2x10x512xbf16> to vector<2x8x512xbf16>
    %63 = arith.maximumf %61, %62 : vector<2x8x512xbf16>
    %64 = vector.shape_cast %63 : vector<2x8x512xbf16> to vector<16x512xbf16>
    %c0_27 = arith.constant 0 : index
    %c0_28 = arith.constant 0 : index
    %65 = vector.load %arg5[%c0_27, %c0_28] : memref<512x64xbf16, #tpu.memory_space<vmem>>, vector<512x64xbf16>
    %cst_29 = arith.constant dense<0.000000e+00> : vector<16x64xf32>
    %66 = tpu.matmul %64, %65, %cst_29 {dimension_numbers = #tpu.dot_dimension_numbers<[1], [0], [0], [1], [0, 0, 1, 1], [], []>} : vector<16x512xbf16>, vector<512x64xbf16>, vector<16x64xf32> -> vector<16x64xf32>
    %c0_30 = arith.constant 0 : index
    %c320 = arith.constant 320 : index
    %67 = vector.load %arg8[%c0_30, %c320] : memref<1x384xf32, #tpu.memory_space<vmem>>, vector<1x64xf32>
    %68 = vector.broadcast %67 : vector<1x64xf32> to vector<16x64xf32>
    %69 = arith.mulf %66, %68 : vector<16x64xf32>
    %c0_31 = arith.constant 0 : index
    %c320_32 = arith.constant 320 : index
    %70 = vector.load %arg9[%c0_31, %c320_32] : memref<1x384xf32, #tpu.memory_space<vmem>>, vector<1x64xf32>
    %71 = vector.broadcast %70 : vector<1x64xf32> to vector<16x64xf32>
    %72 = arith.addf %69, %71 : vector<16x64xf32>
    %cst_33 = arith.constant 0.000000e+00 : f32
    %73 = vector.broadcast %cst_33 : f32 to vector<16x64xf32>
    %74 = arith.maximumf %72, %73 : vector<16x64xf32>
    %75 = vector.shape_cast %12 : vector<16x128xf32> to vector<2x8x128xf32>
    %c0_34 = arith.constant 0 : index
    %c0_35 = arith.constant 0 : index
    %c0_36 = arith.constant 0 : index
    %76 = vector.load %arg10[%c0_34, %c0_35, %c0_36] : memref<2x8x512xf32, #tpu.memory_space<vmem>>, vector<2x8x128xf32>
    tpu.vector_store %arg10[%c0_34, %c0_35, %c0_36], %75 {strides = array<i32>} : memref<2x8x512xf32, #tpu.memory_space<vmem>>, vector<2x8x128xf32>,
    %77 = vector.shape_cast %34 : vector<16x256xf32> to vector<2x8x256xf32>
    %c0_37 = arith.constant 0 : index
    %c0_38 = arith.constant 0 : index
    %c128 = arith.constant 128 : index
    %78 = vector.load %arg10[%c0_37, %c0_38, %c128] : memref<2x8x512xf32, #tpu.memory_space<vmem>>, vector<2x8x256xf32>
    tpu.vector_store %arg10[%c0_37, %c0_38, %c128], %77 {strides = array<i32>} : memref<2x8x512xf32, #tpu.memory_space<vmem>>, vector<2x8x256xf32>,
    %79 = vector.shape_cast %56 : vector<16x64xf32> to vector<2x8x64xf32>
    %c0_39 = arith.constant 0 : index
    %c0_40 = arith.constant 0 : index
    %c384 = arith.constant 384 : index
    %80 = vector.load %arg10[%c0_39, %c0_40, %c384] : memref<2x8x512xf32, #tpu.memory_space<vmem>>, vector<2x8x64xf32>
    tpu.vector_store %arg10[%c0_39, %c0_40, %c384], %79 {strides = array<i32>} : memref<2x8x512xf32, #tpu.memory_space<vmem>>, vector<2x8x64xf32>,
    %81 = vector.shape_cast %74 : vector<16x64xf32> to vector<2x8x64xf32>
    %c0_41 = arith.constant 0 : index
    %c0_42 = arith.constant 0 : index
    %c448 = arith.constant 448 : index
    %82 = vector.load %arg10[%c0_41, %c0_42, %c448] : memref<2x8x512xf32, #tpu.memory_space<vmem>>, vector<2x8x64xf32>
    tpu.vector_store %arg10[%c0_41, %c0_42, %c448], %81 {strides = array<i32>} : memref<2x8x512xf32, #tpu.memory_space<vmem>>, vector<2x8x64xf32>,
    return
  }
  func.func @transform_0(%arg0: i32) -> (i32, i32, i32) {
    %c0_i32 = arith.constant 0 : i32
    %c0_i32_0 = arith.constant 0 : i32
    %c0_i32_1 = arith.constant 0 : i32
    %c0_i32_2 = arith.constant 0 : i32
    return %c0_i32, %c0_i32_0, %c0_i32_1 : i32, i32, i32
  }
  func.func @transform_1(%arg0: i32) -> (i32, i32) {
    %c0_i32 = arith.constant 0 : i32
    %c0_i32_0 = arith.constant 0 : i32
    %c0_i32_1 = arith.constant 0 : i32
    return %c0_i32, %c0_i32_0 : i32, i32
  }
  func.func @transform_2(%arg0: i32) -> (i32, i32) {
    %c0_i32 = arith.constant 0 : i32
    %c0_i32_0 = arith.constant 0 : i32
    %c0_i32_1 = arith.constant 0 : i32
    return %c0_i32, %c0_i32_0 : i32, i32
  }
  func.func @transform_3(%arg0: i32) -> (i32, i32) {
    %c0_i32 = arith.constant 0 : i32
    %c0_i32_0 = arith.constant 0 : i32
    %c0_i32_1 = arith.constant 0 : i32
    return %c0_i32, %c0_i32_0 : i32, i32
  }
  func.func @transform_4(%arg0: i32) -> (i32, i32) {
    %c0_i32 = arith.constant 0 : i32
    %c0_i32_0 = arith.constant 0 : i32
    %c0_i32_1 = arith.constant 0 : i32
    return %c0_i32, %c0_i32_0 : i32, i32
  }
  func.func @transform_5(%arg0: i32) -> (i32, i32) {
    %c0_i32 = arith.constant 0 : i32
    %c0_i32_0 = arith.constant 0 : i32
    %c0_i32_1 = arith.constant 0 : i32
    return %c0_i32, %c0_i32_0 : i32, i32
  }
  func.func @transform_6(%arg0: i32) -> (i32, i32) {
    %c0_i32 = arith.constant 0 : i32
    %c0_i32_0 = arith.constant 0 : i32
    %c0_i32_1 = arith.constant 0 : i32
    return %c0_i32, %c0_i32_0 : i32, i32
  }
  func.func @transform_7(%arg0: i32) -> (i32, i32) {
    %c0_i32 = arith.constant 0 : i32
    %c0_i32_0 = arith.constant 0 : i32
    %c0_i32_1 = arith.constant 0 : i32
    return %c0_i32, %c0_i32_0 : i32, i32
  }
  func.func @transform_8(%arg0: i32) -> (i32, i32) {
    %c0_i32 = arith.constant 0 : i32
    %c0_i32_0 = arith.constant 0 : i32
    %c0_i32_1 = arith.constant 0 : i32
    return %c0_i32, %c0_i32_0 : i32, i32
  }
  func.func @transform_9(%arg0: i32) -> (i32, i32, i32) {
    %c0_i32 = arith.constant 0 : i32
    %c0_i32_0 = arith.constant 0 : i32
    %c0_i32_1 = arith.constant 0 : i32
    %c0_i32_2 = arith.constant 0 : i32
    return %c0_i32, %c0_i32_0, %c0_i32_1 : i32, i32, i32
  }
}

module attributes {stable_mosaic.version = 11 : i64} {
  func.func @linear_kernel(%arg0: i32, %arg1: memref<2x4112xf32, #tpu.memory_space<vmem>>, %arg2: memref<4112x256xf32, #tpu.memory_space<vmem>>, %arg3: memref<1x256xf32, #tpu.memory_space<vmem>>, %arg4: memref<1x256xf32, #tpu.memory_space<vmem>>, %arg5: memref<2x256xf32, #tpu.memory_space<vmem>>) attributes {dimension_semantics = [#tpu.dimension_semantics<arbitrary>], iteration_bounds = array<i64: 1>, scalar_prefetch = 0 : i64, scratch_operands = 0 : i64, tpu.core_type = #tpu.core_type<tc>, window_params = [{pipeline_mode = #tpu.pipeline_mode<synchronous>, transform_indices = @transform_0, window_bounds = array<i64: 2, 4112>}, {pipeline_mode = #tpu.pipeline_mode<synchronous>, transform_indices = @transform_1, window_bounds = array<i64: 4112, 256>}, {pipeline_mode = #tpu.pipeline_mode<synchronous>, transform_indices = @transform_2, window_bounds = array<i64: 1, 256>}, {pipeline_mode = #tpu.pipeline_mode<synchronous>, transform_indices = @transform_3, window_bounds = array<i64: 1, 256>}, {pipeline_mode = #tpu.pipeline_mode<synchronous>, transform_indices = @transform_4, window_bounds = array<i64: 2, 256>}]} {
    %c0 = arith.constant 0 : index
    %c0_0 = arith.constant 0 : index
    %0 = vector.load %arg1[%c0, %c0_0] : memref<2x4112xf32, #tpu.memory_space<vmem>>, vector<2x4112xf32>
    %c0_1 = arith.constant 0 : index
    %c0_2 = arith.constant 0 : index
    %1 = vector.load %arg2[%c0_1, %c0_2] : memref<4112x256xf32, #tpu.memory_space<vmem>>, vector<4112x256xf32>
    %cst = arith.constant dense<0.000000e+00> : vector<2x256xf32>
    %2 = tpu.matmul %0, %1, %cst {dimension_numbers = #tpu.dot_dimension_numbers<[1], [0], [0], [1], [0, 0, 1, 1], [], []>} : vector<2x4112xf32>, vector<4112x256xf32>, vector<2x256xf32> -> vector<2x256xf32>
    %c0_3 = arith.constant 0 : index
    %c0_4 = arith.constant 0 : index
    %3 = vector.load %arg3[%c0_3, %c0_4] : memref<1x256xf32, #tpu.memory_space<vmem>>, vector<1x256xf32>
    %4 = vector.broadcast %3 : vector<1x256xf32> to vector<2x256xf32>
    %5 = arith.mulf %2, %4 : vector<2x256xf32>
    %c0_5 = arith.constant 0 : index
    %c0_6 = arith.constant 0 : index
    %6 = vector.load %arg4[%c0_5, %c0_6] : memref<1x256xf32, #tpu.memory_space<vmem>>, vector<1x256xf32>
    %7 = vector.broadcast %6 : vector<1x256xf32> to vector<2x256xf32>
    %8 = arith.addf %5, %7 : vector<2x256xf32>
    %cst_7 = arith.constant 0.000000e+00 : f32
    %9 = vector.broadcast %cst_7 : f32 to vector<2x256xf32>
    %10 = arith.maximumf %8, %9 : vector<2x256xf32>
    %c0_8 = arith.constant 0 : index
    %c0_9 = arith.constant 0 : index
    %11 = vector.load %arg5[%c0_8, %c0_9] : memref<2x256xf32, #tpu.memory_space<vmem>>, vector<2x256xf32>
    tpu.vector_store %arg5[%c0_8, %c0_9], %10 {strides = array<i32>} : memref<2x256xf32, #tpu.memory_space<vmem>>, vector<2x256xf32>,
    return
  }
  func.func @transform_0(%arg0: i32) -> (i32, i32) {
    %c0_i32 = arith.constant 0 : i32
    %c0_i32_0 = arith.constant 0 : i32
    %c0_i32_1 = arith.constant 0 : i32
    return %c0_i32, %c0_i32_0 : i32, i32
  }
  func.func @transform_1(%arg0: i32) -> (i32, i32) {
    %c0_i32 = arith.constant 0 : i32
    %c0_i32_0 = arith.constant 0 : i32
    %c0_i32_1 = arith.constant 0 : i32
    return %c0_i32, %c0_i32_0 : i32, i32
  }
  func.func @transform_2(%arg0: i32) -> (i32, i32) {
    %c0_i32 = arith.constant 0 : i32
    %c0_i32_0 = arith.constant 0 : i32
    %c0_i32_1 = arith.constant 0 : i32
    return %c0_i32, %c0_i32_0 : i32, i32
  }
  func.func @transform_3(%arg0: i32) -> (i32, i32) {
    %c0_i32 = arith.constant 0 : i32
    %c0_i32_0 = arith.constant 0 : i32
    %c0_i32_1 = arith.constant 0 : i32
    return %c0_i32, %c0_i32_0 : i32, i32
  }
  func.func @transform_4(%arg0: i32) -> (i32, i32) {
    %c0_i32 = arith.constant 0 : i32
    %c0_i32_0 = arith.constant 0 : i32
    %c0_i32_1 = arith.constant 0 : i32
    return %c0_i32, %c0_i32_0 : i32, i32
  }
}

module attributes {stable_mosaic.version = 11 : i64} {
  func.func @linear_kernel(%arg0: i32, %arg1: memref<2x256xf32, #tpu.memory_space<vmem>>, %arg2: memref<256x4xf32, #tpu.memory_space<vmem>>, %arg3: memref<1x4xf32, #tpu.memory_space<vmem>>, %arg4: memref<1x4xf32, #tpu.memory_space<vmem>>, %arg5: memref<2x4xf32, #tpu.memory_space<vmem>>) attributes {dimension_semantics = [#tpu.dimension_semantics<arbitrary>], iteration_bounds = array<i64: 1>, scalar_prefetch = 0 : i64, scratch_operands = 0 : i64, tpu.core_type = #tpu.core_type<tc>, window_params = [{pipeline_mode = #tpu.pipeline_mode<synchronous>, transform_indices = @transform_0, window_bounds = array<i64: 2, 256>}, {pipeline_mode = #tpu.pipeline_mode<synchronous>, transform_indices = @transform_1, window_bounds = array<i64: 256, 4>}, {pipeline_mode = #tpu.pipeline_mode<synchronous>, transform_indices = @transform_2, window_bounds = array<i64: 1, 4>}, {pipeline_mode = #tpu.pipeline_mode<synchronous>, transform_indices = @transform_3, window_bounds = array<i64: 1, 4>}, {pipeline_mode = #tpu.pipeline_mode<synchronous>, transform_indices = @transform_4, window_bounds = array<i64: 2, 4>}]} {
    %c0 = arith.constant 0 : index
    %c0_0 = arith.constant 0 : index
    %0 = vector.load %arg1[%c0, %c0_0] : memref<2x256xf32, #tpu.memory_space<vmem>>, vector<2x256xf32>
    %c0_1 = arith.constant 0 : index
    %c0_2 = arith.constant 0 : index
    %1 = vector.load %arg2[%c0_1, %c0_2] : memref<256x4xf32, #tpu.memory_space<vmem>>, vector<256x4xf32>
    %cst = arith.constant dense<0.000000e+00> : vector<2x4xf32>
    %2 = tpu.matmul %0, %1, %cst {dimension_numbers = #tpu.dot_dimension_numbers<[1], [0], [0], [1], [0, 0, 1, 1], [], []>} : vector<2x256xf32>, vector<256x4xf32>, vector<2x4xf32> -> vector<2x4xf32>
    %c0_3 = arith.constant 0 : index
    %c0_4 = arith.constant 0 : index
    %3 = vector.load %arg3[%c0_3, %c0_4] : memref<1x4xf32, #tpu.memory_space<vmem>>, vector<1x4xf32>
    %4 = vector.broadcast %3 : vector<1x4xf32> to vector<2x4xf32>
    %5 = arith.mulf %2, %4 : vector<2x4xf32>
    %c0_5 = arith.constant 0 : index
    %c0_6 = arith.constant 0 : index
    %6 = vector.load %arg4[%c0_5, %c0_6] : memref<1x4xf32, #tpu.memory_space<vmem>>, vector<1x4xf32>
    %7 = vector.broadcast %6 : vector<1x4xf32> to vector<2x4xf32>
    %8 = arith.addf %5, %7 : vector<2x4xf32>
    %c0_7 = arith.constant 0 : index
    %c0_8 = arith.constant 0 : index
    %9 = vector.load %arg5[%c0_7, %c0_8] : memref<2x4xf32, #tpu.memory_space<vmem>>, vector<2x4xf32>
    tpu.vector_store %arg5[%c0_7, %c0_8], %8 {strides = array<i32>} : memref<2x4xf32, #tpu.memory_space<vmem>>, vector<2x4xf32>,
    return
  }
  func.func @transform_0(%arg0: i32) -> (i32, i32) {
    %c0_i32 = arith.constant 0 : i32
    %c0_i32_0 = arith.constant 0 : i32
    %c0_i32_1 = arith.constant 0 : i32
    return %c0_i32, %c0_i32_0 : i32, i32
  }
  func.func @transform_1(%arg0: i32) -> (i32, i32) {
    %c0_i32 = arith.constant 0 : i32
    %c0_i32_0 = arith.constant 0 : i32
    %c0_i32_1 = arith.constant 0 : i32
    return %c0_i32, %c0_i32_0 : i32, i32
  }
  func.func @transform_2(%arg0: i32) -> (i32, i32) {
    %c0_i32 = arith.constant 0 : i32
    %c0_i32_0 = arith.constant 0 : i32
    %c0_i32_1 = arith.constant 0 : i32
    return %c0_i32, %c0_i32_0 : i32, i32
  }
  func.func @transform_3(%arg0: i32) -> (i32, i32) {
    %c0_i32 = arith.constant 0 : i32
    %c0_i32_0 = arith.constant 0 : i32
    %c0_i32_1 = arith.constant 0 : i32
    return %c0_i32, %c0_i32_0 : i32, i32
  }
  func.func @transform_4(%arg0: i32) -> (i32, i32) {
    %c0_i32 = arith.constant 0 : i32
    %c0_i32_0 = arith.constant 0 : i32
    %c0_i32_1 = arith.constant 0 : i32
    return %c0_i32, %c0_i32_0 : i32, i32
  }
}

</mosaic_0001>

<llo_original>
// kernel: model_forward_pallas.8
$region0: #{model_forward_pallas.8}
  #allocation0 [shape = 'u32[]', space=smem, size = 0x4, offset = 0x4, fixed_abs, tag = 'smem constant byte address 0x4 - core index']
  #allocation1 [shape = 'u32[144,128]{1,0:T(1,128)}', space=vmem, size = 0x12000, scoped, tag = 'internal scratch']
  %s0 = inlined_call_operand.vmem [shape: f32[512,6], index: 0, kind: input, shape index: {}]
  %s1 = inlined_call_operand.hbm [shape: f32[6,8], index: 1, kind: input, shape index: {}]
  %s2 = inlined_call_operand.hbm [shape: f32[1,8], index: 2, kind: input, shape index: {}]
  %s3 = inlined_call_operand.hbm [shape: f32[1,8], index: 3, kind: input, shape index: {}]
  %s4 = inlined_call_operand.vmem [shape: f32[512,8], index: 4, kind: output, shape index: {}]
  %s5 = sld [smem:[#allocation0]]
  $region38: #{model_forward_pallas.8} parent=0
    _
  %s7 = ssub.s32 1, %s5
  %s8 = scalar_select 0, %s7, %s5
  $region1: #{model_forward_pallas.8} parent=0
    #allocation2 [shape = 'u8[4096]{0}', space=vmem, size = 0x1000, scoped, tag = 'input window, operand 1, single buffered']
    #allocation3 [shape = 's32[1]{0}', space=sflag, size = 0x4, scoped, tag = 'scoped memory for model_forward_pallas.8']
    #allocation4 [shape = 'u8[512]{0}', space=vmem, size = 0x400, scoped, tag = 'input window, operand 2, single buffered']
    #allocation5 [shape = 's32[1]{0}', space=sflag, size = 0x4, scoped, tag = 'scoped memory for model_forward_pallas.8']
    #allocation6 [shape = 'u8[512]{0}', space=vmem, size = 0x400, scoped, tag = 'input window, operand 3, single buffered']
    %9 = vsyncpa [#allocation3], 0
    %10 = vsyncpa [#allocation5], 0
    // Predicated region
    $region2: #{model_forward_pallas.8} parent=1 // pred_check
      _
    $region3: #{model_forward_pallas.8} parent=1 // pred_check_branch
      %12 = sbr.rel (0) target = $region5
    $region4: #{model_forward_pallas.8} parent=1 // pred_region
      _
    $region5: #{model_forward_pallas.8} parent=1 // pred_fallthru
      _
    // Predicated region
    $region6: #{model_forward_pallas.8} parent=1 // pred_check
      _
    $region7: #{model_forward_pallas.8} parent=1 // pred_check_branch
      %14 = sbr.rel (0) target = $region9
    $region8: #{model_forward_pallas.8} parent=1 // pred_region
      %s16 = ssub.s32 128, 128
      %17 = vsyncadd [#allocation3], %s16
      %s19 = sshll.u32 [#allocation2], 4
      %s20 = int_to_ptr.vmem [resolvable:$true] %s19
      %22 = dma.hbm_to_vmem [thread:$0]  %s1, 128, %s20, [#allocation3]
    $region9: #{model_forward_pallas.8} parent=1 // pred_fallthru
      _
    // Predicated region
    $region10: #{model_forward_pallas.8} parent=1 // pred_check
      _
    $region11: #{model_forward_pallas.8} parent=1 // pred_check_branch
      %24 = sbr.rel (0) target = $region13
    $region12: #{model_forward_pallas.8} parent=1 // pred_region
      %s26 = ssub.s32 16, 16
      %27 = vsyncadd [#allocation5], %s26
      %s29 = sshll.u32 [#allocation4], 4
      %s30 = int_to_ptr.vmem [resolvable:$true] %s29
      %32 = dma.hbm_to_vmem [thread:$0]  %s2, 16, %s30, [#allocation5]
    $region13: #{model_forward_pallas.8} parent=1 // pred_fallthru
      _
    // Predicated region
    $region14: #{model_forward_pallas.8} parent=1 // pred_check
      _
    $region15: #{model_forward_pallas.8} parent=1 // pred_check_branch
      %34 = sbr.rel (0) target = $region17
    $region16: #{model_forward_pallas.8} parent=1 // pred_region
      %s36 = ssub.s32 16, 16
      %37 = vsyncadd [#allocation5], %s36
      %s39 = sshll.u32 [#allocation6], 4
      %s40 = int_to_ptr.vmem [resolvable:$true] %s39
      %42 = dma.hbm_to_vmem [thread:$0]  %s3, 16, %s40, [#allocation5]
    $region17: #{model_forward_pallas.8} parent=1 // pred_fallthru
      _
    // Predicated region
    $region18: #{model_forward_pallas.8} parent=1 // pred_check
      _
    $region19: #{model_forward_pallas.8} parent=1 // pred_check_branch
      %44 = sbr.rel (0) target = $region21
    $region20: #{model_forward_pallas.8} parent=1 // pred_region
      %45 = dma.done [#allocation3], 128
    $region21: #{model_forward_pallas.8} parent=1 // pred_fallthru
      _
    // Predicated region
    $region22: #{model_forward_pallas.8} parent=1 // pred_check
      _
    $region23: #{model_forward_pallas.8} parent=1 // pred_check_branch
      %47 = sbr.rel (0) target = $region25
    $region24: #{model_forward_pallas.8} parent=1 // pred_region
      %48 = dma.done [#allocation5], 16
    $region25: #{model_forward_pallas.8} parent=1 // pred_fallthru
      _
    // Predicated region
    $region26: #{model_forward_pallas.8} parent=1 // pred_check
      _
    $region27: #{model_forward_pallas.8} parent=1 // pred_check_branch
      %50 = sbr.rel (0) target = $region29
    $region28: #{model_forward_pallas.8} parent=1 // pred_region
      %51 = dma.done [#allocation5], 16
    $region29: #{model_forward_pallas.8} parent=1 // pred_fallthru
      _
    %v52 = vld [vmem:[%s0] sm:$0xff]
    %v53 = vld [vmem:[%s0 + $0x8] sm:$0xff]
    %v54 = vld [vmem:[%s0 + $0x10] sm:$0xff]
    %v55 = vld [vmem:[%s0 + $0x18] sm:$0xff]
    %v56 = vld [vmem:[%s0 + $0x20] sm:$0xff]
    %v57 = vld [vmem:[%s0 + $0x28] sm:$0xff]
    %v58 = vld [vmem:[%s0 + $0x30] sm:$0xff]
    %v59 = vld [vmem:[%s0 + $0x38] sm:$0xff]
    %v60 = vld [vmem:[%s0 + $0x40] sm:$0xff]
    %v61 = vld [vmem:[%s0 + $0x48] sm:$0xff]
    %v62 = vld [vmem:[%s0 + $0x50] sm:$0xff]
    %v63 = vld [vmem:[%s0 + $0x58] sm:$0xff]
    %v64 = vld [vmem:[%s0 + $0x60] sm:$0xff]
    %v65 = vld [vmem:[%s0 + $0x68] sm:$0xff]
    %v66 = vld [vmem:[%s0 + $0x70] sm:$0xff]
    %v67 = vld [vmem:[%s0 + $0x78] sm:$0xff]
    %v68 = vld [vmem:[%s0 + $0x80] sm:$0xff]
    %v69 = vld [vmem:[%s0 + $0x88] sm:$0xff]
    %v70 = vld [vmem:[%s0 + $0x90] sm:$0xff]
    %v71 = vld [vmem:[%s0 + $0x98] sm:$0xff]
    %v72 = vld [vmem:[%s0 + $0xa0] sm:$0xff]
    %v73 = vld [vmem:[%s0 + $0xa8] sm:$0xff]
    %v74 = vld [vmem:[%s0 + $0xb0] sm:$0xff]
    %v75 = vld [vmem:[%s0 + $0xb8] sm:$0xff]
    %v76 = vld [vmem:[%s0 + $0xc0] sm:$0xff]
    %v77 = vld [vmem:[%s0 + $0xc8] sm:$0xff]
    %v78 = vld [vmem:[%s0 + $0xd0] sm:$0xff]
    %v79 = vld [vmem:[%s0 + $0xd8] sm:$0xff]
    %v80 = vld [vmem:[%s0 + $0xe0] sm:$0xff]
    %v81 = vld [vmem:[%s0 + $0xe8] sm:$0xff]
    %v82 = vld [vmem:[%s0 + $0xf0] sm:$0xff]
    %v83 = vld [vmem:[%s0 + $0xf8] sm:$0xff]
    %v84 = vld [vmem:[%s0 + $0x100] sm:$0xff]
    %v85 = vld [vmem:[%s0 + $0x108] sm:$0xff]
    %v86 = vld [vmem:[%s0 + $0x110] sm:$0xff]
    %v87 = vld [vmem:[%s0 + $0x118] sm:$0xff]
    %v88 = vld [vmem:[%s0 + $0x120] sm:$0xff]
    %v89 = vld [vmem:[%s0 + $0x128] sm:$0xff]
    %v90 = vld [vmem:[%s0 + $0x130] sm:$0xff]
    %v91 = vld [vmem:[%s0 + $0x138] sm:$0xff]
    %v92 = vld [vmem:[%s0 + $0x140] sm:$0xff]
    %v93 = vld [vmem:[%s0 + $0x148] sm:$0xff]
    %v94 = vld [vmem:[%s0 + $0x150] sm:$0xff]
    %v95 = vld [vmem:[%s0 + $0x158] sm:$0xff]
    %v96 = vld [vmem:[%s0 + $0x160] sm:$0xff]
    %v97 = vld [vmem:[%s0 + $0x168] sm:$0xff]
    %v98 = vld [vmem:[%s0 + $0x170] sm:$0xff]
    %v99 = vld [vmem:[%s0 + $0x178] sm:$0xff]
    %v100 = vld [vmem:[%s0 + $0x180] sm:$0xff]
    %v101 = vld [vmem:[%s0 + $0x188] sm:$0xff]
    %v102 = vld [vmem:[%s0 + $0x190] sm:$0xff]
    %v103 = vld [vmem:[%s0 + $0x198] sm:$0xff]
    %v104 = vld [vmem:[%s0 + $0x1a0] sm:$0xff]
    %v105 = vld [vmem:[%s0 + $0x1a8] sm:$0xff]
    %v106 = vld [vmem:[%s0 + $0x1b0] sm:$0xff]
    %v107 = vld [vmem:[%s0 + $0x1b8] sm:$0xff]
    %v108 = vld [vmem:[%s0 + $0x1c0] sm:$0xff]
    %v109 = vld [vmem:[%s0 + $0x1c8] sm:$0xff]
    %v110 = vld [vmem:[%s0 + $0x1d0] sm:$0xff]
    %v111 = vld [vmem:[%s0 + $0x1d8] sm:$0xff]
    %v112 = vld [vmem:[%s0 + $0x1e0] sm:$0xff]
    %v113 = vld [vmem:[%s0 + $0x1e8] sm:$0xff]
    %v114 = vld [vmem:[%s0 + $0x1f0] sm:$0xff]
    %v115 = vld [vmem:[%s0 + $0x1f8] sm:$0xff]
    %v116 = vld [vmem:[#allocation2] sm:$0x3f]
    %vm117 = vcmask 48128
    %v119 = vsel %vm117, %v52, 0
    %v122 = vsel %vm117, %v53, 0
    %v125 = vsel %vm117, %v54, 0
    %v128 = vsel %vm117, %v55, 0
    %v131 = vsel %vm117, %v56, 0
    %v134 = vsel %vm117, %v57, 0
    %v137 = vsel %vm117, %v58, 0
    %v140 = vsel %vm117, %v59, 0
    %v143 = vsel %vm117, %v60, 0
    %v146 = vsel %vm117, %v61, 0
    %v149 = vsel %vm117, %v62, 0
    %v152 = vsel %vm117, %v63, 0
    %v155 = vsel %vm117, %v64, 0
    %v158 = vsel %vm117, %v65, 0
    %v161 = vsel %vm117, %v66, 0
    %v164 = vsel %vm117, %v67, 0
    %v167 = vsel %vm117, %v68, 0
    %v170 = vsel %vm117, %v69, 0
    %v173 = vsel %vm117, %v70, 0
    %v176 = vsel %vm117, %v71, 0
    %v179 = vsel %vm117, %v72, 0
    %v182 = vsel %vm117, %v73, 0
    %v185 = vsel %vm117, %v74, 0
    %v188 = vsel %vm117, %v75, 0
    %v191 = vsel %vm117, %v76, 0
    %v194 = vsel %vm117, %v77, 0
    %v197 = vsel %vm117, %v78, 0
    %v200 = vsel %vm117, %v79, 0
    %v203 = vsel %vm117, %v80, 0
    %v206 = vsel %vm117, %v81, 0
    %v209 = vsel %vm117, %v82, 0
    %v212 = vsel %vm117, %v83, 0
    %v215 = vsel %vm117, %v84, 0
    %v218 = vsel %vm117, %v85, 0
    %v221 = vsel %vm117, %v86, 0
    %v224 = vsel %vm117, %v87, 0
    %v227 = vsel %vm117, %v88, 0
    %v230 = vsel %vm117, %v89, 0
    %v233 = vsel %vm117, %v90, 0
    %v236 = vsel %vm117, %v91, 0
    %v239 = vsel %vm117, %v92, 0
    %v242 = vsel %vm117, %v93, 0
    %v245 = vsel %vm117, %v94, 0
    %v248 = vsel %vm117, %v95, 0
    %v251 = vsel %vm117, %v96, 0
    %v254 = vsel %vm117, %v97, 0
    %v257 = vsel %vm117, %v98, 0
    %v260 = vsel %vm117, %v99, 0
    %v263 = vsel %vm117, %v100, 0
    %v266 = vsel %vm117, %v101, 0
    %v269 = vsel %vm117, %v102, 0
    %v272 = vsel %vm117, %v103, 0
    %v275 = vsel %vm117, %v104, 0
    %v278 = vsel %vm117, %v105, 0
    %v281 = vsel %vm117, %v106, 0
    %v284 = vsel %vm117, %v107, 0
    %v287 = vsel %vm117, %v108, 0
    %v290 = vsel %vm117, %v109, 0
    %v293 = vsel %vm117, %v110, 0
    %v296 = vsel %vm117, %v111, 0
    %v299 = vsel %vm117, %v112, 0
    %v302 = vsel %vm117, %v113, 0
    %v305 = vsel %vm117, %v114, 0
    %v308 = vsel %vm117, %v115, 0
    %vm310 = vcmask 1045504
    %v312 = vsel %vm310, %v116, 0
    %314 = vmatprep.subr.mxu0 0.0
    %315 = vmatpush1.msra.mxu0 %v312
    %316 = vmatprep.subr.mxu0 0.0
    %317 = vmatpush1.msra.mxu0 0.0
    %318 = vmatprep.subr.mxu0 0.0
    %319 = vmatpush1.msra.mxu0 0.0
    %320 = vmatprep.subr.mxu0 0.0
    %321 = vmatpush1.msra.mxu0 0.0
    %322 = vmatprep.subr.mxu0 0.0
    %323 = vmatpush1.msra.mxu0 0.0
    %324 = vmatprep.subr.mxu0 0.0
    %325 = vmatpush1.msra.mxu0 0.0
    %326 = vmatprep.subr.mxu0 0.0
    %327 = vmatpush1.msra.mxu0 0.0
    %328 = vmatprep.subr.mxu0 0.0
    %329 = vmatpush1.msra.mxu0 0.0
    %330 = vmatprep.subr.mxu0 0.0
    %331 = vmatpush1.msra.mxu0 0.0
    %332 = vmatprep.subr.mxu0 0.0
    %333 = vmatpush1.msra.mxu0 0.0
    %334 = vmatprep.subr.mxu0 0.0
    %335 = vmatpush1.msra.mxu0 0.0
    %336 = vmatprep.subr.mxu0 0.0
    %337 = vmatpush1.msra.mxu0 0.0
    %338 = vmatprep.subr.mxu0 0.0
    %339 = vmatpush1.msra.mxu0 0.0
    %340 = vmatprep.subr.mxu0 0.0
    %341 = vmatpush1.msra.mxu0 0.0
    %342 = vmatprep.subr.mxu0 0.0
    %343 = vmatpush1.msra.mxu0 0.0
    %344 = vmatprep.subr.mxu0 0.0
    %345 = vmatpush1.msra.mxu0 0.0
    %346 = vmatprep.subr.mxu0 0.0
    %347 = vmatpush1.msra.mxu0 0.0
    %348 = vmatprep.subr.mxu0 0.0
    %349 = vmatpush1.msra.mxu0 0.0
    %350 = vmatprep.subr.mxu0 0.0
    %351 = vmatpush1.msra.mxu0 0.0
    %352 = vmatprep.subr.mxu0 0.0
    %353 = vmatpush1.msra.mxu0 0.0
    %354 = vmatprep.subr.mxu0 0.0
    %355 = vmatpush1.msra.mxu0 0.0
    %356 = vmatprep.subr.mxu0 0.0
    %357 = vmatpush1.msra.mxu0 0.0
    %358 = vmatprep.subr.mxu0 0.0
    %359 = vmatpush1.msra.mxu0 0.0
    %360 = vmatprep.subr.mxu0 0.0
    %361 = vmatpush1.msra.mxu0 0.0
    %362 = vmatprep.subr.mxu0 0.0
    %363 = vmatpush1.msra.mxu0 0.0
    %364 = vmatprep.subr.mxu0 0.0
    %365 = vmatpush1.msra.mxu0 0.0
    %366 = vmatprep.subr.mxu0 0.0
    %367 = vmatpush1.msra.mxu0 0.0
    %368 = vmatprep.subr.mxu0 0.0
    %369 = vmatpush1.msra.mxu0 0.0
    %370 = vmatprep.subr.mxu0 0.0
    %371 = vmatpush1.msra.mxu0 0.0
    %372 = vmatprep.subr.mxu0 0.0
    %373 = vmatpush1.msra.mxu0 0.0
    %374 = vmatprep.subr.mxu0 0.0
    %375 = vmatpush1.msra.mxu0 0.0
    %376 = vmatprep.subr.mxu0 0.0
    %377 = vmatpush1.msra.mxu0 0.0
    %378 = vmatprep.mubr.f32.mxu0 0.0
    %379 = vmatmul.mubr.f32.gmra.mrb[0].mxu0 %v119
    %v380 = vpop.f32.mrb[0].mxu0
    %v381 = vadd.f32 0.0, %v380
    %v382 = vpop.f32.mrb[0].mxu0
    %383 = vmatprep.mubr.f32.mxu0 0.0
    %384 = vmatmul.mubr.f32.gmra.mrb[0].mxu0 %v122
    %v385 = vpop.f32.mrb[0].mxu0
    %v386 = vadd.f32 0.0, %v385
    %v387 = vpop.f32.mrb[0].mxu0
    %388 = vmatprep.mubr.f32.mxu0 0.0
    %389 = vmatmul.mubr.f32.gmra.mrb[0].mxu0 %v125
    %v390 = vpop.f32.mrb[0].mxu0
    %v391 = vadd.f32 0.0, %v390
    %v392 = vpop.f32.mrb[0].mxu0
    %393 = vmatprep.mubr.f32.mxu0 0.0
    %394 = vmatmul.mubr.f32.gmra.mrb[0].mxu0 %v128
    %v395 = vpop.f32.mrb[0].mxu0
    %v396 = vadd.f32 0.0, %v395
    %v397 = vpop.f32.mrb[0].mxu0
    %398 = vmatprep.mubr.f32.mxu0 0.0
    %399 = vmatmul.mubr.f32.gmra.mrb[0].mxu0 %v131
    %v400 = vpop.f32.mrb[0].mxu0
    %v401 = vadd.f32 0.0, %v400
    %v402 = vpop.f32.mrb[0].mxu0
    %403 = vmatprep.mubr.f32.mxu0 0.0
    %404 = vmatmul.mubr.f32.gmra.mrb[0].mxu0 %v134
    %v405 = vpop.f32.mrb[0].mxu0
    %v406 = vadd.f32 0.0, %v405
    %v407 = vpop.f32.mrb[0].mxu0
    %408 = vmatprep.mubr.f32.mxu0 0.0
    %409 = vmatmul.mubr.f32.gmra.mrb[0].mxu0 %v137
    %v410 = vpop.f32.mrb[0].mxu0
    %v411 = vadd.f32 0.0, %v410
    %v412 = vpop.f32.mrb[0].mxu0
    %413 = vmatprep.mubr.f32.mxu0 0.0
    %414 = vmatmul.mubr.f32.gmra.mrb[0].mxu0 %v140
    %v415 = vpop.f32.mrb[0].mxu0
    %v416 = vadd.f32 0.0, %v415
    %v417 = vpop.f32.mrb[0].mxu0
    %418 = vmatprep.mubr.f32.mxu0 0.0
    %419 = vmatmul.mubr.f32.gmra.mrb[0].mxu0 %v143
    %v420 = vpop.f32.mrb[0].mxu0
    %v421 = vadd.f32 0.0, %v420
    %v422 = vpop.f32.mrb[0].mxu0
    %423 = vmatprep.mubr.f32.mxu0 0.0
    %424 = vmatmul.mubr.f32.gmra.mrb[0].mxu0 %v146
    %v425 = vpop.f32.mrb[0].mxu0
    %v426 = vadd.f32 0.0, %v425
    %v427 = vpop.f32.mrb[0].mxu0
    %428 = vmatprep.mubr.f32.mxu0 0.0
    %429 = vmatmul.mubr.f32.gmra.mrb[0].mxu0 %v149
    %v430 = vpop.f32.mrb[0].mxu0
    %v431 = vadd.f32 0.0, %v430
    %v432 = vpop.f32.mrb[0].mxu0
    %433 = vmatprep.mubr.f32.mxu0 0.0
    %434 = vmatmul.mubr.f32.gmra.mrb[0].mxu0 %v152
    %v435 = vpop.f32.mrb[0].mxu0
    %v436 = vadd.f32 0.0, %v435
    %v437 = vpop.f32.mrb[0].mxu0
    %438 = vmatprep.mubr.f32.mxu0 0.0
    %439 = vmatmul.mubr.f32.gmra.mrb[0].mxu0 %v155
    %v440 = vpop.f32.mrb[0].mxu0
    %v441 = vadd.f32 0.0, %v440
    %v442 = vpop.f32.mrb[0].mxu0
    %443 = vmatprep.mubr.f32.mxu0 0.0
    %444 = vmatmul.mubr.f32.gmra.mrb[0].mxu0 %v158
    %v445 = vpop.f32.mrb[0].mxu0
    %v446 = vadd.f32 0.0, %v445
    %v447 = vpop.f32.mrb[0].mxu0
    %448 = vmatprep.mubr.f32.mxu0 0.0
    %449 = vmatmul.mubr.f32.gmra.mrb[0].mxu0 %v161
    %v450 = vpop.f32.mrb[0].mxu0
    %v451 = vadd.f32 0.0, %v450
    %v452 = vpop.f32.mrb[0].mxu0
    %453 = vmatprep.mubr.f32.mxu0 0.0
    %454 = vmatmul.mubr.f32.gmra.mrb[0].mxu0 %v164
    %v455 = vpop.f32.mrb[0].mxu0
    %v456 = vadd.f32 0.0, %v455
    %v457 = vpop.f32.mrb[0].mxu0
    %458 = vmatprep.mubr.f32.mxu0 0.0
    %459 = vmatmul.mubr.f32.gmra.mrb[0].mxu0 %v167
    %v460 = vpop.f32.mrb[0].mxu0
    %v461 = vadd.f32 0.0, %v460
    %v462 = vpop.f32.mrb[0].mxu0
    %463 = vmatprep.mubr.f32.mxu0 0.0
    %464 = vmatmul.mubr.f32.gmra.mrb[0].mxu0 %v170
    %v465 = vpop.f32.mrb[0].mxu0
    %v466 = vadd.f32 0.0, %v465
    %v467 = vpop.f32.mrb[0].mxu0
    %468 = vmatprep.mubr.f32.mxu0 0.0
    %469 = vmatmul.mubr.f32.gmra.mrb[0].mxu0 %v173
    %v470 = vpop.f32.mrb[0].mxu0
    %v471 = vadd.f32 0.0, %v470
    %v472 = vpop.f32.mrb[0].mxu0
    %473 = vmatprep.mubr.f32.mxu0 0.0
    %474 = vmatmul.mubr.f32.gmra.mrb[0].mxu0 %v176
    %v475 = vpop.f32.mrb[0].mxu0
    %v476 = vadd.f32 0.0, %v475
    %v477 = vpop.f32.mrb[0].mxu0
    %478 = vmatprep.mubr.f32.mxu0 0.0
    %479 = vmatmul.mubr.f32.gmra.mrb[0].mxu0 %v179
    %v480 = vpop.f32.mrb[0].mxu0
    %v481 = vadd.f32 0.0, %v480
    %v482 = vpop.f32.mrb[0].mxu0
    %483 = vmatprep.mubr.f32.mxu0 0.0
    %484 = vmatmul.mubr.f32.gmra.mrb[0].mxu0 %v182
    %v485 = vpop.f32.mrb[0].mxu0
    %v486 = vadd.f32 0.0, %v485
    %v487 = vpop.f32.mrb[0].mxu0
    %488 = vmatprep.mubr.f32.mxu0 0.0
    %489 = vmatmul.mubr.f32.gmra.mrb[0].mxu0 %v185
    %v490 = vpop.f32.mrb[0].mxu0
    %v491 = vadd.f32 0.0, %v490
    %v492 = vpop.f32.mrb[0].mxu0
    %493 = vmatprep.mubr.f32.mxu0 0.0
    %494 = vmatmul.mubr.f32.gmra.mrb[0].mxu0 %v188
    %v495 = vpop.f32.mrb[0].mxu0
    %v496 = vadd.f32 0.0, %v495
    %v497 = vpop.f32.mrb[0].mxu0
    %498 = vmatprep.mubr.f32.mxu0 0.0
    %499 = vmatmul.mubr.f32.gmra.mrb[0].mxu0 %v191
    %v500 = vpop.f32.mrb[0].mxu0
    %v501 = vadd.f32 0.0, %v500
    %v502 = vpop.f32.mrb[0].mxu0
    %503 = vmatprep.mubr.f32.mxu0 0.0
    %504 = vmatmul.mubr.f32.gmra.mrb[0].mxu0 %v194
    %v505 = vpop.f32.mrb[0].mxu0
    %v506 = vadd.f32 0.0, %v505
    %v507 = vpop.f32.mrb[0].mxu0
    %508 = vmatprep.mubr.f32.mxu0 0.0
    %509 = vmatmul.mubr.f32.gmra.mrb[0].mxu0 %v197
    %v510 = vpop.f32.mrb[0].mxu0
    %v511 = vadd.f32 0.0, %v510
    %v512 = vpop.f32.mrb[0].mxu0
    %513 = vmatprep.mubr.f32.mxu0 0.0
    %514 = vmatmul.mubr.f32.gmra.mrb[0].mxu0 %v200
    %v515 = vpop.f32.mrb[0].mxu0
    %v516 = vadd.f32 0.0, %v515
    %v517 = vpop.f32.mrb[0].mxu0
    %518 = vmatprep.mubr.f32.mxu0 0.0
    %519 = vmatmul.mubr.f32.gmra.mrb[0].mxu0 %v203
    %v520 = vpop.f32.mrb[0].mxu0
    %v521 = vadd.f32 0.0, %v520
    %v522 = vpop.f32.mrb[0].mxu0
    %523 = vmatprep.mubr.f32.mxu0 0.0
    %524 = vmatmul.mubr.f32.gmra.mrb[0].mxu0 %v206
    %v525 = vpop.f32.mrb[0].mxu0
    %v526 = vadd.f32 0.0, %v525
    %v527 = vpop.f32.mrb[0].mxu0
    %528 = vmatprep.mubr.f32.mxu0 0.0
    %529 = vmatmul.mubr.f32.gmra.mrb[0].mxu0 %v209
    %v530 = vpop.f32.mrb[0].mxu0
    %v531 = vadd.f32 0.0, %v530
    %v532 = vpop.f32.mrb[0].mxu0
    %533 = vmatprep.mubr.f32.mxu0 0.0
    %534 = vmatmul.mubr.f32.gmra.mrb[0].mxu0 %v212
    %v535 = vpop.f32.mrb[0].mxu0
    %v536 = vadd.f32 0.0, %v535
    %v537 = vpop.f32.mrb[0].mxu0
    %538 = vmatprep.mubr.f32.mxu0 0.0
    %539 = vmatmul.mubr.f32.gmra.mrb[0].mxu0 %v215
    %v540 = vpop.f32.mrb[0].mxu0
    %v541 = vadd.f32 0.0, %v540
    %v542 = vpop.f32.mrb[0].mxu0
    %543 = vmatprep.mubr.f32.mxu0 0.0
    %544 = vmatmul.mubr.f32.gmra.mrb[0].mxu0 %v218
    %v545 = vpop.f32.mrb[0].mxu0
    %v546 = vadd.f32 0.0, %v545
    %v547 = vpop.f32.mrb[0].mxu0
    %548 = vmatprep.mubr.f32.mxu0 0.0
    %549 = vmatmul.mubr.f32.gmra.mrb[0].mxu0 %v221
    %v550 = vpop.f32.mrb[0].mxu0
    %v551 = vadd.f32 0.0, %v550
    %v552 = vpop.f32.mrb[0].mxu0
    %553 = vmatprep.mubr.f32.mxu0 0.0
    %554 = vmatmul.mubr.f32.gmra.mrb[0].mxu0 %v224
    %v555 = vpop.f32.mrb[0].mxu0
    %v556 = vadd.f32 0.0, %v555
    %v557 = vpop.f32.mrb[0].mxu0
    %558 = vmatprep.mubr.f32.mxu0 0.0
    %559 = vmatmul.mubr.f32.gmra.mrb[0].mxu0 %v227
    %v560 = vpop.f32.mrb[0].mxu0
    %v561 = vadd.f32 0.0, %v560
    %v562 = vpop.f32.mrb[0].mxu0
    %563 = vmatprep.mubr.f32.mxu0 0.0
    %564 = vmatmul.mubr.f32.gmra.mrb[0].mxu0 %v230
    %v565 = vpop.f32.mrb[0].mxu0
    %v566 = vadd.f32 0.0, %v565
    %v567 = vpop.f32.mrb[0].mxu0
    %568 = vmatprep.mubr.f32.mxu0 0.0
    %569 = vmatmul.mubr.f32.gmra.mrb[0].mxu0 %v233
    %v570 = vpop.f32.mrb[0].mxu0
    %v571 = vadd.f32 0.0, %v570
    %v572 = vpop.f32.mrb[0].mxu0
    %573 = vmatprep.mubr.f32.mxu0 0.0
    %574 = vmatmul.mubr.f32.gmra.mrb[0].mxu0 %v236
    %v575 = vpop.f32.mrb[0].mxu0
    %v576 = vadd.f32 0.0, %v575
    %v577 = vpop.f32.mrb[0].mxu0
    %578 = vmatprep.mubr.f32.mxu0 0.0
    %579 = vmatmul.mubr.f32.gmra.mrb[0].mxu0 %v239
    %v580 = vpop.f32.mrb[0].mxu0
    %v581 = vadd.f32 0.0, %v580
    %v582 = vpop.f32.mrb[0].mxu0
    %583 = vmatprep.mubr.f32.mxu0 0.0
    %584 = vmatmul.mubr.f32.gmra.mrb[0].mxu0 %v242
    %v585 = vpop.f32.mrb[0].mxu0
    %v586 = vadd.f32 0.0, %v585
    %v587 = vpop.f32.mrb[0].mxu0
    %588 = vmatprep.mubr.f32.mxu0 0.0
    %589 = vmatmul.mubr.f32.gmra.mrb[0].mxu0 %v245
    %v590 = vpop.f32.mrb[0].mxu0
    %v591 = vadd.f32 0.0, %v590
    %v592 = vpop.f32.mrb[0].mxu0
    %593 = vmatprep.mubr.f32.mxu0 0.0
    %594 = vmatmul.mubr.f32.gmra.mrb[0].mxu0 %v248
    %v595 = vpop.f32.mrb[0].mxu0
    %v596 = vadd.f32 0.0, %v595
    %v597 = vpop.f32.mrb[0].mxu0
    %598 = vmatprep.mubr.f32.mxu0 0.0
    %599 = vmatmul.mubr.f32.gmra.mrb[0].mxu0 %v251
    %v600 = vpop.f32.mrb[0].mxu0
    %v601 = vadd.f32 0.0, %v600
    %v602 = vpop.f32.mrb[0].mxu0
    %603 = vmatprep.mubr.f32.mxu0 0.0
    %604 = vmatmul.mubr.f32.gmra.mrb[0].mxu0 %v254
    %v605 = vpop.f32.mrb[0].mxu0
    %v606 = vadd.f32 0.0, %v605
    %v607 = vpop.f32.mrb[0].mxu0
    %608 = vmatprep.mubr.f32.mxu0 0.0
    %609 = vmatmul.mubr.f32.gmra.mrb[0].mxu0 %v257
    %v610 = vpop.f32.mrb[0].mxu0
    %v611 = vadd.f32 0.0, %v610
    %v612 = vpop.f32.mrb[0].mxu0
    %613 = vmatprep.mubr.f32.mxu0 0.0
    %614 = vmatmul.mubr.f32.gmra.mrb[0].mxu0 %v260
    %v615 = vpop.f32.mrb[0].mxu0
    %v616 = vadd.f32 0.0, %v615
    %v617 = vpop.f32.mrb[0].mxu0
    %618 = vmatprep.mubr.f32.mxu0 0.0
    %619 = vmatmul.mubr.f32.gmra.mrb[0].mxu0 %v263
    %v620 = vpop.f32.mrb[0].mxu0
    %v621 = vadd.f32 0.0, %v620
    %v622 = vpop.f32.mrb[0].mxu0
    %623 = vmatprep.mubr.f32.mxu0 0.0
    %624 = vmatmul.mubr.f32.gmra.mrb[0].mxu0 %v266
    %v625 = vpop.f32.mrb[0].mxu0
    %v626 = vadd.f32 0.0, %v625
    %v627 = vpop.f32.mrb[0].mxu0
    %628 = vmatprep.mubr.f32.mxu0 0.0
    %629 = vmatmul.mubr.f32.gmra.mrb[0].mxu0 %v269
    %v630 = vpop.f32.mrb[0].mxu0
    %v631 = vadd.f32 0.0, %v630
    %v632 = vpop.f32.mrb[0].mxu0
    %633 = vmatprep.mubr.f32.mxu0 0.0
    %634 = vmatmul.mubr.f32.gmra.mrb[0].mxu0 %v272
    %v635 = vpop.f32.mrb[0].mxu0
    %v636 = vadd.f32 0.0, %v635
    %v637 = vpop.f32.mrb[0].mxu0
    %638 = vmatprep.mubr.f32.mxu0 0.0
    %639 = vmatmul.mubr.f32.gmra.mrb[0].mxu0 %v275
    %v640 = vpop.f32.mrb[0].mxu0
    %v641 = vadd.f32 0.0, %v640
    %v642 = vpop.f32.mrb[0].mxu0
    %643 = vmatprep.mubr.f32.mxu0 0.0
    %644 = vmatmul.mubr.f32.gmra.mrb[0].mxu0 %v278
    %v645 = vpop.f32.mrb[0].mxu0
    %v646 = vadd.f32 0.0, %v645
    %v647 = vpop.f32.mrb[0].mxu0
    %648 = vmatprep.mubr.f32.mxu0 0.0
    %649 = vmatmul.mubr.f32.gmra.mrb[0].mxu0 %v281
    %v650 = vpop.f32.mrb[0].mxu0
    %v651 = vadd.f32 0.0, %v650
    %v652 = vpop.f32.mrb[0].mxu0
    %653 = vmatprep.mubr.f32.mxu0 0.0
    %654 = vmatmul.mubr.f32.gmra.mrb[0].mxu0 %v284
    %v655 = vpop.f32.mrb[0].mxu0
    %v656 = vadd.f32 0.0, %v655
    %v657 = vpop.f32.mrb[0].mxu0
    %658 = vmatprep.mubr.f32.mxu0 0.0
    %659 = vmatmul.mubr.f32.gmra.mrb[0].mxu0 %v287
    %v660 = vpop.f32.mrb[0].mxu0
    %v661 = vadd.f32 0.0, %v660
    %v662 = vpop.f32.mrb[0].mxu0
    %663 = vmatprep.mubr.f32.mxu0 0.0
    %664 = vmatmul.mubr.f32.gmra.mrb[0].mxu0 %v290
    %v665 = vpop.f32.mrb[0].mxu0
    %v666 = vadd.f32 0.0, %v665
    %v667 = vpop.f32.mrb[0].mxu0
    %668 = vmatprep.mubr.f32.mxu0 0.0
    %669 = vmatmul.mubr.f32.gmra.mrb[0].mxu0 %v293
    %v670 = vpop.f32.mrb[0].mxu0
    %v671 = vadd.f32 0.0, %v670
    %v672 = vpop.f32.mrb[0].mxu0
    %673 = vmatprep.mubr.f32.mxu0 0.0
    %674 = vmatmul.mubr.f32.gmra.mrb[0].mxu0 %v296
    %v675 = vpop.f32.mrb[0].mxu0
    %v676 = vadd.f32 0.0, %v675
    %v677 = vpop.f32.mrb[0].mxu0
    %678 = vmatprep.mubr.f32.mxu0 0.0
    %679 = vmatmul.mubr.f32.gmra.mrb[0].mxu0 %v299
    %v680 = vpop.f32.mrb[0].mxu0
    %v681 = vadd.f32 0.0, %v680
    %v682 = vpop.f32.mrb[0].mxu0
    %683 = vmatprep.mubr.f32.mxu0 0.0
    %684 = vmatmul.mubr.f32.gmra.mrb[0].mxu0 %v302
    %v685 = vpop.f32.mrb[0].mxu0
    %v686 = vadd.f32 0.0, %v685
    %v687 = vpop.f32.mrb[0].mxu0
    %688 = vmatprep.mubr.f32.mxu0 0.0
    %689 = vmatmul.mubr.f32.gmra.mrb[0].mxu0 %v305
    %v690 = vpop.f32.mrb[0].mxu0
    %v691 = vadd.f32 0.0, %v690
    %v692 = vpop.f32.mrb[0].mxu0
    %693 = vmatprep.mubr.f32.mxu0 0.0
    %694 = vmatmul.mubr.f32.gmra.mrb[0].mxu0 %v308
    %v695 = vpop.f32.mrb[0].mxu0
    %v696 = vadd.f32 0.0, %v695
    %v697 = vpop.f32.mrb[0].mxu0
    %698 = vdwg.mxu0
    %v699 = vld [vmem:[#allocation4] sm:$0x1]
    %v701 = vlaneseq
    %v702 = vshrl.u32 %v701, 7
    %v703 = vsub.s32 0, %v702
    %v704 = vrot.slane %v699, %v703
    %v706 = vmul.f32 %v381, %v704
    %v707 = vmul.f32 %v386, %v704
    %v708 = vmul.f32 %v391, %v704
    %v709 = vmul.f32 %v396, %v704
    %v710 = vmul.f32 %v401, %v704
    %v711 = vmul.f32 %v406, %v704
    %v712 = vmul.f32 %v411, %v704
    %v713 = vmul.f32 %v416, %v704
    %v714 = vmul.f32 %v421, %v704
    %v715 = vmul.f32 %v426, %v704
    %v716 = vmul.f32 %v431, %v704
    %v717 = vmul.f32 %v436, %v704
    %v718 = vmul.f32 %v441, %v704
    %v719 = vmul.f32 %v446, %v704
    %v720 = vmul.f32 %v451, %v704
    %v721 = vmul.f32 %v456, %v704
    %v722 = vmul.f32 %v461, %v704
    %v723 = vmul.f32 %v466, %v704
    %v724 = vmul.f32 %v471, %v704
    %v725 = vmul.f32 %v476, %v704
    %v726 = vmul.f32 %v481, %v704
    %v727 = vmul.f32 %v486, %v704
    %v728 = vmul.f32 %v491, %v704
    %v729 = vmul.f32 %v496, %v704
    %v730 = vmul.f32 %v501, %v704
    %v731 = vmul.f32 %v506, %v704
    %v732 = vmul.f32 %v511, %v704
    %v733 = vmul.f32 %v516, %v704
    %v734 = vmul.f32 %v521, %v704
    %v735 = vmul.f32 %v526, %v704
    %v736 = vmul.f32 %v531, %v704
    %v737 = vmul.f32 %v536, %v704
    %v738 = vmul.f32 %v541, %v704
    %v739 = vmul.f32 %v546, %v704
    %v740 = vmul.f32 %v551, %v704
    %v741 = vmul.f32 %v556, %v704
    %v742 = vmul.f32 %v561, %v704
    %v743 = vmul.f32 %v566, %v704
    %v744 = vmul.f32 %v571, %v704
    %v745 = vmul.f32 %v576, %v704
    %v746 = vmul.f32 %v581, %v704
    %v747 = vmul.f32 %v586, %v704
    %v748 = vmul.f32 %v591, %v704
    %v749 = vmul.f32 %v596, %v704
    %v750 = vmul.f32 %v601, %v704
    %v751 = vmul.f32 %v606, %v704
    %v752 = vmul.f32 %v611, %v704
    %v753 = vmul.f32 %v616, %v704
    %v754 = vmul.f32 %v621, %v704
    %v755 = vmul.f32 %v626, %v704
    %v756 = vmul.f32 %v631, %v704
    %v757 = vmul.f32 %v636, %v704
    %v758 = vmul.f32 %v641, %v704
    %v759 = vmul.f32 %v646, %v704
    %v760 = vmul.f32 %v651, %v704
    %v761 = vmul.f32 %v656, %v704
    %v762 = vmul.f32 %v661, %v704
    %v763 = vmul.f32 %v666, %v704
    %v764 = vmul.f32 %v671, %v704
    %v765 = vmul.f32 %v676, %v704
    %v766 = vmul.f32 %v681, %v704
    %v767 = vmul.f32 %v686, %v704
    %v768 = vmul.f32 %v691, %v704
    %v769 = vmul.f32 %v696, %v704
    %v770 = vld [vmem:[#allocation6] sm:$0x1]
    %v772 = vlaneseq
    %v773 = vshrl.u32 %v772, 7
    %v774 = vsub.s32 0, %v773
    %v775 = vrot.slane %v770, %v774
    %v777 = vadd.f32 %v706, %v775
    %v778 = vadd.f32 %v707, %v775
    %v779 = vadd.f32 %v708, %v775
    %v780 = vadd.f32 %v709, %v775
    %v781 = vadd.f32 %v710, %v775
    %v782 = vadd.f32 %v711, %v775
    %v783 = vadd.f32 %v712, %v775
    %v784 = vadd.f32 %v713, %v775
    %v785 = vadd.f32 %v714, %v775
    %v786 = vadd.f32 %v715, %v775
    %v787 = vadd.f32 %v716, %v775
    %v788 = vadd.f32 %v717, %v775
    %v789 = vadd.f32 %v718, %v775
    %v790 = vadd.f32 %v719, %v775
    %v791 = vadd.f32 %v720, %v775
    %v792 = vadd.f32 %v721, %v775
    %v793 = vadd.f32 %v722, %v775
    %v794 = vadd.f32 %v723, %v775
    %v795 = vadd.f32 %v724, %v775
    %v796 = vadd.f32 %v725, %v775
    %v797 = vadd.f32 %v726, %v775
    %v798 = vadd.f32 %v727, %v775
    %v799 = vadd.f32 %v728, %v775
    %v800 = vadd.f32 %v729, %v775
    %v801 = vadd.f32 %v730, %v775
    %v802 = vadd.f32 %v731, %v775
    %v803 = vadd.f32 %v732, %v775
    %v804 = vadd.f32 %v733, %v775
    %v805 = vadd.f32 %v734, %v775
    %v806 = vadd.f32 %v735, %v775
    %v807 = vadd.f32 %v736, %v775
    %v808 = vadd.f32 %v737, %v775
    %v809 = vadd.f32 %v738, %v775
    %v810 = vadd.f32 %v739, %v775
    %v811 = vadd.f32 %v740, %v775
    %v812 = vadd.f32 %v741, %v775
    %v813 = vadd.f32 %v742, %v775
    %v814 = vadd.f32 %v743, %v775
    %v815 = vadd.f32 %v744, %v775
    %v816 = vadd.f32 %v745, %v775
    %v817 = vadd.f32 %v746, %v775
    %v818 = vadd.f32 %v747, %v775
    %v819 = vadd.f32 %v748, %v775
    %v820 = vadd.f32 %v749, %v775
    %v821 = vadd.f32 %v750, %v775
    %v822 = vadd.f32 %v751, %v775
    %v823 = vadd.f32 %v752, %v775
    %v824 = vadd.f32 %v753, %v775
    %v825 = vadd.f32 %v754, %v775
    %v826 = vadd.f32 %v755, %v775
    %v827 = vadd.f32 %v756, %v775
    %v828 = vadd.f32 %v757, %v775
    %v829 = vadd.f32 %v758, %v775
    %v830 = vadd.f32 %v759, %v775
    %v831 = vadd.f32 %v760, %v775
    %v832 = vadd.f32 %v761, %v775
    %v833 = vadd.f32 %v762, %v775
    %v834 = vadd.f32 %v763, %v775
    %v835 = vadd.f32 %v764, %v775
    %v836 = vadd.f32 %v765, %v775
    %v837 = vadd.f32 %v766, %v775
    %v838 = vadd.f32 %v767, %v775
    %v839 = vadd.f32 %v768, %v775
    %v840 = vadd.f32 %v769, %v775
    %v841 = vmax.f32 %v777, 0.0
    %v842 = vmax.f32 %v778, 0.0
    %v843 = vmax.f32 %v779, 0.0
    %v844 = vmax.f32 %v780, 0.0
    %v845 = vmax.f32 %v781, 0.0
    %v846 = vmax.f32 %v782, 0.0
    %v847 = vmax.f32 %v783, 0.0
    %v848 = vmax.f32 %v784, 0.0
    %v849 = vmax.f32 %v785, 0.0
    %v850 = vmax.f32 %v786, 0.0
    %v851 = vmax.f32 %v787, 0.0
    %v852 = vmax.f32 %v788, 0.0
    %v853 = vmax.f32 %v789, 0.0
    %v854 = vmax.f32 %v790, 0.0
    %v855 = vmax.f32 %v791, 0.0
    %v856 = vmax.f32 %v792, 0.0
    %v857 = vmax.f32 %v793, 0.0
    %v858 = vmax.f32 %v794, 0.0
    %v859 = vmax.f32 %v795, 0.0
    %v860 = vmax.f32 %v796, 0.0
    %v861 = vmax.f32 %v797, 0.0
    %v862 = vmax.f32 %v798, 0.0
    %v863 = vmax.f32 %v799, 0.0
    %v864 = vmax.f32 %v800, 0.0
    %v865 = vmax.f32 %v801, 0.0
    %v866 = vmax.f32 %v802, 0.0
    %v867 = vmax.f32 %v803, 0.0
    %v868 = vmax.f32 %v804, 0.0
    %v869 = vmax.f32 %v805, 0.0
    %v870 = vmax.f32 %v806, 0.0
    %v871 = vmax.f32 %v807, 0.0
    %v872 = vmax.f32 %v808, 0.0
    %v873 = vmax.f32 %v809, 0.0
    %v874 = vmax.f32 %v810, 0.0
    %v875 = vmax.f32 %v811, 0.0
    %v876 = vmax.f32 %v812, 0.0
    %v877 = vmax.f32 %v813, 0.0
    %v878 = vmax.f32 %v814, 0.0
    %v879 = vmax.f32 %v815, 0.0
    %v880 = vmax.f32 %v816, 0.0
    %v881 = vmax.f32 %v817, 0.0
    %v882 = vmax.f32 %v818, 0.0
    %v883 = vmax.f32 %v819, 0.0
    %v884 = vmax.f32 %v820, 0.0
    %v885 = vmax.f32 %v821, 0.0
    %v886 = vmax.f32 %v822, 0.0
    %v887 = vmax.f32 %v823, 0.0
    %v888 = vmax.f32 %v824, 0.0
    %v889 = vmax.f32 %v825, 0.0
    %v890 = vmax.f32 %v826, 0.0
    %v891 = vmax.f32 %v827, 0.0
    %v892 = vmax.f32 %v828, 0.0
    %v893 = vmax.f32 %v829, 0.0
    %v894 = vmax.f32 %v830, 0.0
    %v895 = vmax.f32 %v831, 0.0
    %v896 = vmax.f32 %v832, 0.0
    %v897 = vmax.f32 %v833, 0.0
    %v898 = vmax.f32 %v834, 0.0
    %v899 = vmax.f32 %v835, 0.0
    %v900 = vmax.f32 %v836, 0.0
    %v901 = vmax.f32 %v837, 0.0
    %v902 = vmax.f32 %v838, 0.0
    %v903 = vmax.f32 %v839, 0.0
    %v904 = vmax.f32 %v840, 0.0
    %vm905 = vcmask 64512
    %906 = vst.msk [vmem:[%s4] sm:$0xff] %vm905, %v841
    %907 = vst.msk [vmem:[%s4 + $0x8] sm:$0xff] %vm905, %v842
    %908 = vst.msk [vmem:[%s4 + $0x10] sm:$0xff] %vm905, %v843
    %909 = vst.msk [vmem:[%s4 + $0x18] sm:$0xff] %vm905, %v844
    %910 = vst.msk [vmem:[%s4 + $0x20] sm:$0xff] %vm905, %v845
    %911 = vst.msk [vmem:[%s4 + $0x28] sm:$0xff] %vm905, %v846
    %912 = vst.msk [vmem:[%s4 + $0x30] sm:$0xff] %vm905, %v847
    %913 = vst.msk [vmem:[%s4 + $0x38] sm:$0xff] %vm905, %v848
    %914 = vst.msk [vmem:[%s4 + $0x40] sm:$0xff] %vm905, %v849
    %915 = vst.msk [vmem:[%s4 + $0x48] sm:$0xff] %vm905, %v850
    %916 = vst.msk [vmem:[%s4 + $0x50] sm:$0xff] %vm905, %v851
    %917 = vst.msk [vmem:[%s4 + $0x58] sm:$0xff] %vm905, %v852
    %918 = vst.msk [vmem:[%s4 + $0x60] sm:$0xff] %vm905, %v853
    %919 = vst.msk [vmem:[%s4 + $0x68] sm:$0xff] %vm905, %v854
    %920 = vst.msk [vmem:[%s4 + $0x70] sm:$0xff] %vm905, %v855
    %921 = vst.msk [vmem:[%s4 + $0x78] sm:$0xff] %vm905, %v856
    %922 = vst.msk [vmem:[%s4 + $0x80] sm:$0xff] %vm905, %v857
    %923 = vst.msk [vmem:[%s4 + $0x88] sm:$0xff] %vm905, %v858
    %924 = vst.msk [vmem:[%s4 + $0x90] sm:$0xff] %vm905, %v859
    %925 = vst.msk [vmem:[%s4 + $0x98] sm:$0xff] %vm905, %v860
    %926 = vst.msk [vmem:[%s4 + $0xa0] sm:$0xff] %vm905, %v861
    %927 = vst.msk [vmem:[%s4 + $0xa8] sm:$0xff] %vm905, %v862
    %928 = vst.msk [vmem:[%s4 + $0xb0] sm:$0xff] %vm905, %v863
    %929 = vst.msk [vmem:[%s4 + $0xb8] sm:$0xff] %vm905, %v864
    %930 = vst.msk [vmem:[%s4 + $0xc0] sm:$0xff] %vm905, %v865
    %931 = vst.msk [vmem:[%s4 + $0xc8] sm:$0xff] %vm905, %v866
    %932 = vst.msk [vmem:[%s4 + $0xd0] sm:$0xff] %vm905, %v867
    %933 = vst.msk [vmem:[%s4 + $0xd8] sm:$0xff] %vm905, %v868
    %934 = vst.msk [vmem:[%s4 + $0xe0] sm:$0xff] %vm905, %v869
    %935 = vst.msk [vmem:[%s4 + $0xe8] sm:$0xff] %vm905, %v870
    %936 = vst.msk [vmem:[%s4 + $0xf0] sm:$0xff] %vm905, %v871
    %937 = vst.msk [vmem:[%s4 + $0xf8] sm:$0xff] %vm905, %v872
    %938 = vst.msk [vmem:[%s4 + $0x100] sm:$0xff] %vm905, %v873
    %939 = vst.msk [vmem:[%s4 + $0x108] sm:$0xff] %vm905, %v874
    %940 = vst.msk [vmem:[%s4 + $0x110] sm:$0xff] %vm905, %v875
    %941 = vst.msk [vmem:[%s4 + $0x118] sm:$0xff] %vm905, %v876
    %942 = vst.msk [vmem:[%s4 + $0x120] sm:$0xff] %vm905, %v877
    %943 = vst.msk [vmem:[%s4 + $0x128] sm:$0xff] %vm905, %v878
    %944 = vst.msk [vmem:[%s4 + $0x130] sm:$0xff] %vm905, %v879
    %945 = vst.msk [vmem:[%s4 + $0x138] sm:$0xff] %vm905, %v880
    %946 = vst.msk [vmem:[%s4 + $0x140] sm:$0xff] %vm905, %v881
    %947 = vst.msk [vmem:[%s4 + $0x148] sm:$0xff] %vm905, %v882
    %948 = vst.msk [vmem:[%s4 + $0x150] sm:$0xff] %vm905, %v883
    %949 = vst.msk [vmem:[%s4 + $0x158] sm:$0xff] %vm905, %v884
    %950 = vst.msk [vmem:[%s4 + $0x160] sm:$0xff] %vm905, %v885
    %951 = vst.msk [vmem:[%s4 + $0x168] sm:$0xff] %vm905, %v886
    %952 = vst.msk [vmem:[%s4 + $0x170] sm:$0xff] %vm905, %v887
    %953 = vst.msk [vmem:[%s4 + $0x178] sm:$0xff] %vm905, %v888
    %954 = vst.msk [vmem:[%s4 + $0x180] sm:$0xff] %vm905, %v889
    %955 = vst.msk [vmem:[%s4 + $0x188] sm:$0xff] %vm905, %v890
    %956 = vst.msk [vmem:[%s4 + $0x190] sm:$0xff] %vm905, %v891
    %957 = vst.msk [vmem:[%s4 + $0x198] sm:$0xff] %vm905, %v892
    %958 = vst.msk [vmem:[%s4 + $0x1a0] sm:$0xff] %vm905, %v893
    %959 = vst.msk [vmem:[%s4 + $0x1a8] sm:$0xff] %vm905, %v894
    %960 = vst.msk [vmem:[%s4 + $0x1b0] sm:$0xff] %vm905, %v895
    %961 = vst.msk [vmem:[%s4 + $0x1b8] sm:$0xff] %vm905, %v896
    %962 = vst.msk [vmem:[%s4 + $0x1c0] sm:$0xff] %vm905, %v897
    %963 = vst.msk [vmem:[%s4 + $0x1c8] sm:$0xff] %vm905, %v898
    %964 = vst.msk [vmem:[%s4 + $0x1d0] sm:$0xff] %vm905, %v899
    %965 = vst.msk [vmem:[%s4 + $0x1d8] sm:$0xff] %vm905, %v900
    %966 = vst.msk [vmem:[%s4 + $0x1e0] sm:$0xff] %vm905, %v901
    %967 = vst.msk [vmem:[%s4 + $0x1e8] sm:$0xff] %vm905, %v902
    %968 = vst.msk [vmem:[%s4 + $0x1f0] sm:$0xff] %vm905, %v903
    %969 = vst.msk [vmem:[%s4 + $0x1f8] sm:$0xff] %vm905, %v904
    // Predicated region
    $region30: #{model_forward_pallas.8} parent=1 // pred_check
      _
    $region31: #{model_forward_pallas.8} parent=1 // pred_check_branch
      %971 = sbr.rel (0) target = $region33
    $region32: #{model_forward_pallas.8} parent=1 // pred_region
      _
    $region33: #{model_forward_pallas.8} parent=1 // pred_fallthru
      _
    // Predicated region
    $region34: #{model_forward_pallas.8} parent=1 // pred_check
      _
    $region35: #{model_forward_pallas.8} parent=1 // pred_check_branch
      %973 = sbr.rel (0) target = $region37
    $region36: #{model_forward_pallas.8} parent=1 // pred_region
      _
    $region37: #{model_forward_pallas.8} parent=1 // pred_fallthru
      _
    %974 = vsyncpa [#allocation3], 1
    %975 = vsyncpa [#allocation5], 1

// kernel: model_forward_pallas.7
$region0: #{model_forward_pallas.7}
  #allocation0 [shape = 'u32[]', space=smem, size = 0x4, offset = 0x4, fixed_abs, tag = 'smem constant byte address 0x4 - core index']
  #allocation1 [shape = 'u32[144,128]{1,0:T(1,128)}', space=vmem, size = 0x12000, scoped, tag = 'internal scratch']
  %s0 = inlined_call_operand.vmem [shape: bf16[2,6,7], index: 0, kind: input, shape index: {}]
  %s1 = inlined_call_operand.hbm [shape: bf16[7,176], index: 1, kind: input, shape index: {}]
  %s2 = inlined_call_operand.hbm [shape: bf16[288,128], index: 2, kind: input, shape index: {}]
  %s3 = inlined_call_operand.vmem [shape: bf16[112,32], index: 3, kind: input, shape index: {}]
  %s4 = inlined_call_operand.hbm [shape: bf16[7,32], index: 4, kind: input, shape index: {}]
  %s5 = inlined_call_operand.hbm [shape: f32[1,176], index: 5, kind: input, shape index: {}]
  %s6 = inlined_call_operand.hbm [shape: f32[1,176], index: 6, kind: input, shape index: {}]
  %s7 = inlined_call_operand.hbm [shape: f32[1,192], index: 7, kind: input, shape index: {}]
  %s8 = inlined_call_operand.hbm [shape: f32[1,192], index: 8, kind: input, shape index: {}]
  %s9 = inlined_call_operand.vmem [shape: f32[2,6,256], index: 9, kind: output, shape index: {}]
  %s10 = sld [smem:[#allocation0]]
  $region74: #{model_forward_pallas.7} parent=0
    _
  %s12 = ssub.s32 1, %s10
  %s13 = scalar_select 0, %s12, %s10
  $region1: #{model_forward_pallas.7} parent=0
    #allocation2 [shape = 'u8[4096]{0}', space=vmem, size = 0x1000, scoped, tag = 'input window, operand 1, single buffered']
    #allocation3 [shape = 's32[1]{0}', space=sflag, size = 0x4, scoped, tag = 'scoped memory for model_forward_pallas.7']
    #allocation4 [shape = 'u8[73728]{0}', space=vmem, size = 0x12000, scoped, tag = 'input window, operand 2, single buffered']
    #allocation5 [shape = 's32[1]{0}', space=sflag, size = 0x4, scoped, tag = 'scoped memory for model_forward_pallas.7']
    #allocation6 [shape = 'u8[2048]{0}', space=vmem, size = 0x800, scoped, tag = 'input window, operand 4, single buffered']
    #allocation7 [shape = 'u8[1024]{0}', space=vmem, size = 0x400, scoped, tag = 'input window, operand 5, single buffered']
    #allocation8 [shape = 's32[1]{0}', space=sflag, size = 0x4, scoped, tag = 'scoped memory for model_forward_pallas.7']
    #allocation9 [shape = 'u8[1024]{0}', space=vmem, size = 0x400, scoped, tag = 'input window, operand 6, single buffered']
    #allocation10 [shape = 'u8[1024]{0}', space=vmem, size = 0x400, scoped, tag = 'input window, operand 7, single buffered']
    #allocation11 [shape = 's32[1]{0}', space=sflag, size = 0x4, scoped, tag = 'scoped memory for model_forward_pallas.7']
    #allocation12 [shape = 'u8[1024]{0}', space=vmem, size = 0x400, scoped, tag = 'input window, operand 8, single buffered']
    %14 = vsyncpa [#allocation3], 0
    %15 = vsyncpa [#allocation5], 0
    %16 = vsyncpa [#allocation8], 0
    %17 = vsyncpa [#allocation11], 0
    // Predicated region
    $region2: #{model_forward_pallas.7} parent=1 // pred_check
      _
    $region3: #{model_forward_pallas.7} parent=1 // pred_check_branch
      %19 = sbr.rel (0) target = $region5
    $region4: #{model_forward_pallas.7} parent=1 // pred_region
      _
    $region5: #{model_forward_pallas.7} parent=1 // pred_fallthru
      _
    // Predicated region
    $region6: #{model_forward_pallas.7} parent=1 // pred_check
      _
    $region7: #{model_forward_pallas.7} parent=1 // pred_check_branch
      %21 = sbr.rel (0) target = $region9
    $region8: #{model_forward_pallas.7} parent=1 // pred_region
      %s23 = ssub.s32 128, 128
      %24 = vsyncadd [#allocation3], %s23
      %s26 = sshll.u32 [#allocation2], 4
      %s27 = int_to_ptr.vmem [resolvable:$true] %s26
      %29 = dma.hbm_to_vmem [thread:$0]  %s1, 128, %s27, [#allocation3]
    $region9: #{model_forward_pallas.7} parent=1 // pred_fallthru
      _
    // Predicated region
    $region10: #{model_forward_pallas.7} parent=1 // pred_check
      _
    $region11: #{model_forward_pallas.7} parent=1 // pred_check_branch
      %31 = sbr.rel (0) target = $region13
    $region12: #{model_forward_pallas.7} parent=1 // pred_region
      %s33 = ssub.s32 2304, 2304
      %34 = vsyncadd [#allocation5], %s33
      %s35 = sshll.u32 [#allocation4], 4
      %s36 = int_to_ptr.vmem [resolvable:$true] %s35
      %41 = dma.hbm_to_vmem [thread:$0]  %s2, 2304, %s36, [#allocation5], 64, 64, 4
    $region13: #{model_forward_pallas.7} parent=1 // pred_fallthru
      _
    // Predicated region
    $region14: #{model_forward_pallas.7} parent=1 // pred_check
      _
    $region15: #{model_forward_pallas.7} parent=1 // pred_check_branch
      %43 = sbr.rel (0) target = $region17
    $region16: #{model_forward_pallas.7} parent=1 // pred_region
      _
    $region17: #{model_forward_pallas.7} parent=1 // pred_fallthru
      _
    // Predicated region
    $region18: #{model_forward_pallas.7} parent=1 // pred_check
      _
    $region19: #{model_forward_pallas.7} parent=1 // pred_check_branch
      %45 = sbr.rel (0) target = $region21
    $region20: #{model_forward_pallas.7} parent=1 // pred_region
      %s47 = ssub.s32 64, 64
      %48 = vsyncadd [#allocation5], %s47
      %s50 = sshll.u32 [#allocation6], 4
      %s51 = int_to_ptr.vmem [resolvable:$true] %s50
      %53 = dma.hbm_to_vmem [thread:$0]  %s4, 64, %s51, [#allocation5]
    $region21: #{model_forward_pallas.7} parent=1 // pred_fallthru
      _
    // Predicated region
    $region22: #{model_forward_pallas.7} parent=1 // pred_check
      _
    $region23: #{model_forward_pallas.7} parent=1 // pred_check_branch
      %55 = sbr.rel (0) target = $region25
    $region24: #{model_forward_pallas.7} parent=1 // pred_region
      %s57 = ssub.s32 32, 32
      %58 = vsyncadd [#allocation8], %s57
      %s60 = sshll.u32 [#allocation7], 4
      %s61 = int_to_ptr.vmem [resolvable:$true] %s60
      %63 = dma.hbm_to_vmem [thread:$0]  %s5, 32, %s61, [#allocation8]
    $region25: #{model_forward_pallas.7} parent=1 // pred_fallthru
      _
    // Predicated region
    $region26: #{model_forward_pallas.7} parent=1 // pred_check
      _
    $region27: #{model_forward_pallas.7} parent=1 // pred_check_branch
      %65 = sbr.rel (0) target = $region29
    $region28: #{model_forward_pallas.7} parent=1 // pred_region
      %s67 = ssub.s32 32, 32
      %68 = vsyncadd [#allocation8], %s67
      %s70 = sshll.u32 [#allocation9], 4
      %s71 = int_to_ptr.vmem [resolvable:$true] %s70
      %73 = dma.hbm_to_vmem [thread:$0]  %s6, 32, %s71, [#allocation8]
    $region29: #{model_forward_pallas.7} parent=1 // pred_fallthru
      _
    // Predicated region
    $region30: #{model_forward_pallas.7} parent=1 // pred_check
      _
    $region31: #{model_forward_pallas.7} parent=1 // pred_check_branch
      %75 = sbr.rel (0) target = $region33
    $region32: #{model_forward_pallas.7} parent=1 // pred_region
      %s77 = ssub.s32 32, 32
      %78 = vsyncadd [#allocation11], %s77
      %s80 = sshll.u32 [#allocation10], 4
      %s81 = int_to_ptr.vmem [resolvable:$true] %s80
      %83 = dma.hbm_to_vmem [thread:$0]  %s7, 32, %s81, [#allocation11]
    $region33: #{model_forward_pallas.7} parent=1 // pred_fallthru
      _
    // Predicated region
    $region34: #{model_forward_pallas.7} parent=1 // pred_check
      _
    $region35: #{model_forward_pallas.7} parent=1 // pred_check_branch
      %85 = sbr.rel (0) target = $region37
    $region36: #{model_forward_pallas.7} parent=1 // pred_region
      %s87 = ssub.s32 32, 32
      %88 = vsyncadd [#allocation11], %s87
      %s90 = sshll.u32 [#allocation12], 4
      %s91 = int_to_ptr.vmem [resolvable:$true] %s90
      %93 = dma.hbm_to_vmem [thread:$0]  %s8, 32, %s91, [#allocation11]
    $region37: #{model_forward_pallas.7} parent=1 // pred_fallthru
      _
    // Predicated region
    $region38: #{model_forward_pallas.7} parent=1 // pred_check
      _
    $region39: #{model_forward_pallas.7} parent=1 // pred_check_branch
      %95 = sbr.rel (0) target = $region41
    $region40: #{model_forward_pallas.7} parent=1 // pred_region
      %96 = dma.done [#allocation3], 128
    $region41: #{model_forward_pallas.7} parent=1 // pred_fallthru
      _
    // Predicated region
    $region42: #{model_forward_pallas.7} parent=1 // pred_check
      _
    $region43: #{model_forward_pallas.7} parent=1 // pred_check_branch
      %98 = sbr.rel (0) target = $region45
    $region44: #{model_forward_pallas.7} parent=1 // pred_region
      %99 = dma.done [#allocation5], 2304
    $region45: #{model_forward_pallas.7} parent=1 // pred_fallthru
      _
    // Predicated region
    $region46: #{model_forward_pallas.7} parent=1 // pred_check
      _
    $region47: #{model_forward_pallas.7} parent=1 // pred_check_branch
      %101 = sbr.rel (0) target = $region49
    $region48: #{model_forward_pallas.7} parent=1 // pred_region
      %102 = dma.done [#allocation5], 64
    $region49: #{model_forward_pallas.7} parent=1 // pred_fallthru
      _
    // Predicated region
    $region50: #{model_forward_pallas.7} parent=1 // pred_check
      _
    $region51: #{model_forward_pallas.7} parent=1 // pred_check_branch
      %104 = sbr.rel (0) target = $region53
    $region52: #{model_forward_pallas.7} parent=1 // pred_region
      %105 = dma.done [#allocation8], 32
    $region53: #{model_forward_pallas.7} parent=1 // pred_fallthru
      _
    // Predicated region
    $region54: #{model_forward_pallas.7} parent=1 // pred_check
      _
    $region55: #{model_forward_pallas.7} parent=1 // pred_check_branch
      %107 = sbr.rel (0) target = $region57
    $region56: #{model_forward_pallas.7} parent=1 // pred_region
      %108 = dma.done [#allocation8], 32
    $region57: #{model_forward_pallas.7} parent=1 // pred_fallthru
      _
    // Predicated region
    $region58: #{model_forward_pallas.7} parent=1 // pred_check
      _
    $region59: #{model_forward_pallas.7} parent=1 // pred_check_branch
      %110 = sbr.rel (0) target = $region61
    $region60: #{model_forward_pallas.7} parent=1 // pred_region
      %111 = dma.done [#allocation11], 32
    $region61: #{model_forward_pallas.7} parent=1 // pred_fallthru
      _
    // Predicated region
    $region62: #{model_forward_pallas.7} parent=1 // pred_check
      _
    $region63: #{model_forward_pallas.7} parent=1 // pred_check_branch
      %113 = sbr.rel (0) target = $region65
    $region64: #{model_forward_pallas.7} parent=1 // pred_region
      %114 = dma.done [#allocation11], 32
    $region65: #{model_forward_pallas.7} parent=1 // pred_fallthru
      _
    %v117 = vld [vmem:[%s0] sm:$0x7]
    %v118 = vld [vmem:[%s0 + $0x4] sm:$0x7]
    %v122 = vunpack.c.l.s4 1966171168
    %v123 = vunpack.c.0.s8 %v122
    %v124 = vlaneseq
    %v125 = vshrl.u32 %v124, 7
    %v126 = vsub.s32 %v123, %v125
    %v127 = vrot.slane %v117, %v126
    %v128 = vcombine.high %v127, %v127
    %v130 = vunpack.c.l.s4 1966171168
    %v131 = vunpack.c.0.s8 %v130
    %v132 = vlaneseq
    %v133 = vshrl.u32 %v132, 7
    %v134 = vsub.s32 %v131, %v133
    %v135 = vrot.slane %v127, %v134
    %v137 = vunpack.c.l.s4 1966171168
    %v138 = vunpack.c.0.s8 %v137
    %v139 = vlaneseq
    %v140 = vshrl.u32 %v139, 7
    %v141 = vsub.s32 %v138, %v140
    %v142 = vrot.slane %v128, %v141
    %v143 = vcombine.high %v135, %v135
    %v145 = vunpack.c.l.s4 1966171168
    %v146 = vunpack.c.0.s8 %v145
    %v147 = vlaneseq
    %v148 = vshrl.u32 %v147, 7
    %v149 = vsub.s32 %v146, %v148
    %v150 = vrot.slane %v118, %v149
    %v151 = vcombine.high %v150, %v150
    %v153 = vunpack.c.l.s4 1966171168
    %v154 = vunpack.c.0.s8 %v153
    %v155 = vlaneseq
    %v156 = vshrl.u32 %v155, 7
    %v157 = vsub.s32 %v154, %v156
    %v158 = vrot.slane %v150, %v157
    %v160 = vunpack.c.l.s4 1966171168
    %v161 = vunpack.c.0.s8 %v160
    %v162 = vlaneseq
    %v163 = vshrl.u32 %v162, 7
    %v164 = vsub.s32 %v161, %v163
    %v165 = vrot.slane %v151, %v164
    %v166 = vcombine.high %v158, %v158
    %v167 = vld [vmem:[#allocation2] sm:$0xff]
    %v168 = vcombine.low %v135, %v142
    %v169 = vcombine.low %v143, %v158
    %v170 = vcombine.low %v165, %v166
    %v172 = vunpack.c.l.s4 1966171168
    %v173 = vunpack.c.0.s8 %v172
    %v174 = vlaneseq
    %v175 = vshrl.u32 %v174, 7
    %v176 = vsub.s32 %v173, %v175
    %v177 = vrot.slane %v168, %v176
    %v179 = vunpack.c.l.s4 1966171168
    %v180 = vunpack.c.0.s8 %v179
    %v181 = vlaneseq
    %v182 = vshrl.u32 %v181, 7
    %v183 = vsub.s32 %v180, %v182
    %v184 = vrot.slane %v169, %v183
    %v186 = vunpack.c.l.s4 1966171168
    %v187 = vunpack.c.0.s8 %v186
    %v188 = vlaneseq
    %v189 = vshrl.u32 %v188, 7
    %v190 = vsub.s32 %v187, %v189
    %v191 = vrot.slane %v170, %v190
    %v192 = vcombine.low %v177, %v184
    %v194 = vunpack.c.l.s4 1966171168
    %v195 = vunpack.c.0.s8 %v194
    %v196 = vlaneseq
    %v197 = vshrl.u32 %v196, 7
    %v198 = vsub.s32 %v195, %v197
    %v199 = vrot.slane %v192, %v198
    %v201 = vunpack.c.l.s4 1966171168
    %v202 = vunpack.c.0.s8 %v201
    %v203 = vlaneseq
    %v204 = vshrl.u32 %v203, 7
    %v205 = vsub.s32 %v202, %v204
    %v206 = vrot.slane %v191, %v205
    %v207 = vcombine.low %v199, %v206
    %v209 = vunpack.c.l.b16 %v167
    %v210 = vunpack.c.h.b16 %v167
    %v211 = vpack.c.b16 %v209, %v209
    %v212 = vpack.c.b16 %v210, %v210
    %vm213 = vcmask 56320
    %v215 = vsel %vm213, %v207, 0
    %vm217 = vcmask 1042432
    %vm218 = vcmask 1043456
    %v219 = vsel %vm217, 4294967295, 65535
    %v220 = vsel %vm218, %v219, 0
    %v222 = vand.u32 %v211, %v220
    %v225 = vand.u32 %v212, %v220
    %227 = vmatprep.subr.bf16.mxu0 %v225
    %228 = vmatpush1.bf16.msra.mxu0 %v222
    %229 = vmatprep.subr.bf16.mxu0 0
    %230 = vmatpush1.bf16.msra.mxu0 0
    %231 = vmatprep.subr.bf16.mxu0 0
    %232 = vmatpush1.bf16.msra.mxu0 0
    %233 = vmatprep.subr.bf16.mxu0 0
    %234 = vmatpush1.bf16.msra.mxu0 0
    %235 = vmatprep.subr.bf16.mxu0 0
    %236 = vmatpush1.bf16.msra.mxu0 0
    %237 = vmatprep.subr.bf16.mxu0 0
    %238 = vmatpush1.bf16.msra.mxu0 0
    %239 = vmatprep.subr.bf16.mxu0 0
    %240 = vmatpush1.bf16.msra.mxu0 0
    %241 = vmatprep.subr.bf16.mxu0 0
    %242 = vmatpush1.bf16.msra.mxu0 0
    %243 = vmatprep.subr.bf16.mxu0 0
    %244 = vmatpush1.bf16.msra.mxu0 0
    %245 = vmatprep.subr.bf16.mxu0 0
    %246 = vmatpush1.bf16.msra.mxu0 0
    %247 = vmatprep.subr.bf16.mxu0 0
    %248 = vmatpush1.bf16.msra.mxu0 0
    %249 = vmatprep.subr.bf16.mxu0 0
    %250 = vmatpush1.bf16.msra.mxu0 0
    %251 = vmatprep.subr.bf16.mxu0 0
    %252 = vmatpush1.bf16.msra.mxu0 0
    %253 = vmatprep.subr.bf16.mxu0 0
    %254 = vmatpush1.bf16.msra.mxu0 0
    %255 = vmatprep.subr.bf16.mxu0 0
    %256 = vmatpush1.bf16.msra.mxu0 0
    %257 = vmatprep.subr.bf16.mxu0 0
    %258 = vmatpush1.bf16.msra.mxu0 0
    %259 = vmatprep.mubr.bf16.mxu0 0
    %260 = vmatmul.mubr.bf16.gmra.mrb[0].mxu0 %v215
    %v261 = vpop.f32.mrb[0].mxu0
    %v262 = vadd.f32 0.0, %v261
    %v263 = vpop.f32.mrb[0].mxu0
    %v264 = vadd.f32 0.0, %v263
    %v265 = vpop.f32.mrb[0].mxu0
    %v266 = vadd.f32 0.0, %v265
    %v267 = vpop.f32.mrb[0].mxu0
    %v268 = vadd.f32 0.0, %v267
    %269 = vdwg.mxu0
    %v270 = vld [vmem:[#allocation7] sm:$0x3]
    %v272 = vlaneseq
    %v273 = vshrl.u32 %v272, 7
    %v274 = vsub.s32 0, %v273
    %v275 = vrot.slane %v270, %v274
    %v276 = vlaneseq
    %v277 = vshrl.u32 %v276, 7
    %v278 = vsub.s32 1, %v277
    %v279 = vrot.slane %v270, %v278
    %v282 = vmul.f32 %v262, %v275
    %v283 = vmul.f32 %v264, %v279
    %v284 = vmul.f32 %v266, %v275
    %v285 = vmul.f32 %v268, %v279
    %v286 = vld [vmem:[#allocation9] sm:$0x3]
    %v288 = vlaneseq
    %v289 = vshrl.u32 %v288, 7
    %v290 = vsub.s32 0, %v289
    %v291 = vrot.slane %v286, %v290
    %v292 = vlaneseq
    %v293 = vshrl.u32 %v292, 7
    %v294 = vsub.s32 1, %v293
    %v295 = vrot.slane %v286, %v294
    %v298 = vadd.f32 %v282, %v291
    %v299 = vadd.f32 %v283, %v295
    %v300 = vadd.f32 %v284, %v291
    %v301 = vadd.f32 %v285, %v295
    %v302 = vmax.f32 %v298, 0.0
    %v303 = vmax.f32 %v299, 0.0
    %v304 = vmax.f32 %v300, 0.0
    %v305 = vmax.f32 %v301, 0.0
    %v306 = vpack.c.bf16 %v304, %v302
    %v307 = vpack.c.bf16 %v305, %v303
    %v310 = vcombine.low %v306, %v307
    %v311 = vcombine.high %v306, %v307
    %v313 = vunpack.c.l.s4 1966171168
    %v314 = vunpack.c.0.s8 %v313
    %v315 = vlaneseq
    %v316 = vshrl.u32 %v315, 7
    %v317 = vsub.s32 %v314, %v316
    %v318 = vrot.slane %v310, %v317
    %v320 = vunpack.c.l.s4 1966171168
    %v321 = vunpack.c.0.s8 %v320
    %v322 = vlaneseq
    %v323 = vshrl.u32 %v322, 7
    %v324 = vsub.s32 %v321, %v323
    %v325 = vrot.slane %v311, %v324
    %v326 = vcombine.high %v318, %v318
    %v327 = vcombine.high %v325, %v325
    %v329 = vunpack.c.l.s4 1966171168
    %v330 = vunpack.c.0.s8 %v329
    %v331 = vlaneseq
    %v332 = vshrl.u32 %v331, 7
    %v333 = vsub.s32 %v330, %v332
    %v334 = vrot.slane %v318, %v333
    %v336 = vunpack.c.l.s4 1966171168
    %v337 = vunpack.c.0.s8 %v336
    %v338 = vlaneseq
    %v339 = vshrl.u32 %v338, 7
    %v340 = vsub.s32 %v337, %v339
    %v341 = vrot.slane %v325, %v340
    %v343 = vunpack.c.l.s4 1966171168
    %v344 = vunpack.c.0.s8 %v343
    %v345 = vlaneseq
    %v346 = vshrl.u32 %v345, 7
    %v347 = vsub.s32 %v344, %v346
    %v348 = vrot.slane %v326, %v347
    %v350 = vunpack.c.l.s4 1966171168
    %v351 = vunpack.c.0.s8 %v350
    %v352 = vlaneseq
    %v353 = vshrl.u32 %v352, 7
    %v354 = vsub.s32 %v351, %v353
    %v355 = vrot.slane %v327, %v354
    %v356 = vcombine.high %v334, %v334
    %v357 = vcombine.high %v348, %v348
    %v358 = vld [vmem:[#allocation4] sm:$0xf]
    %v359 = vld [vmem:[#allocation4 + $0x4] sm:$0xf]
    %v360 = vld [vmem:[#allocation4 + $0x8] sm:$0xf]
    %v361 = vld [vmem:[#allocation4 + $0xc] sm:$0xf]
    %v362 = vld [vmem:[#allocation4 + $0x10] sm:$0xf]
    %v363 = vld [vmem:[#allocation4 + $0x14] sm:$0xf]
    %v364 = vld [vmem:[#allocation4 + $0x18] sm:$0xf]
    %v365 = vld [vmem:[#allocation4 + $0x1c] sm:$0xf]
    %v366 = vld [vmem:[#allocation4 + $0x20] sm:$0xf]
    %v367 = vld [vmem:[#allocation4 + $0x24] sm:$0xf]
    %v368 = vld [vmem:[#allocation4 + $0x28] sm:$0xf]
    %v369 = vld [vmem:[#allocation4 + $0x2c] sm:$0xf]
    %v370 = vld [vmem:[#allocation4 + $0x30] sm:$0xf]
    %v371 = vld [vmem:[#allocation4 + $0x34] sm:$0xf]
    %v372 = vld [vmem:[#allocation4 + $0x38] sm:$0xf]
    %v373 = vld [vmem:[#allocation4 + $0x3c] sm:$0xf]
    %v374 = vld [vmem:[#allocation4 + $0x40] sm:$0xf]
    %v375 = vld [vmem:[#allocation4 + $0x44] sm:$0xf]
    %v376 = vld [vmem:[#allocation4 + $0x48] sm:$0xf]
    %v377 = vld [vmem:[#allocation4 + $0x4c] sm:$0xf]
    %v378 = vld [vmem:[#allocation4 + $0x50] sm:$0xf]
    %v379 = vld [vmem:[#allocation4 + $0x54] sm:$0xf]
    %v380 = vld [vmem:[#allocation4 + $0x58] sm:$0xf]
    %v381 = vld [vmem:[#allocation4 + $0x5c] sm:$0xf]
    %v382 = vld [vmem:[#allocation4 + $0x60] sm:$0xf]
    %v383 = vld [vmem:[#allocation4 + $0x64] sm:$0xf]
    %v384 = vld [vmem:[#allocation4 + $0x68] sm:$0xf]
    %v385 = vld [vmem:[#allocation4 + $0x6c] sm:$0xf]
    %v386 = vld [vmem:[#allocation4 + $0x70] sm:$0xf]
    %v387 = vld [vmem:[#allocation4 + $0x74] sm:$0xf]
    %v388 = vld [vmem:[#allocation4 + $0x78] sm:$0xf]
    %v389 = vld [vmem:[#allocation4 + $0x7c] sm:$0xf]
    %v390 = vld [vmem:[#allocation4 + $0x80] sm:$0xf]
    %v391 = vld [vmem:[#allocation4 + $0x84] sm:$0xf]
    %v392 = vld [vmem:[#allocation4 + $0x88] sm:$0xf]
    %v393 = vld [vmem:[#allocation4 + $0x8c] sm:$0xf]
    %v394 = vcombine.low %v334, %v348
    %v396 = vunpack.c.l.s4 1966171168
    %v397 = vunpack.c.0.s8 %v396
    %v398 = vlaneseq
    %v399 = vshrl.u32 %v398, 7
    %v400 = vsub.s32 %v397, %v399
    %v401 = vrot.slane %v394, %v400
    %v403 = vunpack.c.l.s4 1966171168
    %v404 = vunpack.c.0.s8 %v403
    %v405 = vlaneseq
    %v406 = vshrl.u32 %v405, 7
    %v407 = vsub.s32 %v404, %v406
    %v408 = vrot.slane %v356, %v407
    %v409 = vcombine.low %v401, %v408
    %v410 = vcombine.high %v401, %v408
    %v412 = vunpack.c.l.s4 1966171168
    %v413 = vunpack.c.0.s8 %v412
    %v414 = vlaneseq
    %v415 = vshrl.u32 %v414, 7
    %v416 = vsub.s32 %v413, %v415
    %v417 = vrot.slane %v409, %v416
    %v419 = vunpack.c.l.s4 1966171168
    %v420 = vunpack.c.0.s8 %v419
    %v421 = vlaneseq
    %v422 = vshrl.u32 %v421, 7
    %v423 = vsub.s32 %v420, %v422
    %v424 = vrot.slane %v410, %v423
    %v425 = vcombine.low %v357, %v341
    %v427 = vunpack.c.l.s4 1966171168
    %v428 = vunpack.c.0.s8 %v427
    %v429 = vlaneseq
    %v430 = vshrl.u32 %v429, 7
    %v431 = vsub.s32 %v428, %v430
    %v432 = vrot.slane %v425, %v431
    %v434 = vunpack.c.l.s4 1966171168
    %v435 = vunpack.c.0.s8 %v434
    %v436 = vlaneseq
    %v437 = vshrl.u32 %v436, 7
    %v438 = vsub.s32 %v435, %v437
    %v439 = vrot.slane %v355, %v438
    %v440 = vcombine.low %v432, %v439
    %v441 = vcombine.high %v432, %v439
    %v443 = vunpack.c.l.s4 1966171168
    %v444 = vunpack.c.0.s8 %v443
    %v445 = vlaneseq
    %v446 = vshrl.u32 %v445, 7
    %v447 = vsub.s32 %v444, %v446
    %v448 = vrot.slane %v440, %v447
    %v450 = vunpack.c.l.s4 1966171168
    %v451 = vunpack.c.0.s8 %v450
    %v452 = vlaneseq
    %v453 = vshrl.u32 %v452, 7
    %v454 = vsub.s32 %v451, %v453
    %v455 = vrot.slane %v441, %v454
    %v457 = vshrl.u32 %v417, 16
    %v459 = vrot.slane %v457, 7
    %v460 = vshll.u32 %v417, 16
    %v462 = vor.u32 %v459, %v460
    %v464 = vshrl.u32 %v424, 16
    %v466 = vrot.slane %v464, 7
    %v467 = vshll.u32 %v424, 16
    %v469 = vor.u32 %v466, %v467
    %v471 = vshrl.u32 %v448, 16
    %v473 = vrot.slane %v471, 7
    %v474 = vshll.u32 %v448, 16
    %v476 = vor.u32 %v473, %v474
    %v478 = vshrl.u32 %v455, 16
    %v480 = vrot.slane %v478, 7
    %v481 = vshll.u32 %v455, 16
    %v483 = vor.u32 %v480, %v481
    %484 = vrot.lane.b32.xlu0 %v462, 64
    %v485 = vpop.permute.xlu0 %484
    %486 = vrot.lane.b32.xlu0 %v469, 64
    %v487 = vpop.permute.xlu0 %486
    %488 = vrot.lane.b32.xlu0 %v476, 64
    %v489 = vpop.permute.xlu0 %488
    %490 = vrot.lane.b32.xlu0 %v483, 64
    %v491 = vpop.permute.xlu0 %490
    %vm492 = vcmask 523264
    %v493 = vsel %vm492, %v485, %v487
    %v494 = vsel %vm492, %v489, %v491
    %vm497 = vcmask 1040384
    %vm498 = vsmask.f32 256
    %vm499 = vmand %vm497, %vm498
    %v500 = vsel %vm499, 0, %v493
    %v501 = vsel %vm499, 0, %v494
    %vm502 = vcmask 1043456
    %vm503 = vsmask.f32 3328
    %vm504 = vmand %vm502, %vm503
    %v505 = vsel %vm504, %v500, 0
    %v506 = vsel %vm504, %v501, 0
    %v508 = vshrl.u32 %v505, 16
    %v510 = vshll.u32 %v505, 16
    %v512 = vrot.slane %v510, 1
    %v513 = vor.u32 %v508, %v512
    %v515 = vshrl.u32 %v506, 16
    %v517 = vshll.u32 %v506, 16
    %v519 = vrot.slane %v517, 1
    %v520 = vor.u32 %v515, %v519
    %521 = vrot.lane.b32.xlu0 %v513, 96
    %v522 = vpop.permute.xlu0 %521
    %523 = vrot.lane.b32.xlu0 %v520, 96
    %v524 = vpop.permute.xlu0 %523
    %v527 = vrot.slane %v505, 1
    %v528 = vrot.slane %v506, 1
    %529 = vrot.lane.b32.xlu0 %v527, 64
    %v530 = vpop.permute.xlu0 %529
    %531 = vrot.lane.b32.xlu0 %v528, 64
    %v532 = vpop.permute.xlu0 %531
    %vm533 = vcmask 785408
    %v535 = vsel %vm533, %v505, %v522
    %v537 = vsel %vm533, %v506, %v524
    %vm538 = vcmask 523264
    %v540 = vsel %vm538, %v522, %v530
    %v542 = vsel %vm538, %v524, %v532
    %v547 = vcombine.low %v535, %v540
    %v549 = vunpack.c.l.s4 1966171168
    %v550 = vunpack.c.0.s8 %v549
    %v551 = vlaneseq
    %v552 = vshrl.u32 %v551, 7
    %v553 = vsub.s32 %v550, %v552
    %v554 = vrot.slane %v547, %v553
    %v556 = vunpack.c.l.s4 1966171168
    %v557 = vunpack.c.0.s8 %v556
    %v558 = vlaneseq
    %v559 = vshrl.u32 %v558, 7
    %v560 = vsub.s32 %v557, %v559
    %v561 = vrot.slane %v530, %v560
    %v562 = vcombine.low %v554, %v561
    %v563 = vcombine.high %v554, %v561
    %v565 = vunpack.c.l.s4 1966171168
    %v566 = vunpack.c.0.s8 %v565
    %v567 = vlaneseq
    %v568 = vshrl.u32 %v567, 7
    %v569 = vsub.s32 %v566, %v568
    %v570 = vrot.slane %v562, %v569
    %v572 = vunpack.c.l.s4 1966171168
    %v573 = vunpack.c.0.s8 %v572
    %v574 = vlaneseq
    %v575 = vshrl.u32 %v574, 7
    %v576 = vsub.s32 %v573, %v575
    %v577 = vrot.slane %v563, %v576
    %v578 = vcombine.high %v570, %v570
    %v579 = vcombine.low %v537, %v542
    %v581 = vunpack.c.l.s4 1966171168
    %v582 = vunpack.c.0.s8 %v581
    %v583 = vlaneseq
    %v584 = vshrl.u32 %v583, 7
    %v585 = vsub.s32 %v582, %v584
    %v586 = vrot.slane %v579, %v585
    %v588 = vunpack.c.l.s4 1966171168
    %v589 = vunpack.c.0.s8 %v588
    %v590 = vlaneseq
    %v591 = vshrl.u32 %v590, 7
    %v592 = vsub.s32 %v589, %v591
    %v593 = vrot.slane %v532, %v592
    %v594 = vcombine.low %v586, %v593
    %v595 = vcombine.high %v586, %v593
    %v597 = vunpack.c.l.s4 1966171168
    %v598 = vunpack.c.0.s8 %v597
    %v599 = vlaneseq
    %v600 = vshrl.u32 %v599, 7
    %v601 = vsub.s32 %v598, %v600
    %v602 = vrot.slane %v594, %v601
    %v604 = vunpack.c.l.s4 1966171168
    %v605 = vunpack.c.0.s8 %v604
    %v606 = vlaneseq
    %v607 = vshrl.u32 %v606, 7
    %v608 = vsub.s32 %v605, %v607
    %v609 = vrot.slane %v595, %v608
    %v610 = vcombine.high %v602, %v602
    %v611 = vcombine.low %v570, %v577
    %v612 = vcombine.low %v578, %v602
    %v613 = vcombine.low %v609, %v610
    %v615 = vunpack.c.l.s4 1966171168
    %v616 = vunpack.c.0.s8 %v615
    %v617 = vlaneseq
    %v618 = vshrl.u32 %v617, 7
    %v619 = vsub.s32 %v616, %v618
    %v620 = vrot.slane %v611, %v619
    %v622 = vunpack.c.l.s4 1966171168
    %v623 = vunpack.c.0.s8 %v622
    %v624 = vlaneseq
    %v625 = vshrl.u32 %v624, 7
    %v626 = vsub.s32 %v623, %v625
    %v627 = vrot.slane %v612, %v626
    %v629 = vunpack.c.l.s4 1966171168
    %v630 = vunpack.c.0.s8 %v629
    %v631 = vlaneseq
    %v632 = vshrl.u32 %v631, 7
    %v633 = vsub.s32 %v630, %v632
    %v634 = vrot.slane %v613, %v633
    %v635 = vcombine.low %v620, %v627
    %v636 = vcombine.high %v620, %v627
    %v637 = vcombine.high %v634, %v634
    %v639 = vunpack.c.l.s4 1966171168
    %v640 = vunpack.c.0.s8 %v639
    %v641 = vlaneseq
    %v642 = vshrl.u32 %v641, 7
    %v643 = vsub.s32 %v640, %v642
    %v644 = vrot.slane %v635, %v643
    %v646 = vunpack.c.l.s4 1966171168
    %v647 = vunpack.c.0.s8 %v646
    %v648 = vlaneseq
    %v649 = vshrl.u32 %v648, 7
    %v650 = vsub.s32 %v647, %v649
    %v651 = vrot.slane %v636, %v650
    %v653 = vunpack.c.l.s4 1966171168
    %v654 = vunpack.c.0.s8 %v653
    %v655 = vlaneseq
    %v656 = vshrl.u32 %v655, 7
    %v657 = vsub.s32 %v654, %v656
    %v658 = vrot.slane %v634, %v657
    %v660 = vunpack.c.l.s4 1966171168
    %v661 = vunpack.c.0.s8 %v660
    %v662 = vlaneseq
    %v663 = vshrl.u32 %v662, 7
    %v664 = vsub.s32 %v661, %v663
    %v665 = vrot.slane %v637, %v664
    %v666 = vcombine.low %v644, %v658
    %v667 = vcombine.high %v644, %v658
    %v668 = vcombine.low %v651, %v665
    %v707 = vunpack.c.l.b16 %v358
    %v708 = vunpack.c.l.b16 %v359
    %v709 = vunpack.c.l.b16 %v360
    %v710 = vunpack.c.l.b16 %v361
    %v711 = vunpack.c.l.b16 %v362
    %v712 = vunpack.c.l.b16 %v363
    %v713 = vunpack.c.l.b16 %v364
    %v714 = vunpack.c.l.b16 %v365
    %v715 = vunpack.c.l.b16 %v366
    %v716 = vunpack.c.l.b16 %v367
    %v717 = vunpack.c.l.b16 %v368
    %v718 = vunpack.c.l.b16 %v369
    %v719 = vunpack.c.l.b16 %v370
    %v720 = vunpack.c.l.b16 %v371
    %v721 = vunpack.c.l.b16 %v372
    %v722 = vunpack.c.l.b16 %v373
    %v723 = vunpack.c.l.b16 %v374
    %v724 = vunpack.c.l.b16 %v375
    %v725 = vunpack.c.l.b16 %v376
    %v726 = vunpack.c.l.b16 %v377
    %v727 = vunpack.c.l.b16 %v378
    %v728 = vunpack.c.l.b16 %v379
    %v729 = vunpack.c.l.b16 %v380
    %v730 = vunpack.c.l.b16 %v381
    %v731 = vunpack.c.l.b16 %v382
    %v732 = vunpack.c.l.b16 %v383
    %v733 = vunpack.c.l.b16 %v384
    %v734 = vunpack.c.l.b16 %v385
    %v735 = vunpack.c.l.b16 %v386
    %v736 = vunpack.c.l.b16 %v387
    %v737 = vunpack.c.l.b16 %v388
    %v738 = vunpack.c.l.b16 %v389
    %v739 = vunpack.c.l.b16 %v390
    %v740 = vunpack.c.l.b16 %v391
    %v741 = vunpack.c.l.b16 %v392
    %v742 = vunpack.c.l.b16 %v393
    %v743 = vpack.c.b16 %v708, %v707
    %v744 = vpack.c.b16 %v710, %v709
    %v745 = vpack.c.b16 %v712, %v711
    %v746 = vpack.c.b16 %v714, %v713
    %v747 = vpack.c.b16 %v716, %v715
    %v748 = vpack.c.b16 %v718, %v717
    %v749 = vpack.c.b16 %v720, %v719
    %v750 = vpack.c.b16 %v722, %v721
    %v751 = vpack.c.b16 %v724, %v723
    %v752 = vpack.c.b16 %v726, %v725
    %v753 = vpack.c.b16 %v728, %v727
    %v754 = vpack.c.b16 %v730, %v729
    %v755 = vpack.c.b16 %v732, %v731
    %v756 = vpack.c.b16 %v734, %v733
    %v757 = vpack.c.b16 %v736, %v735
    %v758 = vpack.c.b16 %v738, %v737
    %v759 = vpack.c.b16 %v740, %v739
    %v760 = vpack.c.b16 %v742, %v741
    %vm779 = vcmask 261120
    %v781 = vsel %vm779, %v667, 0
    %783 = vmatprep.subr.bf16.mxu0 0
    %784 = vmatpush1.bf16.msra.mxu0 %v743
    %785 = vmatprep.subr.bf16.mxu0 0
    %786 = vmatpush1.bf16.msra.mxu0 %v744
    %787 = vmatprep.subr.bf16.mxu0 0
    %788 = vmatpush1.bf16.msra.mxu0 %v745
    %789 = vmatprep.subr.bf16.mxu0 0
    %790 = vmatpush1.bf16.msra.mxu0 %v746
    %791 = vmatprep.subr.bf16.mxu0 0
    %792 = vmatpush1.bf16.msra.mxu0 %v747
    %793 = vmatprep.subr.bf16.mxu0 0
    %794 = vmatpush1.bf16.msra.mxu0 %v748
    %795 = vmatprep.subr.bf16.mxu0 0
    %796 = vmatpush1.bf16.msra.mxu0 %v749
    %797 = vmatprep.subr.bf16.mxu0 0
    %798 = vmatpush1.bf16.msra.mxu0 %v750
    %799 = vmatprep.subr.bf16.mxu0 0
    %800 = vmatpush1.bf16.msra.mxu0 %v751
    %801 = vmatprep.subr.bf16.mxu0 0
    %802 = vmatpush1.bf16.msra.mxu0 %v752
    %803 = vmatprep.subr.bf16.mxu0 0
    %804 = vmatpush1.bf16.msra.mxu0 %v753
    %805 = vmatprep.subr.bf16.mxu0 0
    %806 = vmatpush1.bf16.msra.mxu0 %v754
    %807 = vmatprep.subr.bf16.mxu0 0
    %808 = vmatpush1.bf16.msra.mxu0 %v755
    %809 = vmatprep.subr.bf16.mxu0 0
    %810 = vmatpush1.bf16.msra.mxu0 %v756
    %811 = vmatprep.subr.bf16.mxu0 0
    %812 = vmatpush1.bf16.msra.mxu0 %v757
    %813 = vmatprep.subr.bf16.mxu0 0
    %814 = vmatpush1.bf16.msra.mxu0 %v758
    %815 = vmatprep.mubr.bf16.mxu0 %v668
    %816 = vmatmul.mubr.bf16.gmra.mrb[0].mxu0 %v666
    %v817 = vpop.f32.mrb[0].mxu0
    %v818 = vadd.f32 0.0, %v817
    %v819 = vpop.f32.mrb[0].mxu0
    %v820 = vpop.f32.mrb[0].mxu0
    %v821 = vadd.f32 0.0, %v820
    %v822 = vpop.f32.mrb[0].mxu0
    %823 = vdwg.mxu0
    %824 = vmatprep.subr.bf16.mxu0 0
    %825 = vmatpush1.bf16.msra.mxu0 %v759
    %826 = vmatprep.subr.bf16.mxu0 0
    %827 = vmatpush1.bf16.msra.mxu0 %v760
    %828 = vmatprep.subr.bf16.mxu0 0
    %829 = vmatpush1.bf16.msra.mxu0 0
    %830 = vmatprep.subr.bf16.mxu0 0
    %831 = vmatpush1.bf16.msra.mxu0 0
    %832 = vmatprep.subr.bf16.mxu0 0
    %833 = vmatpush1.bf16.msra.mxu0 0
    %834 = vmatprep.subr.bf16.mxu0 0
    %835 = vmatpush1.bf16.msra.mxu0 0
    %836 = vmatprep.subr.bf16.mxu0 0
    %837 = vmatpush1.bf16.msra.mxu0 0
    %838 = vmatprep.subr.bf16.mxu0 0
    %839 = vmatpush1.bf16.msra.mxu0 0
    %840 = vmatprep.subr.bf16.mxu0 0
    %841 = vmatpush1.bf16.msra.mxu0 0
    %842 = vmatprep.subr.bf16.mxu0 0
    %843 = vmatpush1.bf16.msra.mxu0 0
    %844 = vmatprep.subr.bf16.mxu0 0
    %845 = vmatpush1.bf16.msra.mxu0 0
    %846 = vmatprep.subr.bf16.mxu0 0
    %847 = vmatpush1.bf16.msra.mxu0 0
    %848 = vmatprep.subr.bf16.mxu0 0
    %849 = vmatpush1.bf16.msra.mxu0 0
    %850 = vmatprep.subr.bf16.mxu0 0
    %851 = vmatpush1.bf16.msra.mxu0 0
    %852 = vmatprep.subr.bf16.mxu0 0
    %853 = vmatpush1.bf16.msra.mxu0 0
    %854 = vmatprep.subr.bf16.mxu0 0
    %855 = vmatpush1.bf16.msra.mxu0 0
    %856 = vmatprep.mubr.bf16.mxu0 0
    %857 = vmatmul.mubr.bf16.gmra.mrb[0].mxu0 %v781
    %v858 = vpop.f32.mrb[0].mxu0
    %v859 = vadd.f32 %v818, %v858
    %v860 = vpop.f32.mrb[0].mxu0
    %v861 = vpop.f32.mrb[0].mxu0
    %v862 = vadd.f32 %v821, %v861
    %v863 = vpop.f32.mrb[0].mxu0
    %864 = vdwg.mxu0
    %v865 = vld [vmem:[#allocation10] sm:$0x1]
    %v867 = vlaneseq
    %v868 = vshrl.u32 %v867, 7
    %v869 = vsub.s32 0, %v868
    %v870 = vrot.slane %v865, %v869
    %v872 = vmul.f32 %v859, %v870
    %v873 = vmul.f32 %v862, %v870
    %v874 = vld [vmem:[#allocation12] sm:$0x1]
    %v876 = vlaneseq
    %v877 = vshrl.u32 %v876, 7
    %v878 = vsub.s32 0, %v877
    %v879 = vrot.slane %v874, %v878
    %v881 = vadd.f32 %v872, %v879
    %v882 = vadd.f32 %v873, %v879
    %v883 = vmax.f32 %v881, 0.0
    %v884 = vmax.f32 %v882, 0.0
    %v885 = vcombine.high %v307, %v307
    %v887 = vunpack.c.l.s4 1966171168
    %v888 = vunpack.c.0.s8 %v887
    %v889 = vlaneseq
    %v890 = vshrl.u32 %v889, 7
    %v891 = vsub.s32 %v888, %v890
    %v892 = vrot.slane %v307, %v891
    %v894 = vunpack.c.l.s4 1966171168
    %v895 = vunpack.c.0.s8 %v894
    %v896 = vlaneseq
    %v897 = vshrl.u32 %v896, 7
    %v898 = vsub.s32 %v895, %v897
    %v899 = vrot.slane %v885, %v898
    %v900 = vcombine.high %v892, %v892
    %v901 = vcombine.high %v899, %v899
    %v903 = vunpack.c.l.s4 1966171168
    %v904 = vunpack.c.0.s8 %v903
    %v905 = vlaneseq
    %v906 = vshrl.u32 %v905, 7
    %v907 = vsub.s32 %v904, %v906
    %v908 = vrot.slane %v892, %v907
    %v910 = vunpack.c.l.s4 1966171168
    %v911 = vunpack.c.0.s8 %v910
    %v912 = vlaneseq
    %v913 = vshrl.u32 %v912, 7
    %v914 = vsub.s32 %v911, %v913
    %v915 = vrot.slane %v899, %v914
    %v917 = vunpack.c.l.s4 1966171168
    %v918 = vunpack.c.0.s8 %v917
    %v919 = vlaneseq
    %v920 = vshrl.u32 %v919, 7
    %v921 = vsub.s32 %v918, %v920
    %v922 = vrot.slane %v900, %v921
    %v924 = vunpack.c.l.s4 1966171168
    %v925 = vunpack.c.0.s8 %v924
    %v926 = vlaneseq
    %v927 = vshrl.u32 %v926, 7
    %v928 = vsub.s32 %v925, %v927
    %v929 = vrot.slane %v901, %v928
    %v930 = vcombine.high %v908, %v908
    %v931 = vcombine.high %v922, %v922
    %v932 = vld [vmem:[%s3] sm:$0xf]
    %v933 = vld [vmem:[%s3 + $0x4] sm:$0xf]
    %v934 = vld [vmem:[%s3 + $0x8] sm:$0xf]
    %v935 = vld [vmem:[%s3 + $0xc] sm:$0xf]
    %v936 = vld [vmem:[%s3 + $0x10] sm:$0xf]
    %v937 = vld [vmem:[%s3 + $0x14] sm:$0xf]
    %v938 = vld [vmem:[%s3 + $0x18] sm:$0xf]
    %v939 = vld [vmem:[%s3 + $0x1c] sm:$0xf]
    %v940 = vld [vmem:[%s3 + $0x20] sm:$0xf]
    %v941 = vld [vmem:[%s3 + $0x24] sm:$0xf]
    %v942 = vld [vmem:[%s3 + $0x28] sm:$0xf]
    %v943 = vld [vmem:[%s3 + $0x2c] sm:$0xf]
    %v944 = vld [vmem:[%s3 + $0x30] sm:$0xf]
    %v945 = vld [vmem:[%s3 + $0x34] sm:$0xf]
    %v946 = vcombine.low %v908, %v922
    %v948 = vunpack.c.l.s4 1966171168
    %v949 = vunpack.c.0.s8 %v948
    %v950 = vlaneseq
    %v951 = vshrl.u32 %v950, 7
    %v952 = vsub.s32 %v949, %v951
    %v953 = vrot.slane %v946, %v952
    %v955 = vunpack.c.l.s4 1966171168
    %v956 = vunpack.c.0.s8 %v955
    %v957 = vlaneseq
    %v958 = vshrl.u32 %v957, 7
    %v959 = vsub.s32 %v956, %v958
    %v960 = vrot.slane %v930, %v959
    %v961 = vcombine.low %v953, %v960
    %v963 = vunpack.c.l.s4 1966171168
    %v964 = vunpack.c.0.s8 %v963
    %v965 = vlaneseq
    %v966 = vshrl.u32 %v965, 7
    %v967 = vsub.s32 %v964, %v966
    %v968 = vrot.slane %v961, %v967
    %v969 = vcombine.low %v931, %v915
    %v971 = vunpack.c.l.s4 1966171168
    %v972 = vunpack.c.0.s8 %v971
    %v973 = vlaneseq
    %v974 = vshrl.u32 %v973, 7
    %v975 = vsub.s32 %v972, %v974
    %v976 = vrot.slane %v969, %v975
    %v978 = vunpack.c.l.s4 1966171168
    %v979 = vunpack.c.0.s8 %v978
    %v980 = vlaneseq
    %v981 = vshrl.u32 %v980, 7
    %v982 = vsub.s32 %v979, %v981
    %v983 = vrot.slane %v929, %v982
    %v984 = vcombine.low %v976, %v983
    %v986 = vunpack.c.l.s4 1966171168
    %v987 = vunpack.c.0.s8 %v986
    %v988 = vlaneseq
    %v989 = vshrl.u32 %v988, 7
    %v990 = vsub.s32 %v987, %v989
    %v991 = vrot.slane %v984, %v990
    %v993 = vshrl.u32 %v968, 16
    %v995 = vrot.slane %v993, 6
    %v996 = vshll.u32 %v968, 16
    %v998 = vrot.slane %v996, 7
    %v999 = vor.u32 %v995, %v998
    %v1001 = vshrl.u32 %v991, 16
    %v1003 = vrot.slane %v1001, 6
    %v1004 = vshll.u32 %v991, 16
    %v1006 = vrot.slane %v1004, 7
    %v1007 = vor.u32 %v1003, %v1006
    %1008 = vrot.lane.b32.xlu0 %v999, 96
    %v1009 = vpop.permute.xlu0 %1008
    %1010 = vrot.lane.b32.xlu0 %v1007, 96
    %v1011 = vpop.permute.xlu0 %1010
    %vm1014 = vcmask 1041408
    %vm1015 = vsmask.f32 1280
    %vm1016 = vmand %vm1014, %vm1015
    %v1017 = vsel %vm1016, 0, %v1009
    %v1018 = vsel %vm1016, 0, %v1011
    %vm1019 = vcmask 1044480
    %vm1020 = vsmask.f32 4352
    %vm1021 = vmand %vm1019, %vm1020
    %v1022 = vsel %vm1021, %v1017, 0
    %v1023 = vsel %vm1021, %v1018, 0
    %v1025 = vshrl.u32 %v1022, 16
    %v1027 = vshll.u32 %v1022, 16
    %v1029 = vrot.slane %v1027, 1
    %v1030 = vor.u32 %v1025, %v1029
    %v1032 = vshrl.u32 %v1023, 16
    %v1034 = vshll.u32 %v1023, 16
    %v1036 = vrot.slane %v1034, 1
    %v1037 = vor.u32 %v1032, %v1036
    %1038 = vrot.lane.b32.xlu0 %v1030, 16
    %v1039 = vpop.permute.xlu0 %1038
    %1040 = vrot.lane.b32.xlu0 %v1037, 16
    %v1041 = vpop.permute.xlu0 %1040
    %v1044 = vrot.slane %v1022, 1
    %v1045 = vrot.slane %v1023, 1
    %1046 = vrot.lane.b32.xlu0 %v1044, 32
    %v1047 = vpop.permute.xlu0 %1046
    %1048 = vrot.lane.b32.xlu0 %v1045, 32
    %v1049 = vpop.permute.xlu0 %1048
    %v1050 = vrot.slane %v1025, 1
    %v1051 = vrot.slane %v1027, 2
    %v1052 = vor.u32 %v1050, %v1051
    %v1053 = vrot.slane %v1032, 1
    %v1054 = vrot.slane %v1034, 2
    %v1055 = vor.u32 %v1053, %v1054
    %1056 = vrot.lane.b32.xlu0 %v1052, 48
    %v1057 = vpop.permute.xlu0 %1056
    %1058 = vrot.lane.b32.xlu0 %v1055, 48
    %v1059 = vpop.permute.xlu0 %1058
    %v1060 = vrot.slane %v1022, 2
    %v1061 = vrot.slane %v1023, 2
    %1062 = vrot.lane.b32.xlu0 %v1060, 64
    %v1063 = vpop.permute.xlu0 %1062
    %1064 = vrot.lane.b32.xlu0 %v1061, 64
    %v1065 = vpop.permute.xlu0 %1064
    %v1066 = vrot.slane %v1025, 2
    %v1067 = vrot.slane %v1027, 3
    %v1068 = vor.u32 %v1066, %v1067
    %v1069 = vrot.slane %v1032, 2
    %v1070 = vrot.slane %v1034, 3
    %v1071 = vor.u32 %v1069, %v1070
    %1072 = vrot.lane.b32.xlu0 %v1068, 80
    %v1073 = vpop.permute.xlu0 %1072
    %1074 = vrot.lane.b32.xlu0 %v1071, 80
    %v1075 = vpop.permute.xlu0 %1074
    %v1076 = vrot.slane %v1022, 3
    %v1077 = vrot.slane %v1023, 3
    %1078 = vrot.lane.b32.xlu0 %v1076, 96
    %v1079 = vpop.permute.xlu0 %1078
    %1080 = vrot.lane.b32.xlu0 %v1077, 96
    %v1081 = vpop.permute.xlu0 %1080
    %vm1082 = vcmask 130048
    %v1084 = vsel %vm1082, %v1022, %v1039
    %v1086 = vsel %vm1082, %v1023, %v1041
    %v1088 = vsel %vm779, %v1084, %v1047
    %v1090 = vsel %vm779, %v1086, %v1049
    %vm1091 = vcmask 392192
    %v1093 = vsel %vm1091, %v1088, %v1057
    %v1095 = vsel %vm1091, %v1090, %v1059
    %v1097 = vsel %vm538, %v1093, %v1063
    %v1099 = vsel %vm538, %v1095, %v1065
    %vm1100 = vcmask 654336
    %v1102 = vsel %vm1100, %v1097, %v1073
    %v1104 = vsel %vm1100, %v1099, %v1075
    %v1106 = vsel %vm533, %v1102, %v1079
    %v1108 = vsel %vm533, %v1104, %v1081
    %v1112 = vunpack.c.l.s4 1966171168
    %v1113 = vunpack.c.0.s8 %v1112
    %v1114 = vlaneseq
    %v1115 = vshrl.u32 %v1114, 7
    %v1116 = vsub.s32 %v1113, %v1115
    %v1117 = vrot.slane %v1106, %v1116
    %v1118 = vcombine.high %v1117, %v1117
    %v1120 = vunpack.c.l.s4 1966171168
    %v1121 = vunpack.c.0.s8 %v1120
    %v1122 = vlaneseq
    %v1123 = vshrl.u32 %v1122, 7
    %v1124 = vsub.s32 %v1121, %v1123
    %v1125 = vrot.slane %v1117, %v1124
    %v1127 = vunpack.c.l.s4 1966171168
    %v1128 = vunpack.c.0.s8 %v1127
    %v1129 = vlaneseq
    %v1130 = vshrl.u32 %v1129, 7
    %v1131 = vsub.s32 %v1128, %v1130
    %v1132 = vrot.slane %v1118, %v1131
    %v1133 = vcombine.high %v1125, %v1125
    %v1135 = vunpack.c.l.s4 1966171168
    %v1136 = vunpack.c.0.s8 %v1135
    %v1137 = vlaneseq
    %v1138 = vshrl.u32 %v1137, 7
    %v1139 = vsub.s32 %v1136, %v1138
    %v1140 = vrot.slane %v1108, %v1139
    %v1141 = vcombine.high %v1140, %v1140
    %v1143 = vunpack.c.l.s4 1966171168
    %v1144 = vunpack.c.0.s8 %v1143
    %v1145 = vlaneseq
    %v1146 = vshrl.u32 %v1145, 7
    %v1147 = vsub.s32 %v1144, %v1146
    %v1148 = vrot.slane %v1140, %v1147
    %v1150 = vunpack.c.l.s4 1966171168
    %v1151 = vunpack.c.0.s8 %v1150
    %v1152 = vlaneseq
    %v1153 = vshrl.u32 %v1152, 7
    %v1154 = vsub.s32 %v1151, %v1153
    %v1155 = vrot.slane %v1141, %v1154
    %v1156 = vcombine.high %v1148, %v1148
    %v1157 = vcombine.low %v1125, %v1132
    %v1158 = vcombine.low %v1133, %v1148
    %v1159 = vcombine.low %v1155, %v1156
    %v1161 = vunpack.c.l.s4 1966171168
    %v1162 = vunpack.c.0.s8 %v1161
    %v1163 = vlaneseq
    %v1164 = vshrl.u32 %v1163, 7
    %v1165 = vsub.s32 %v1162, %v1164
    %v1166 = vrot.slane %v1157, %v1165
    %v1168 = vunpack.c.l.s4 1966171168
    %v1169 = vunpack.c.0.s8 %v1168
    %v1170 = vlaneseq
    %v1171 = vshrl.u32 %v1170, 7
    %v1172 = vsub.s32 %v1169, %v1171
    %v1173 = vrot.slane %v1158, %v1172
    %v1175 = vunpack.c.l.s4 1966171168
    %v1176 = vunpack.c.0.s8 %v1175
    %v1177 = vlaneseq
    %v1178 = vshrl.u32 %v1177, 7
    %v1179 = vsub.s32 %v1176, %v1178
    %v1180 = vrot.slane %v1159, %v1179
    %v1181 = vcombine.low %v1166, %v1173
    %v1183 = vunpack.c.l.s4 1966171168
    %v1184 = vunpack.c.0.s8 %v1183
    %v1185 = vlaneseq
    %v1186 = vshrl.u32 %v1185, 7
    %v1187 = vsub.s32 %v1184, %v1186
    %v1188 = vrot.slane %v1181, %v1187
    %v1190 = vunpack.c.l.s4 1966171168
    %v1191 = vunpack.c.0.s8 %v1190
    %v1192 = vlaneseq
    %v1193 = vshrl.u32 %v1192, 7
    %v1194 = vsub.s32 %v1191, %v1193
    %v1195 = vrot.slane %v1180, %v1194
    %v1196 = vcombine.low %v1188, %v1195
    %v1211 = vunpack.c.l.b16 %v932
    %v1212 = vunpack.c.l.b16 %v933
    %v1213 = vunpack.c.l.b16 %v934
    %v1214 = vunpack.c.l.b16 %v935
    %v1215 = vunpack.c.l.b16 %v936
    %v1216 = vunpack.c.l.b16 %v937
    %v1217 = vunpack.c.l.b16 %v938
    %v1218 = vunpack.c.l.b16 %v939
    %v1219 = vunpack.c.l.b16 %v940
    %v1220 = vunpack.c.l.b16 %v941
    %v1221 = vunpack.c.l.b16 %v942
    %v1222 = vunpack.c.l.b16 %v943
    %v1223 = vunpack.c.l.b16 %v944
    %v1224 = vunpack.c.l.b16 %v945
    %v1225 = vpack.c.b16 %v1212, %v1211
    %v1226 = vpack.c.b16 %v1214, %v1213
    %v1227 = vpack.c.b16 %v1216, %v1215
    %v1228 = vpack.c.b16 %v1218, %v1217
    %v1229 = vpack.c.b16 %v1220, %v1219
    %v1230 = vpack.c.b16 %v1222, %v1221
    %v1231 = vpack.c.b16 %v1224, %v1223
    %vm1239 = vcmask 916480
    %v1241 = vsel %vm1239, %v1196, 0
    %1243 = vmatprep.subr.bf16.mxu0 0
    %1244 = vmatpush1.bf16.msra.mxu0 %v1225
    %1245 = vmatprep.subr.bf16.mxu0 0
    %1246 = vmatpush1.bf16.msra.mxu0 %v1226
    %1247 = vmatprep.subr.bf16.mxu0 0
    %1248 = vmatpush1.bf16.msra.mxu0 %v1227
    %1249 = vmatprep.subr.bf16.mxu0 0
    %1250 = vmatpush1.bf16.msra.mxu0 %v1228
    %1251 = vmatprep.subr.bf16.mxu0 0
    %1252 = vmatpush1.bf16.msra.mxu0 %v1229
    %1253 = vmatprep.subr.bf16.mxu0 0
    %1254 = vmatpush1.bf16.msra.mxu0 %v1230
    %1255 = vmatprep.subr.bf16.mxu0 0
    %1256 = vmatpush1.bf16.msra.mxu0 %v1231
    %1257 = vmatprep.subr.bf16.mxu0 0
    %1258 = vmatpush1.bf16.msra.mxu0 0
    %1259 = vmatprep.subr.bf16.mxu0 0
    %1260 = vmatpush1.bf16.msra.mxu0 0
    %1261 = vmatprep.subr.bf16.mxu0 0
    %1262 = vmatpush1.bf16.msra.mxu0 0
    %1263 = vmatprep.subr.bf16.mxu0 0
    %1264 = vmatpush1.bf16.msra.mxu0 0
    %1265 = vmatprep.subr.bf16.mxu0 0
    %1266 = vmatpush1.bf16.msra.mxu0 0
    %1267 = vmatprep.subr.bf16.mxu0 0
    %1268 = vmatpush1.bf16.msra.mxu0 0
    %1269 = vmatprep.subr.bf16.mxu0 0
    %1270 = vmatpush1.bf16.msra.mxu0 0
    %1271 = vmatprep.subr.bf16.mxu0 0
    %1272 = vmatpush1.bf16.msra.mxu0 0
    %1273 = vmatprep.subr.bf16.mxu0 0
    %1274 = vmatpush1.bf16.msra.mxu0 0
    %1275 = vmatprep.mubr.bf16.mxu0 0
    %1276 = vmatmul.mubr.bf16.gmra.mrb[0].mxu0 %v1241
    %v1277 = vpop.f32.mrb[0].mxu0
    %v1278 = vadd.f32 0.0, %v1277
    %v1279 = vpop.f32.mrb[0].mxu0
    %v1280 = vpop.f32.mrb[0].mxu0
    %v1281 = vadd.f32 0.0, %v1280
    %v1282 = vpop.f32.mrb[0].mxu0
    %1283 = vdwg.mxu0
    %v1284 = vld [vmem:[#allocation10 + $0x1] sm:$0x1]
    %v1286 = vlaneseq
    %v1287 = vshrl.u32 %v1286, 7
    %v1288 = vsub.s32 0, %v1287
    %v1289 = vrot.slane %v1284, %v1288
    %v1291 = vmul.f32 %v1278, %v1289
    %v1292 = vmul.f32 %v1281, %v1289
    %v1293 = vld [vmem:[#allocation12 + $0x1] sm:$0x1]
    %v1295 = vlaneseq
    %v1296 = vshrl.u32 %v1295, 7
    %v1297 = vsub.s32 0, %v1296
    %v1298 = vrot.slane %v1293, %v1297
    %v1300 = vadd.f32 %v1291, %v1298
    %v1301 = vadd.f32 %v1292, %v1298
    %v1302 = vmax.f32 %v1300, 0.0
    %v1303 = vmax.f32 %v1301, 0.0
    %v1304 = vunpack.c.l.b16 %v117
    %v1305 = vunpack.c.l.b16 %v118
    %v1306 = vpack.c.b16 %v1304, %v1304
    %v1307 = vpack.c.b16 %v1305, %v1305
    %v1309 = vshrl.u32 %v1306, 16
    %v1311 = vrot.slane %v1309, 7
    %v1312 = vshll.u32 %v1306, 16
    %v1314 = vor.u32 %v1311, %v1312
    %v1316 = vshrl.u32 %v1307, 16
    %v1318 = vrot.slane %v1316, 7
    %v1319 = vshll.u32 %v1307, 16
    %v1321 = vor.u32 %v1318, %v1319
    %v1324 = vsel %vm499, 4286644096, %v1314
    %v1325 = vsel %vm499, 4286644096, %v1321
    %v1326 = vsel %vm504, %v1324, 4286644096
    %v1327 = vsel %vm504, %v1325, 4286644096
    %v1329 = vshrl.u32 %v1326, 16
    %v1331 = vshll.u32 %v1326, 16
    %v1333 = vrot.slane %v1331, 1
    %v1334 = vor.u32 %v1329, %v1333
    %v1336 = vshrl.u32 %v1327, 16
    %v1338 = vshll.u32 %v1327, 16
    %v1340 = vrot.slane %v1338, 1
    %v1341 = vor.u32 %v1336, %v1340
    %v1344 = vmax.bf16 %v1326, %v1334
    %v1345 = vmax.bf16 %v1327, %v1341
    %v1348 = vrot.slane %v1326, 1
    %v1349 = vrot.slane %v1327, 1
    %v1352 = vmax.bf16 %v1344, %v1348
    %v1353 = vmax.bf16 %v1345, %v1349
    %v1357 = vunpack.c.l.s4 1966171168
    %v1358 = vunpack.c.0.s8 %v1357
    %v1359 = vlaneseq
    %v1360 = vshrl.u32 %v1359, 7
    %v1361 = vsub.s32 %v1358, %v1360
    %v1362 = vrot.slane %v1352, %v1361
    %v1363 = vcombine.high %v1362, %v1362
    %v1365 = vunpack.c.l.s4 1966171168
    %v1366 = vunpack.c.0.s8 %v1365
    %v1367 = vlaneseq
    %v1368 = vshrl.u32 %v1367, 7
    %v1369 = vsub.s32 %v1366, %v1368
    %v1370 = vrot.slane %v1362, %v1369
    %v1372 = vunpack.c.l.s4 1966171168
    %v1373 = vunpack.c.0.s8 %v1372
    %v1374 = vlaneseq
    %v1375 = vshrl.u32 %v1374, 7
    %v1376 = vsub.s32 %v1373, %v1375
    %v1377 = vrot.slane %v1363, %v1376
    %v1378 = vcombine.high %v1370, %v1370
    %v1380 = vunpack.c.l.s4 1966171168
    %v1381 = vunpack.c.0.s8 %v1380
    %v1382 = vlaneseq
    %v1383 = vshrl.u32 %v1382, 7
    %v1384 = vsub.s32 %v1381, %v1383
    %v1385 = vrot.slane %v1353, %v1384
    %v1386 = vcombine.high %v1385, %v1385
    %v1388 = vunpack.c.l.s4 1966171168
    %v1389 = vunpack.c.0.s8 %v1388
    %v1390 = vlaneseq
    %v1391 = vshrl.u32 %v1390, 7
    %v1392 = vsub.s32 %v1389, %v1391
    %v1393 = vrot.slane %v1385, %v1392
    %v1395 = vunpack.c.l.s4 1966171168
    %v1396 = vunpack.c.0.s8 %v1395
    %v1397 = vlaneseq
    %v1398 = vshrl.u32 %v1397, 7
    %v1399 = vsub.s32 %v1396, %v1398
    %v1400 = vrot.slane %v1386, %v1399
    %v1401 = vcombine.high %v1393, %v1393
    %v1402 = vld [vmem:[#allocation6] sm:$0xf]
    %v1403 = vcombine.low %v1370, %v1377
    %v1404 = vcombine.low %v1378, %v1393
    %v1405 = vcombine.low %v1400, %v1401
    %v1407 = vunpack.c.l.s4 1966171168
    %v1408 = vunpack.c.0.s8 %v1407
    %v1409 = vlaneseq
    %v1410 = vshrl.u32 %v1409, 7
    %v1411 = vsub.s32 %v1408, %v1410
    %v1412 = vrot.slane %v1403, %v1411
    %v1414 = vunpack.c.l.s4 1966171168
    %v1415 = vunpack.c.0.s8 %v1414
    %v1416 = vlaneseq
    %v1417 = vshrl.u32 %v1416, 7
    %v1418 = vsub.s32 %v1415, %v1417
    %v1419 = vrot.slane %v1404, %v1418
    %v1421 = vunpack.c.l.s4 1966171168
    %v1422 = vunpack.c.0.s8 %v1421
    %v1423 = vlaneseq
    %v1424 = vshrl.u32 %v1423, 7
    %v1425 = vsub.s32 %v1422, %v1424
    %v1426 = vrot.slane %v1405, %v1425
    %v1427 = vcombine.low %v1412, %v1419
    %v1429 = vunpack.c.l.s4 1966171168
    %v1430 = vunpack.c.0.s8 %v1429
    %v1431 = vlaneseq
    %v1432 = vshrl.u32 %v1431, 7
    %v1433 = vsub.s32 %v1430, %v1432
    %v1434 = vrot.slane %v1427, %v1433
    %v1436 = vunpack.c.l.s4 1966171168
    %v1437 = vunpack.c.0.s8 %v1436
    %v1438 = vlaneseq
    %v1439 = vshrl.u32 %v1438, 7
    %v1440 = vsub.s32 %v1437, %v1439
    %v1441 = vrot.slane %v1426, %v1440
    %v1442 = vcombine.low %v1434, %v1441
    %v1444 = vsel %vm213, %v1442, 0
    %v1447 = vand.u32 %v1402, %v220
    %1449 = vmatprep.subr.bf16.mxu0 0
    %1450 = vmatpush1.bf16.msra.mxu0 %v1447
    %1451 = vmatprep.subr.bf16.mxu0 0
    %1452 = vmatpush1.bf16.msra.mxu0 0
    %1453 = vmatprep.subr.bf16.mxu0 0
    %1454 = vmatpush1.bf16.msra.mxu0 0
    %1455 = vmatprep.subr.bf16.mxu0 0
    %1456 = vmatpush1.bf16.msra.mxu0 0
    %1457 = vmatprep.subr.bf16.mxu0 0
    %1458 = vmatpush1.bf16.msra.mxu0 0
    %1459 = vmatprep.subr.bf16.mxu0 0
    %1460 = vmatpush1.bf16.msra.mxu0 0
    %1461 = vmatprep.subr.bf16.mxu0 0
    %1462 = vmatpush1.bf16.msra.mxu0 0
    %1463 = vmatprep.subr.bf16.mxu0 0
    %1464 = vmatpush1.bf16.msra.mxu0 0
    %1465 = vmatprep.subr.bf16.mxu0 0
    %1466 = vmatpush1.bf16.msra.mxu0 0
    %1467 = vmatprep.subr.bf16.mxu0 0
    %1468 = vmatpush1.bf16.msra.mxu0 0
    %1469 = vmatprep.subr.bf16.mxu0 0
    %1470 = vmatpush1.bf16.msra.mxu0 0
    %1471 = vmatprep.subr.bf16.mxu0 0
    %1472 = vmatpush1.bf16.msra.mxu0 0
    %1473 = vmatprep.subr.bf16.mxu0 0
    %1474 = vmatpush1.bf16.msra.mxu0 0
    %1475 = vmatprep.subr.bf16.mxu0 0
    %1476 = vmatpush1.bf16.msra.mxu0 0
    %1477 = vmatprep.subr.bf16.mxu0 0
    %1478 = vmatpush1.bf16.msra.mxu0 0
    %1479 = vmatprep.subr.bf16.mxu0 0
    %1480 = vmatpush1.bf16.msra.mxu0 0
    %1481 = vmatprep.mubr.bf16.mxu0 0
    %1482 = vmatmul.mubr.bf16.gmra.mrb[0].mxu0 %v1444
    %v1483 = vpop.f32.mrb[0].mxu0
    %v1484 = vadd.f32 0.0, %v1483
    %v1485 = vpop.f32.mrb[0].mxu0
    %v1486 = vpop.f32.mrb[0].mxu0
    %v1487 = vadd.f32 0.0, %v1486
    %v1488 = vpop.f32.mrb[0].mxu0
    %1489 = vdwg.mxu0
    %v1490 = vld [vmem:[#allocation10 + $0x1] sm:$0x1]
    %v1492 = vlaneseq
    %v1493 = vshrl.u32 %v1492, 7
    %v1494 = vsub.s32 0, %v1493
    %v1495 = vrot.slane %v1490, %v1494
    %1496 = vrot.lane.b32.xlu0 %v1495, 96
    %v1497 = vpop.permute.xlu0 %1496
    %v1499 = vmul.f32 %v1484, %v1497
    %v1500 = vmul.f32 %v1487, %v1497
    %v1501 = vld [vmem:[#allocation12 + $0x1] sm:$0x1]
    %v1503 = vlaneseq
    %v1504 = vshrl.u32 %v1503, 7
    %v1505 = vsub.s32 0, %v1504
    %v1506 = vrot.slane %v1501, %v1505
    %1507 = vrot.lane.b32.xlu0 %v1506, 96
    %v1508 = vpop.permute.xlu0 %1507
    %v1510 = vadd.f32 %v1499, %v1508
    %v1511 = vadd.f32 %v1500, %v1508
    %v1512 = vmax.f32 %v1510, 0.0
    %v1513 = vmax.f32 %v1511, 0.0
    %v1516 = vcombine.high %v302, %v302
    %v1518 = vunpack.c.l.s4 1983009808
    %v1519 = vunpack.c.0.s8 %v1518
    %v1520 = vlaneseq
    %v1521 = vshrl.u32 %v1520, 7
    %v1522 = vsub.s32 %v1519, %v1521
    %v1523 = vrot.slane %v302, %v1522
    %v1525 = vunpack.c.l.s4 1983009808
    %v1526 = vunpack.c.0.s8 %v1525
    %v1527 = vlaneseq
    %v1528 = vshrl.u32 %v1527, 7
    %v1529 = vsub.s32 %v1526, %v1528
    %v1530 = vrot.slane %v1516, %v1529
    %v1531 = vcombine.high %v1523, %v1523
    %v1532 = vcombine.high %v1530, %v1530
    %v1534 = vunpack.c.l.s4 1983009808
    %v1535 = vunpack.c.0.s8 %v1534
    %v1536 = vlaneseq
    %v1537 = vshrl.u32 %v1536, 7
    %v1538 = vsub.s32 %v1535, %v1537
    %v1539 = vrot.slane %v304, %v1538
    %v1540 = vcombine.high %v1539, %v1539
    %v1541 = vcombine.low %v1523, %v1531
    %v1543 = vunpack.c.l.s4 1983009808
    %v1544 = vunpack.c.0.s8 %v1543
    %v1545 = vlaneseq
    %v1546 = vshrl.u32 %v1545, 7
    %v1547 = vsub.s32 %v1544, %v1546
    %v1548 = vrot.slane %v1541, %v1547
    %v1550 = vunpack.c.l.s4 1983009808
    %v1551 = vunpack.c.0.s8 %v1550
    %v1552 = vlaneseq
    %v1553 = vshrl.u32 %v1552, 7
    %v1554 = vsub.s32 %v1551, %v1553
    %v1555 = vrot.slane %v1530, %v1554
    %v1556 = vcombine.low %v1548, %v1555
    %v1557 = vcombine.low %v1532, %v1539
    %v1559 = vunpack.c.l.s4 1983009808
    %v1560 = vunpack.c.0.s8 %v1559
    %v1561 = vlaneseq
    %v1562 = vshrl.u32 %v1561, 7
    %v1563 = vsub.s32 %v1560, %v1562
    %v1564 = vrot.slane %v1557, %v1563
    %v1566 = vunpack.c.l.s4 1983009808
    %v1567 = vunpack.c.0.s8 %v1566
    %v1568 = vlaneseq
    %v1569 = vshrl.u32 %v1568, 7
    %v1570 = vsub.s32 %v1567, %v1569
    %v1571 = vrot.slane %v1540, %v1570
    %v1572 = vcombine.low %v1564, %v1571
    %vm1575 = vcmask 521216
    %1576 = vst.msk [vmem:[%s9] sm:$0x3f] %vm1575, %v1556
    %1577 = vst.msk [vmem:[%s9 + $0x10] sm:$0x3f] %vm1575, %v1572
    %v1580 = vcombine.high %v883, %v883
    %v1582 = vunpack.c.l.s4 1983009808
    %v1583 = vunpack.c.0.s8 %v1582
    %v1584 = vlaneseq
    %v1585 = vshrl.u32 %v1584, 7
    %v1586 = vsub.s32 %v1583, %v1585
    %v1587 = vrot.slane %v883, %v1586
    %v1589 = vunpack.c.l.s4 1983009808
    %v1590 = vunpack.c.0.s8 %v1589
    %v1591 = vlaneseq
    %v1592 = vshrl.u32 %v1591, 7
    %v1593 = vsub.s32 %v1590, %v1592
    %v1594 = vrot.slane %v1580, %v1593
    %v1595 = vcombine.high %v1587, %v1587
    %v1596 = vcombine.high %v1594, %v1594
    %v1598 = vunpack.c.l.s4 1983009808
    %v1599 = vunpack.c.0.s8 %v1598
    %v1600 = vlaneseq
    %v1601 = vshrl.u32 %v1600, 7
    %v1602 = vsub.s32 %v1599, %v1601
    %v1603 = vrot.slane %v884, %v1602
    %v1604 = vcombine.high %v1603, %v1603
    %v1605 = vcombine.low %v1587, %v1595
    %v1607 = vunpack.c.l.s4 1983009808
    %v1608 = vunpack.c.0.s8 %v1607
    %v1609 = vlaneseq
    %v1610 = vshrl.u32 %v1609, 7
    %v1611 = vsub.s32 %v1608, %v1610
    %v1612 = vrot.slane %v1605, %v1611
    %v1614 = vunpack.c.l.s4 1983009808
    %v1615 = vunpack.c.0.s8 %v1614
    %v1616 = vlaneseq
    %v1617 = vshrl.u32 %v1616, 7
    %v1618 = vsub.s32 %v1615, %v1617
    %v1619 = vrot.slane %v1594, %v1618
    %v1620 = vcombine.low %v1612, %v1619
    %v1621 = vcombine.low %v1596, %v1603
    %v1623 = vunpack.c.l.s4 1983009808
    %v1624 = vunpack.c.0.s8 %v1623
    %v1625 = vlaneseq
    %v1626 = vshrl.u32 %v1625, 7
    %v1627 = vsub.s32 %v1624, %v1626
    %v1628 = vrot.slane %v1621, %v1627
    %v1630 = vunpack.c.l.s4 1983009808
    %v1631 = vunpack.c.0.s8 %v1630
    %v1632 = vlaneseq
    %v1633 = vshrl.u32 %v1632, 7
    %v1634 = vsub.s32 %v1631, %v1633
    %v1635 = vrot.slane %v1604, %v1634
    %v1636 = vcombine.low %v1628, %v1635
    %1637 = vrot.lane.b32.xlu0 %v1620, 64
    %v1638 = vpop.permute.xlu0 %1637
    %1639 = vrot.lane.b32.xlu0 %v1636, 64
    %v1640 = vpop.permute.xlu0 %1639
    %vm1643 = vcmask 1046016
    %1644 = vst.msk [vmem:[%s9] sm:$0x3f] %vm1643, %v1638
    %1645 = vst.msk [vmem:[%s9 + $0x8] sm:$0x3f] %vm1575, %v1638
    %1646 = vst.msk [vmem:[%s9 + $0x10] sm:$0x3f] %vm1643, %v1640
    %1647 = vst.msk [vmem:[%s9 + $0x18] sm:$0x3f] %vm1575, %v1640
    %v1650 = vcombine.high %v1302, %v1302
    %v1652 = vunpack.c.l.s4 1983009808
    %v1653 = vunpack.c.0.s8 %v1652
    %v1654 = vlaneseq
    %v1655 = vshrl.u32 %v1654, 7
    %v1656 = vsub.s32 %v1653, %v1655
    %v1657 = vrot.slane %v1302, %v1656
    %v1659 = vunpack.c.l.s4 1983009808
    %v1660 = vunpack.c.0.s8 %v1659
    %v1661 = vlaneseq
    %v1662 = vshrl.u32 %v1661, 7
    %v1663 = vsub.s32 %v1660, %v1662
    %v1664 = vrot.slane %v1650, %v1663
    %v1665 = vcombine.high %v1657, %v1657
    %v1666 = vcombine.high %v1664, %v1664
    %v1668 = vunpack.c.l.s4 1983009808
    %v1669 = vunpack.c.0.s8 %v1668
    %v1670 = vlaneseq
    %v1671 = vshrl.u32 %v1670, 7
    %v1672 = vsub.s32 %v1669, %v1671
    %v1673 = vrot.slane %v1303, %v1672
    %v1674 = vcombine.high %v1673, %v1673
    %v1675 = vcombine.low %v1657, %v1665
    %v1677 = vunpack.c.l.s4 1983009808
    %v1678 = vunpack.c.0.s8 %v1677
    %v1679 = vlaneseq
    %v1680 = vshrl.u32 %v1679, 7
    %v1681 = vsub.s32 %v1678, %v1680
    %v1682 = vrot.slane %v1675, %v1681
    %v1684 = vunpack.c.l.s4 1983009808
    %v1685 = vunpack.c.0.s8 %v1684
    %v1686 = vlaneseq
    %v1687 = vshrl.u32 %v1686, 7
    %v1688 = vsub.s32 %v1685, %v1687
    %v1689 = vrot.slane %v1664, %v1688
    %v1690 = vcombine.low %v1682, %v1689
    %v1691 = vcombine.low %v1666, %v1673
    %v1693 = vunpack.c.l.s4 1983009808
    %v1694 = vunpack.c.0.s8 %v1693
    %v1695 = vlaneseq
    %v1696 = vshrl.u32 %v1695, 7
    %v1697 = vsub.s32 %v1694, %v1696
    %v1698 = vrot.slane %v1691, %v1697
    %v1700 = vunpack.c.l.s4 1983009808
    %v1701 = vunpack.c.0.s8 %v1700
    %v1702 = vlaneseq
    %v1703 = vshrl.u32 %v1702, 7
    %v1704 = vsub.s32 %v1701, %v1703
    %v1705 = vrot.slane %v1674, %v1704
    %v1706 = vcombine.low %v1698, %v1705
    %1707 = vrot.lane.b32.xlu0 %v1690, 64
    %v1708 = vpop.permute.xlu0 %1707
    %1709 = vrot.lane.b32.xlu0 %v1706, 64
    %v1710 = vpop.permute.xlu0 %1709
    %vm1713 = vcmask 783872
    %1714 = vst.msk [vmem:[%s9 + $0x8] sm:$0x3f] %vm1713, %v1708
    %1715 = vst.msk [vmem:[%s9 + $0x18] sm:$0x3f] %vm1713, %v1710
    %v1718 = vcombine.high %v1512, %v1512
    %v1720 = vunpack.c.l.s4 1983009808
    %v1721 = vunpack.c.0.s8 %v1720
    %v1722 = vlaneseq
    %v1723 = vshrl.u32 %v1722, 7
    %v1724 = vsub.s32 %v1721, %v1723
    %v1725 = vrot.slane %v1512, %v1724
    %v1727 = vunpack.c.l.s4 1983009808
    %v1728 = vunpack.c.0.s8 %v1727
    %v1729 = vlaneseq
    %v1730 = vshrl.u32 %v1729, 7
    %v1731 = vsub.s32 %v1728, %v1730
    %v1732 = vrot.slane %v1718, %v1731
    %v1733 = vcombine.high %v1725, %v1725
    %v1734 = vcombine.high %v1732, %v1732
    %v1736 = vunpack.c.l.s4 1983009808
    %v1737 = vunpack.c.0.s8 %v1736
    %v1738 = vlaneseq
    %v1739 = vshrl.u32 %v1738, 7
    %v1740 = vsub.s32 %v1737, %v1739
    %v1741 = vrot.slane %v1513, %v1740
    %v1742 = vcombine.high %v1741, %v1741
    %v1743 = vcombine.low %v1725, %v1733
    %v1745 = vunpack.c.l.s4 1983009808
    %v1746 = vunpack.c.0.s8 %v1745
    %v1747 = vlaneseq
    %v1748 = vshrl.u32 %v1747, 7
    %v1749 = vsub.s32 %v1746, %v1748
    %v1750 = vrot.slane %v1743, %v1749
    %v1752 = vunpack.c.l.s4 1983009808
    %v1753 = vunpack.c.0.s8 %v1752
    %v1754 = vlaneseq
    %v1755 = vshrl.u32 %v1754, 7
    %v1756 = vsub.s32 %v1753, %v1755
    %v1757 = vrot.slane %v1732, %v1756
    %v1758 = vcombine.low %v1750, %v1757
    %v1759 = vcombine.low %v1734, %v1741
    %v1761 = vunpack.c.l.s4 1983009808
    %v1762 = vunpack.c.0.s8 %v1761
    %v1763 = vlaneseq
    %v1764 = vshrl.u32 %v1763, 7
    %v1765 = vsub.s32 %v1762, %v1764
    %v1766 = vrot.slane %v1759, %v1765
    %v1768 = vunpack.c.l.s4 1983009808
    %v1769 = vunpack.c.0.s8 %v1768
    %v1770 = vlaneseq
    %v1771 = vshrl.u32 %v1770, 7
    %v1772 = vsub.s32 %v1769, %v1771
    %v1773 = vrot.slane %v1742, %v1772
    %v1774 = vcombine.low %v1766, %v1773
    %1775 = vrot.lane.b32.xlu0 %v1758, 96
    %v1776 = vpop.permute.xlu0 %1775
    %1777 = vrot.lane.b32.xlu0 %v1774, 96
    %v1778 = vpop.permute.xlu0 %1777
    %vm1781 = vcmask 1046272
    %1782 = vst.msk [vmem:[%s9 + $0x8] sm:$0x3f] %vm1781, %v1776
    %1783 = vst.msk [vmem:[%s9 + $0x18] sm:$0x3f] %vm1781, %v1778
    // Predicated region
    $region66: #{model_forward_pallas.7} parent=1 // pred_check
      _
    $region67: #{model_forward_pallas.7} parent=1 // pred_check_branch
      %1785 = sbr.rel (0) target = $region69
    $region68: #{model_forward_pallas.7} parent=1 // pred_region
      _
    $region69: #{model_forward_pallas.7} parent=1 // pred_fallthru
      _
    // Predicated region
    $region70: #{model_forward_pallas.7} parent=1 // pred_check
      _
    $region71: #{model_forward_pallas.7} parent=1 // pred_check_branch
      %1787 = sbr.rel (0) target = $region73
    $region72: #{model_forward_pallas.7} parent=1 // pred_region
      _
    $region73: #{model_forward_pallas.7} parent=1 // pred_fallthru
      _
    %1788 = vsyncpa [#allocation3], 1
    %1789 = vsyncpa [#allocation5], 1
    %1790 = vsyncpa [#allocation8], 1
    %1791 = vsyncpa [#allocation11], 1

// kernel: model_forward_pallas.6
$region0: #{model_forward_pallas.6}
  #allocation0 [shape = 'u32[]', space=smem, size = 0x4, offset = 0x4, fixed_abs, tag = 'smem constant byte address 0x4 - core index']
  #allocation1 [shape = 'u32[144,128]{1,0:T(1,128)}', space=vmem, size = 0x12000, scoped, tag = 'internal scratch']
  %s0 = inlined_call_operand.vmem [shape: bf16[2,8,5], index: 0, kind: input, shape index: {}]
  %s1 = inlined_call_operand.hbm [shape: bf16[5,176], index: 1, kind: input, shape index: {}]
  %s2 = inlined_call_operand.hbm [shape: bf16[288,128], index: 2, kind: input, shape index: {}]
  %s3 = inlined_call_operand.vmem [shape: bf16[112,32], index: 3, kind: input, shape index: {}]
  %s4 = inlined_call_operand.hbm [shape: bf16[5,32], index: 4, kind: input, shape index: {}]
  %s5 = inlined_call_operand.hbm [shape: f32[1,176], index: 5, kind: input, shape index: {}]
  %s6 = inlined_call_operand.hbm [shape: f32[1,176], index: 6, kind: input, shape index: {}]
  %s7 = inlined_call_operand.hbm [shape: f32[1,192], index: 7, kind: input, shape index: {}]
  %s8 = inlined_call_operand.hbm [shape: f32[1,192], index: 8, kind: input, shape index: {}]
  %s9 = inlined_call_operand.vmem [shape: f32[2,8,256], index: 9, kind: output, shape index: {}]
  %s10 = sld [smem:[#allocation0]]
  $region74: #{model_forward_pallas.6} parent=0
    _
  %s12 = ssub.s32 1, %s10
  %s13 = scalar_select 0, %s12, %s10
  $region1: #{model_forward_pallas.6} parent=0
    #allocation2 [shape = 'u8[4096]{0}', space=vmem, size = 0x1000, scoped, tag = 'input window, operand 1, single buffered']
    #allocation3 [shape = 's32[1]{0}', space=sflag, size = 0x4, scoped, tag = 'scoped memory for model_forward_pallas.6']
    #allocation4 [shape = 'u8[73728]{0}', space=vmem, size = 0x12000, scoped, tag = 'input window, operand 2, single buffered']
    #allocation5 [shape = 's32[1]{0}', space=sflag, size = 0x4, scoped, tag = 'scoped memory for model_forward_pallas.6']
    #allocation6 [shape = 'u8[2048]{0}', space=vmem, size = 0x800, scoped, tag = 'input window, operand 4, single buffered']
    #allocation7 [shape = 'u8[1024]{0}', space=vmem, size = 0x400, scoped, tag = 'input window, operand 5, single buffered']
    #allocation8 [shape = 's32[1]{0}', space=sflag, size = 0x4, scoped, tag = 'scoped memory for model_forward_pallas.6']
    #allocation9 [shape = 'u8[1024]{0}', space=vmem, size = 0x400, scoped, tag = 'input window, operand 6, single buffered']
    #allocation10 [shape = 'u8[1024]{0}', space=vmem, size = 0x400, scoped, tag = 'input window, operand 7, single buffered']
    #allocation11 [shape = 's32[1]{0}', space=sflag, size = 0x4, scoped, tag = 'scoped memory for model_forward_pallas.6']
    #allocation12 [shape = 'u8[1024]{0}', space=vmem, size = 0x400, scoped, tag = 'input window, operand 8, single buffered']
    %14 = vsyncpa [#allocation3], 0
    %15 = vsyncpa [#allocation5], 0
    %16 = vsyncpa [#allocation8], 0
    %17 = vsyncpa [#allocation11], 0
    // Predicated region
    $region2: #{model_forward_pallas.6} parent=1 // pred_check
      _
    $region3: #{model_forward_pallas.6} parent=1 // pred_check_branch
      %19 = sbr.rel (0) target = $region5
    $region4: #{model_forward_pallas.6} parent=1 // pred_region
      _
    $region5: #{model_forward_pallas.6} parent=1 // pred_fallthru
      _
    // Predicated region
    $region6: #{model_forward_pallas.6} parent=1 // pred_check
      _
    $region7: #{model_forward_pallas.6} parent=1 // pred_check_branch
      %21 = sbr.rel (0) target = $region9
    $region8: #{model_forward_pallas.6} parent=1 // pred_region
      %s23 = ssub.s32 128, 128
      %24 = vsyncadd [#allocation3], %s23
      %s26 = sshll.u32 [#allocation2], 4
      %s27 = int_to_ptr.vmem [resolvable:$true] %s26
      %29 = dma.hbm_to_vmem [thread:$0]  %s1, 128, %s27, [#allocation3]
    $region9: #{model_forward_pallas.6} parent=1 // pred_fallthru
      _
    // Predicated region
    $region10: #{model_forward_pallas.6} parent=1 // pred_check
      _
    $region11: #{model_forward_pallas.6} parent=1 // pred_check_branch
      %31 = sbr.rel (0) target = $region13
    $region12: #{model_forward_pallas.6} parent=1 // pred_region
      %s33 = ssub.s32 2304, 2304
      %34 = vsyncadd [#allocation5], %s33
      %s35 = sshll.u32 [#allocation4], 4
      %s36 = int_to_ptr.vmem [resolvable:$true] %s35
      %41 = dma.hbm_to_vmem [thread:$0]  %s2, 2304, %s36, [#allocation5], 64, 64, 4
    $region13: #{model_forward_pallas.6} parent=1 // pred_fallthru
      _
    // Predicated region
    $region14: #{model_forward_pallas.6} parent=1 // pred_check
      _
    $region15: #{model_forward_pallas.6} parent=1 // pred_check_branch
      %43 = sbr.rel (0) target = $region17
    $region16: #{model_forward_pallas.6} parent=1 // pred_region
      _
    $region17: #{model_forward_pallas.6} parent=1 // pred_fallthru
      _
    // Predicated region
    $region18: #{model_forward_pallas.6} parent=1 // pred_check
      _
    $region19: #{model_forward_pallas.6} parent=1 // pred_check_branch
      %45 = sbr.rel (0) target = $region21
    $region20: #{model_forward_pallas.6} parent=1 // pred_region
      %s47 = ssub.s32 64, 64
      %48 = vsyncadd [#allocation5], %s47
      %s50 = sshll.u32 [#allocation6], 4
      %s51 = int_to_ptr.vmem [resolvable:$true] %s50
      %53 = dma.hbm_to_vmem [thread:$0]  %s4, 64, %s51, [#allocation5]
    $region21: #{model_forward_pallas.6} parent=1 // pred_fallthru
      _
    // Predicated region
    $region22: #{model_forward_pallas.6} parent=1 // pred_check
      _
    $region23: #{model_forward_pallas.6} parent=1 // pred_check_branch
      %55 = sbr.rel (0) target = $region25
    $region24: #{model_forward_pallas.6} parent=1 // pred_region
      %s57 = ssub.s32 32, 32
      %58 = vsyncadd [#allocation8], %s57
      %s60 = sshll.u32 [#allocation7], 4
      %s61 = int_to_ptr.vmem [resolvable:$true] %s60
      %63 = dma.hbm_to_vmem [thread:$0]  %s5, 32, %s61, [#allocation8]
    $region25: #{model_forward_pallas.6} parent=1 // pred_fallthru
      _
    // Predicated region
    $region26: #{model_forward_pallas.6} parent=1 // pred_check
      _
    $region27: #{model_forward_pallas.6} parent=1 // pred_check_branch
      %65 = sbr.rel (0) target = $region29
    $region28: #{model_forward_pallas.6} parent=1 // pred_region
      %s67 = ssub.s32 32, 32
      %68 = vsyncadd [#allocation8], %s67
      %s70 = sshll.u32 [#allocation9], 4
      %s71 = int_to_ptr.vmem [resolvable:$true] %s70
      %73 = dma.hbm_to_vmem [thread:$0]  %s6, 32, %s71, [#allocation8]
    $region29: #{model_forward_pallas.6} parent=1 // pred_fallthru
      _
    // Predicated region
    $region30: #{model_forward_pallas.6} parent=1 // pred_check
      _
    $region31: #{model_forward_pallas.6} parent=1 // pred_check_branch
      %75 = sbr.rel (0) target = $region33
    $region32: #{model_forward_pallas.6} parent=1 // pred_region
      %s77 = ssub.s32 32, 32
      %78 = vsyncadd [#allocation11], %s77
      %s80 = sshll.u32 [#allocation10], 4
      %s81 = int_to_ptr.vmem [resolvable:$true] %s80
      %83 = dma.hbm_to_vmem [thread:$0]  %s7, 32, %s81, [#allocation11]
    $region33: #{model_forward_pallas.6} parent=1 // pred_fallthru
      _
    // Predicated region
    $region34: #{model_forward_pallas.6} parent=1 // pred_check
      _
    $region35: #{model_forward_pallas.6} parent=1 // pred_check_branch
      %85 = sbr.rel (0) target = $region37
    $region36: #{model_forward_pallas.6} parent=1 // pred_region
      %s87 = ssub.s32 32, 32
      %88 = vsyncadd [#allocation11], %s87
      %s90 = sshll.u32 [#allocation12], 4
      %s91 = int_to_ptr.vmem [resolvable:$true] %s90
      %93 = dma.hbm_to_vmem [thread:$0]  %s8, 32, %s91, [#allocation11]
    $region37: #{model_forward_pallas.6} parent=1 // pred_fallthru
      _
    // Predicated region
    $region38: #{model_forward_pallas.6} parent=1 // pred_check
      _
    $region39: #{model_forward_pallas.6} parent=1 // pred_check_branch
      %95 = sbr.rel (0) target = $region41
    $region40: #{model_forward_pallas.6} parent=1 // pred_region
      %96 = dma.done [#allocation3], 128
    $region41: #{model_forward_pallas.6} parent=1 // pred_fallthru
      _
    // Predicated region
    $region42: #{model_forward_pallas.6} parent=1 // pred_check
      _
    $region43: #{model_forward_pallas.6} parent=1 // pred_check_branch
      %98 = sbr.rel (0) target = $region45
    $region44: #{model_forward_pallas.6} parent=1 // pred_region
      %99 = dma.done [#allocation5], 2304
    $region45: #{model_forward_pallas.6} parent=1 // pred_fallthru
      _
    // Predicated region
    $region46: #{model_forward_pallas.6} parent=1 // pred_check
      _
    $region47: #{model_forward_pallas.6} parent=1 // pred_check_branch
      %101 = sbr.rel (0) target = $region49
    $region48: #{model_forward_pallas.6} parent=1 // pred_region
      %102 = dma.done [#allocation5], 64
    $region49: #{model_forward_pallas.6} parent=1 // pred_fallthru
      _
    // Predicated region
    $region50: #{model_forward_pallas.6} parent=1 // pred_check
      _
    $region51: #{model_forward_pallas.6} parent=1 // pred_check_branch
      %104 = sbr.rel (0) target = $region53
    $region52: #{model_forward_pallas.6} parent=1 // pred_region
      %105 = dma.done [#allocation8], 32
    $region53: #{model_forward_pallas.6} parent=1 // pred_fallthru
      _
    // Predicated region
    $region54: #{model_forward_pallas.6} parent=1 // pred_check
      _
    $region55: #{model_forward_pallas.6} parent=1 // pred_check_branch
      %107 = sbr.rel (0) target = $region57
    $region56: #{model_forward_pallas.6} parent=1 // pred_region
      %108 = dma.done [#allocation8], 32
    $region57: #{model_forward_pallas.6} parent=1 // pred_fallthru
      _
    // Predicated region
    $region58: #{model_forward_pallas.6} parent=1 // pred_check
      _
    $region59: #{model_forward_pallas.6} parent=1 // pred_check_branch
      %110 = sbr.rel (0) target = $region61
    $region60: #{model_forward_pallas.6} parent=1 // pred_region
      %111 = dma.done [#allocation11], 32
    $region61: #{model_forward_pallas.6} parent=1 // pred_fallthru
      _
    // Predicated region
    $region62: #{model_forward_pallas.6} parent=1 // pred_check
      _
    $region63: #{model_forward_pallas.6} parent=1 // pred_check_branch
      %113 = sbr.rel (0) target = $region65
    $region64: #{model_forward_pallas.6} parent=1 // pred_region
      %114 = dma.done [#allocation11], 32
    $region65: #{model_forward_pallas.6} parent=1 // pred_fallthru
      _
    %v117 = vld [vmem:[%s0] sm:$0xf]
    %v118 = vld [vmem:[%s0 + $0x4] sm:$0xf]
    %v119 = vld [vmem:[#allocation2] sm:$0x77]
    %v122 = vunpack.c.l.b16 %v117
    %v123 = vunpack.c.l.b16 %v118
    %v124 = vpack.c.b16 %v123, %v122
    %v126 = vunpack.c.l.b16 %v119
    %v127 = vunpack.c.h.b16 %v119
    %v128 = vpack.c.b16 %v126, %v126
    %v129 = vpack.c.b16 %v127, %v127
    %vm130 = vcmask 39936
    %v132 = vsel %vm130, %v124, 0
    %vm134 = vcmask 1041408
    %vm135 = vcmask 1042432
    %v136 = vsel %vm134, 4294967295, 65535
    %v137 = vsel %vm135, %v136, 0
    %v139 = vand.u32 %v128, %v137
    %v142 = vand.u32 %v129, %v137
    %144 = vmatprep.subr.bf16.mxu0 %v142
    %145 = vmatpush1.bf16.msra.mxu0 %v139
    %146 = vmatprep.subr.bf16.mxu0 0
    %147 = vmatpush1.bf16.msra.mxu0 0
    %148 = vmatprep.subr.bf16.mxu0 0
    %149 = vmatpush1.bf16.msra.mxu0 0
    %150 = vmatprep.subr.bf16.mxu0 0
    %151 = vmatpush1.bf16.msra.mxu0 0
    %152 = vmatprep.subr.bf16.mxu0 0
    %153 = vmatpush1.bf16.msra.mxu0 0
    %154 = vmatprep.subr.bf16.mxu0 0
    %155 = vmatpush1.bf16.msra.mxu0 0
    %156 = vmatprep.subr.bf16.mxu0 0
    %157 = vmatpush1.bf16.msra.mxu0 0
    %158 = vmatprep.subr.bf16.mxu0 0
    %159 = vmatpush1.bf16.msra.mxu0 0
    %160 = vmatprep.subr.bf16.mxu0 0
    %161 = vmatpush1.bf16.msra.mxu0 0
    %162 = vmatprep.subr.bf16.mxu0 0
    %163 = vmatpush1.bf16.msra.mxu0 0
    %164 = vmatprep.subr.bf16.mxu0 0
    %165 = vmatpush1.bf16.msra.mxu0 0
    %166 = vmatprep.subr.bf16.mxu0 0
    %167 = vmatpush1.bf16.msra.mxu0 0
    %168 = vmatprep.subr.bf16.mxu0 0
    %169 = vmatpush1.bf16.msra.mxu0 0
    %170 = vmatprep.subr.bf16.mxu0 0
    %171 = vmatpush1.bf16.msra.mxu0 0
    %172 = vmatprep.subr.bf16.mxu0 0
    %173 = vmatpush1.bf16.msra.mxu0 0
    %174 = vmatprep.subr.bf16.mxu0 0
    %175 = vmatpush1.bf16.msra.mxu0 0
    %176 = vmatprep.mubr.bf16.mxu0 0
    %177 = vmatmul.mubr.bf16.gmra.mrb[0].mxu0 %v132
    %v178 = vpop.f32.mrb[0].mxu0
    %v179 = vadd.f32 0.0, %v178
    %v180 = vpop.f32.mrb[0].mxu0
    %v181 = vadd.f32 0.0, %v180
    %v182 = vpop.f32.mrb[0].mxu0
    %v183 = vadd.f32 0.0, %v182
    %v184 = vpop.f32.mrb[0].mxu0
    %v185 = vadd.f32 0.0, %v184
    %186 = vdwg.mxu0
    %v187 = vld [vmem:[#allocation7] sm:$0x3]
    %v189 = vlaneseq
    %v190 = vshrl.u32 %v189, 7
    %v191 = vsub.s32 0, %v190
    %v192 = vrot.slane %v187, %v191
    %v193 = vlaneseq
    %v194 = vshrl.u32 %v193, 7
    %v195 = vsub.s32 1, %v194
    %v196 = vrot.slane %v187, %v195
    %v199 = vmul.f32 %v179, %v192
    %v200 = vmul.f32 %v181, %v196
    %v201 = vmul.f32 %v183, %v192
    %v202 = vmul.f32 %v185, %v196
    %v203 = vld [vmem:[#allocation9] sm:$0x3]
    %v205 = vlaneseq
    %v206 = vshrl.u32 %v205, 7
    %v207 = vsub.s32 0, %v206
    %v208 = vrot.slane %v203, %v207
    %v209 = vlaneseq
    %v210 = vshrl.u32 %v209, 7
    %v211 = vsub.s32 1, %v210
    %v212 = vrot.slane %v203, %v211
    %v215 = vadd.f32 %v199, %v208
    %v216 = vadd.f32 %v200, %v212
    %v217 = vadd.f32 %v201, %v208
    %v218 = vadd.f32 %v202, %v212
    %v219 = vmax.f32 %v215, 0.0
    %v220 = vmax.f32 %v216, 0.0
    %v221 = vmax.f32 %v217, 0.0
    %v222 = vmax.f32 %v218, 0.0
    %v223 = vpack.c.bf16 %v221, %v219
    %v224 = vpack.c.bf16 %v222, %v220
    %v227 = vunpack.c.l.b16 %v223
    %v228 = vunpack.c.l.b16 %v224
    %v229 = vunpack.c.h.b16 %v223
    %v230 = vunpack.c.h.b16 %v224
    %v231 = vld [vmem:[#allocation4] sm:$0xf]
    %v232 = vld [vmem:[#allocation4 + $0x4] sm:$0xf]
    %v233 = vld [vmem:[#allocation4 + $0x8] sm:$0xf]
    %v234 = vld [vmem:[#allocation4 + $0xc] sm:$0xf]
    %v235 = vld [vmem:[#allocation4 + $0x10] sm:$0xf]
    %v236 = vld [vmem:[#allocation4 + $0x14] sm:$0xf]
    %v237 = vld [vmem:[#allocation4 + $0x18] sm:$0xf]
    %v238 = vld [vmem:[#allocation4 + $0x1c] sm:$0xf]
    %v239 = vld [vmem:[#allocation4 + $0x20] sm:$0xf]
    %v240 = vld [vmem:[#allocation4 + $0x24] sm:$0xf]
    %v241 = vld [vmem:[#allocation4 + $0x28] sm:$0xf]
    %v242 = vld [vmem:[#allocation4 + $0x2c] sm:$0xf]
    %v243 = vld [vmem:[#allocation4 + $0x30] sm:$0xf]
    %v244 = vld [vmem:[#allocation4 + $0x34] sm:$0xf]
    %v245 = vld [vmem:[#allocation4 + $0x38] sm:$0xf]
    %v246 = vld [vmem:[#allocation4 + $0x3c] sm:$0xf]
    %v247 = vld [vmem:[#allocation4 + $0x40] sm:$0xf]
    %v248 = vld [vmem:[#allocation4 + $0x44] sm:$0xf]
    %v249 = vld [vmem:[#allocation4 + $0x48] sm:$0xf]
    %v250 = vld [vmem:[#allocation4 + $0x4c] sm:$0xf]
    %v251 = vld [vmem:[#allocation4 + $0x50] sm:$0xf]
    %v252 = vld [vmem:[#allocation4 + $0x54] sm:$0xf]
    %v253 = vld [vmem:[#allocation4 + $0x58] sm:$0xf]
    %v254 = vld [vmem:[#allocation4 + $0x5c] sm:$0xf]
    %v255 = vld [vmem:[#allocation4 + $0x60] sm:$0xf]
    %v256 = vld [vmem:[#allocation4 + $0x64] sm:$0xf]
    %v257 = vld [vmem:[#allocation4 + $0x68] sm:$0xf]
    %v258 = vld [vmem:[#allocation4 + $0x6c] sm:$0xf]
    %v259 = vld [vmem:[#allocation4 + $0x70] sm:$0xf]
    %v260 = vld [vmem:[#allocation4 + $0x74] sm:$0xf]
    %v261 = vld [vmem:[#allocation4 + $0x78] sm:$0xf]
    %v262 = vld [vmem:[#allocation4 + $0x7c] sm:$0xf]
    %v263 = vld [vmem:[#allocation4 + $0x80] sm:$0xf]
    %v264 = vld [vmem:[#allocation4 + $0x84] sm:$0xf]
    %v265 = vld [vmem:[#allocation4 + $0x88] sm:$0xf]
    %v266 = vld [vmem:[#allocation4 + $0x8c] sm:$0xf]
    %v267 = vpack.c.b16 %v227, %v227
    %v268 = vpack.c.b16 %v228, %v228
    %v269 = vpack.c.b16 %v229, %v229
    %v270 = vpack.c.b16 %v230, %v230
    %v272 = vshrl.u32 %v267, 16
    %v274 = vrot.slane %v272, 7
    %v275 = vshll.u32 %v267, 16
    %v277 = vor.u32 %v274, %v275
    %v279 = vshrl.u32 %v268, 16
    %v281 = vrot.slane %v279, 7
    %v282 = vshll.u32 %v268, 16
    %v284 = vor.u32 %v281, %v282
    %v286 = vshrl.u32 %v269, 16
    %v288 = vrot.slane %v286, 7
    %v289 = vshll.u32 %v269, 16
    %v291 = vor.u32 %v288, %v289
    %v293 = vshrl.u32 %v270, 16
    %v295 = vrot.slane %v293, 7
    %v296 = vshll.u32 %v270, 16
    %v298 = vor.u32 %v295, %v296
    %299 = vrot.lane.b32.xlu0 %v277, 64
    %v300 = vpop.permute.xlu0 %299
    %301 = vrot.lane.b32.xlu0 %v284, 64
    %v302 = vpop.permute.xlu0 %301
    %303 = vrot.lane.b32.xlu0 %v291, 64
    %v304 = vpop.permute.xlu0 %303
    %305 = vrot.lane.b32.xlu0 %v298, 64
    %v306 = vpop.permute.xlu0 %305
    %vm307 = vcmask 523264
    %v308 = vsel %vm307, %v300, %v302
    %v309 = vsel %vm307, %v304, %v306
    %vm312 = vcmask 1040384
    %vm313 = vsmask.f32 256
    %vm314 = vmand %vm312, %vm313
    %v315 = vsel %vm314, 0, %v308
    %v316 = vsel %vm314, 0, %v309
    %vm317 = vcmask 1044480
    %vm318 = vsmask.f32 4352
    %vm319 = vmand %vm317, %vm318
    %v320 = vsel %vm319, %v315, 0
    %v321 = vsel %vm319, %v316, 0
    %v323 = vshrl.u32 %v320, 16
    %v325 = vshll.u32 %v320, 16
    %v327 = vrot.slane %v325, 1
    %v328 = vor.u32 %v323, %v327
    %v330 = vshrl.u32 %v321, 16
    %v332 = vshll.u32 %v321, 16
    %v334 = vrot.slane %v332, 1
    %v335 = vor.u32 %v330, %v334
    %336 = vrot.lane.b32.xlu0 %v328, 96
    %v337 = vpop.permute.xlu0 %336
    %338 = vrot.lane.b32.xlu0 %v335, 96
    %v339 = vpop.permute.xlu0 %338
    %v342 = vrot.slane %v320, 1
    %v343 = vrot.slane %v321, 1
    %344 = vrot.lane.b32.xlu0 %v342, 64
    %v345 = vpop.permute.xlu0 %344
    %346 = vrot.lane.b32.xlu0 %v343, 64
    %v347 = vpop.permute.xlu0 %346
    %vm348 = vcmask 785408
    %v350 = vsel %vm348, %v320, %v337
    %v352 = vsel %vm348, %v321, %v339
    %vm353 = vcmask 523264
    %v355 = vsel %vm353, %v337, %v345
    %v357 = vsel %vm353, %v339, %v347
    %v362 = vunpack.c.l.b16 %v350
    %v363 = vunpack.c.l.b16 %v355
    %v364 = vunpack.c.l.b16 %v345
    %v365 = vunpack.c.l.b16 %v352
    %v366 = vunpack.c.l.b16 %v357
    %v367 = vunpack.c.l.b16 %v347
    %v368 = vpack.c.b16 %v365, %v362
    %v369 = vpack.c.b16 %v366, %v363
    %v370 = vpack.c.b16 %v367, %v364
    %v409 = vunpack.c.l.b16 %v231
    %v410 = vunpack.c.l.b16 %v232
    %v411 = vunpack.c.l.b16 %v233
    %v412 = vunpack.c.l.b16 %v234
    %v413 = vunpack.c.l.b16 %v235
    %v414 = vunpack.c.l.b16 %v236
    %v415 = vunpack.c.l.b16 %v237
    %v416 = vunpack.c.l.b16 %v238
    %v417 = vunpack.c.l.b16 %v239
    %v418 = vunpack.c.l.b16 %v240
    %v419 = vunpack.c.l.b16 %v241
    %v420 = vunpack.c.l.b16 %v242
    %v421 = vunpack.c.l.b16 %v243
    %v422 = vunpack.c.l.b16 %v244
    %v423 = vunpack.c.l.b16 %v245
    %v424 = vunpack.c.l.b16 %v246
    %v425 = vunpack.c.l.b16 %v247
    %v426 = vunpack.c.l.b16 %v248
    %v427 = vunpack.c.l.b16 %v249
    %v428 = vunpack.c.l.b16 %v250
    %v429 = vunpack.c.l.b16 %v251
    %v430 = vunpack.c.l.b16 %v252
    %v431 = vunpack.c.l.b16 %v253
    %v432 = vunpack.c.l.b16 %v254
    %v433 = vunpack.c.l.b16 %v255
    %v434 = vunpack.c.l.b16 %v256
    %v435 = vunpack.c.l.b16 %v257
    %v436 = vunpack.c.l.b16 %v258
    %v437 = vunpack.c.l.b16 %v259
    %v438 = vunpack.c.l.b16 %v260
    %v439 = vunpack.c.l.b16 %v261
    %v440 = vunpack.c.l.b16 %v262
    %v441 = vunpack.c.l.b16 %v263
    %v442 = vunpack.c.l.b16 %v264
    %v443 = vunpack.c.l.b16 %v265
    %v444 = vunpack.c.l.b16 %v266
    %v445 = vpack.c.b16 %v410, %v409
    %v446 = vpack.c.b16 %v412, %v411
    %v447 = vpack.c.b16 %v414, %v413
    %v448 = vpack.c.b16 %v416, %v415
    %v449 = vpack.c.b16 %v418, %v417
    %v450 = vpack.c.b16 %v420, %v419
    %v451 = vpack.c.b16 %v422, %v421
    %v452 = vpack.c.b16 %v424, %v423
    %v453 = vpack.c.b16 %v426, %v425
    %v454 = vpack.c.b16 %v428, %v427
    %v455 = vpack.c.b16 %v430, %v429
    %v456 = vpack.c.b16 %v432, %v431
    %v457 = vpack.c.b16 %v434, %v433
    %v458 = vpack.c.b16 %v436, %v435
    %v459 = vpack.c.b16 %v438, %v437
    %v460 = vpack.c.b16 %v440, %v439
    %v461 = vpack.c.b16 %v442, %v441
    %v462 = vpack.c.b16 %v444, %v443
    %vm481 = vcmask 261120
    %v483 = vsel %vm481, %v370, 0
    %485 = vmatprep.subr.bf16.mxu0 0
    %486 = vmatpush1.bf16.msra.mxu0 %v445
    %487 = vmatprep.subr.bf16.mxu0 0
    %488 = vmatpush1.bf16.msra.mxu0 %v446
    %489 = vmatprep.subr.bf16.mxu0 0
    %490 = vmatpush1.bf16.msra.mxu0 %v447
    %491 = vmatprep.subr.bf16.mxu0 0
    %492 = vmatpush1.bf16.msra.mxu0 %v448
    %493 = vmatprep.subr.bf16.mxu0 0
    %494 = vmatpush1.bf16.msra.mxu0 %v449
    %495 = vmatprep.subr.bf16.mxu0 0
    %496 = vmatpush1.bf16.msra.mxu0 %v450
    %497 = vmatprep.subr.bf16.mxu0 0
    %498 = vmatpush1.bf16.msra.mxu0 %v451
    %499 = vmatprep.subr.bf16.mxu0 0
    %500 = vmatpush1.bf16.msra.mxu0 %v452
    %501 = vmatprep.subr.bf16.mxu0 0
    %502 = vmatpush1.bf16.msra.mxu0 %v453
    %503 = vmatprep.subr.bf16.mxu0 0
    %504 = vmatpush1.bf16.msra.mxu0 %v454
    %505 = vmatprep.subr.bf16.mxu0 0
    %506 = vmatpush1.bf16.msra.mxu0 %v455
    %507 = vmatprep.subr.bf16.mxu0 0
    %508 = vmatpush1.bf16.msra.mxu0 %v456
    %509 = vmatprep.subr.bf16.mxu0 0
    %510 = vmatpush1.bf16.msra.mxu0 %v457
    %511 = vmatprep.subr.bf16.mxu0 0
    %512 = vmatpush1.bf16.msra.mxu0 %v458
    %513 = vmatprep.subr.bf16.mxu0 0
    %514 = vmatpush1.bf16.msra.mxu0 %v459
    %515 = vmatprep.subr.bf16.mxu0 0
    %516 = vmatpush1.bf16.msra.mxu0 %v460
    %517 = vmatprep.mubr.bf16.mxu0 %v369
    %518 = vmatmul.mubr.bf16.gmra.mrb[0].mxu0 %v368
    %v519 = vpop.f32.mrb[0].mxu0
    %v520 = vadd.f32 0.0, %v519
    %v521 = vpop.f32.mrb[0].mxu0
    %v522 = vpop.f32.mrb[0].mxu0
    %v523 = vadd.f32 0.0, %v522
    %v524 = vpop.f32.mrb[0].mxu0
    %525 = vdwg.mxu0
    %526 = vmatprep.subr.bf16.mxu0 0
    %527 = vmatpush1.bf16.msra.mxu0 %v461
    %528 = vmatprep.subr.bf16.mxu0 0
    %529 = vmatpush1.bf16.msra.mxu0 %v462
    %530 = vmatprep.subr.bf16.mxu0 0
    %531 = vmatpush1.bf16.msra.mxu0 0
    %532 = vmatprep.subr.bf16.mxu0 0
    %533 = vmatpush1.bf16.msra.mxu0 0
    %534 = vmatprep.subr.bf16.mxu0 0
    %535 = vmatpush1.bf16.msra.mxu0 0
    %536 = vmatprep.subr.bf16.mxu0 0
    %537 = vmatpush1.bf16.msra.mxu0 0
    %538 = vmatprep.subr.bf16.mxu0 0
    %539 = vmatpush1.bf16.msra.mxu0 0
    %540 = vmatprep.subr.bf16.mxu0 0
    %541 = vmatpush1.bf16.msra.mxu0 0
    %542 = vmatprep.subr.bf16.mxu0 0
    %543 = vmatpush1.bf16.msra.mxu0 0
    %544 = vmatprep.subr.bf16.mxu0 0
    %545 = vmatpush1.bf16.msra.mxu0 0
    %546 = vmatprep.subr.bf16.mxu0 0
    %547 = vmatpush1.bf16.msra.mxu0 0
    %548 = vmatprep.subr.bf16.mxu0 0
    %549 = vmatpush1.bf16.msra.mxu0 0
    %550 = vmatprep.subr.bf16.mxu0 0
    %551 = vmatpush1.bf16.msra.mxu0 0
    %552 = vmatprep.subr.bf16.mxu0 0
    %553 = vmatpush1.bf16.msra.mxu0 0
    %554 = vmatprep.subr.bf16.mxu0 0
    %555 = vmatpush1.bf16.msra.mxu0 0
    %556 = vmatprep.subr.bf16.mxu0 0
    %557 = vmatpush1.bf16.msra.mxu0 0
    %558 = vmatprep.mubr.bf16.mxu0 0
    %559 = vmatmul.mubr.bf16.gmra.mrb[0].mxu0 %v483
    %v560 = vpop.f32.mrb[0].mxu0
    %v561 = vadd.f32 %v520, %v560
    %v562 = vpop.f32.mrb[0].mxu0
    %v563 = vpop.f32.mrb[0].mxu0
    %v564 = vadd.f32 %v523, %v563
    %v565 = vpop.f32.mrb[0].mxu0
    %566 = vdwg.mxu0
    %v567 = vld [vmem:[#allocation10] sm:$0x1]
    %v569 = vlaneseq
    %v570 = vshrl.u32 %v569, 7
    %v571 = vsub.s32 0, %v570
    %v572 = vrot.slane %v567, %v571
    %v574 = vmul.f32 %v561, %v572
    %v575 = vmul.f32 %v564, %v572
    %v576 = vld [vmem:[#allocation12] sm:$0x1]
    %v578 = vlaneseq
    %v579 = vshrl.u32 %v578, 7
    %v580 = vsub.s32 0, %v579
    %v581 = vrot.slane %v576, %v580
    %v583 = vadd.f32 %v574, %v581
    %v584 = vadd.f32 %v575, %v581
    %v585 = vmax.f32 %v583, 0.0
    %v586 = vmax.f32 %v584, 0.0
    %v587 = vld [vmem:[%s3] sm:$0xf]
    %v588 = vld [vmem:[%s3 + $0x4] sm:$0xf]
    %v589 = vld [vmem:[%s3 + $0x8] sm:$0xf]
    %v590 = vld [vmem:[%s3 + $0xc] sm:$0xf]
    %v591 = vld [vmem:[%s3 + $0x10] sm:$0xf]
    %v592 = vld [vmem:[%s3 + $0x14] sm:$0xf]
    %v593 = vld [vmem:[%s3 + $0x18] sm:$0xf]
    %v594 = vld [vmem:[%s3 + $0x1c] sm:$0xf]
    %v595 = vld [vmem:[%s3 + $0x20] sm:$0xf]
    %v596 = vld [vmem:[%s3 + $0x24] sm:$0xf]
    %v597 = vld [vmem:[%s3 + $0x28] sm:$0xf]
    %v598 = vld [vmem:[%s3 + $0x2c] sm:$0xf]
    %v599 = vld [vmem:[%s3 + $0x30] sm:$0xf]
    %v600 = vld [vmem:[%s3 + $0x34] sm:$0xf]
    %v601 = vrot.slane %v279, 6
    %v602 = vrot.slane %v282, 7
    %v603 = vor.u32 %v601, %v602
    %v604 = vrot.slane %v293, 6
    %v605 = vrot.slane %v296, 7
    %v606 = vor.u32 %v604, %v605
    %607 = vrot.lane.b32.xlu0 %v603, 96
    %v608 = vpop.permute.xlu0 %607
    %609 = vrot.lane.b32.xlu0 %v606, 96
    %v610 = vpop.permute.xlu0 %609
    %vm613 = vcmask 1041408
    %vm614 = vsmask.f32 1280
    %vm615 = vmand %vm613, %vm614
    %v616 = vsel %vm615, 0, %v608
    %v617 = vsel %vm615, 0, %v610
    %vm618 = vcmask 1045504
    %vm619 = vsmask.f32 5376
    %vm620 = vmand %vm618, %vm619
    %v621 = vsel %vm620, %v616, 0
    %v622 = vsel %vm620, %v617, 0
    %v624 = vshrl.u32 %v621, 16
    %v626 = vshll.u32 %v621, 16
    %v628 = vrot.slane %v626, 1
    %v629 = vor.u32 %v624, %v628
    %v631 = vshrl.u32 %v622, 16
    %v633 = vshll.u32 %v622, 16
    %v635 = vrot.slane %v633, 1
    %v636 = vor.u32 %v631, %v635
    %637 = vrot.lane.b32.xlu0 %v629, 16
    %v638 = vpop.permute.xlu0 %637
    %639 = vrot.lane.b32.xlu0 %v636, 16
    %v640 = vpop.permute.xlu0 %639
    %v643 = vrot.slane %v621, 1
    %v644 = vrot.slane %v622, 1
    %645 = vrot.lane.b32.xlu0 %v643, 32
    %v646 = vpop.permute.xlu0 %645
    %647 = vrot.lane.b32.xlu0 %v644, 32
    %v648 = vpop.permute.xlu0 %647
    %v649 = vrot.slane %v624, 1
    %v650 = vrot.slane %v626, 2
    %v651 = vor.u32 %v649, %v650
    %v652 = vrot.slane %v631, 1
    %v653 = vrot.slane %v633, 2
    %v654 = vor.u32 %v652, %v653
    %655 = vrot.lane.b32.xlu0 %v651, 48
    %v656 = vpop.permute.xlu0 %655
    %657 = vrot.lane.b32.xlu0 %v654, 48
    %v658 = vpop.permute.xlu0 %657
    %v659 = vrot.slane %v621, 2
    %v660 = vrot.slane %v622, 2
    %661 = vrot.lane.b32.xlu0 %v659, 64
    %v662 = vpop.permute.xlu0 %661
    %663 = vrot.lane.b32.xlu0 %v660, 64
    %v664 = vpop.permute.xlu0 %663
    %v665 = vrot.slane %v624, 2
    %v666 = vrot.slane %v626, 3
    %v667 = vor.u32 %v665, %v666
    %v668 = vrot.slane %v631, 2
    %v669 = vrot.slane %v633, 3
    %v670 = vor.u32 %v668, %v669
    %671 = vrot.lane.b32.xlu0 %v667, 80
    %v672 = vpop.permute.xlu0 %671
    %673 = vrot.lane.b32.xlu0 %v670, 80
    %v674 = vpop.permute.xlu0 %673
    %v675 = vrot.slane %v621, 3
    %v676 = vrot.slane %v622, 3
    %677 = vrot.lane.b32.xlu0 %v675, 96
    %v678 = vpop.permute.xlu0 %677
    %679 = vrot.lane.b32.xlu0 %v676, 96
    %v680 = vpop.permute.xlu0 %679
    %vm681 = vcmask 130048
    %v683 = vsel %vm681, %v621, %v638
    %v685 = vsel %vm681, %v622, %v640
    %v687 = vsel %vm481, %v683, %v646
    %v689 = vsel %vm481, %v685, %v648
    %vm690 = vcmask 392192
    %v692 = vsel %vm690, %v687, %v656
    %v694 = vsel %vm690, %v689, %v658
    %v696 = vsel %vm353, %v692, %v662
    %v698 = vsel %vm353, %v694, %v664
    %vm699 = vcmask 654336
    %v701 = vsel %vm699, %v696, %v672
    %v703 = vsel %vm699, %v698, %v674
    %v705 = vsel %vm348, %v701, %v678
    %v707 = vsel %vm348, %v703, %v680
    %v710 = vunpack.c.l.b16 %v705
    %v711 = vunpack.c.l.b16 %v707
    %v712 = vpack.c.b16 %v711, %v710
    %v727 = vunpack.c.l.b16 %v587
    %v728 = vunpack.c.l.b16 %v588
    %v729 = vunpack.c.l.b16 %v589
    %v730 = vunpack.c.l.b16 %v590
    %v731 = vunpack.c.l.b16 %v591
    %v732 = vunpack.c.l.b16 %v592
    %v733 = vunpack.c.l.b16 %v593
    %v734 = vunpack.c.l.b16 %v594
    %v735 = vunpack.c.l.b16 %v595
    %v736 = vunpack.c.l.b16 %v596
    %v737 = vunpack.c.l.b16 %v597
    %v738 = vunpack.c.l.b16 %v598
    %v739 = vunpack.c.l.b16 %v599
    %v740 = vunpack.c.l.b16 %v600
    %v741 = vpack.c.b16 %v728, %v727
    %v742 = vpack.c.b16 %v730, %v729
    %v743 = vpack.c.b16 %v732, %v731
    %v744 = vpack.c.b16 %v734, %v733
    %v745 = vpack.c.b16 %v736, %v735
    %v746 = vpack.c.b16 %v738, %v737
    %v747 = vpack.c.b16 %v740, %v739
    %vm755 = vcmask 916480
    %v757 = vsel %vm755, %v712, 0
    %759 = vmatprep.subr.bf16.mxu0 0
    %760 = vmatpush1.bf16.msra.mxu0 %v741
    %761 = vmatprep.subr.bf16.mxu0 0
    %762 = vmatpush1.bf16.msra.mxu0 %v742
    %763 = vmatprep.subr.bf16.mxu0 0
    %764 = vmatpush1.bf16.msra.mxu0 %v743
    %765 = vmatprep.subr.bf16.mxu0 0
    %766 = vmatpush1.bf16.msra.mxu0 %v744
    %767 = vmatprep.subr.bf16.mxu0 0
    %768 = vmatpush1.bf16.msra.mxu0 %v745
    %769 = vmatprep.subr.bf16.mxu0 0
    %770 = vmatpush1.bf16.msra.mxu0 %v746
    %771 = vmatprep.subr.bf16.mxu0 0
    %772 = vmatpush1.bf16.msra.mxu0 %v747
    %773 = vmatprep.subr.bf16.mxu0 0
    %774 = vmatpush1.bf16.msra.mxu0 0
    %775 = vmatprep.subr.bf16.mxu0 0
    %776 = vmatpush1.bf16.msra.mxu0 0
    %777 = vmatprep.subr.bf16.mxu0 0
    %778 = vmatpush1.bf16.msra.mxu0 0
    %779 = vmatprep.subr.bf16.mxu0 0
    %780 = vmatpush1.bf16.msra.mxu0 0
    %781 = vmatprep.subr.bf16.mxu0 0
    %782 = vmatpush1.bf16.msra.mxu0 0
    %783 = vmatprep.subr.bf16.mxu0 0
    %784 = vmatpush1.bf16.msra.mxu0 0
    %785 = vmatprep.subr.bf16.mxu0 0
    %786 = vmatpush1.bf16.msra.mxu0 0
    %787 = vmatprep.subr.bf16.mxu0 0
    %788 = vmatpush1.bf16.msra.mxu0 0
    %789 = vmatprep.subr.bf16.mxu0 0
    %790 = vmatpush1.bf16.msra.mxu0 0
    %791 = vmatprep.mubr.bf16.mxu0 0
    %792 = vmatmul.mubr.bf16.gmra.mrb[0].mxu0 %v757
    %v793 = vpop.f32.mrb[0].mxu0
    %v794 = vadd.f32 0.0, %v793
    %v795 = vpop.f32.mrb[0].mxu0
    %v796 = vpop.f32.mrb[0].mxu0
    %v797 = vadd.f32 0.0, %v796
    %v798 = vpop.f32.mrb[0].mxu0
    %799 = vdwg.mxu0
    %v800 = vld [vmem:[#allocation10 + $0x1] sm:$0x1]
    %v802 = vlaneseq
    %v803 = vshrl.u32 %v802, 7
    %v804 = vsub.s32 0, %v803
    %v805 = vrot.slane %v800, %v804
    %v807 = vmul.f32 %v794, %v805
    %v808 = vmul.f32 %v797, %v805
    %v809 = vld [vmem:[#allocation12 + $0x1] sm:$0x1]
    %v811 = vlaneseq
    %v812 = vshrl.u32 %v811, 7
    %v813 = vsub.s32 0, %v812
    %v814 = vrot.slane %v809, %v813
    %v816 = vadd.f32 %v807, %v814
    %v817 = vadd.f32 %v808, %v814
    %v818 = vmax.f32 %v816, 0.0
    %v819 = vmax.f32 %v817, 0.0
    %v820 = vpack.c.b16 %v122, %v122
    %v821 = vpack.c.b16 %v123, %v123
    %v823 = vshrl.u32 %v820, 16
    %v825 = vrot.slane %v823, 7
    %v826 = vshll.u32 %v820, 16
    %v828 = vor.u32 %v825, %v826
    %v830 = vshrl.u32 %v821, 16
    %v832 = vrot.slane %v830, 7
    %v833 = vshll.u32 %v821, 16
    %v835 = vor.u32 %v832, %v833
    %v838 = vsel %vm314, 4286644096, %v828
    %v839 = vsel %vm314, 4286644096, %v835
    %v840 = vsel %vm319, %v838, 4286644096
    %v841 = vsel %vm319, %v839, 4286644096
    %v843 = vshrl.u32 %v840, 16
    %v845 = vshll.u32 %v840, 16
    %v847 = vrot.slane %v845, 1
    %v848 = vor.u32 %v843, %v847
    %v850 = vshrl.u32 %v841, 16
    %v852 = vshll.u32 %v841, 16
    %v854 = vrot.slane %v852, 1
    %v855 = vor.u32 %v850, %v854
    %v858 = vmax.bf16 %v840, %v848
    %v859 = vmax.bf16 %v841, %v855
    %v862 = vrot.slane %v840, 1
    %v863 = vrot.slane %v841, 1
    %v866 = vmax.bf16 %v858, %v862
    %v867 = vmax.bf16 %v859, %v863
    %v868 = vld [vmem:[#allocation6] sm:$0x7]
    %v871 = vunpack.c.l.b16 %v866
    %v872 = vunpack.c.l.b16 %v867
    %v873 = vpack.c.b16 %v872, %v871
    %v875 = vsel %vm130, %v873, 0
    %v878 = vand.u32 %v868, %v137
    %880 = vmatprep.subr.bf16.mxu0 0
    %881 = vmatpush1.bf16.msra.mxu0 %v878
    %882 = vmatprep.subr.bf16.mxu0 0
    %883 = vmatpush1.bf16.msra.mxu0 0
    %884 = vmatprep.subr.bf16.mxu0 0
    %885 = vmatpush1.bf16.msra.mxu0 0
    %886 = vmatprep.subr.bf16.mxu0 0
    %887 = vmatpush1.bf16.msra.mxu0 0
    %888 = vmatprep.subr.bf16.mxu0 0
    %889 = vmatpush1.bf16.msra.mxu0 0
    %890 = vmatprep.subr.bf16.mxu0 0
    %891 = vmatpush1.bf16.msra.mxu0 0
    %892 = vmatprep.subr.bf16.mxu0 0
    %893 = vmatpush1.bf16.msra.mxu0 0
    %894 = vmatprep.subr.bf16.mxu0 0
    %895 = vmatpush1.bf16.msra.mxu0 0
    %896 = vmatprep.subr.bf16.mxu0 0
    %897 = vmatpush1.bf16.msra.mxu0 0
    %898 = vmatprep.subr.bf16.mxu0 0
    %899 = vmatpush1.bf16.msra.mxu0 0
    %900 = vmatprep.subr.bf16.mxu0 0
    %901 = vmatpush1.bf16.msra.mxu0 0
    %902 = vmatprep.subr.bf16.mxu0 0
    %903 = vmatpush1.bf16.msra.mxu0 0
    %904 = vmatprep.subr.bf16.mxu0 0
    %905 = vmatpush1.bf16.msra.mxu0 0
    %906 = vmatprep.subr.bf16.mxu0 0
    %907 = vmatpush1.bf16.msra.mxu0 0
    %908 = vmatprep.subr.bf16.mxu0 0
    %909 = vmatpush1.bf16.msra.mxu0 0
    %910 = vmatprep.subr.bf16.mxu0 0
    %911 = vmatpush1.bf16.msra.mxu0 0
    %912 = vmatprep.mubr.bf16.mxu0 0
    %913 = vmatmul.mubr.bf16.gmra.mrb[0].mxu0 %v875
    %v914 = vpop.f32.mrb[0].mxu0
    %v915 = vadd.f32 0.0, %v914
    %v916 = vpop.f32.mrb[0].mxu0
    %v917 = vpop.f32.mrb[0].mxu0
    %v918 = vadd.f32 0.0, %v917
    %v919 = vpop.f32.mrb[0].mxu0
    %920 = vdwg.mxu0
    %921 = vrot.lane.b32.xlu0 %v805, 96
    %v922 = vpop.permute.xlu0 %921
    %v924 = vmul.f32 %v915, %v922
    %v925 = vmul.f32 %v918, %v922
    %926 = vrot.lane.b32.xlu0 %v814, 96
    %v927 = vpop.permute.xlu0 %926
    %v929 = vadd.f32 %v924, %v927
    %v930 = vadd.f32 %v925, %v927
    %v931 = vmax.f32 %v929, 0.0
    %v932 = vmax.f32 %v930, 0.0
    %933 = vst.msk [vmem:[%s9] sm:$0xff] %vm353, %v219
    %934 = vst.msk [vmem:[%s9 + $0x10] sm:$0xff] %vm353, %v221
    %937 = vrot.lane.b32.xlu0 %v585, 64
    %v938 = vpop.permute.xlu0 %937
    %939 = vrot.lane.b32.xlu0 %v586, 64
    %v940 = vpop.permute.xlu0 %939
    %vm943 = vcmask 1048064
    %944 = vst.msk [vmem:[%s9] sm:$0xff] %vm943, %v938
    %945 = vst.msk [vmem:[%s9 + $0x8] sm:$0xff] %vm353, %v938
    %946 = vst.msk [vmem:[%s9 + $0x10] sm:$0xff] %vm943, %v940
    %947 = vst.msk [vmem:[%s9 + $0x18] sm:$0xff] %vm353, %v940
    %950 = vrot.lane.b32.xlu0 %v818, 64
    %v951 = vpop.permute.xlu0 %950
    %952 = vrot.lane.b32.xlu0 %v819, 64
    %v953 = vpop.permute.xlu0 %952
    %vm956 = vcmask 785920
    %957 = vst.msk [vmem:[%s9 + $0x8] sm:$0xff] %vm956, %v951
    %958 = vst.msk [vmem:[%s9 + $0x18] sm:$0xff] %vm956, %v953
    %961 = vrot.lane.b32.xlu0 %v931, 96
    %v962 = vpop.permute.xlu0 %961
    %963 = vrot.lane.b32.xlu0 %v932, 96
    %v964 = vpop.permute.xlu0 %963
    %vm967 = vcmask 1048320
    %968 = vst.msk [vmem:[%s9 + $0x8] sm:$0xff] %vm967, %v962
    %969 = vst.msk [vmem:[%s9 + $0x18] sm:$0xff] %vm967, %v964
    // Predicated region
    $region66: #{model_forward_pallas.6} parent=1 // pred_check
      _
    $region67: #{model_forward_pallas.6} parent=1 // pred_check_branch
      %971 = sbr.rel (0) target = $region69
    $region68: #{model_forward_pallas.6} parent=1 // pred_region
      _
    $region69: #{model_forward_pallas.6} parent=1 // pred_fallthru
      _
    // Predicated region
    $region70: #{model_forward_pallas.6} parent=1 // pred_check
      _
    $region71: #{model_forward_pallas.6} parent=1 // pred_check_branch
      %973 = sbr.rel (0) target = $region73
    $region72: #{model_forward_pallas.6} parent=1 // pred_region
      _
    $region73: #{model_forward_pallas.6} parent=1 // pred_fallthru
      _
    %974 = vsyncpa [#allocation3], 1
    %975 = vsyncpa [#allocation5], 1
    %976 = vsyncpa [#allocation8], 1
    %977 = vsyncpa [#allocation11], 1

// kernel: custom-call
$region0: #{custom-call}
  %s0 = inlined_call_operand.vmem [shape: f32[2,8], index: 0, kind: output, shape index: {}]

// kernel: model_forward_pallas.11
$region0: #{model_forward_pallas.11}
  #allocation0 [shape = 'u32[]', space=smem, size = 0x4, offset = 0x4, fixed_abs, tag = 'smem constant byte address 0x4 - core index']
  #allocation1 [shape = 'u32[144,128]{1,0:T(1,128)}', space=vmem, size = 0x12000, scoped, tag = 'internal scratch']
  %s0 = inlined_call_operand.vmem [shape: f32[2,256], index: 0, kind: input, shape index: {}]
  %s1 = inlined_call_operand.vmem [shape: f32[256,4], index: 1, kind: input, shape index: {}]
  %s2 = inlined_call_operand.vmem [shape: f32[1,4], index: 2, kind: input, shape index: {}]
  %s3 = inlined_call_operand.vmem [shape: f32[1,4], index: 3, kind: input, shape index: {}]
  %s4 = inlined_call_operand.hbm [shape: f32[2,4], index: 4, kind: output, shape index: {}]
  %s5 = sld [smem:[#allocation0]]
  $region26: #{model_forward_pallas.11} parent=0
    _
  %s7 = ssub.s32 1, %s5
  %s8 = scalar_select 0, %s7, %s5
  $region1: #{model_forward_pallas.11} parent=0
    #allocation2 [shape = 'u8[1024]{0}', space=vmem, size = 0x400, scoped, tag = 'output window, operand 0, single buffered']
    #allocation3 [shape = 's32[1]{0}', space=sflag, size = 0x4, scoped, tag = 'scoped memory for model_forward_pallas.11']
    %9 = vsyncpa [#allocation3], 0
    // Predicated region
    $region2: #{model_forward_pallas.11} parent=1 // pred_check
      _
    $region3: #{model_forward_pallas.11} parent=1 // pred_check_branch
      %11 = sbr.rel (0) target = $region5
    $region4: #{model_forward_pallas.11} parent=1 // pred_region
      _
    $region5: #{model_forward_pallas.11} parent=1 // pred_fallthru
      _
    // Predicated region
    $region6: #{model_forward_pallas.11} parent=1 // pred_check
      _
    $region7: #{model_forward_pallas.11} parent=1 // pred_check_branch
      %13 = sbr.rel (0) target = $region9
    $region8: #{model_forward_pallas.11} parent=1 // pred_region
      _
    $region9: #{model_forward_pallas.11} parent=1 // pred_fallthru
      _
    // Predicated region
    $region10: #{model_forward_pallas.11} parent=1 // pred_check
      _
    $region11: #{model_forward_pallas.11} parent=1 // pred_check_branch
      %15 = sbr.rel (0) target = $region13
    $region12: #{model_forward_pallas.11} parent=1 // pred_region
      _
    $region13: #{model_forward_pallas.11} parent=1 // pred_fallthru
      _
    // Predicated region
    $region14: #{model_forward_pallas.11} parent=1 // pred_check
      _
    $region15: #{model_forward_pallas.11} parent=1 // pred_check_branch
      %17 = sbr.rel (0) target = $region17
    $region16: #{model_forward_pallas.11} parent=1 // pred_region
      _
    $region17: #{model_forward_pallas.11} parent=1 // pred_fallthru
      _
    %v18 = vld [vmem:[%s0] sm:$0xf]
    %v19 = vld [vmem:[%s1] sm:$0xff]
    %v20 = vld [vmem:[%s1 + $0x8] sm:$0xff]
    %v21 = vld [vmem:[%s1 + $0x10] sm:$0xff]
    %v22 = vld [vmem:[%s1 + $0x18] sm:$0xff]
    %v23 = vld [vmem:[%s1 + $0x20] sm:$0xff]
    %v24 = vld [vmem:[%s1 + $0x28] sm:$0xff]
    %v25 = vld [vmem:[%s1 + $0x30] sm:$0xff]
    %v26 = vld [vmem:[%s1 + $0x38] sm:$0xff]
    %v27 = vld [vmem:[%s1 + $0x40] sm:$0xff]
    %v28 = vld [vmem:[%s1 + $0x48] sm:$0xff]
    %v29 = vld [vmem:[%s1 + $0x50] sm:$0xff]
    %v30 = vld [vmem:[%s1 + $0x58] sm:$0xff]
    %v31 = vld [vmem:[%s1 + $0x60] sm:$0xff]
    %v32 = vld [vmem:[%s1 + $0x68] sm:$0xff]
    %v33 = vld [vmem:[%s1 + $0x70] sm:$0xff]
    %v34 = vld [vmem:[%s1 + $0x78] sm:$0xff]
    %v35 = vld [vmem:[%s1 + $0x80] sm:$0xff]
    %v36 = vld [vmem:[%s1 + $0x88] sm:$0xff]
    %v37 = vld [vmem:[%s1 + $0x90] sm:$0xff]
    %v38 = vld [vmem:[%s1 + $0x98] sm:$0xff]
    %v39 = vld [vmem:[%s1 + $0xa0] sm:$0xff]
    %v40 = vld [vmem:[%s1 + $0xa8] sm:$0xff]
    %v41 = vld [vmem:[%s1 + $0xb0] sm:$0xff]
    %v42 = vld [vmem:[%s1 + $0xb8] sm:$0xff]
    %v43 = vld [vmem:[%s1 + $0xc0] sm:$0xff]
    %v44 = vld [vmem:[%s1 + $0xc8] sm:$0xff]
    %v45 = vld [vmem:[%s1 + $0xd0] sm:$0xff]
    %v46 = vld [vmem:[%s1 + $0xd8] sm:$0xff]
    %v47 = vld [vmem:[%s1 + $0xe0] sm:$0xff]
    %v48 = vld [vmem:[%s1 + $0xe8] sm:$0xff]
    %v49 = vld [vmem:[%s1 + $0xf0] sm:$0xff]
    %v50 = vld [vmem:[%s1 + $0xf8] sm:$0xff]
    %v53 = vunpack.c.l.s4 1983009808
    %v54 = vunpack.c.0.s8 %v53
    %v55 = vlaneseq
    %v56 = vshrl.u32 %v55, 7
    %v57 = vsub.s32 %v54, %v56
    %v58 = vrot.slane %v18, %v57
    %v59 = vcombine.high %v58, %v58
    %62 = vmatprep.subr.mxu0 0.0
    %63 = vmatpush1.msra.mxu0 %v19
    %64 = vmatprep.subr.mxu0 0.0
    %65 = vmatpush1.msra.mxu0 %v20
    %66 = vmatprep.subr.mxu0 0.0
    %67 = vmatpush1.msra.mxu0 %v21
    %68 = vmatprep.subr.mxu0 0.0
    %69 = vmatpush1.msra.mxu0 %v22
    %70 = vmatprep.subr.mxu0 0.0
    %71 = vmatpush1.msra.mxu0 %v23
    %72 = vmatprep.subr.mxu0 0.0
    %73 = vmatpush1.msra.mxu0 %v24
    %74 = vmatprep.subr.mxu0 0.0
    %75 = vmatpush1.msra.mxu0 %v25
    %76 = vmatprep.subr.mxu0 0.0
    %77 = vmatpush1.msra.mxu0 %v26
    %78 = vmatprep.subr.mxu0 0.0
    %79 = vmatpush1.msra.mxu0 %v27
    %80 = vmatprep.subr.mxu0 0.0
    %81 = vmatpush1.msra.mxu0 %v28
    %82 = vmatprep.subr.mxu0 0.0
    %83 = vmatpush1.msra.mxu0 %v29
    %84 = vmatprep.subr.mxu0 0.0
    %85 = vmatpush1.msra.mxu0 %v30
    %86 = vmatprep.subr.mxu0 0.0
    %87 = vmatpush1.msra.mxu0 %v31
    %88 = vmatprep.subr.mxu0 0.0
    %89 = vmatpush1.msra.mxu0 %v32
    %90 = vmatprep.subr.mxu0 0.0
    %91 = vmatpush1.msra.mxu0 %v33
    %92 = vmatprep.subr.mxu0 0.0
    %93 = vmatpush1.msra.mxu0 %v34
    %94 = vmatprep.subr.mxu0 0.0
    %95 = vmatpush1.msra.mxu0 %v35
    %96 = vmatprep.subr.mxu0 0.0
    %97 = vmatpush1.msra.mxu0 %v36
    %98 = vmatprep.subr.mxu0 0.0
    %99 = vmatpush1.msra.mxu0 %v37
    %100 = vmatprep.subr.mxu0 0.0
    %101 = vmatpush1.msra.mxu0 %v38
    %102 = vmatprep.subr.mxu0 0.0
    %103 = vmatpush1.msra.mxu0 %v39
    %104 = vmatprep.subr.mxu0 0.0
    %105 = vmatpush1.msra.mxu0 %v40
    %106 = vmatprep.subr.mxu0 0.0
    %107 = vmatpush1.msra.mxu0 %v41
    %108 = vmatprep.subr.mxu0 0.0
    %109 = vmatpush1.msra.mxu0 %v42
    %110 = vmatprep.subr.mxu0 0.0
    %111 = vmatpush1.msra.mxu0 %v43
    %112 = vmatprep.subr.mxu0 0.0
    %113 = vmatpush1.msra.mxu0 %v44
    %114 = vmatprep.subr.mxu0 0.0
    %115 = vmatpush1.msra.mxu0 %v45
    %116 = vmatprep.subr.mxu0 0.0
    %117 = vmatpush1.msra.mxu0 %v46
    %118 = vmatprep.subr.mxu0 0.0
    %119 = vmatpush1.msra.mxu0 %v47
    %120 = vmatprep.subr.mxu0 0.0
    %121 = vmatpush1.msra.mxu0 %v48
    %122 = vmatprep.subr.mxu0 0.0
    %123 = vmatpush1.msra.mxu0 %v49
    %124 = vmatprep.subr.mxu0 0.0
    %125 = vmatpush1.msra.mxu0 %v50
    %126 = vmatprep.mubr.f32.mxu0 %v59
    %127 = vmatmul.mubr.f32.gmra.mrb[0].mxu0 %v58
    %v128 = vpop.f32.mrb[0].mxu0
    %v129 = vadd.f32 0.0, %v128
    %v130 = vpop.f32.mrb[0].mxu0
    %131 = vdwg.mxu0
    %v132 = vld [vmem:[%s2] sm:$0x1]
    %v134 = vlaneseq
    %v135 = vshrl.u32 %v134, 7
    %v136 = vsub.s32 0, %v135
    %v137 = vrot.slane %v132, %v136
    %v139 = vmul.f32 %v129, %v137
    %v140 = vld [vmem:[%s3] sm:$0x1]
    %v142 = vlaneseq
    %v143 = vshrl.u32 %v142, 7
    %v144 = vsub.s32 0, %v143
    %v145 = vrot.slane %v140, %v144
    %v147 = vadd.f32 %v139, %v145
    %vm148 = vcmask 25600
    %149 = vst.msk [vmem:[#allocation2] sm:$0x3] %vm148, %v147
    // Predicated region
    $region18: #{model_forward_pallas.11} parent=1 // pred_check
      _
    $region19: #{model_forward_pallas.11} parent=1 // pred_check_branch
      %151 = sbr.rel (0) target = $region21
    $region20: #{model_forward_pallas.11} parent=1 // pred_region
      %s153 = ssub.s32 32, 32
      %154 = vsyncadd [#allocation3], %s153
      %s156 = sshll.u32 [#allocation2], 4
      %s157 = int_to_ptr.vmem [resolvable:$true] %s156
      %159 = dma.vmem_to_hbm [thread:$0]  %s157, 32, %s4, [#allocation3]
    $region21: #{model_forward_pallas.11} parent=1 // pred_fallthru
      _
    // Predicated region
    $region22: #{model_forward_pallas.11} parent=1 // pred_check
      _
    $region23: #{model_forward_pallas.11} parent=1 // pred_check_branch
      %161 = sbr.rel (0) target = $region25
    $region24: #{model_forward_pallas.11} parent=1 // pred_region
      %162 = dma.done [#allocation3], 32
    $region25: #{model_forward_pallas.11} parent=1 // pred_fallthru
      _
    %163 = vsyncpa [#allocation3], 1

// kernel: model_forward_pallas.9
$region0: #{model_forward_pallas.9}
  #allocation0 [shape = 'u32[]', space=smem, size = 0x4, offset = 0x4, fixed_abs, tag = 'smem constant byte address 0x4 - core index']
  #allocation1 [shape = 'u32[144,128]{1,0:T(1,128)}', space=vmem, size = 0x12000, scoped, tag = 'internal scratch']
  %s0 = inlined_call_operand.vmem [shape: bf16[2,8,512], index: 0, kind: input, shape index: {}]
  %s1 = inlined_call_operand.vmem [shape: bf16[512,352], index: 1, kind: input, shape index: {}]
  %s2 = inlined_call_operand.hbm [shape: bf16[576,256], index: 2, kind: input, shape index: {}]
  %s3 = inlined_call_operand.vmem [shape: bf16[224,64], index: 3, kind: input, shape index: {}]
  %s4 = inlined_call_operand.vmem [shape: bf16[512,64], index: 4, kind: input, shape index: {}]
  %s5 = inlined_call_operand.hbm [shape: f32[1,352], index: 5, kind: input, shape index: {}]
  %s6 = inlined_call_operand.hbm [shape: f32[1,352], index: 6, kind: input, shape index: {}]
  %s7 = inlined_call_operand.hbm [shape: f32[1,384], index: 7, kind: input, shape index: {}]
  %s8 = inlined_call_operand.hbm [shape: f32[1,384], index: 8, kind: input, shape index: {}]
  %s9 = inlined_call_operand.vmem [shape: f32[2,8,512], index: 9, kind: output, shape index: {}]
  %s10 = sld [smem:[#allocation0]]
  $region66: #{model_forward_pallas.9} parent=0
    _
  %s12 = ssub.s32 1, %s10
  %s13 = scalar_select 0, %s12, %s10
  $region1: #{model_forward_pallas.9} parent=0
    #allocation2 [shape = 'u8[294912]{0}', space=vmem, size = 0x48000, scoped, tag = 'input window, operand 2, single buffered']
    #allocation3 [shape = 's32[1]{0}', space=sflag, size = 0x4, scoped, tag = 'scoped memory for model_forward_pallas.9']
    #allocation4 [shape = 'u8[1536]{0}', space=vmem, size = 0x800, scoped, tag = 'input window, operand 5, single buffered']
    #allocation5 [shape = 's32[1]{0}', space=sflag, size = 0x4, scoped, tag = 'scoped memory for model_forward_pallas.9']
    #allocation6 [shape = 'u8[1536]{0}', space=vmem, size = 0x800, scoped, tag = 'input window, operand 6, single buffered']
    #allocation7 [shape = 'u8[1536]{0}', space=vmem, size = 0x800, scoped, tag = 'input window, operand 7, single buffered']
    #allocation8 [shape = 's32[1]{0}', space=sflag, size = 0x4, scoped, tag = 'scoped memory for model_forward_pallas.9']
    #allocation9 [shape = 'u8[1536]{0}', space=vmem, size = 0x800, scoped, tag = 'input window, operand 8, single buffered']
    %14 = vsyncpa [#allocation3], 0
    %15 = vsyncpa [#allocation5], 0
    %16 = vsyncpa [#allocation8], 0
    // Predicated region
    $region2: #{model_forward_pallas.9} parent=1 // pred_check
      _
    $region3: #{model_forward_pallas.9} parent=1 // pred_check_branch
      %18 = sbr.rel (0) target = $region5
    $region4: #{model_forward_pallas.9} parent=1 // pred_region
      _
    $region5: #{model_forward_pallas.9} parent=1 // pred_fallthru
      _
    // Predicated region
    $region6: #{model_forward_pallas.9} parent=1 // pred_check
      _
    $region7: #{model_forward_pallas.9} parent=1 // pred_check_branch
      %20 = sbr.rel (0) target = $region9
    $region8: #{model_forward_pallas.9} parent=1 // pred_region
      _
    $region9: #{model_forward_pallas.9} parent=1 // pred_fallthru
      _
    // Predicated region
    $region10: #{model_forward_pallas.9} parent=1 // pred_check
      _
    $region11: #{model_forward_pallas.9} parent=1 // pred_check_branch
      %22 = sbr.rel (0) target = $region13
    $region12: #{model_forward_pallas.9} parent=1 // pred_region
      %s24 = ssub.s32 9216, 9216
      %25 = vsyncadd [#allocation3], %s24
      %s26 = sshll.u32 [#allocation2], 4
      %s27 = int_to_ptr.vmem [resolvable:$true] %s26
      %32 = dma.hbm_to_vmem [thread:$0]  %s2, 9216, %s27, [#allocation3], 128, 128, 8
    $region13: #{model_forward_pallas.9} parent=1 // pred_fallthru
      _
    // Predicated region
    $region14: #{model_forward_pallas.9} parent=1 // pred_check
      _
    $region15: #{model_forward_pallas.9} parent=1 // pred_check_branch
      %34 = sbr.rel (0) target = $region17
    $region16: #{model_forward_pallas.9} parent=1 // pred_region
      _
    $region17: #{model_forward_pallas.9} parent=1 // pred_fallthru
      _
    // Predicated region
    $region18: #{model_forward_pallas.9} parent=1 // pred_check
      _
    $region19: #{model_forward_pallas.9} parent=1 // pred_check_branch
      %36 = sbr.rel (0) target = $region21
    $region20: #{model_forward_pallas.9} parent=1 // pred_region
      _
    $region21: #{model_forward_pallas.9} parent=1 // pred_fallthru
      _
    // Predicated region
    $region22: #{model_forward_pallas.9} parent=1 // pred_check
      _
    $region23: #{model_forward_pallas.9} parent=1 // pred_check_branch
      %38 = sbr.rel (0) target = $region25
    $region24: #{model_forward_pallas.9} parent=1 // pred_region
      %s40 = ssub.s32 48, 48
      %41 = vsyncadd [#allocation5], %s40
      %s43 = sshll.u32 [#allocation4], 4
      %s44 = int_to_ptr.vmem [resolvable:$true] %s43
      %46 = dma.hbm_to_vmem [thread:$0]  %s5, 48, %s44, [#allocation5]
    $region25: #{model_forward_pallas.9} parent=1 // pred_fallthru
      _
    // Predicated region
    $region26: #{model_forward_pallas.9} parent=1 // pred_check
      _
    $region27: #{model_forward_pallas.9} parent=1 // pred_check_branch
      %48 = sbr.rel (0) target = $region29
    $region28: #{model_forward_pallas.9} parent=1 // pred_region
      %s50 = ssub.s32 48, 48
      %51 = vsyncadd [#allocation5], %s50
      %s53 = sshll.u32 [#allocation6], 4
      %s54 = int_to_ptr.vmem [resolvable:$true] %s53
      %56 = dma.hbm_to_vmem [thread:$0]  %s6, 48, %s54, [#allocation5]
    $region29: #{model_forward_pallas.9} parent=1 // pred_fallthru
      _
    // Predicated region
    $region30: #{model_forward_pallas.9} parent=1 // pred_check
      _
    $region31: #{model_forward_pallas.9} parent=1 // pred_check_branch
      %58 = sbr.rel (0) target = $region33
    $region32: #{model_forward_pallas.9} parent=1 // pred_region
      %s60 = ssub.s32 48, 48
      %61 = vsyncadd [#allocation8], %s60
      %s63 = sshll.u32 [#allocation7], 4
      %s64 = int_to_ptr.vmem [resolvable:$true] %s63
      %66 = dma.hbm_to_vmem [thread:$0]  %s7, 48, %s64, [#allocation8]
    $region33: #{model_forward_pallas.9} parent=1 // pred_fallthru
      _
    // Predicated region
    $region34: #{model_forward_pallas.9} parent=1 // pred_check
      _
    $region35: #{model_forward_pallas.9} parent=1 // pred_check_branch
      %68 = sbr.rel (0) target = $region37
    $region36: #{model_forward_pallas.9} parent=1 // pred_region
      %s70 = ssub.s32 48, 48
      %71 = vsyncadd [#allocation8], %s70
      %s73 = sshll.u32 [#allocation9], 4
      %s74 = int_to_ptr.vmem [resolvable:$true] %s73
      %76 = dma.hbm_to_vmem [thread:$0]  %s8, 48, %s74, [#allocation8]
    $region37: #{model_forward_pallas.9} parent=1 // pred_fallthru
      _
    // Predicated region
    $region38: #{model_forward_pallas.9} parent=1 // pred_check
      _
    $region39: #{model_forward_pallas.9} parent=1 // pred_check_branch
      %78 = sbr.rel (0) target = $region41
    $region40: #{model_forward_pallas.9} parent=1 // pred_region
      %79 = dma.done [#allocation3], 9216
    $region41: #{model_forward_pallas.9} parent=1 // pred_fallthru
      _
    // Predicated region
    $region42: #{model_forward_pallas.9} parent=1 // pred_check
      _
    $region43: #{model_forward_pallas.9} parent=1 // pred_check_branch
      %81 = sbr.rel (0) target = $region45
    $region44: #{model_forward_pallas.9} parent=1 // pred_region
      %82 = dma.done [#allocation5], 48
    $region45: #{model_forward_pallas.9} parent=1 // pred_fallthru
      _
    // Predicated region
    $region46: #{model_forward_pallas.9} parent=1 // pred_check
      _
    $region47: #{model_forward_pallas.9} parent=1 // pred_check_branch
      %84 = sbr.rel (0) target = $region49
    $region48: #{model_forward_pallas.9} parent=1 // pred_region
      %85 = dma.done [#allocation5], 48
    $region49: #{model_forward_pallas.9} parent=1 // pred_fallthru
      _
    // Predicated region
    $region50: #{model_forward_pallas.9} parent=1 // pred_check
      _
    $region51: #{model_forward_pallas.9} parent=1 // pred_check_branch
      %87 = sbr.rel (0) target = $region53
    $region52: #{model_forward_pallas.9} parent=1 // pred_region
      %88 = dma.done [#allocation8], 48
    $region53: #{model_forward_pallas.9} parent=1 // pred_fallthru
      _
    // Predicated region
    $region54: #{model_forward_pallas.9} parent=1 // pred_check
      _
    $region55: #{model_forward_pallas.9} parent=1 // pred_check_branch
      %90 = sbr.rel (0) target = $region57
    $region56: #{model_forward_pallas.9} parent=1 // pred_region
      %91 = dma.done [#allocation8], 48
    $region57: #{model_forward_pallas.9} parent=1 // pred_fallthru
      _
    %v94 = vld [vmem:[%s0] sm:$0xff]
    %v95 = vld [vmem:[%s0 + $0x8] sm:$0xff]
    %v96 = vld [vmem:[%s0 + $0x10] sm:$0xff]
    %v97 = vld [vmem:[%s0 + $0x18] sm:$0xff]
    %v98 = vld [vmem:[%s1] sm:$0xff]
    %v99 = vld [vmem:[%s1 + $0x8] sm:$0xf]
    %v100 = vld [vmem:[%s1 + $0xc] sm:$0xff]
    %v101 = vld [vmem:[%s1 + $0x14] sm:$0xf]
    %v102 = vld [vmem:[%s1 + $0x18] sm:$0xff]
    %v103 = vld [vmem:[%s1 + $0x20] sm:$0xf]
    %v104 = vld [vmem:[%s1 + $0x24] sm:$0xff]
    %v105 = vld [vmem:[%s1 + $0x2c] sm:$0xf]
    %v106 = vld [vmem:[%s1 + $0x30] sm:$0xff]
    %v107 = vld [vmem:[%s1 + $0x38] sm:$0xf]
    %v108 = vld [vmem:[%s1 + $0x3c] sm:$0xff]
    %v109 = vld [vmem:[%s1 + $0x44] sm:$0xf]
    %v110 = vld [vmem:[%s1 + $0x48] sm:$0xff]
    %v111 = vld [vmem:[%s1 + $0x50] sm:$0xf]
    %v112 = vld [vmem:[%s1 + $0x54] sm:$0xff]
    %v113 = vld [vmem:[%s1 + $0x5c] sm:$0xf]
    %v114 = vld [vmem:[%s1 + $0x60] sm:$0xff]
    %v115 = vld [vmem:[%s1 + $0x68] sm:$0xf]
    %v116 = vld [vmem:[%s1 + $0x6c] sm:$0xff]
    %v117 = vld [vmem:[%s1 + $0x74] sm:$0xf]
    %v118 = vld [vmem:[%s1 + $0x78] sm:$0xff]
    %v119 = vld [vmem:[%s1 + $0x80] sm:$0xf]
    %v120 = vld [vmem:[%s1 + $0x84] sm:$0xff]
    %v121 = vld [vmem:[%s1 + $0x8c] sm:$0xf]
    %v122 = vld [vmem:[%s1 + $0x90] sm:$0xff]
    %v123 = vld [vmem:[%s1 + $0x98] sm:$0xf]
    %v124 = vld [vmem:[%s1 + $0x9c] sm:$0xff]
    %v125 = vld [vmem:[%s1 + $0xa4] sm:$0xf]
    %v126 = vld [vmem:[%s1 + $0xa8] sm:$0xff]
    %v127 = vld [vmem:[%s1 + $0xb0] sm:$0xf]
    %v128 = vld [vmem:[%s1 + $0xb4] sm:$0xff]
    %v129 = vld [vmem:[%s1 + $0xbc] sm:$0xf]
    %v130 = vld [vmem:[%s1 + $0xc0] sm:$0xff]
    %v131 = vld [vmem:[%s1 + $0xc8] sm:$0xf]
    %v132 = vld [vmem:[%s1 + $0xcc] sm:$0xff]
    %v133 = vld [vmem:[%s1 + $0xd4] sm:$0xf]
    %v134 = vld [vmem:[%s1 + $0xd8] sm:$0xff]
    %v135 = vld [vmem:[%s1 + $0xe0] sm:$0xf]
    %v136 = vld [vmem:[%s1 + $0xe4] sm:$0xff]
    %v137 = vld [vmem:[%s1 + $0xec] sm:$0xf]
    %v138 = vld [vmem:[%s1 + $0xf0] sm:$0xff]
    %v139 = vld [vmem:[%s1 + $0xf8] sm:$0xf]
    %v140 = vld [vmem:[%s1 + $0xfc] sm:$0xff]
    %v141 = vld [vmem:[%s1 + $0x104] sm:$0xf]
    %v142 = vld [vmem:[%s1 + $0x108] sm:$0xff]
    %v143 = vld [vmem:[%s1 + $0x110] sm:$0xf]
    %v144 = vld [vmem:[%s1 + $0x114] sm:$0xff]
    %v145 = vld [vmem:[%s1 + $0x11c] sm:$0xf]
    %v146 = vld [vmem:[%s1 + $0x120] sm:$0xff]
    %v147 = vld [vmem:[%s1 + $0x128] sm:$0xf]
    %v148 = vld [vmem:[%s1 + $0x12c] sm:$0xff]
    %v149 = vld [vmem:[%s1 + $0x134] sm:$0xf]
    %v150 = vld [vmem:[%s1 + $0x138] sm:$0xff]
    %v151 = vld [vmem:[%s1 + $0x140] sm:$0xf]
    %v152 = vld [vmem:[%s1 + $0x144] sm:$0xff]
    %v153 = vld [vmem:[%s1 + $0x14c] sm:$0xf]
    %v154 = vld [vmem:[%s1 + $0x150] sm:$0xff]
    %v155 = vld [vmem:[%s1 + $0x158] sm:$0xf]
    %v156 = vld [vmem:[%s1 + $0x15c] sm:$0xff]
    %v157 = vld [vmem:[%s1 + $0x164] sm:$0xf]
    %v158 = vld [vmem:[%s1 + $0x168] sm:$0xff]
    %v159 = vld [vmem:[%s1 + $0x170] sm:$0xf]
    %v160 = vld [vmem:[%s1 + $0x174] sm:$0xff]
    %v161 = vld [vmem:[%s1 + $0x17c] sm:$0xf]
    %v162 = vld [vmem:[%s1 + $0x180] sm:$0xff]
    %v163 = vld [vmem:[%s1 + $0x188] sm:$0xf]
    %v164 = vld [vmem:[%s1 + $0x18c] sm:$0xff]
    %v165 = vld [vmem:[%s1 + $0x194] sm:$0xf]
    %v166 = vld [vmem:[%s1 + $0x198] sm:$0xff]
    %v167 = vld [vmem:[%s1 + $0x1a0] sm:$0xf]
    %v168 = vld [vmem:[%s1 + $0x1a4] sm:$0xff]
    %v169 = vld [vmem:[%s1 + $0x1ac] sm:$0xf]
    %v170 = vld [vmem:[%s1 + $0x1b0] sm:$0xff]
    %v171 = vld [vmem:[%s1 + $0x1b8] sm:$0xf]
    %v172 = vld [vmem:[%s1 + $0x1bc] sm:$0xff]
    %v173 = vld [vmem:[%s1 + $0x1c4] sm:$0xf]
    %v174 = vld [vmem:[%s1 + $0x1c8] sm:$0xff]
    %v175 = vld [vmem:[%s1 + $0x1d0] sm:$0xf]
    %v176 = vld [vmem:[%s1 + $0x1d4] sm:$0xff]
    %v177 = vld [vmem:[%s1 + $0x1dc] sm:$0xf]
    %v178 = vld [vmem:[%s1 + $0x1e0] sm:$0xff]
    %v179 = vld [vmem:[%s1 + $0x1e8] sm:$0xf]
    %v180 = vld [vmem:[%s1 + $0x1ec] sm:$0xff]
    %v181 = vld [vmem:[%s1 + $0x1f4] sm:$0xf]
    %v182 = vld [vmem:[%s1 + $0x1f8] sm:$0xff]
    %v183 = vld [vmem:[%s1 + $0x200] sm:$0xf]
    %v184 = vld [vmem:[%s1 + $0x204] sm:$0xff]
    %v185 = vld [vmem:[%s1 + $0x20c] sm:$0xf]
    %v186 = vld [vmem:[%s1 + $0x210] sm:$0xff]
    %v187 = vld [vmem:[%s1 + $0x218] sm:$0xf]
    %v188 = vld [vmem:[%s1 + $0x21c] sm:$0xff]
    %v189 = vld [vmem:[%s1 + $0x224] sm:$0xf]
    %v190 = vld [vmem:[%s1 + $0x228] sm:$0xff]
    %v191 = vld [vmem:[%s1 + $0x230] sm:$0xf]
    %v192 = vld [vmem:[%s1 + $0x234] sm:$0xff]
    %v193 = vld [vmem:[%s1 + $0x23c] sm:$0xf]
    %v194 = vld [vmem:[%s1 + $0x240] sm:$0xff]
    %v195 = vld [vmem:[%s1 + $0x248] sm:$0xf]
    %v196 = vld [vmem:[%s1 + $0x24c] sm:$0xff]
    %v197 = vld [vmem:[%s1 + $0x254] sm:$0xf]
    %v198 = vld [vmem:[%s1 + $0x258] sm:$0xff]
    %v199 = vld [vmem:[%s1 + $0x260] sm:$0xf]
    %v200 = vld [vmem:[%s1 + $0x264] sm:$0xff]
    %v201 = vld [vmem:[%s1 + $0x26c] sm:$0xf]
    %v202 = vld [vmem:[%s1 + $0x270] sm:$0xff]
    %v203 = vld [vmem:[%s1 + $0x278] sm:$0xf]
    %v204 = vld [vmem:[%s1 + $0x27c] sm:$0xff]
    %v205 = vld [vmem:[%s1 + $0x284] sm:$0xf]
    %v206 = vld [vmem:[%s1 + $0x288] sm:$0xff]
    %v207 = vld [vmem:[%s1 + $0x290] sm:$0xf]
    %v208 = vld [vmem:[%s1 + $0x294] sm:$0xff]
    %v209 = vld [vmem:[%s1 + $0x29c] sm:$0xf]
    %v210 = vld [vmem:[%s1 + $0x2a0] sm:$0xff]
    %v211 = vld [vmem:[%s1 + $0x2a8] sm:$0xf]
    %v212 = vld [vmem:[%s1 + $0x2ac] sm:$0xff]
    %v213 = vld [vmem:[%s1 + $0x2b4] sm:$0xf]
    %v214 = vld [vmem:[%s1 + $0x2b8] sm:$0xff]
    %v215 = vld [vmem:[%s1 + $0x2c0] sm:$0xf]
    %v216 = vld [vmem:[%s1 + $0x2c4] sm:$0xff]
    %v217 = vld [vmem:[%s1 + $0x2cc] sm:$0xf]
    %v218 = vld [vmem:[%s1 + $0x2d0] sm:$0xff]
    %v219 = vld [vmem:[%s1 + $0x2d8] sm:$0xf]
    %v220 = vld [vmem:[%s1 + $0x2dc] sm:$0xff]
    %v221 = vld [vmem:[%s1 + $0x2e4] sm:$0xf]
    %v222 = vld [vmem:[%s1 + $0x2e8] sm:$0xff]
    %v223 = vld [vmem:[%s1 + $0x2f0] sm:$0xf]
    %v224 = vld [vmem:[%s1 + $0x2f4] sm:$0xff]
    %v225 = vld [vmem:[%s1 + $0x2fc] sm:$0xf]
    %v230 = vunpack.c.l.b16 %v94
    %v231 = vunpack.c.h.b16 %v94
    %v232 = vunpack.c.l.b16 %v95
    %v233 = vunpack.c.h.b16 %v95
    %v234 = vunpack.c.l.b16 %v96
    %v235 = vunpack.c.h.b16 %v96
    %v236 = vunpack.c.l.b16 %v97
    %v237 = vunpack.c.h.b16 %v97
    %v238 = vpack.c.b16 %v234, %v230
    %v239 = vpack.c.b16 %v235, %v231
    %v240 = vpack.c.b16 %v236, %v232
    %v241 = vpack.c.b16 %v237, %v233
    %v374 = vunpack.c.l.b16 %v98
    %v375 = vunpack.c.h.b16 %v98
    %v376 = vunpack.c.l.b16 %v99
    %v377 = vunpack.c.l.b16 %v100
    %v378 = vunpack.c.h.b16 %v100
    %v379 = vunpack.c.l.b16 %v101
    %v380 = vunpack.c.l.b16 %v102
    %v381 = vunpack.c.h.b16 %v102
    %v382 = vunpack.c.l.b16 %v103
    %v383 = vunpack.c.l.b16 %v104
    %v384 = vunpack.c.h.b16 %v104
    %v385 = vunpack.c.l.b16 %v105
    %v386 = vunpack.c.l.b16 %v106
    %v387 = vunpack.c.h.b16 %v106
    %v388 = vunpack.c.l.b16 %v107
    %v389 = vunpack.c.l.b16 %v108
    %v390 = vunpack.c.h.b16 %v108
    %v391 = vunpack.c.l.b16 %v109
    %v392 = vunpack.c.l.b16 %v110
    %v393 = vunpack.c.h.b16 %v110
    %v394 = vunpack.c.l.b16 %v111
    %v395 = vunpack.c.l.b16 %v112
    %v396 = vunpack.c.h.b16 %v112
    %v397 = vunpack.c.l.b16 %v113
    %v398 = vunpack.c.l.b16 %v114
    %v399 = vunpack.c.h.b16 %v114
    %v400 = vunpack.c.l.b16 %v115
    %v401 = vunpack.c.l.b16 %v116
    %v402 = vunpack.c.h.b16 %v116
    %v403 = vunpack.c.l.b16 %v117
    %v404 = vunpack.c.l.b16 %v118
    %v405 = vunpack.c.h.b16 %v118
    %v406 = vunpack.c.l.b16 %v119
    %v407 = vunpack.c.l.b16 %v120
    %v408 = vunpack.c.h.b16 %v120
    %v409 = vunpack.c.l.b16 %v121
    %v410 = vunpack.c.l.b16 %v122
    %v411 = vunpack.c.h.b16 %v122
    %v412 = vunpack.c.l.b16 %v123
    %v413 = vunpack.c.l.b16 %v124
    %v414 = vunpack.c.h.b16 %v124
    %v415 = vunpack.c.l.b16 %v125
    %v416 = vunpack.c.l.b16 %v126
    %v417 = vunpack.c.h.b16 %v126
    %v418 = vunpack.c.l.b16 %v127
    %v419 = vunpack.c.l.b16 %v128
    %v420 = vunpack.c.h.b16 %v128
    %v421 = vunpack.c.l.b16 %v129
    %v422 = vunpack.c.l.b16 %v130
    %v423 = vunpack.c.h.b16 %v130
    %v424 = vunpack.c.l.b16 %v131
    %v425 = vunpack.c.l.b16 %v132
    %v426 = vunpack.c.h.b16 %v132
    %v427 = vunpack.c.l.b16 %v133
    %v428 = vunpack.c.l.b16 %v134
    %v429 = vunpack.c.h.b16 %v134
    %v430 = vunpack.c.l.b16 %v135
    %v431 = vunpack.c.l.b16 %v136
    %v432 = vunpack.c.h.b16 %v136
    %v433 = vunpack.c.l.b16 %v137
    %v434 = vunpack.c.l.b16 %v138
    %v435 = vunpack.c.h.b16 %v138
    %v436 = vunpack.c.l.b16 %v139
    %v437 = vunpack.c.l.b16 %v140
    %v438 = vunpack.c.h.b16 %v140
    %v439 = vunpack.c.l.b16 %v141
    %v440 = vunpack.c.l.b16 %v142
    %v441 = vunpack.c.h.b16 %v142
    %v442 = vunpack.c.l.b16 %v143
    %v443 = vunpack.c.l.b16 %v144
    %v444 = vunpack.c.h.b16 %v144
    %v445 = vunpack.c.l.b16 %v145
    %v446 = vunpack.c.l.b16 %v146
    %v447 = vunpack.c.h.b16 %v146
    %v448 = vunpack.c.l.b16 %v147
    %v449 = vunpack.c.l.b16 %v148
    %v450 = vunpack.c.h.b16 %v148
    %v451 = vunpack.c.l.b16 %v149
    %v452 = vunpack.c.l.b16 %v150
    %v453 = vunpack.c.h.b16 %v150
    %v454 = vunpack.c.l.b16 %v151
    %v455 = vunpack.c.l.b16 %v152
    %v456 = vunpack.c.h.b16 %v152
    %v457 = vunpack.c.l.b16 %v153
    %v458 = vunpack.c.l.b16 %v154
    %v459 = vunpack.c.h.b16 %v154
    %v460 = vunpack.c.l.b16 %v155
    %v461 = vunpack.c.l.b16 %v156
    %v462 = vunpack.c.h.b16 %v156
    %v463 = vunpack.c.l.b16 %v157
    %v464 = vunpack.c.l.b16 %v158
    %v465 = vunpack.c.h.b16 %v158
    %v466 = vunpack.c.l.b16 %v159
    %v467 = vunpack.c.l.b16 %v160
    %v468 = vunpack.c.h.b16 %v160
    %v469 = vunpack.c.l.b16 %v161
    %v470 = vunpack.c.l.b16 %v162
    %v471 = vunpack.c.h.b16 %v162
    %v472 = vunpack.c.l.b16 %v163
    %v473 = vunpack.c.l.b16 %v164
    %v474 = vunpack.c.h.b16 %v164
    %v475 = vunpack.c.l.b16 %v165
    %v476 = vunpack.c.l.b16 %v166
    %v477 = vunpack.c.h.b16 %v166
    %v478 = vunpack.c.l.b16 %v167
    %v479 = vunpack.c.l.b16 %v168
    %v480 = vunpack.c.h.b16 %v168
    %v481 = vunpack.c.l.b16 %v169
    %v482 = vunpack.c.l.b16 %v170
    %v483 = vunpack.c.h.b16 %v170
    %v484 = vunpack.c.l.b16 %v171
    %v485 = vunpack.c.l.b16 %v172
    %v486 = vunpack.c.h.b16 %v172
    %v487 = vunpack.c.l.b16 %v173
    %v488 = vunpack.c.l.b16 %v174
    %v489 = vunpack.c.h.b16 %v174
    %v490 = vunpack.c.l.b16 %v175
    %v491 = vunpack.c.l.b16 %v176
    %v492 = vunpack.c.h.b16 %v176
    %v493 = vunpack.c.l.b16 %v177
    %v494 = vunpack.c.l.b16 %v178
    %v495 = vunpack.c.h.b16 %v178
    %v496 = vunpack.c.l.b16 %v179
    %v497 = vunpack.c.l.b16 %v180
    %v498 = vunpack.c.h.b16 %v180
    %v499 = vunpack.c.l.b16 %v181
    %v500 = vunpack.c.l.b16 %v182
    %v501 = vunpack.c.h.b16 %v182
    %v502 = vunpack.c.l.b16 %v183
    %v503 = vunpack.c.l.b16 %v184
    %v504 = vunpack.c.h.b16 %v184
    %v505 = vunpack.c.l.b16 %v185
    %v506 = vunpack.c.l.b16 %v186
    %v507 = vunpack.c.h.b16 %v186
    %v508 = vunpack.c.l.b16 %v187
    %v509 = vunpack.c.l.b16 %v188
    %v510 = vunpack.c.h.b16 %v188
    %v511 = vunpack.c.l.b16 %v189
    %v512 = vunpack.c.l.b16 %v190
    %v513 = vunpack.c.h.b16 %v190
    %v514 = vunpack.c.l.b16 %v191
    %v515 = vunpack.c.l.b16 %v192
    %v516 = vunpack.c.h.b16 %v192
    %v517 = vunpack.c.l.b16 %v193
    %v518 = vunpack.c.l.b16 %v194
    %v519 = vunpack.c.h.b16 %v194
    %v520 = vunpack.c.l.b16 %v195
    %v521 = vunpack.c.l.b16 %v196
    %v522 = vunpack.c.h.b16 %v196
    %v523 = vunpack.c.l.b16 %v197
    %v524 = vunpack.c.l.b16 %v198
    %v525 = vunpack.c.h.b16 %v198
    %v526 = vunpack.c.l.b16 %v199
    %v527 = vunpack.c.l.b16 %v200
    %v528 = vunpack.c.h.b16 %v200
    %v529 = vunpack.c.l.b16 %v201
    %v530 = vunpack.c.l.b16 %v202
    %v531 = vunpack.c.h.b16 %v202
    %v532 = vunpack.c.l.b16 %v203
    %v533 = vunpack.c.l.b16 %v204
    %v534 = vunpack.c.h.b16 %v204
    %v535 = vunpack.c.l.b16 %v205
    %v536 = vunpack.c.l.b16 %v206
    %v537 = vunpack.c.h.b16 %v206
    %v538 = vunpack.c.l.b16 %v207
    %v539 = vunpack.c.l.b16 %v208
    %v540 = vunpack.c.h.b16 %v208
    %v541 = vunpack.c.l.b16 %v209
    %v542 = vunpack.c.l.b16 %v210
    %v543 = vunpack.c.h.b16 %v210
    %v544 = vunpack.c.l.b16 %v211
    %v545 = vunpack.c.l.b16 %v212
    %v546 = vunpack.c.h.b16 %v212
    %v547 = vunpack.c.l.b16 %v213
    %v548 = vunpack.c.l.b16 %v214
    %v549 = vunpack.c.h.b16 %v214
    %v550 = vunpack.c.l.b16 %v215
    %v551 = vunpack.c.l.b16 %v216
    %v552 = vunpack.c.h.b16 %v216
    %v553 = vunpack.c.l.b16 %v217
    %v554 = vunpack.c.l.b16 %v218
    %v555 = vunpack.c.h.b16 %v218
    %v556 = vunpack.c.l.b16 %v219
    %v557 = vunpack.c.l.b16 %v220
    %v558 = vunpack.c.h.b16 %v220
    %v559 = vunpack.c.l.b16 %v221
    %v560 = vunpack.c.l.b16 %v222
    %v561 = vunpack.c.h.b16 %v222
    %v562 = vunpack.c.l.b16 %v223
    %v563 = vunpack.c.l.b16 %v224
    %v564 = vunpack.c.h.b16 %v224
    %v565 = vunpack.c.l.b16 %v225
    %v566 = vpack.c.b16 %v377, %v374
    %v567 = vpack.c.b16 %v378, %v375
    %v568 = vpack.c.b16 %v379, %v376
    %v569 = vpack.c.b16 %v383, %v380
    %v570 = vpack.c.b16 %v384, %v381
    %v571 = vpack.c.b16 %v385, %v382
    %v572 = vpack.c.b16 %v389, %v386
    %v573 = vpack.c.b16 %v390, %v387
    %v574 = vpack.c.b16 %v391, %v388
    %v575 = vpack.c.b16 %v395, %v392
    %v576 = vpack.c.b16 %v396, %v393
    %v577 = vpack.c.b16 %v397, %v394
    %v578 = vpack.c.b16 %v401, %v398
    %v579 = vpack.c.b16 %v402, %v399
    %v580 = vpack.c.b16 %v403, %v400
    %v581 = vpack.c.b16 %v407, %v404
    %v582 = vpack.c.b16 %v408, %v405
    %v583 = vpack.c.b16 %v409, %v406
    %v584 = vpack.c.b16 %v413, %v410
    %v585 = vpack.c.b16 %v414, %v411
    %v586 = vpack.c.b16 %v415, %v412
    %v587 = vpack.c.b16 %v419, %v416
    %v588 = vpack.c.b16 %v420, %v417
    %v589 = vpack.c.b16 %v421, %v418
    %v590 = vpack.c.b16 %v425, %v422
    %v591 = vpack.c.b16 %v426, %v423
    %v592 = vpack.c.b16 %v427, %v424
    %v593 = vpack.c.b16 %v431, %v428
    %v594 = vpack.c.b16 %v432, %v429
    %v595 = vpack.c.b16 %v433, %v430
    %v596 = vpack.c.b16 %v437, %v434
    %v597 = vpack.c.b16 %v438, %v435
    %v598 = vpack.c.b16 %v439, %v436
    %v599 = vpack.c.b16 %v443, %v440
    %v600 = vpack.c.b16 %v444, %v441
    %v601 = vpack.c.b16 %v445, %v442
    %v602 = vpack.c.b16 %v449, %v446
    %v603 = vpack.c.b16 %v450, %v447
    %v604 = vpack.c.b16 %v451, %v448
    %v605 = vpack.c.b16 %v455, %v452
    %v606 = vpack.c.b16 %v456, %v453
    %v607 = vpack.c.b16 %v457, %v454
    %v608 = vpack.c.b16 %v461, %v458
    %v609 = vpack.c.b16 %v462, %v459
    %v610 = vpack.c.b16 %v463, %v460
    %v611 = vpack.c.b16 %v467, %v464
    %v612 = vpack.c.b16 %v468, %v465
    %v613 = vpack.c.b16 %v469, %v466
    %v614 = vpack.c.b16 %v473, %v470
    %v615 = vpack.c.b16 %v474, %v471
    %v616 = vpack.c.b16 %v475, %v472
    %v617 = vpack.c.b16 %v479, %v476
    %v618 = vpack.c.b16 %v480, %v477
    %v619 = vpack.c.b16 %v481, %v478
    %v620 = vpack.c.b16 %v485, %v482
    %v621 = vpack.c.b16 %v486, %v483
    %v622 = vpack.c.b16 %v487, %v484
    %v623 = vpack.c.b16 %v491, %v488
    %v624 = vpack.c.b16 %v492, %v489
    %v625 = vpack.c.b16 %v493, %v490
    %v626 = vpack.c.b16 %v497, %v494
    %v627 = vpack.c.b16 %v498, %v495
    %v628 = vpack.c.b16 %v499, %v496
    %v629 = vpack.c.b16 %v503, %v500
    %v630 = vpack.c.b16 %v504, %v501
    %v631 = vpack.c.b16 %v505, %v502
    %v632 = vpack.c.b16 %v509, %v506
    %v633 = vpack.c.b16 %v510, %v507
    %v634 = vpack.c.b16 %v511, %v508
    %v635 = vpack.c.b16 %v515, %v512
    %v636 = vpack.c.b16 %v516, %v513
    %v637 = vpack.c.b16 %v517, %v514
    %v638 = vpack.c.b16 %v521, %v518
    %v639 = vpack.c.b16 %v522, %v519
    %v640 = vpack.c.b16 %v523, %v520
    %v641 = vpack.c.b16 %v527, %v524
    %v642 = vpack.c.b16 %v528, %v525
    %v643 = vpack.c.b16 %v529, %v526
    %v644 = vpack.c.b16 %v533, %v530
    %v645 = vpack.c.b16 %v534, %v531
    %v646 = vpack.c.b16 %v535, %v532
    %v647 = vpack.c.b16 %v539, %v536
    %v648 = vpack.c.b16 %v540, %v537
    %v649 = vpack.c.b16 %v541, %v538
    %v650 = vpack.c.b16 %v545, %v542
    %v651 = vpack.c.b16 %v546, %v543
    %v652 = vpack.c.b16 %v547, %v544
    %v653 = vpack.c.b16 %v551, %v548
    %v654 = vpack.c.b16 %v552, %v549
    %v655 = vpack.c.b16 %v553, %v550
    %v656 = vpack.c.b16 %v557, %v554
    %v657 = vpack.c.b16 %v558, %v555
    %v658 = vpack.c.b16 %v559, %v556
    %v659 = vpack.c.b16 %v563, %v560
    %v660 = vpack.c.b16 %v564, %v561
    %v661 = vpack.c.b16 %v565, %v562
    %758 = vmatprep.subr.bf16.mxu0 %v567
    %759 = vmatpush1.bf16.msra.mxu0 %v566
    %760 = vmatprep.subr.bf16.mxu0 %v570
    %761 = vmatpush1.bf16.msra.mxu0 %v569
    %762 = vmatprep.subr.bf16.mxu0 %v573
    %763 = vmatpush1.bf16.msra.mxu0 %v572
    %764 = vmatprep.subr.bf16.mxu0 %v576
    %765 = vmatpush1.bf16.msra.mxu0 %v575
    %766 = vmatprep.subr.bf16.mxu0 %v579
    %767 = vmatpush1.bf16.msra.mxu0 %v578
    %768 = vmatprep.subr.bf16.mxu0 %v582
    %769 = vmatpush1.bf16.msra.mxu0 %v581
    %770 = vmatprep.subr.bf16.mxu0 %v585
    %771 = vmatpush1.bf16.msra.mxu0 %v584
    %772 = vmatprep.subr.bf16.mxu0 %v588
    %773 = vmatpush1.bf16.msra.mxu0 %v587
    %774 = vmatprep.subr.bf16.mxu0 %v591
    %775 = vmatpush1.bf16.msra.mxu0 %v590
    %776 = vmatprep.subr.bf16.mxu0 %v594
    %777 = vmatpush1.bf16.msra.mxu0 %v593
    %778 = vmatprep.subr.bf16.mxu0 %v597
    %779 = vmatpush1.bf16.msra.mxu0 %v596
    %780 = vmatprep.subr.bf16.mxu0 %v600
    %781 = vmatpush1.bf16.msra.mxu0 %v599
    %782 = vmatprep.subr.bf16.mxu0 %v603
    %783 = vmatpush1.bf16.msra.mxu0 %v602
    %784 = vmatprep.subr.bf16.mxu0 %v606
    %785 = vmatpush1.bf16.msra.mxu0 %v605
    %786 = vmatprep.subr.bf16.mxu0 %v609
    %787 = vmatpush1.bf16.msra.mxu0 %v608
    %788 = vmatprep.subr.bf16.mxu0 %v612
    %789 = vmatpush1.bf16.msra.mxu0 %v611
    %790 = vmatprep.mubr.bf16.mxu0 %v239
    %791 = vmatmul.mubr.bf16.gmra.mrb[0].mxu0 %v238
    %v792 = vpop.f32.mrb[0].mxu0
    %v793 = vadd.f32 0.0, %v792
    %v794 = vpop.f32.mrb[0].mxu0
    %v795 = vadd.f32 0.0, %v794
    %v796 = vpop.f32.mrb[0].mxu0
    %v797 = vadd.f32 0.0, %v796
    %v798 = vpop.f32.mrb[0].mxu0
    %v799 = vadd.f32 0.0, %v798
    %800 = vdwg.mxu0
    %801 = vmatprep.subr.bf16.mxu0 %v615
    %802 = vmatpush1.bf16.msra.mxu0 %v614
    %803 = vmatprep.subr.bf16.mxu0 %v618
    %804 = vmatpush1.bf16.msra.mxu0 %v617
    %805 = vmatprep.subr.bf16.mxu0 %v621
    %806 = vmatpush1.bf16.msra.mxu0 %v620
    %807 = vmatprep.subr.bf16.mxu0 %v624
    %808 = vmatpush1.bf16.msra.mxu0 %v623
    %809 = vmatprep.subr.bf16.mxu0 %v627
    %810 = vmatpush1.bf16.msra.mxu0 %v626
    %811 = vmatprep.subr.bf16.mxu0 %v630
    %812 = vmatpush1.bf16.msra.mxu0 %v629
    %813 = vmatprep.subr.bf16.mxu0 %v633
    %814 = vmatpush1.bf16.msra.mxu0 %v632
    %815 = vmatprep.subr.bf16.mxu0 %v636
    %816 = vmatpush1.bf16.msra.mxu0 %v635
    %817 = vmatprep.subr.bf16.mxu0 %v639
    %818 = vmatpush1.bf16.msra.mxu0 %v638
    %819 = vmatprep.subr.bf16.mxu0 %v642
    %820 = vmatpush1.bf16.msra.mxu0 %v641
    %821 = vmatprep.subr.bf16.mxu0 %v645
    %822 = vmatpush1.bf16.msra.mxu0 %v644
    %823 = vmatprep.subr.bf16.mxu0 %v648
    %824 = vmatpush1.bf16.msra.mxu0 %v647
    %825 = vmatprep.subr.bf16.mxu0 %v651
    %826 = vmatpush1.bf16.msra.mxu0 %v650
    %827 = vmatprep.subr.bf16.mxu0 %v654
    %828 = vmatpush1.bf16.msra.mxu0 %v653
    %829 = vmatprep.subr.bf16.mxu0 %v657
    %830 = vmatpush1.bf16.msra.mxu0 %v656
    %831 = vmatprep.subr.bf16.mxu0 %v660
    %832 = vmatpush1.bf16.msra.mxu0 %v659
    %833 = vmatprep.mubr.bf16.mxu0 %v241
    %834 = vmatmul.mubr.bf16.gmra.mrb[0].mxu0 %v240
    %v835 = vpop.f32.mrb[0].mxu0
    %v836 = vadd.f32 %v793, %v835
    %v837 = vpop.f32.mrb[0].mxu0
    %v838 = vadd.f32 %v795, %v837
    %v839 = vpop.f32.mrb[0].mxu0
    %v840 = vadd.f32 %v797, %v839
    %v841 = vpop.f32.mrb[0].mxu0
    %v842 = vadd.f32 %v799, %v841
    %843 = vdwg.mxu0
    %844 = vmatprep.subr.bf16.mxu0 0
    %845 = vmatpush1.bf16.msra.mxu0 %v568
    %846 = vmatprep.subr.bf16.mxu0 0
    %847 = vmatpush1.bf16.msra.mxu0 %v571
    %848 = vmatprep.subr.bf16.mxu0 0
    %849 = vmatpush1.bf16.msra.mxu0 %v574
    %850 = vmatprep.subr.bf16.mxu0 0
    %851 = vmatpush1.bf16.msra.mxu0 %v577
    %852 = vmatprep.subr.bf16.mxu0 0
    %853 = vmatpush1.bf16.msra.mxu0 %v580
    %854 = vmatprep.subr.bf16.mxu0 0
    %855 = vmatpush1.bf16.msra.mxu0 %v583
    %856 = vmatprep.subr.bf16.mxu0 0
    %857 = vmatpush1.bf16.msra.mxu0 %v586
    %858 = vmatprep.subr.bf16.mxu0 0
    %859 = vmatpush1.bf16.msra.mxu0 %v589
    %860 = vmatprep.subr.bf16.mxu0 0
    %861 = vmatpush1.bf16.msra.mxu0 %v592
    %862 = vmatprep.subr.bf16.mxu0 0
    %863 = vmatpush1.bf16.msra.mxu0 %v595
    %864 = vmatprep.subr.bf16.mxu0 0
    %865 = vmatpush1.bf16.msra.mxu0 %v598
    %866 = vmatprep.subr.bf16.mxu0 0
    %867 = vmatpush1.bf16.msra.mxu0 %v601
    %868 = vmatprep.subr.bf16.mxu0 0
    %869 = vmatpush1.bf16.msra.mxu0 %v604
    %870 = vmatprep.subr.bf16.mxu0 0
    %871 = vmatpush1.bf16.msra.mxu0 %v607
    %872 = vmatprep.subr.bf16.mxu0 0
    %873 = vmatpush1.bf16.msra.mxu0 %v610
    %874 = vmatprep.subr.bf16.mxu0 0
    %875 = vmatpush1.bf16.msra.mxu0 %v613
    %876 = vmatprep.mubr.bf16.mxu0 %v239
    %877 = vmatmul.mubr.bf16.gmra.mrb[0].mxu0 %v238
    %v878 = vpop.f32.mrb[0].mxu0
    %v879 = vadd.f32 0.0, %v878
    %v880 = vpop.f32.mrb[0].mxu0
    %v881 = vpop.f32.mrb[0].mxu0
    %v882 = vadd.f32 0.0, %v881
    %v883 = vpop.f32.mrb[0].mxu0
    %884 = vdwg.mxu0
    %885 = vmatprep.subr.bf16.mxu0 0
    %886 = vmatpush1.bf16.msra.mxu0 %v616
    %887 = vmatprep.subr.bf16.mxu0 0
    %888 = vmatpush1.bf16.msra.mxu0 %v619
    %889 = vmatprep.subr.bf16.mxu0 0
    %890 = vmatpush1.bf16.msra.mxu0 %v622
    %891 = vmatprep.subr.bf16.mxu0 0
    %892 = vmatpush1.bf16.msra.mxu0 %v625
    %893 = vmatprep.subr.bf16.mxu0 0
    %894 = vmatpush1.bf16.msra.mxu0 %v628
    %895 = vmatprep.subr.bf16.mxu0 0
    %896 = vmatpush1.bf16.msra.mxu0 %v631
    %897 = vmatprep.subr.bf16.mxu0 0
    %898 = vmatpush1.bf16.msra.mxu0 %v634
    %899 = vmatprep.subr.bf16.mxu0 0
    %900 = vmatpush1.bf16.msra.mxu0 %v637
    %901 = vmatprep.subr.bf16.mxu0 0
    %902 = vmatpush1.bf16.msra.mxu0 %v640
    %903 = vmatprep.subr.bf16.mxu0 0
    %904 = vmatpush1.bf16.msra.mxu0 %v643
    %905 = vmatprep.subr.bf16.mxu0 0
    %906 = vmatpush1.bf16.msra.mxu0 %v646
    %907 = vmatprep.subr.bf16.mxu0 0
    %908 = vmatpush1.bf16.msra.mxu0 %v649
    %909 = vmatprep.subr.bf16.mxu0 0
    %910 = vmatpush1.bf16.msra.mxu0 %v652
    %911 = vmatprep.subr.bf16.mxu0 0
    %912 = vmatpush1.bf16.msra.mxu0 %v655
    %913 = vmatprep.subr.bf16.mxu0 0
    %914 = vmatpush1.bf16.msra.mxu0 %v658
    %915 = vmatprep.subr.bf16.mxu0 0
    %916 = vmatpush1.bf16.msra.mxu0 %v661
    %917 = vmatprep.mubr.bf16.mxu0 %v241
    %918 = vmatmul.mubr.bf16.gmra.mrb[0].mxu0 %v240
    %v919 = vpop.f32.mrb[0].mxu0
    %v920 = vadd.f32 %v879, %v919
    %v921 = vpop.f32.mrb[0].mxu0
    %v922 = vpop.f32.mrb[0].mxu0
    %v923 = vadd.f32 %v882, %v922
    %v924 = vpop.f32.mrb[0].mxu0
    %925 = vdwg.mxu0
    %v926 = vld [vmem:[#allocation4] sm:$0x7]
    %v928 = vlaneseq
    %v929 = vshrl.u32 %v928, 7
    %v930 = vsub.s32 0, %v929
    %v931 = vrot.slane %v926, %v930
    %v932 = vlaneseq
    %v933 = vshrl.u32 %v932, 7
    %v934 = vsub.s32 1, %v933
    %v935 = vrot.slane %v926, %v934
    %v936 = vlaneseq
    %v937 = vshrl.u32 %v936, 7
    %v938 = vsub.s32 2, %v937
    %v939 = vrot.slane %v926, %v938
    %v943 = vmul.f32 %v836, %v931
    %v944 = vmul.f32 %v838, %v935
    %v945 = vmul.f32 %v920, %v939
    %v946 = vmul.f32 %v840, %v931
    %v947 = vmul.f32 %v842, %v935
    %v948 = vmul.f32 %v923, %v939
    %v949 = vld [vmem:[#allocation6] sm:$0x7]
    %v951 = vlaneseq
    %v952 = vshrl.u32 %v951, 7
    %v953 = vsub.s32 0, %v952
    %v954 = vrot.slane %v949, %v953
    %v955 = vlaneseq
    %v956 = vshrl.u32 %v955, 7
    %v957 = vsub.s32 1, %v956
    %v958 = vrot.slane %v949, %v957
    %v959 = vlaneseq
    %v960 = vshrl.u32 %v959, 7
    %v961 = vsub.s32 2, %v960
    %v962 = vrot.slane %v949, %v961
    %v966 = vadd.f32 %v943, %v954
    %v967 = vadd.f32 %v944, %v958
    %v968 = vadd.f32 %v945, %v962
    %v969 = vadd.f32 %v946, %v954
    %v970 = vadd.f32 %v947, %v958
    %v971 = vadd.f32 %v948, %v962
    %v972 = vmax.f32 %v966, 0.0
    %v973 = vmax.f32 %v967, 0.0
    %v974 = vmax.f32 %v968, 0.0
    %v975 = vmax.f32 %v969, 0.0
    %v976 = vmax.f32 %v970, 0.0
    %v977 = vmax.f32 %v971, 0.0
    %v978 = vpack.c.bf16 %v976, %v973
    %v979 = vpack.c.bf16 %v977, %v974
    %v982 = vunpack.c.l.b16 %v978
    %v983 = vunpack.c.l.b16 %v979
    %v984 = vunpack.c.h.b16 %v978
    %v985 = vunpack.c.h.b16 %v979
    %v986 = vld [vmem:[#allocation2] sm:$0xff]
    %v987 = vld [vmem:[#allocation2 + $0x8] sm:$0xff]
    %v988 = vld [vmem:[#allocation2 + $0x10] sm:$0xff]
    %v989 = vld [vmem:[#allocation2 + $0x18] sm:$0xff]
    %v990 = vld [vmem:[#allocation2 + $0x20] sm:$0xff]
    %v991 = vld [vmem:[#allocation2 + $0x28] sm:$0xff]
    %v992 = vld [vmem:[#allocation2 + $0x30] sm:$0xff]
    %v993 = vld [vmem:[#allocation2 + $0x38] sm:$0xff]
    %v994 = vld [vmem:[#allocation2 + $0x40] sm:$0xff]
    %v995 = vld [vmem:[#allocation2 + $0x48] sm:$0xff]
    %v996 = vld [vmem:[#allocation2 + $0x50] sm:$0xff]
    %v997 = vld [vmem:[#allocation2 + $0x58] sm:$0xff]
    %v998 = vld [vmem:[#allocation2 + $0x60] sm:$0xff]
    %v999 = vld [vmem:[#allocation2 + $0x68] sm:$0xff]
    %v1000 = vld [vmem:[#allocation2 + $0x70] sm:$0xff]
    %v1001 = vld [vmem:[#allocation2 + $0x78] sm:$0xff]
    %v1002 = vld [vmem:[#allocation2 + $0x80] sm:$0xff]
    %v1003 = vld [vmem:[#allocation2 + $0x88] sm:$0xff]
    %v1004 = vld [vmem:[#allocation2 + $0x90] sm:$0xff]
    %v1005 = vld [vmem:[#allocation2 + $0x98] sm:$0xff]
    %v1006 = vld [vmem:[#allocation2 + $0xa0] sm:$0xff]
    %v1007 = vld [vmem:[#allocation2 + $0xa8] sm:$0xff]
    %v1008 = vld [vmem:[#allocation2 + $0xb0] sm:$0xff]
    %v1009 = vld [vmem:[#allocation2 + $0xb8] sm:$0xff]
    %v1010 = vld [vmem:[#allocation2 + $0xc0] sm:$0xff]
    %v1011 = vld [vmem:[#allocation2 + $0xc8] sm:$0xff]
    %v1012 = vld [vmem:[#allocation2 + $0xd0] sm:$0xff]
    %v1013 = vld [vmem:[#allocation2 + $0xd8] sm:$0xff]
    %v1014 = vld [vmem:[#allocation2 + $0xe0] sm:$0xff]
    %v1015 = vld [vmem:[#allocation2 + $0xe8] sm:$0xff]
    %v1016 = vld [vmem:[#allocation2 + $0xf0] sm:$0xff]
    %v1017 = vld [vmem:[#allocation2 + $0xf8] sm:$0xff]
    %v1018 = vld [vmem:[#allocation2 + $0x100] sm:$0xff]
    %v1019 = vld [vmem:[#allocation2 + $0x108] sm:$0xff]
    %v1020 = vld [vmem:[#allocation2 + $0x110] sm:$0xff]
    %v1021 = vld [vmem:[#allocation2 + $0x118] sm:$0xff]
    %v1022 = vld [vmem:[#allocation2 + $0x120] sm:$0xff]
    %v1023 = vld [vmem:[#allocation2 + $0x128] sm:$0xff]
    %v1024 = vld [vmem:[#allocation2 + $0x130] sm:$0xff]
    %v1025 = vld [vmem:[#allocation2 + $0x138] sm:$0xff]
    %v1026 = vld [vmem:[#allocation2 + $0x140] sm:$0xff]
    %v1027 = vld [vmem:[#allocation2 + $0x148] sm:$0xff]
    %v1028 = vld [vmem:[#allocation2 + $0x150] sm:$0xff]
    %v1029 = vld [vmem:[#allocation2 + $0x158] sm:$0xff]
    %v1030 = vld [vmem:[#allocation2 + $0x160] sm:$0xff]
    %v1031 = vld [vmem:[#allocation2 + $0x168] sm:$0xff]
    %v1032 = vld [vmem:[#allocation2 + $0x170] sm:$0xff]
    %v1033 = vld [vmem:[#allocation2 + $0x178] sm:$0xff]
    %v1034 = vld [vmem:[#allocation2 + $0x180] sm:$0xff]
    %v1035 = vld [vmem:[#allocation2 + $0x188] sm:$0xff]
    %v1036 = vld [vmem:[#allocation2 + $0x190] sm:$0xff]
    %v1037 = vld [vmem:[#allocation2 + $0x198] sm:$0xff]
    %v1038 = vld [vmem:[#allocation2 + $0x1a0] sm:$0xff]
    %v1039 = vld [vmem:[#allocation2 + $0x1a8] sm:$0xff]
    %v1040 = vld [vmem:[#allocation2 + $0x1b0] sm:$0xff]
    %v1041 = vld [vmem:[#allocation2 + $0x1b8] sm:$0xff]
    %v1042 = vld [vmem:[#allocation2 + $0x1c0] sm:$0xff]
    %v1043 = vld [vmem:[#allocation2 + $0x1c8] sm:$0xff]
    %v1044 = vld [vmem:[#allocation2 + $0x1d0] sm:$0xff]
    %v1045 = vld [vmem:[#allocation2 + $0x1d8] sm:$0xff]
    %v1046 = vld [vmem:[#allocation2 + $0x1e0] sm:$0xff]
    %v1047 = vld [vmem:[#allocation2 + $0x1e8] sm:$0xff]
    %v1048 = vld [vmem:[#allocation2 + $0x1f0] sm:$0xff]
    %v1049 = vld [vmem:[#allocation2 + $0x1f8] sm:$0xff]
    %v1050 = vld [vmem:[#allocation2 + $0x200] sm:$0xff]
    %v1051 = vld [vmem:[#allocation2 + $0x208] sm:$0xff]
    %v1052 = vld [vmem:[#allocation2 + $0x210] sm:$0xff]
    %v1053 = vld [vmem:[#allocation2 + $0x218] sm:$0xff]
    %v1054 = vld [vmem:[#allocation2 + $0x220] sm:$0xff]
    %v1055 = vld [vmem:[#allocation2 + $0x228] sm:$0xff]
    %v1056 = vld [vmem:[#allocation2 + $0x230] sm:$0xff]
    %v1057 = vld [vmem:[#allocation2 + $0x238] sm:$0xff]
    %v1058 = vpack.c.b16 %v982, %v982
    %v1059 = vpack.c.b16 %v983, %v983
    %v1060 = vpack.c.b16 %v984, %v984
    %v1061 = vpack.c.b16 %v985, %v985
    %v1063 = vshrl.u32 %v1058, 16
    %v1065 = vrot.slane %v1063, 7
    %v1066 = vshll.u32 %v1058, 16
    %v1068 = vor.u32 %v1065, %v1066
    %v1070 = vshrl.u32 %v1059, 16
    %v1072 = vrot.slane %v1070, 7
    %v1073 = vshll.u32 %v1059, 16
    %v1075 = vor.u32 %v1072, %v1073
    %v1077 = vshrl.u32 %v1060, 16
    %v1079 = vrot.slane %v1077, 7
    %v1080 = vshll.u32 %v1060, 16
    %v1082 = vor.u32 %v1079, %v1080
    %v1084 = vshrl.u32 %v1061, 16
    %v1086 = vrot.slane %v1084, 7
    %v1087 = vshll.u32 %v1061, 16
    %v1089 = vor.u32 %v1086, %v1087
    %vm1094 = vcmask 1040384
    %vm1095 = vsmask.f32 256
    %vm1096 = vmand %vm1094, %vm1095
    %v1097 = vsel %vm1096, 0, %v1068
    %v1098 = vsel %vm1096, 0, %v1075
    %v1099 = vsel %vm1096, 0, %v1082
    %v1100 = vsel %vm1096, 0, %v1089
    %vm1101 = vcmask 1044480
    %vm1102 = vsmask.f32 4352
    %vm1103 = vmand %vm1101, %vm1102
    %v1104 = vsel %vm1103, %v1097, 0
    %v1105 = vsel %vm1103, %v1098, 0
    %v1106 = vsel %vm1103, %v1099, 0
    %v1107 = vsel %vm1103, %v1100, 0
    %v1109 = vshrl.u32 %v1104, 16
    %v1111 = vshll.u32 %v1104, 16
    %v1113 = vrot.slane %v1111, 1
    %v1114 = vor.u32 %v1109, %v1113
    %v1116 = vshrl.u32 %v1105, 16
    %v1118 = vshll.u32 %v1105, 16
    %v1120 = vrot.slane %v1118, 1
    %v1121 = vor.u32 %v1116, %v1120
    %v1123 = vshrl.u32 %v1106, 16
    %v1125 = vshll.u32 %v1106, 16
    %v1127 = vrot.slane %v1125, 1
    %v1128 = vor.u32 %v1123, %v1127
    %v1130 = vshrl.u32 %v1107, 16
    %v1132 = vshll.u32 %v1107, 16
    %v1134 = vrot.slane %v1132, 1
    %v1135 = vor.u32 %v1130, %v1134
    %1136 = vrot.lane.b32.xlu0 %v1114, 64
    %v1137 = vpop.permute.xlu0 %1136
    %1138 = vrot.lane.b32.xlu0 %v1121, 64
    %v1139 = vpop.permute.xlu0 %1138
    %1140 = vrot.lane.b32.xlu0 %v1128, 64
    %v1141 = vpop.permute.xlu0 %1140
    %1142 = vrot.lane.b32.xlu0 %v1135, 64
    %v1143 = vpop.permute.xlu0 %1142
    %vm1144 = vcmask 523264
    %v1145 = vsel %vm1144, %v1137, %v1139
    %v1146 = vsel %vm1144, %v1141, %v1143
    %v1151 = vrot.slane %v1104, 1
    %v1152 = vrot.slane %v1105, 1
    %v1153 = vrot.slane %v1106, 1
    %v1154 = vrot.slane %v1107, 1
    %vm1155 = vcmask 523264
    %v1157 = vsel %vm1155, %v1105, %v1137
    %v1159 = vsel %vm1155, %v1107, %v1141
    %v1162 = vunpack.c.l.b16 %v1104
    %v1163 = vunpack.c.l.b16 %v1157
    %v1164 = vunpack.c.l.b16 %v1145
    %v1165 = vunpack.c.l.b16 %v1151
    %v1166 = vunpack.c.l.b16 %v1152
    %v1167 = vunpack.c.l.b16 %v1106
    %v1168 = vunpack.c.l.b16 %v1159
    %v1169 = vunpack.c.l.b16 %v1146
    %v1170 = vunpack.c.l.b16 %v1153
    %v1171 = vunpack.c.l.b16 %v1154
    %v1172 = vpack.c.b16 %v1167, %v1162
    %v1173 = vpack.c.b16 %v1168, %v1163
    %v1174 = vpack.c.b16 %v1169, %v1164
    %v1175 = vpack.c.b16 %v1170, %v1165
    %v1176 = vpack.c.b16 %v1171, %v1166
    %v1253 = vunpack.c.l.b16 %v986
    %v1254 = vunpack.c.h.b16 %v986
    %v1255 = vunpack.c.l.b16 %v987
    %v1256 = vunpack.c.h.b16 %v987
    %v1257 = vunpack.c.l.b16 %v988
    %v1258 = vunpack.c.h.b16 %v988
    %v1259 = vunpack.c.l.b16 %v989
    %v1260 = vunpack.c.h.b16 %v989
    %v1261 = vunpack.c.l.b16 %v990
    %v1262 = vunpack.c.h.b16 %v990
    %v1263 = vunpack.c.l.b16 %v991
    %v1264 = vunpack.c.h.b16 %v991
    %v1265 = vunpack.c.l.b16 %v992
    %v1266 = vunpack.c.h.b16 %v992
    %v1267 = vunpack.c.l.b16 %v993
    %v1268 = vunpack.c.h.b16 %v993
    %v1269 = vunpack.c.l.b16 %v994
    %v1270 = vunpack.c.h.b16 %v994
    %v1271 = vunpack.c.l.b16 %v995
    %v1272 = vunpack.c.h.b16 %v995
    %v1273 = vunpack.c.l.b16 %v996
    %v1274 = vunpack.c.h.b16 %v996
    %v1275 = vunpack.c.l.b16 %v997
    %v1276 = vunpack.c.h.b16 %v997
    %v1277 = vunpack.c.l.b16 %v998
    %v1278 = vunpack.c.h.b16 %v998
    %v1279 = vunpack.c.l.b16 %v999
    %v1280 = vunpack.c.h.b16 %v999
    %v1281 = vunpack.c.l.b16 %v1000
    %v1282 = vunpack.c.h.b16 %v1000
    %v1283 = vunpack.c.l.b16 %v1001
    %v1284 = vunpack.c.h.b16 %v1001
    %v1285 = vunpack.c.l.b16 %v1002
    %v1286 = vunpack.c.h.b16 %v1002
    %v1287 = vunpack.c.l.b16 %v1003
    %v1288 = vunpack.c.h.b16 %v1003
    %v1289 = vunpack.c.l.b16 %v1004
    %v1290 = vunpack.c.h.b16 %v1004
    %v1291 = vunpack.c.l.b16 %v1005
    %v1292 = vunpack.c.h.b16 %v1005
    %v1293 = vunpack.c.l.b16 %v1006
    %v1294 = vunpack.c.h.b16 %v1006
    %v1295 = vunpack.c.l.b16 %v1007
    %v1296 = vunpack.c.h.b16 %v1007
    %v1297 = vunpack.c.l.b16 %v1008
    %v1298 = vunpack.c.h.b16 %v1008
    %v1299 = vunpack.c.l.b16 %v1009
    %v1300 = vunpack.c.h.b16 %v1009
    %v1301 = vunpack.c.l.b16 %v1010
    %v1302 = vunpack.c.h.b16 %v1010
    %v1303 = vunpack.c.l.b16 %v1011
    %v1304 = vunpack.c.h.b16 %v1011
    %v1305 = vunpack.c.l.b16 %v1012
    %v1306 = vunpack.c.h.b16 %v1012
    %v1307 = vunpack.c.l.b16 %v1013
    %v1308 = vunpack.c.h.b16 %v1013
    %v1309 = vunpack.c.l.b16 %v1014
    %v1310 = vunpack.c.h.b16 %v1014
    %v1311 = vunpack.c.l.b16 %v1015
    %v1312 = vunpack.c.h.b16 %v1015
    %v1313 = vunpack.c.l.b16 %v1016
    %v1314 = vunpack.c.h.b16 %v1016
    %v1315 = vunpack.c.l.b16 %v1017
    %v1316 = vunpack.c.h.b16 %v1017
    %v1317 = vunpack.c.l.b16 %v1018
    %v1318 = vunpack.c.h.b16 %v1018
    %v1319 = vunpack.c.l.b16 %v1019
    %v1320 = vunpack.c.h.b16 %v1019
    %v1321 = vunpack.c.l.b16 %v1020
    %v1322 = vunpack.c.h.b16 %v1020
    %v1323 = vunpack.c.l.b16 %v1021
    %v1324 = vunpack.c.h.b16 %v1021
    %v1325 = vunpack.c.l.b16 %v1022
    %v1326 = vunpack.c.h.b16 %v1022
    %v1327 = vunpack.c.l.b16 %v1023
    %v1328 = vunpack.c.h.b16 %v1023
    %v1329 = vunpack.c.l.b16 %v1024
    %v1330 = vunpack.c.h.b16 %v1024
    %v1331 = vunpack.c.l.b16 %v1025
    %v1332 = vunpack.c.h.b16 %v1025
    %v1333 = vunpack.c.l.b16 %v1026
    %v1334 = vunpack.c.h.b16 %v1026
    %v1335 = vunpack.c.l.b16 %v1027
    %v1336 = vunpack.c.h.b16 %v1027
    %v1337 = vunpack.c.l.b16 %v1028
    %v1338 = vunpack.c.h.b16 %v1028
    %v1339 = vunpack.c.l.b16 %v1029
    %v1340 = vunpack.c.h.b16 %v1029
    %v1341 = vunpack.c.l.b16 %v1030
    %v1342 = vunpack.c.h.b16 %v1030
    %v1343 = vunpack.c.l.b16 %v1031
    %v1344 = vunpack.c.h.b16 %v1031
    %v1345 = vunpack.c.l.b16 %v1032
    %v1346 = vunpack.c.h.b16 %v1032
    %v1347 = vunpack.c.l.b16 %v1033
    %v1348 = vunpack.c.h.b16 %v1033
    %v1349 = vunpack.c.l.b16 %v1034
    %v1350 = vunpack.c.h.b16 %v1034
    %v1351 = vunpack.c.l.b16 %v1035
    %v1352 = vunpack.c.h.b16 %v1035
    %v1353 = vunpack.c.l.b16 %v1036
    %v1354 = vunpack.c.h.b16 %v1036
    %v1355 = vunpack.c.l.b16 %v1037
    %v1356 = vunpack.c.h.b16 %v1037
    %v1357 = vunpack.c.l.b16 %v1038
    %v1358 = vunpack.c.h.b16 %v1038
    %v1359 = vunpack.c.l.b16 %v1039
    %v1360 = vunpack.c.h.b16 %v1039
    %v1361 = vunpack.c.l.b16 %v1040
    %v1362 = vunpack.c.h.b16 %v1040
    %v1363 = vunpack.c.l.b16 %v1041
    %v1364 = vunpack.c.h.b16 %v1041
    %v1365 = vunpack.c.l.b16 %v1042
    %v1366 = vunpack.c.h.b16 %v1042
    %v1367 = vunpack.c.l.b16 %v1043
    %v1368 = vunpack.c.h.b16 %v1043
    %v1369 = vunpack.c.l.b16 %v1044
    %v1370 = vunpack.c.h.b16 %v1044
    %v1371 = vunpack.c.l.b16 %v1045
    %v1372 = vunpack.c.h.b16 %v1045
    %v1373 = vunpack.c.l.b16 %v1046
    %v1374 = vunpack.c.h.b16 %v1046
    %v1375 = vunpack.c.l.b16 %v1047
    %v1376 = vunpack.c.h.b16 %v1047
    %v1377 = vunpack.c.l.b16 %v1048
    %v1378 = vunpack.c.h.b16 %v1048
    %v1379 = vunpack.c.l.b16 %v1049
    %v1380 = vunpack.c.h.b16 %v1049
    %v1381 = vunpack.c.l.b16 %v1050
    %v1382 = vunpack.c.h.b16 %v1050
    %v1383 = vunpack.c.l.b16 %v1051
    %v1384 = vunpack.c.h.b16 %v1051
    %v1385 = vunpack.c.l.b16 %v1052
    %v1386 = vunpack.c.h.b16 %v1052
    %v1387 = vunpack.c.l.b16 %v1053
    %v1388 = vunpack.c.h.b16 %v1053
    %v1389 = vunpack.c.l.b16 %v1054
    %v1390 = vunpack.c.h.b16 %v1054
    %v1391 = vunpack.c.l.b16 %v1055
    %v1392 = vunpack.c.h.b16 %v1055
    %v1393 = vunpack.c.l.b16 %v1056
    %v1394 = vunpack.c.h.b16 %v1056
    %v1395 = vunpack.c.l.b16 %v1057
    %v1396 = vunpack.c.h.b16 %v1057
    %v1397 = vpack.c.b16 %v1255, %v1253
    %v1398 = vpack.c.b16 %v1256, %v1254
    %v1399 = vpack.c.b16 %v1259, %v1257
    %v1400 = vpack.c.b16 %v1260, %v1258
    %v1401 = vpack.c.b16 %v1263, %v1261
    %v1402 = vpack.c.b16 %v1264, %v1262
    %v1403 = vpack.c.b16 %v1267, %v1265
    %v1404 = vpack.c.b16 %v1268, %v1266
    %v1405 = vpack.c.b16 %v1271, %v1269
    %v1406 = vpack.c.b16 %v1272, %v1270
    %v1407 = vpack.c.b16 %v1275, %v1273
    %v1408 = vpack.c.b16 %v1276, %v1274
    %v1409 = vpack.c.b16 %v1279, %v1277
    %v1410 = vpack.c.b16 %v1280, %v1278
    %v1411 = vpack.c.b16 %v1283, %v1281
    %v1412 = vpack.c.b16 %v1284, %v1282
    %v1413 = vpack.c.b16 %v1287, %v1285
    %v1414 = vpack.c.b16 %v1288, %v1286
    %v1415 = vpack.c.b16 %v1291, %v1289
    %v1416 = vpack.c.b16 %v1292, %v1290
    %v1417 = vpack.c.b16 %v1295, %v1293
    %v1418 = vpack.c.b16 %v1296, %v1294
    %v1419 = vpack.c.b16 %v1299, %v1297
    %v1420 = vpack.c.b16 %v1300, %v1298
    %v1421 = vpack.c.b16 %v1303, %v1301
    %v1422 = vpack.c.b16 %v1304, %v1302
    %v1423 = vpack.c.b16 %v1307, %v1305
    %v1424 = vpack.c.b16 %v1308, %v1306
    %v1425 = vpack.c.b16 %v1311, %v1309
    %v1426 = vpack.c.b16 %v1312, %v1310
    %v1427 = vpack.c.b16 %v1315, %v1313
    %v1428 = vpack.c.b16 %v1316, %v1314
    %v1429 = vpack.c.b16 %v1319, %v1317
    %v1430 = vpack.c.b16 %v1320, %v1318
    %v1431 = vpack.c.b16 %v1323, %v1321
    %v1432 = vpack.c.b16 %v1324, %v1322
    %v1433 = vpack.c.b16 %v1327, %v1325
    %v1434 = vpack.c.b16 %v1328, %v1326
    %v1435 = vpack.c.b16 %v1331, %v1329
    %v1436 = vpack.c.b16 %v1332, %v1330
    %v1437 = vpack.c.b16 %v1335, %v1333
    %v1438 = vpack.c.b16 %v1336, %v1334
    %v1439 = vpack.c.b16 %v1339, %v1337
    %v1440 = vpack.c.b16 %v1340, %v1338
    %v1441 = vpack.c.b16 %v1343, %v1341
    %v1442 = vpack.c.b16 %v1344, %v1342
    %v1443 = vpack.c.b16 %v1347, %v1345
    %v1444 = vpack.c.b16 %v1348, %v1346
    %v1445 = vpack.c.b16 %v1351, %v1349
    %v1446 = vpack.c.b16 %v1352, %v1350
    %v1447 = vpack.c.b16 %v1355, %v1353
    %v1448 = vpack.c.b16 %v1356, %v1354
    %v1449 = vpack.c.b16 %v1359, %v1357
    %v1450 = vpack.c.b16 %v1360, %v1358
    %v1451 = vpack.c.b16 %v1363, %v1361
    %v1452 = vpack.c.b16 %v1364, %v1362
    %v1453 = vpack.c.b16 %v1367, %v1365
    %v1454 = vpack.c.b16 %v1368, %v1366
    %v1455 = vpack.c.b16 %v1371, %v1369
    %v1456 = vpack.c.b16 %v1372, %v1370
    %v1457 = vpack.c.b16 %v1375, %v1373
    %v1458 = vpack.c.b16 %v1376, %v1374
    %v1459 = vpack.c.b16 %v1379, %v1377
    %v1460 = vpack.c.b16 %v1380, %v1378
    %v1461 = vpack.c.b16 %v1383, %v1381
    %v1462 = vpack.c.b16 %v1384, %v1382
    %v1463 = vpack.c.b16 %v1387, %v1385
    %v1464 = vpack.c.b16 %v1388, %v1386
    %v1465 = vpack.c.b16 %v1391, %v1389
    %v1466 = vpack.c.b16 %v1392, %v1390
    %v1467 = vpack.c.b16 %v1395, %v1393
    %v1468 = vpack.c.b16 %v1396, %v1394
    %v1542 = vsel %vm1155, %v1176, 0
    %1544 = vmatprep.subr.bf16.mxu0 %v1398
    %1545 = vmatpush1.bf16.msra.mxu0 %v1397
    %1546 = vmatprep.subr.bf16.mxu0 %v1400
    %1547 = vmatpush1.bf16.msra.mxu0 %v1399
    %1548 = vmatprep.subr.bf16.mxu0 %v1402
    %1549 = vmatpush1.bf16.msra.mxu0 %v1401
    %1550 = vmatprep.subr.bf16.mxu0 %v1404
    %1551 = vmatpush1.bf16.msra.mxu0 %v1403
    %1552 = vmatprep.subr.bf16.mxu0 %v1406
    %1553 = vmatpush1.bf16.msra.mxu0 %v1405
    %1554 = vmatprep.subr.bf16.mxu0 %v1408
    %1555 = vmatpush1.bf16.msra.mxu0 %v1407
    %1556 = vmatprep.subr.bf16.mxu0 %v1410
    %1557 = vmatpush1.bf16.msra.mxu0 %v1409
    %1558 = vmatprep.subr.bf16.mxu0 %v1412
    %1559 = vmatpush1.bf16.msra.mxu0 %v1411
    %1560 = vmatprep.subr.bf16.mxu0 %v1414
    %1561 = vmatpush1.bf16.msra.mxu0 %v1413
    %1562 = vmatprep.subr.bf16.mxu0 %v1416
    %1563 = vmatpush1.bf16.msra.mxu0 %v1415
    %1564 = vmatprep.subr.bf16.mxu0 %v1418
    %1565 = vmatpush1.bf16.msra.mxu0 %v1417
    %1566 = vmatprep.subr.bf16.mxu0 %v1420
    %1567 = vmatpush1.bf16.msra.mxu0 %v1419
    %1568 = vmatprep.subr.bf16.mxu0 %v1422
    %1569 = vmatpush1.bf16.msra.mxu0 %v1421
    %1570 = vmatprep.subr.bf16.mxu0 %v1424
    %1571 = vmatpush1.bf16.msra.mxu0 %v1423
    %1572 = vmatprep.subr.bf16.mxu0 %v1426
    %1573 = vmatpush1.bf16.msra.mxu0 %v1425
    %1574 = vmatprep.subr.bf16.mxu0 %v1428
    %1575 = vmatpush1.bf16.msra.mxu0 %v1427
    %1576 = vmatprep.mubr.bf16.mxu0 %v1173
    %1577 = vmatmul.mubr.bf16.gmra.mrb[0].mxu0 %v1172
    %v1578 = vpop.f32.mrb[0].mxu0
    %v1579 = vadd.f32 0.0, %v1578
    %v1580 = vpop.f32.mrb[0].mxu0
    %v1581 = vadd.f32 0.0, %v1580
    %v1582 = vpop.f32.mrb[0].mxu0
    %v1583 = vadd.f32 0.0, %v1582
    %v1584 = vpop.f32.mrb[0].mxu0
    %v1585 = vadd.f32 0.0, %v1584
    %1586 = vdwg.mxu0
    %1587 = vmatprep.subr.bf16.mxu0 %v1430
    %1588 = vmatpush1.bf16.msra.mxu0 %v1429
    %1589 = vmatprep.subr.bf16.mxu0 %v1432
    %1590 = vmatpush1.bf16.msra.mxu0 %v1431
    %1591 = vmatprep.subr.bf16.mxu0 %v1434
    %1592 = vmatpush1.bf16.msra.mxu0 %v1433
    %1593 = vmatprep.subr.bf16.mxu0 %v1436
    %1594 = vmatpush1.bf16.msra.mxu0 %v1435
    %1595 = vmatprep.subr.bf16.mxu0 %v1438
    %1596 = vmatpush1.bf16.msra.mxu0 %v1437
    %1597 = vmatprep.subr.bf16.mxu0 %v1440
    %1598 = vmatpush1.bf16.msra.mxu0 %v1439
    %1599 = vmatprep.subr.bf16.mxu0 %v1442
    %1600 = vmatpush1.bf16.msra.mxu0 %v1441
    %1601 = vmatprep.subr.bf16.mxu0 %v1444
    %1602 = vmatpush1.bf16.msra.mxu0 %v1443
    %1603 = vmatprep.subr.bf16.mxu0 %v1446
    %1604 = vmatpush1.bf16.msra.mxu0 %v1445
    %1605 = vmatprep.subr.bf16.mxu0 %v1448
    %1606 = vmatpush1.bf16.msra.mxu0 %v1447
    %1607 = vmatprep.subr.bf16.mxu0 %v1450
    %1608 = vmatpush1.bf16.msra.mxu0 %v1449
    %1609 = vmatprep.subr.bf16.mxu0 %v1452
    %1610 = vmatpush1.bf16.msra.mxu0 %v1451
    %1611 = vmatprep.subr.bf16.mxu0 %v1454
    %1612 = vmatpush1.bf16.msra.mxu0 %v1453
    %1613 = vmatprep.subr.bf16.mxu0 %v1456
    %1614 = vmatpush1.bf16.msra.mxu0 %v1455
    %1615 = vmatprep.subr.bf16.mxu0 %v1458
    %1616 = vmatpush1.bf16.msra.mxu0 %v1457
    %1617 = vmatprep.subr.bf16.mxu0 %v1460
    %1618 = vmatpush1.bf16.msra.mxu0 %v1459
    %1619 = vmatprep.mubr.bf16.mxu0 %v1175
    %1620 = vmatmul.mubr.bf16.gmra.mrb[0].mxu0 %v1174
    %v1621 = vpop.f32.mrb[0].mxu0
    %v1622 = vadd.f32 %v1579, %v1621
    %v1623 = vpop.f32.mrb[0].mxu0
    %v1624 = vadd.f32 %v1581, %v1623
    %v1625 = vpop.f32.mrb[0].mxu0
    %v1626 = vadd.f32 %v1583, %v1625
    %v1627 = vpop.f32.mrb[0].mxu0
    %v1628 = vadd.f32 %v1585, %v1627
    %1629 = vdwg.mxu0
    %1630 = vmatprep.subr.bf16.mxu0 %v1462
    %1631 = vmatpush1.bf16.msra.mxu0 %v1461
    %1632 = vmatprep.subr.bf16.mxu0 %v1464
    %1633 = vmatpush1.bf16.msra.mxu0 %v1463
    %1634 = vmatprep.subr.bf16.mxu0 %v1466
    %1635 = vmatpush1.bf16.msra.mxu0 %v1465
    %1636 = vmatprep.subr.bf16.mxu0 %v1468
    %1637 = vmatpush1.bf16.msra.mxu0 %v1467
    %1638 = vmatprep.subr.bf16.mxu0 0
    %1639 = vmatpush1.bf16.msra.mxu0 0
    %1640 = vmatprep.subr.bf16.mxu0 0
    %1641 = vmatpush1.bf16.msra.mxu0 0
    %1642 = vmatprep.subr.bf16.mxu0 0
    %1643 = vmatpush1.bf16.msra.mxu0 0
    %1644 = vmatprep.subr.bf16.mxu0 0
    %1645 = vmatpush1.bf16.msra.mxu0 0
    %1646 = vmatprep.subr.bf16.mxu0 0
    %1647 = vmatpush1.bf16.msra.mxu0 0
    %1648 = vmatprep.subr.bf16.mxu0 0
    %1649 = vmatpush1.bf16.msra.mxu0 0
    %1650 = vmatprep.subr.bf16.mxu0 0
    %1651 = vmatpush1.bf16.msra.mxu0 0
    %1652 = vmatprep.subr.bf16.mxu0 0
    %1653 = vmatpush1.bf16.msra.mxu0 0
    %1654 = vmatprep.subr.bf16.mxu0 0
    %1655 = vmatpush1.bf16.msra.mxu0 0
    %1656 = vmatprep.subr.bf16.mxu0 0
    %1657 = vmatpush1.bf16.msra.mxu0 0
    %1658 = vmatprep.subr.bf16.mxu0 0
    %1659 = vmatpush1.bf16.msra.mxu0 0
    %1660 = vmatprep.subr.bf16.mxu0 0
    %1661 = vmatpush1.bf16.msra.mxu0 0
    %1662 = vmatprep.mubr.bf16.mxu0 0
    %1663 = vmatmul.mubr.bf16.gmra.mrb[0].mxu0 %v1542
    %v1664 = vpop.f32.mrb[0].mxu0
    %v1665 = vadd.f32 %v1622, %v1664
    %v1666 = vpop.f32.mrb[0].mxu0
    %v1667 = vadd.f32 %v1624, %v1666
    %v1668 = vpop.f32.mrb[0].mxu0
    %v1669 = vadd.f32 %v1626, %v1668
    %v1670 = vpop.f32.mrb[0].mxu0
    %v1671 = vadd.f32 %v1628, %v1670
    %1672 = vdwg.mxu0
    %v1673 = vld [vmem:[#allocation7] sm:$0x3]
    %v1675 = vlaneseq
    %v1676 = vshrl.u32 %v1675, 7
    %v1677 = vsub.s32 0, %v1676
    %v1678 = vrot.slane %v1673, %v1677
    %v1679 = vlaneseq
    %v1680 = vshrl.u32 %v1679, 7
    %v1681 = vsub.s32 1, %v1680
    %v1682 = vrot.slane %v1673, %v1681
    %v1685 = vmul.f32 %v1665, %v1678
    %v1686 = vmul.f32 %v1667, %v1682
    %v1687 = vmul.f32 %v1669, %v1678
    %v1688 = vmul.f32 %v1671, %v1682
    %v1689 = vld [vmem:[#allocation9] sm:$0x3]
    %v1691 = vlaneseq
    %v1692 = vshrl.u32 %v1691, 7
    %v1693 = vsub.s32 0, %v1692
    %v1694 = vrot.slane %v1689, %v1693
    %v1695 = vlaneseq
    %v1696 = vshrl.u32 %v1695, 7
    %v1697 = vsub.s32 1, %v1696
    %v1698 = vrot.slane %v1689, %v1697
    %v1701 = vadd.f32 %v1685, %v1694
    %v1702 = vadd.f32 %v1686, %v1698
    %v1703 = vadd.f32 %v1687, %v1694
    %v1704 = vadd.f32 %v1688, %v1698
    %v1705 = vmax.f32 %v1701, 0.0
    %v1706 = vmax.f32 %v1702, 0.0
    %v1707 = vmax.f32 %v1703, 0.0
    %v1708 = vmax.f32 %v1704, 0.0
    %v1709 = vld [vmem:[%s3] sm:$0xf]
    %v1710 = vld [vmem:[%s3 + $0x4] sm:$0xf]
    %v1711 = vld [vmem:[%s3 + $0x8] sm:$0xf]
    %v1712 = vld [vmem:[%s3 + $0xc] sm:$0xf]
    %v1713 = vld [vmem:[%s3 + $0x10] sm:$0xf]
    %v1714 = vld [vmem:[%s3 + $0x14] sm:$0xf]
    %v1715 = vld [vmem:[%s3 + $0x18] sm:$0xf]
    %v1716 = vld [vmem:[%s3 + $0x1c] sm:$0xf]
    %v1717 = vld [vmem:[%s3 + $0x20] sm:$0xf]
    %v1718 = vld [vmem:[%s3 + $0x24] sm:$0xf]
    %v1719 = vld [vmem:[%s3 + $0x28] sm:$0xf]
    %v1720 = vld [vmem:[%s3 + $0x2c] sm:$0xf]
    %v1721 = vld [vmem:[%s3 + $0x30] sm:$0xf]
    %v1722 = vld [vmem:[%s3 + $0x34] sm:$0xf]
    %v1723 = vld [vmem:[%s3 + $0x38] sm:$0xf]
    %v1724 = vld [vmem:[%s3 + $0x3c] sm:$0xf]
    %v1725 = vld [vmem:[%s3 + $0x40] sm:$0xf]
    %v1726 = vld [vmem:[%s3 + $0x44] sm:$0xf]
    %v1727 = vld [vmem:[%s3 + $0x48] sm:$0xf]
    %v1728 = vld [vmem:[%s3 + $0x4c] sm:$0xf]
    %v1729 = vld [vmem:[%s3 + $0x50] sm:$0xf]
    %v1730 = vld [vmem:[%s3 + $0x54] sm:$0xf]
    %v1731 = vld [vmem:[%s3 + $0x58] sm:$0xf]
    %v1732 = vld [vmem:[%s3 + $0x5c] sm:$0xf]
    %v1733 = vld [vmem:[%s3 + $0x60] sm:$0xf]
    %v1734 = vld [vmem:[%s3 + $0x64] sm:$0xf]
    %v1735 = vld [vmem:[%s3 + $0x68] sm:$0xf]
    %v1736 = vld [vmem:[%s3 + $0x6c] sm:$0xf]
    %v1737 = vrot.slane %v1070, 6
    %v1738 = vrot.slane %v1073, 7
    %v1739 = vor.u32 %v1737, %v1738
    %v1740 = vrot.slane %v1084, 6
    %v1741 = vrot.slane %v1087, 7
    %v1742 = vor.u32 %v1740, %v1741
    %1743 = vrot.lane.b32.xlu0 %v1739, 64
    %v1744 = vpop.permute.xlu0 %1743
    %1745 = vrot.lane.b32.xlu0 %v1742, 64
    %v1746 = vpop.permute.xlu0 %1745
    %vm1749 = vcmask 1041408
    %vm1750 = vsmask.f32 1280
    %vm1751 = vmand %vm1749, %vm1750
    %v1752 = vsel %vm1751, 0, %v1744
    %v1753 = vsel %vm1751, 0, %v1746
    %vm1754 = vcmask 1045504
    %vm1755 = vsmask.f32 5376
    %vm1756 = vmand %vm1754, %vm1755
    %v1757 = vsel %vm1756, %v1752, 0
    %v1758 = vsel %vm1756, %v1753, 0
    %v1760 = vshrl.u32 %v1757, 16
    %v1762 = vshll.u32 %v1757, 16
    %v1764 = vrot.slane %v1762, 1
    %v1765 = vor.u32 %v1760, %v1764
    %v1767 = vshrl.u32 %v1758, 16
    %v1769 = vshll.u32 %v1758, 16
    %v1771 = vrot.slane %v1769, 1
    %v1772 = vor.u32 %v1767, %v1771
    %1773 = vrot.lane.b32.xlu0 %v1765, 32
    %v1774 = vpop.permute.xlu0 %1773
    %1775 = vrot.lane.b32.xlu0 %v1772, 32
    %v1776 = vpop.permute.xlu0 %1775
    %v1779 = vrot.slane %v1757, 1
    %v1780 = vrot.slane %v1758, 1
    %1781 = vrot.lane.b32.xlu0 %v1779, 64
    %v1782 = vpop.permute.xlu0 %1781
    %1783 = vrot.lane.b32.xlu0 %v1780, 64
    %v1784 = vpop.permute.xlu0 %1783
    %v1785 = vrot.slane %v1760, 1
    %v1786 = vrot.slane %v1762, 2
    %v1787 = vor.u32 %v1785, %v1786
    %v1788 = vrot.slane %v1767, 1
    %v1789 = vrot.slane %v1769, 2
    %v1790 = vor.u32 %v1788, %v1789
    %1791 = vrot.lane.b32.xlu0 %v1787, 96
    %v1792 = vpop.permute.xlu0 %1791
    %1793 = vrot.lane.b32.xlu0 %v1790, 96
    %v1794 = vpop.permute.xlu0 %1793
    %v1795 = vrot.slane %v1757, 2
    %v1796 = vrot.slane %v1758, 2
    %v1797 = vrot.slane %v1760, 2
    %v1798 = vrot.slane %v1762, 3
    %v1799 = vor.u32 %v1797, %v1798
    %v1800 = vrot.slane %v1767, 2
    %v1801 = vrot.slane %v1769, 3
    %v1802 = vor.u32 %v1800, %v1801
    %1803 = vrot.lane.b32.xlu0 %v1799, 32
    %v1804 = vpop.permute.xlu0 %1803
    %1805 = vrot.lane.b32.xlu0 %v1802, 32
    %v1806 = vpop.permute.xlu0 %1805
    %v1807 = vrot.slane %v1757, 3
    %v1808 = vrot.slane %v1758, 3
    %1809 = vrot.lane.b32.xlu0 %v1807, 64
    %v1810 = vpop.permute.xlu0 %1809
    %1811 = vrot.lane.b32.xlu0 %v1808, 64
    %v1812 = vpop.permute.xlu0 %1811
    %vm1813 = vcmask 261120
    %v1815 = vsel %vm1813, %v1757, %v1774
    %v1817 = vsel %vm1813, %v1758, %v1776
    %v1819 = vsel %vm1155, %v1815, %v1782
    %v1821 = vsel %vm1155, %v1817, %v1784
    %vm1822 = vcmask 785408
    %v1824 = vsel %vm1822, %v1819, %v1792
    %v1826 = vsel %vm1822, %v1821, %v1794
    %v1829 = vsel %vm1813, %v1795, %v1804
    %v1832 = vsel %vm1813, %v1796, %v1806
    %v1834 = vsel %vm1155, %v1829, %v1810
    %v1836 = vsel %vm1155, %v1832, %v1812
    %v1841 = vunpack.c.l.b16 %v1824
    %v1842 = vunpack.c.l.b16 %v1834
    %v1843 = vunpack.c.l.b16 %v1826
    %v1844 = vunpack.c.l.b16 %v1836
    %v1845 = vpack.c.b16 %v1843, %v1841
    %v1846 = vpack.c.b16 %v1844, %v1842
    %v1876 = vunpack.c.l.b16 %v1709
    %v1877 = vunpack.c.l.b16 %v1710
    %v1878 = vunpack.c.l.b16 %v1711
    %v1879 = vunpack.c.l.b16 %v1712
    %v1880 = vunpack.c.l.b16 %v1713
    %v1881 = vunpack.c.l.b16 %v1714
    %v1882 = vunpack.c.l.b16 %v1715
    %v1883 = vunpack.c.l.b16 %v1716
    %v1884 = vunpack.c.l.b16 %v1717
    %v1885 = vunpack.c.l.b16 %v1718
    %v1886 = vunpack.c.l.b16 %v1719
    %v1887 = vunpack.c.l.b16 %v1720
    %v1888 = vunpack.c.l.b16 %v1721
    %v1889 = vunpack.c.l.b16 %v1722
    %v1890 = vunpack.c.l.b16 %v1723
    %v1891 = vunpack.c.l.b16 %v1724
    %v1892 = vunpack.c.l.b16 %v1725
    %v1893 = vunpack.c.l.b16 %v1726
    %v1894 = vunpack.c.l.b16 %v1727
    %v1895 = vunpack.c.l.b16 %v1728
    %v1896 = vunpack.c.l.b16 %v1729
    %v1897 = vunpack.c.l.b16 %v1730
    %v1898 = vunpack.c.l.b16 %v1731
    %v1899 = vunpack.c.l.b16 %v1732
    %v1900 = vunpack.c.l.b16 %v1733
    %v1901 = vunpack.c.l.b16 %v1734
    %v1902 = vunpack.c.l.b16 %v1735
    %v1903 = vunpack.c.l.b16 %v1736
    %v1904 = vpack.c.b16 %v1877, %v1876
    %v1905 = vpack.c.b16 %v1879, %v1878
    %v1906 = vpack.c.b16 %v1881, %v1880
    %v1907 = vpack.c.b16 %v1883, %v1882
    %v1908 = vpack.c.b16 %v1885, %v1884
    %v1909 = vpack.c.b16 %v1887, %v1886
    %v1910 = vpack.c.b16 %v1889, %v1888
    %v1911 = vpack.c.b16 %v1891, %v1890
    %v1912 = vpack.c.b16 %v1893, %v1892
    %v1913 = vpack.c.b16 %v1895, %v1894
    %v1914 = vpack.c.b16 %v1897, %v1896
    %v1915 = vpack.c.b16 %v1899, %v1898
    %v1916 = vpack.c.b16 %v1901, %v1900
    %v1917 = vpack.c.b16 %v1903, %v1902
    %v1933 = vsel %vm1822, %v1846, 0
    %1935 = vmatprep.subr.bf16.mxu0 0
    %1936 = vmatpush1.bf16.msra.mxu0 %v1904
    %1937 = vmatprep.subr.bf16.mxu0 0
    %1938 = vmatpush1.bf16.msra.mxu0 %v1905
    %1939 = vmatprep.subr.bf16.mxu0 0
    %1940 = vmatpush1.bf16.msra.mxu0 %v1906
    %1941 = vmatprep.subr.bf16.mxu0 0
    %1942 = vmatpush1.bf16.msra.mxu0 %v1907
    %1943 = vmatprep.subr.bf16.mxu0 0
    %1944 = vmatpush1.bf16.msra.mxu0 %v1908
    %1945 = vmatprep.subr.bf16.mxu0 0
    %1946 = vmatpush1.bf16.msra.mxu0 %v1909
    %1947 = vmatprep.subr.bf16.mxu0 0
    %1948 = vmatpush1.bf16.msra.mxu0 %v1910
    %1949 = vmatprep.subr.bf16.mxu0 0
    %1950 = vmatpush1.bf16.msra.mxu0 %v1911
    %1951 = vmatprep.subr.bf16.mxu0 0
    %1952 = vmatpush1.bf16.msra.mxu0 %v1912
    %1953 = vmatprep.subr.bf16.mxu0 0
    %1954 = vmatpush1.bf16.msra.mxu0 %v1913
    %1955 = vmatprep.subr.bf16.mxu0 0
    %1956 = vmatpush1.bf16.msra.mxu0 %v1914
    %1957 = vmatprep.subr.bf16.mxu0 0
    %1958 = vmatpush1.bf16.msra.mxu0 %v1915
    %1959 = vmatprep.subr.bf16.mxu0 0
    %1960 = vmatpush1.bf16.msra.mxu0 %v1916
    %1961 = vmatprep.subr.bf16.mxu0 0
    %1962 = vmatpush1.bf16.msra.mxu0 %v1917
    %1963 = vmatprep.subr.bf16.mxu0 0
    %1964 = vmatpush1.bf16.msra.mxu0 0
    %1965 = vmatprep.subr.bf16.mxu0 0
    %1966 = vmatpush1.bf16.msra.mxu0 0
    %1967 = vmatprep.mubr.bf16.mxu0 %v1933
    %1968 = vmatmul.mubr.bf16.gmra.mrb[0].mxu0 %v1845
    %v1969 = vpop.f32.mrb[0].mxu0
    %v1970 = vadd.f32 0.0, %v1969
    %v1971 = vpop.f32.mrb[0].mxu0
    %v1972 = vpop.f32.mrb[0].mxu0
    %v1973 = vadd.f32 0.0, %v1972
    %v1974 = vpop.f32.mrb[0].mxu0
    %1975 = vdwg.mxu0
    %v1976 = vld [vmem:[#allocation7 + $0x2] sm:$0x1]
    %v1978 = vlaneseq
    %v1979 = vshrl.u32 %v1978, 7
    %v1980 = vsub.s32 0, %v1979
    %v1981 = vrot.slane %v1976, %v1980
    %v1983 = vmul.f32 %v1970, %v1981
    %v1984 = vmul.f32 %v1973, %v1981
    %v1985 = vld [vmem:[#allocation9 + $0x2] sm:$0x1]
    %v1987 = vlaneseq
    %v1988 = vshrl.u32 %v1987, 7
    %v1989 = vsub.s32 0, %v1988
    %v1990 = vrot.slane %v1985, %v1989
    %v1992 = vadd.f32 %v1983, %v1990
    %v1993 = vadd.f32 %v1984, %v1990
    %v1994 = vmax.f32 %v1992, 0.0
    %v1995 = vmax.f32 %v1993, 0.0
    %v1996 = vpack.c.b16 %v230, %v230
    %v1997 = vpack.c.b16 %v231, %v231
    %v1998 = vpack.c.b16 %v232, %v232
    %v1999 = vpack.c.b16 %v233, %v233
    %v2000 = vpack.c.b16 %v234, %v234
    %v2001 = vpack.c.b16 %v235, %v235
    %v2002 = vpack.c.b16 %v236, %v236
    %v2003 = vpack.c.b16 %v237, %v237
    %v2005 = vshrl.u32 %v1996, 16
    %v2007 = vrot.slane %v2005, 7
    %v2008 = vshll.u32 %v1996, 16
    %v2010 = vor.u32 %v2007, %v2008
    %v2012 = vshrl.u32 %v1997, 16
    %v2014 = vrot.slane %v2012, 7
    %v2015 = vshll.u32 %v1997, 16
    %v2017 = vor.u32 %v2014, %v2015
    %v2019 = vshrl.u32 %v1998, 16
    %v2021 = vrot.slane %v2019, 7
    %v2022 = vshll.u32 %v1998, 16
    %v2024 = vor.u32 %v2021, %v2022
    %v2026 = vshrl.u32 %v1999, 16
    %v2028 = vrot.slane %v2026, 7
    %v2029 = vshll.u32 %v1999, 16
    %v2031 = vor.u32 %v2028, %v2029
    %v2033 = vshrl.u32 %v2000, 16
    %v2035 = vrot.slane %v2033, 7
    %v2036 = vshll.u32 %v2000, 16
    %v2038 = vor.u32 %v2035, %v2036
    %v2040 = vshrl.u32 %v2001, 16
    %v2042 = vrot.slane %v2040, 7
    %v2043 = vshll.u32 %v2001, 16
    %v2045 = vor.u32 %v2042, %v2043
    %v2047 = vshrl.u32 %v2002, 16
    %v2049 = vrot.slane %v2047, 7
    %v2050 = vshll.u32 %v2002, 16
    %v2052 = vor.u32 %v2049, %v2050
    %v2054 = vshrl.u32 %v2003, 16
    %v2056 = vrot.slane %v2054, 7
    %v2057 = vshll.u32 %v2003, 16
    %v2059 = vor.u32 %v2056, %v2057
    %v2068 = vsel %vm1096, 4286644096, %v2010
    %v2069 = vsel %vm1096, 4286644096, %v2017
    %v2070 = vsel %vm1096, 4286644096, %v2024
    %v2071 = vsel %vm1096, 4286644096, %v2031
    %v2072 = vsel %vm1096, 4286644096, %v2038
    %v2073 = vsel %vm1096, 4286644096, %v2045
    %v2074 = vsel %vm1096, 4286644096, %v2052
    %v2075 = vsel %vm1096, 4286644096, %v2059
    %v2076 = vsel %vm1103, %v2068, 4286644096
    %v2077 = vsel %vm1103, %v2069, 4286644096
    %v2078 = vsel %vm1103, %v2070, 4286644096
    %v2079 = vsel %vm1103, %v2071, 4286644096
    %v2080 = vsel %vm1103, %v2072, 4286644096
    %v2081 = vsel %vm1103, %v2073, 4286644096
    %v2082 = vsel %vm1103, %v2074, 4286644096
    %v2083 = vsel %vm1103, %v2075, 4286644096
    %v2085 = vshrl.u32 %v2076, 16
    %v2087 = vshll.u32 %v2076, 16
    %v2089 = vrot.slane %v2087, 1
    %v2090 = vor.u32 %v2085, %v2089
    %v2092 = vshrl.u32 %v2077, 16
    %v2094 = vshll.u32 %v2077, 16
    %v2096 = vrot.slane %v2094, 1
    %v2097 = vor.u32 %v2092, %v2096
    %v2099 = vshrl.u32 %v2078, 16
    %v2101 = vshll.u32 %v2078, 16
    %v2103 = vrot.slane %v2101, 1
    %v2104 = vor.u32 %v2099, %v2103
    %v2106 = vshrl.u32 %v2079, 16
    %v2108 = vshll.u32 %v2079, 16
    %v2110 = vrot.slane %v2108, 1
    %v2111 = vor.u32 %v2106, %v2110
    %v2113 = vshrl.u32 %v2080, 16
    %v2115 = vshll.u32 %v2080, 16
    %v2117 = vrot.slane %v2115, 1
    %v2118 = vor.u32 %v2113, %v2117
    %v2120 = vshrl.u32 %v2081, 16
    %v2122 = vshll.u32 %v2081, 16
    %v2124 = vrot.slane %v2122, 1
    %v2125 = vor.u32 %v2120, %v2124
    %v2127 = vshrl.u32 %v2082, 16
    %v2129 = vshll.u32 %v2082, 16
    %v2131 = vrot.slane %v2129, 1
    %v2132 = vor.u32 %v2127, %v2131
    %v2134 = vshrl.u32 %v2083, 16
    %v2136 = vshll.u32 %v2083, 16
    %v2138 = vrot.slane %v2136, 1
    %v2139 = vor.u32 %v2134, %v2138
    %v2148 = vmax.bf16 %v2076, %v2090
    %v2149 = vmax.bf16 %v2077, %v2097
    %v2150 = vmax.bf16 %v2078, %v2104
    %v2151 = vmax.bf16 %v2079, %v2111
    %v2152 = vmax.bf16 %v2080, %v2118
    %v2153 = vmax.bf16 %v2081, %v2125
    %v2154 = vmax.bf16 %v2082, %v2132
    %v2155 = vmax.bf16 %v2083, %v2139
    %v2164 = vrot.slane %v2076, 1
    %v2165 = vrot.slane %v2077, 1
    %v2166 = vrot.slane %v2078, 1
    %v2167 = vrot.slane %v2079, 1
    %v2168 = vrot.slane %v2080, 1
    %v2169 = vrot.slane %v2081, 1
    %v2170 = vrot.slane %v2082, 1
    %v2171 = vrot.slane %v2083, 1
    %v2180 = vmax.bf16 %v2148, %v2164
    %v2181 = vmax.bf16 %v2149, %v2165
    %v2182 = vmax.bf16 %v2150, %v2166
    %v2183 = vmax.bf16 %v2151, %v2167
    %v2184 = vmax.bf16 %v2152, %v2168
    %v2185 = vmax.bf16 %v2153, %v2169
    %v2186 = vmax.bf16 %v2154, %v2170
    %v2187 = vmax.bf16 %v2155, %v2171
    %v2196 = vunpack.c.l.b16 %v2180
    %v2197 = vunpack.c.l.b16 %v2181
    %v2198 = vunpack.c.l.b16 %v2182
    %v2199 = vunpack.c.l.b16 %v2183
    %v2200 = vunpack.c.l.b16 %v2184
    %v2201 = vunpack.c.l.b16 %v2185
    %v2202 = vunpack.c.l.b16 %v2186
    %v2203 = vunpack.c.l.b16 %v2187
    %v2204 = vld [vmem:[%s4] sm:$0xf]
    %v2205 = vld [vmem:[%s4 + $0x4] sm:$0xf]
    %v2206 = vld [vmem:[%s4 + $0x8] sm:$0xf]
    %v2207 = vld [vmem:[%s4 + $0xc] sm:$0xf]
    %v2208 = vld [vmem:[%s4 + $0x10] sm:$0xf]
    %v2209 = vld [vmem:[%s4 + $0x14] sm:$0xf]
    %v2210 = vld [vmem:[%s4 + $0x18] sm:$0xf]
    %v2211 = vld [vmem:[%s4 + $0x1c] sm:$0xf]
    %v2212 = vld [vmem:[%s4 + $0x20] sm:$0xf]
    %v2213 = vld [vmem:[%s4 + $0x24] sm:$0xf]
    %v2214 = vld [vmem:[%s4 + $0x28] sm:$0xf]
    %v2215 = vld [vmem:[%s4 + $0x2c] sm:$0xf]
    %v2216 = vld [vmem:[%s4 + $0x30] sm:$0xf]
    %v2217 = vld [vmem:[%s4 + $0x34] sm:$0xf]
    %v2218 = vld [vmem:[%s4 + $0x38] sm:$0xf]
    %v2219 = vld [vmem:[%s4 + $0x3c] sm:$0xf]
    %v2220 = vld [vmem:[%s4 + $0x40] sm:$0xf]
    %v2221 = vld [vmem:[%s4 + $0x44] sm:$0xf]
    %v2222 = vld [vmem:[%s4 + $0x48] sm:$0xf]
    %v2223 = vld [vmem:[%s4 + $0x4c] sm:$0xf]
    %v2224 = vld [vmem:[%s4 + $0x50] sm:$0xf]
    %v2225 = vld [vmem:[%s4 + $0x54] sm:$0xf]
    %v2226 = vld [vmem:[%s4 + $0x58] sm:$0xf]
    %v2227 = vld [vmem:[%s4 + $0x5c] sm:$0xf]
    %v2228 = vld [vmem:[%s4 + $0x60] sm:$0xf]
    %v2229 = vld [vmem:[%s4 + $0x64] sm:$0xf]
    %v2230 = vld [vmem:[%s4 + $0x68] sm:$0xf]
    %v2231 = vld [vmem:[%s4 + $0x6c] sm:$0xf]
    %v2232 = vld [vmem:[%s4 + $0x70] sm:$0xf]
    %v2233 = vld [vmem:[%s4 + $0x74] sm:$0xf]
    %v2234 = vld [vmem:[%s4 + $0x78] sm:$0xf]
    %v2235 = vld [vmem:[%s4 + $0x7c] sm:$0xf]
    %v2236 = vld [vmem:[%s4 + $0x80] sm:$0xf]
    %v2237 = vld [vmem:[%s4 + $0x84] sm:$0xf]
    %v2238 = vld [vmem:[%s4 + $0x88] sm:$0xf]
    %v2239 = vld [vmem:[%s4 + $0x8c] sm:$0xf]
    %v2240 = vld [vmem:[%s4 + $0x90] sm:$0xf]
    %v2241 = vld [vmem:[%s4 + $0x94] sm:$0xf]
    %v2242 = vld [vmem:[%s4 + $0x98] sm:$0xf]
    %v2243 = vld [vmem:[%s4 + $0x9c] sm:$0xf]
    %v2244 = vld [vmem:[%s4 + $0xa0] sm:$0xf]
    %v2245 = vld [vmem:[%s4 + $0xa4] sm:$0xf]
    %v2246 = vld [vmem:[%s4 + $0xa8] sm:$0xf]
    %v2247 = vld [vmem:[%s4 + $0xac] sm:$0xf]
    %v2248 = vld [vmem:[%s4 + $0xb0] sm:$0xf]
    %v2249 = vld [vmem:[%s4 + $0xb4] sm:$0xf]
    %v2250 = vld [vmem:[%s4 + $0xb8] sm:$0xf]
    %v2251 = vld [vmem:[%s4 + $0xbc] sm:$0xf]
    %v2252 = vld [vmem:[%s4 + $0xc0] sm:$0xf]
    %v2253 = vld [vmem:[%s4 + $0xc4] sm:$0xf]
    %v2254 = vld [vmem:[%s4 + $0xc8] sm:$0xf]
    %v2255 = vld [vmem:[%s4 + $0xcc] sm:$0xf]
    %v2256 = vld [vmem:[%s4 + $0xd0] sm:$0xf]
    %v2257 = vld [vmem:[%s4 + $0xd4] sm:$0xf]
    %v2258 = vld [vmem:[%s4 + $0xd8] sm:$0xf]
    %v2259 = vld [vmem:[%s4 + $0xdc] sm:$0xf]
    %v2260 = vld [vmem:[%s4 + $0xe0] sm:$0xf]
    %v2261 = vld [vmem:[%s4 + $0xe4] sm:$0xf]
    %v2262 = vld [vmem:[%s4 + $0xe8] sm:$0xf]
    %v2263 = vld [vmem:[%s4 + $0xec] sm:$0xf]
    %v2264 = vld [vmem:[%s4 + $0xf0] sm:$0xf]
    %v2265 = vld [vmem:[%s4 + $0xf4] sm:$0xf]
    %v2266 = vld [vmem:[%s4 + $0xf8] sm:$0xf]
    %v2267 = vld [vmem:[%s4 + $0xfc] sm:$0xf]
    %v2268 = vpack.c.b16 %v2200, %v2196
    %v2269 = vpack.c.b16 %v2201, %v2197
    %v2270 = vpack.c.b16 %v2202, %v2198
    %v2271 = vpack.c.b16 %v2203, %v2199
    %v2340 = vunpack.c.l.b16 %v2204
    %v2341 = vunpack.c.l.b16 %v2205
    %v2342 = vunpack.c.l.b16 %v2206
    %v2343 = vunpack.c.l.b16 %v2207
    %v2344 = vunpack.c.l.b16 %v2208
    %v2345 = vunpack.c.l.b16 %v2209
    %v2346 = vunpack.c.l.b16 %v2210
    %v2347 = vunpack.c.l.b16 %v2211
    %v2348 = vunpack.c.l.b16 %v2212
    %v2349 = vunpack.c.l.b16 %v2213
    %v2350 = vunpack.c.l.b16 %v2214
    %v2351 = vunpack.c.l.b16 %v2215
    %v2352 = vunpack.c.l.b16 %v2216
    %v2353 = vunpack.c.l.b16 %v2217
    %v2354 = vunpack.c.l.b16 %v2218
    %v2355 = vunpack.c.l.b16 %v2219
    %v2356 = vunpack.c.l.b16 %v2220
    %v2357 = vunpack.c.l.b16 %v2221
    %v2358 = vunpack.c.l.b16 %v2222
    %v2359 = vunpack.c.l.b16 %v2223
    %v2360 = vunpack.c.l.b16 %v2224
    %v2361 = vunpack.c.l.b16 %v2225
    %v2362 = vunpack.c.l.b16 %v2226
    %v2363 = vunpack.c.l.b16 %v2227
    %v2364 = vunpack.c.l.b16 %v2228
    %v2365 = vunpack.c.l.b16 %v2229
    %v2366 = vunpack.c.l.b16 %v2230
    %v2367 = vunpack.c.l.b16 %v2231
    %v2368 = vunpack.c.l.b16 %v2232
    %v2369 = vunpack.c.l.b16 %v2233
    %v2370 = vunpack.c.l.b16 %v2234
    %v2371 = vunpack.c.l.b16 %v2235
    %v2372 = vunpack.c.l.b16 %v2236
    %v2373 = vunpack.c.l.b16 %v2237
    %v2374 = vunpack.c.l.b16 %v2238
    %v2375 = vunpack.c.l.b16 %v2239
    %v2376 = vunpack.c.l.b16 %v2240
    %v2377 = vunpack.c.l.b16 %v2241
    %v2378 = vunpack.c.l.b16 %v2242
    %v2379 = vunpack.c.l.b16 %v2243
    %v2380 = vunpack.c.l.b16 %v2244
    %v2381 = vunpack.c.l.b16 %v2245
    %v2382 = vunpack.c.l.b16 %v2246
    %v2383 = vunpack.c.l.b16 %v2247
    %v2384 = vunpack.c.l.b16 %v2248
    %v2385 = vunpack.c.l.b16 %v2249
    %v2386 = vunpack.c.l.b16 %v2250
    %v2387 = vunpack.c.l.b16 %v2251
    %v2388 = vunpack.c.l.b16 %v2252
    %v2389 = vunpack.c.l.b16 %v2253
    %v2390 = vunpack.c.l.b16 %v2254
    %v2391 = vunpack.c.l.b16 %v2255
    %v2392 = vunpack.c.l.b16 %v2256
    %v2393 = vunpack.c.l.b16 %v2257
    %v2394 = vunpack.c.l.b16 %v2258
    %v2395 = vunpack.c.l.b16 %v2259
    %v2396 = vunpack.c.l.b16 %v2260
    %v2397 = vunpack.c.l.b16 %v2261
    %v2398 = vunpack.c.l.b16 %v2262
    %v2399 = vunpack.c.l.b16 %v2263
    %v2400 = vunpack.c.l.b16 %v2264
    %v2401 = vunpack.c.l.b16 %v2265
    %v2402 = vunpack.c.l.b16 %v2266
    %v2403 = vunpack.c.l.b16 %v2267
    %v2404 = vpack.c.b16 %v2341, %v2340
    %v2405 = vpack.c.b16 %v2343, %v2342
    %v2406 = vpack.c.b16 %v2345, %v2344
    %v2407 = vpack.c.b16 %v2347, %v2346
    %v2408 = vpack.c.b16 %v2349, %v2348
    %v2409 = vpack.c.b16 %v2351, %v2350
    %v2410 = vpack.c.b16 %v2353, %v2352
    %v2411 = vpack.c.b16 %v2355, %v2354
    %v2412 = vpack.c.b16 %v2357, %v2356
    %v2413 = vpack.c.b16 %v2359, %v2358
    %v2414 = vpack.c.b16 %v2361, %v2360
    %v2415 = vpack.c.b16 %v2363, %v2362
    %v2416 = vpack.c.b16 %v2365, %v2364
    %v2417 = vpack.c.b16 %v2367, %v2366
    %v2418 = vpack.c.b16 %v2369, %v2368
    %v2419 = vpack.c.b16 %v2371, %v2370
    %v2420 = vpack.c.b16 %v2373, %v2372
    %v2421 = vpack.c.b16 %v2375, %v2374
    %v2422 = vpack.c.b16 %v2377, %v2376
    %v2423 = vpack.c.b16 %v2379, %v2378
    %v2424 = vpack.c.b16 %v2381, %v2380
    %v2425 = vpack.c.b16 %v2383, %v2382
    %v2426 = vpack.c.b16 %v2385, %v2384
    %v2427 = vpack.c.b16 %v2387, %v2386
    %v2428 = vpack.c.b16 %v2389, %v2388
    %v2429 = vpack.c.b16 %v2391, %v2390
    %v2430 = vpack.c.b16 %v2393, %v2392
    %v2431 = vpack.c.b16 %v2395, %v2394
    %v2432 = vpack.c.b16 %v2397, %v2396
    %v2433 = vpack.c.b16 %v2399, %v2398
    %v2434 = vpack.c.b16 %v2401, %v2400
    %v2435 = vpack.c.b16 %v2403, %v2402
    %2468 = vmatprep.subr.bf16.mxu0 0
    %2469 = vmatpush1.bf16.msra.mxu0 %v2404
    %2470 = vmatprep.subr.bf16.mxu0 0
    %2471 = vmatpush1.bf16.msra.mxu0 %v2405
    %2472 = vmatprep.subr.bf16.mxu0 0
    %2473 = vmatpush1.bf16.msra.mxu0 %v2406
    %2474 = vmatprep.subr.bf16.mxu0 0
    %2475 = vmatpush1.bf16.msra.mxu0 %v2407
    %2476 = vmatprep.subr.bf16.mxu0 0
    %2477 = vmatpush1.bf16.msra.mxu0 %v2408
    %2478 = vmatprep.subr.bf16.mxu0 0
    %2479 = vmatpush1.bf16.msra.mxu0 %v2409
    %2480 = vmatprep.subr.bf16.mxu0 0
    %2481 = vmatpush1.bf16.msra.mxu0 %v2410
    %2482 = vmatprep.subr.bf16.mxu0 0
    %2483 = vmatpush1.bf16.msra.mxu0 %v2411
    %2484 = vmatprep.subr.bf16.mxu0 0
    %2485 = vmatpush1.bf16.msra.mxu0 %v2412
    %2486 = vmatprep.subr.bf16.mxu0 0
    %2487 = vmatpush1.bf16.msra.mxu0 %v2413
    %2488 = vmatprep.subr.bf16.mxu0 0
    %2489 = vmatpush1.bf16.msra.mxu0 %v2414
    %2490 = vmatprep.subr.bf16.mxu0 0
    %2491 = vmatpush1.bf16.msra.mxu0 %v2415
    %2492 = vmatprep.subr.bf16.mxu0 0
    %2493 = vmatpush1.bf16.msra.mxu0 %v2416
    %2494 = vmatprep.subr.bf16.mxu0 0
    %2495 = vmatpush1.bf16.msra.mxu0 %v2417
    %2496 = vmatprep.subr.bf16.mxu0 0
    %2497 = vmatpush1.bf16.msra.mxu0 %v2418
    %2498 = vmatprep.subr.bf16.mxu0 0
    %2499 = vmatpush1.bf16.msra.mxu0 %v2419
    %2500 = vmatprep.mubr.bf16.mxu0 %v2269
    %2501 = vmatmul.mubr.bf16.gmra.mrb[0].mxu0 %v2268
    %v2502 = vpop.f32.mrb[0].mxu0
    %v2503 = vadd.f32 0.0, %v2502
    %v2504 = vpop.f32.mrb[0].mxu0
    %v2505 = vpop.f32.mrb[0].mxu0
    %v2506 = vadd.f32 0.0, %v2505
    %v2507 = vpop.f32.mrb[0].mxu0
    %2508 = vdwg.mxu0
    %2509 = vmatprep.subr.bf16.mxu0 0
    %2510 = vmatpush1.bf16.msra.mxu0 %v2420
    %2511 = vmatprep.subr.bf16.mxu0 0
    %2512 = vmatpush1.bf16.msra.mxu0 %v2421
    %2513 = vmatprep.subr.bf16.mxu0 0
    %2514 = vmatpush1.bf16.msra.mxu0 %v2422
    %2515 = vmatprep.subr.bf16.mxu0 0
    %2516 = vmatpush1.bf16.msra.mxu0 %v2423
    %2517 = vmatprep.subr.bf16.mxu0 0
    %2518 = vmatpush1.bf16.msra.mxu0 %v2424
    %2519 = vmatprep.subr.bf16.mxu0 0
    %2520 = vmatpush1.bf16.msra.mxu0 %v2425
    %2521 = vmatprep.subr.bf16.mxu0 0
    %2522 = vmatpush1.bf16.msra.mxu0 %v2426
    %2523 = vmatprep.subr.bf16.mxu0 0
    %2524 = vmatpush1.bf16.msra.mxu0 %v2427
    %2525 = vmatprep.subr.bf16.mxu0 0
    %2526 = vmatpush1.bf16.msra.mxu0 %v2428
    %2527 = vmatprep.subr.bf16.mxu0 0
    %2528 = vmatpush1.bf16.msra.mxu0 %v2429
    %2529 = vmatprep.subr.bf16.mxu0 0
    %2530 = vmatpush1.bf16.msra.mxu0 %v2430
    %2531 = vmatprep.subr.bf16.mxu0 0
    %2532 = vmatpush1.bf16.msra.mxu0 %v2431
    %2533 = vmatprep.subr.bf16.mxu0 0
    %2534 = vmatpush1.bf16.msra.mxu0 %v2432
    %2535 = vmatprep.subr.bf16.mxu0 0
    %2536 = vmatpush1.bf16.msra.mxu0 %v2433
    %2537 = vmatprep.subr.bf16.mxu0 0
    %2538 = vmatpush1.bf16.msra.mxu0 %v2434
    %2539 = vmatprep.subr.bf16.mxu0 0
    %2540 = vmatpush1.bf16.msra.mxu0 %v2435
    %2541 = vmatprep.mubr.bf16.mxu0 %v2271
    %2542 = vmatmul.mubr.bf16.gmra.mrb[0].mxu0 %v2270
    %v2543 = vpop.f32.mrb[0].mxu0
    %v2544 = vadd.f32 %v2503, %v2543
    %v2545 = vpop.f32.mrb[0].mxu0
    %v2546 = vpop.f32.mrb[0].mxu0
    %v2547 = vadd.f32 %v2506, %v2546
    %v2548 = vpop.f32.mrb[0].mxu0
    %2549 = vdwg.mxu0
    %2550 = vrot.lane.b32.xlu0 %v1981, 64
    %v2551 = vpop.permute.xlu0 %2550
    %v2553 = vmul.f32 %v2544, %v2551
    %v2554 = vmul.f32 %v2547, %v2551
    %2555 = vrot.lane.b32.xlu0 %v1990, 64
    %v2556 = vpop.permute.xlu0 %2555
    %v2558 = vadd.f32 %v2553, %v2556
    %v2559 = vadd.f32 %v2554, %v2556
    %v2560 = vmax.f32 %v2558, 0.0
    %v2561 = vmax.f32 %v2559, 0.0
    %2562 = vst [vmem:[%s9] sm:$0xff] %v972
    %2563 = vst [vmem:[%s9 + $0x20] sm:$0xff] %v975
    %2564 = vst [vmem:[%s9 + $0x8] sm:$0xff] %v1705
    %2565 = vst [vmem:[%s9 + $0x10] sm:$0xff] %v1706
    %2566 = vst [vmem:[%s9 + $0x28] sm:$0xff] %v1707
    %2567 = vst [vmem:[%s9 + $0x30] sm:$0xff] %v1708
    %2568 = vst.msk [vmem:[%s9 + $0x18] sm:$0xff] %vm1155, %v1994
    %2569 = vst.msk [vmem:[%s9 + $0x38] sm:$0xff] %vm1155, %v1995
    %2572 = vrot.lane.b32.xlu0 %v2560, 64
    %v2573 = vpop.permute.xlu0 %2572
    %2574 = vrot.lane.b32.xlu0 %v2561, 64
    %v2575 = vpop.permute.xlu0 %2574
    %vm2578 = vcmask 1048064
    %2579 = vst.msk [vmem:[%s9 + $0x18] sm:$0xff] %vm2578, %v2573
    %2580 = vst.msk [vmem:[%s9 + $0x38] sm:$0xff] %vm2578, %v2575
    // Predicated region
    $region58: #{model_forward_pallas.9} parent=1 // pred_check
      _
    $region59: #{model_forward_pallas.9} parent=1 // pred_check_branch
      %2582 = sbr.rel (0) target = $region61
    $region60: #{model_forward_pallas.9} parent=1 // pred_region
      _
    $region61: #{model_forward_pallas.9} parent=1 // pred_fallthru
      _
    // Predicated region
    $region62: #{model_forward_pallas.9} parent=1 // pred_check
      _
    $region63: #{model_forward_pallas.9} parent=1 // pred_check_branch
      %2584 = sbr.rel (0) target = $region65
    $region64: #{model_forward_pallas.9} parent=1 // pred_region
      _
    $region65: #{model_forward_pallas.9} parent=1 // pred_fallthru
      _
    %2585 = vsyncpa [#allocation3], 1
    %2586 = vsyncpa [#allocation5], 1
    %2587 = vsyncpa [#allocation8], 1

// kernel: model_forward_pallas.10
$region0: #{model_forward_pallas.10}
  #allocation0 [shape = 'u32[]', space=smem, size = 0x4, offset = 0x4, fixed_abs, tag = 'smem constant byte address 0x4 - core index']
  #allocation1 [shape = 'u32[144,128]{1,0:T(1,128)}', space=vmem, size = 0x12000, scoped, tag = 'internal scratch']
  %s0 = inlined_call_operand.vmem [shape: f32[2,4112], index: 0, kind: input, shape index: {}]
  %s1 = inlined_call_operand.vmem [shape: f32[4112,256], index: 1, kind: input, shape index: {}]
  %s2 = inlined_call_operand.vmem [shape: f32[1,256], index: 2, kind: input, shape index: {}]
  %s3 = inlined_call_operand.vmem [shape: f32[1,256], index: 3, kind: input, shape index: {}]
  %s4 = inlined_call_operand.vmem [shape: f32[2,256], index: 4, kind: output, shape index: {}]
  %s5 = sld [smem:[#allocation0]]
  $region26: #{model_forward_pallas.10} parent=0
    _
  %s7 = ssub.s32 1, %s5
  %s8 = scalar_select 0, %s7, %s5
  // Predicated region
  $region2: #{model_forward_pallas.10} parent=0 // pred_check
    _
  $region3: #{model_forward_pallas.10} parent=0 // pred_check_branch
    %10 = sbr.rel (0) target = $region5
  $region4: #{model_forward_pallas.10} parent=0 // pred_region
    _
  $region5: #{model_forward_pallas.10} parent=0 // pred_fallthru
    _
  // Predicated region
  $region6: #{model_forward_pallas.10} parent=0 // pred_check
    _
  $region7: #{model_forward_pallas.10} parent=0 // pred_check_branch
    %12 = sbr.rel (0) target = $region9
  $region8: #{model_forward_pallas.10} parent=0 // pred_region
    _
  $region9: #{model_forward_pallas.10} parent=0 // pred_fallthru
    _
  // Predicated region
  $region10: #{model_forward_pallas.10} parent=0 // pred_check
    _
  $region11: #{model_forward_pallas.10} parent=0 // pred_check_branch
    %14 = sbr.rel (0) target = $region13
  $region12: #{model_forward_pallas.10} parent=0 // pred_region
    _
  $region13: #{model_forward_pallas.10} parent=0 // pred_fallthru
    _
  // Predicated region
  $region14: #{model_forward_pallas.10} parent=0 // pred_check
    _
  $region15: #{model_forward_pallas.10} parent=0 // pred_check_branch
    %16 = sbr.rel (0) target = $region17
  $region16: #{model_forward_pallas.10} parent=0 // pred_region
    _
  $region17: #{model_forward_pallas.10} parent=0 // pred_fallthru
    _
  %v17 = vld [vmem:[%s0] sm:$0xff]
  %v18 = vld [vmem:[%s0 + $0x8] sm:$0xff]
  %v19 = vld [vmem:[%s0 + $0x10] sm:$0xff]
  %v20 = vld [vmem:[%s0 + $0x18] sm:$0xff]
  %v21 = vld [vmem:[%s0 + $0x20] sm:$0xff]
  %v22 = vld [vmem:[%s0 + $0x28] sm:$0xff]
  %v23 = vld [vmem:[%s0 + $0x30] sm:$0xff]
  %v24 = vld [vmem:[%s0 + $0x38] sm:$0xff]
  %v25 = vld [vmem:[%s0 + $0x40] sm:$0x3]
  %v26 = vld [vmem:[%s1] sm:$0xff]
  %v27 = vld [vmem:[%s1 + $0x8] sm:$0xff]
  %v28 = vld [vmem:[%s1 + $0x10] sm:$0xff]
  %v29 = vld [vmem:[%s1 + $0x18] sm:$0xff]
  %v30 = vld [vmem:[%s1 + $0x20] sm:$0xff]
  %v31 = vld [vmem:[%s1 + $0x28] sm:$0xff]
  %v32 = vld [vmem:[%s1 + $0x30] sm:$0xff]
  %v33 = vld [vmem:[%s1 + $0x38] sm:$0xff]
  %v34 = vld [vmem:[%s1 + $0x40] sm:$0xff]
  %v35 = vld [vmem:[%s1 + $0x48] sm:$0xff]
  %v36 = vld [vmem:[%s1 + $0x50] sm:$0xff]
  %v37 = vld [vmem:[%s1 + $0x58] sm:$0xff]
  %v38 = vld [vmem:[%s1 + $0x60] sm:$0xff]
  %v39 = vld [vmem:[%s1 + $0x68] sm:$0xff]
  %v40 = vld [vmem:[%s1 + $0x70] sm:$0xff]
  %v41 = vld [vmem:[%s1 + $0x78] sm:$0xff]
  %v42 = vld [vmem:[%s1 + $0x80] sm:$0xff]
  %v43 = vld [vmem:[%s1 + $0x88] sm:$0xff]
  %v44 = vld [vmem:[%s1 + $0x90] sm:$0xff]
  %v45 = vld [vmem:[%s1 + $0x98] sm:$0xff]
  %v46 = vld [vmem:[%s1 + $0xa0] sm:$0xff]
  %v47 = vld [vmem:[%s1 + $0xa8] sm:$0xff]
  %v48 = vld [vmem:[%s1 + $0xb0] sm:$0xff]
  %v49 = vld [vmem:[%s1 + $0xb8] sm:$0xff]
  %v50 = vld [vmem:[%s1 + $0xc0] sm:$0xff]
  %v51 = vld [vmem:[%s1 + $0xc8] sm:$0xff]
  %v52 = vld [vmem:[%s1 + $0xd0] sm:$0xff]
  %v53 = vld [vmem:[%s1 + $0xd8] sm:$0xff]
  %v54 = vld [vmem:[%s1 + $0xe0] sm:$0xff]
  %v55 = vld [vmem:[%s1 + $0xe8] sm:$0xff]
  %v56 = vld [vmem:[%s1 + $0xf0] sm:$0xff]
  %v57 = vld [vmem:[%s1 + $0xf8] sm:$0xff]
  %v58 = vld [vmem:[%s1 + $0x100] sm:$0xff]
  %v59 = vld [vmem:[%s1 + $0x108] sm:$0xff]
  %v60 = vld [vmem:[%s1 + $0x110] sm:$0xff]
  %v61 = vld [vmem:[%s1 + $0x118] sm:$0xff]
  %v62 = vld [vmem:[%s1 + $0x120] sm:$0xff]
  %v63 = vld [vmem:[%s1 + $0x128] sm:$0xff]
  %v64 = vld [vmem:[%s1 + $0x130] sm:$0xff]
  %v65 = vld [vmem:[%s1 + $0x138] sm:$0xff]
  %v66 = vld [vmem:[%s1 + $0x140] sm:$0xff]
  %v67 = vld [vmem:[%s1 + $0x148] sm:$0xff]
  %v68 = vld [vmem:[%s1 + $0x150] sm:$0xff]
  %v69 = vld [vmem:[%s1 + $0x158] sm:$0xff]
  %v70 = vld [vmem:[%s1 + $0x160] sm:$0xff]
  %v71 = vld [vmem:[%s1 + $0x168] sm:$0xff]
  %v72 = vld [vmem:[%s1 + $0x170] sm:$0xff]
  %v73 = vld [vmem:[%s1 + $0x178] sm:$0xff]
  %v74 = vld [vmem:[%s1 + $0x180] sm:$0xff]
  %v75 = vld [vmem:[%s1 + $0x188] sm:$0xff]
  %v76 = vld [vmem:[%s1 + $0x190] sm:$0xff]
  %v77 = vld [vmem:[%s1 + $0x198] sm:$0xff]
  %v78 = vld [vmem:[%s1 + $0x1a0] sm:$0xff]
  %v79 = vld [vmem:[%s1 + $0x1a8] sm:$0xff]
  %v80 = vld [vmem:[%s1 + $0x1b0] sm:$0xff]
  %v81 = vld [vmem:[%s1 + $0x1b8] sm:$0xff]
  %v82 = vld [vmem:[%s1 + $0x1c0] sm:$0xff]
  %v83 = vld [vmem:[%s1 + $0x1c8] sm:$0xff]
  %v84 = vld [vmem:[%s1 + $0x1d0] sm:$0xff]
  %v85 = vld [vmem:[%s1 + $0x1d8] sm:$0xff]
  %v86 = vld [vmem:[%s1 + $0x1e0] sm:$0xff]
  %v87 = vld [vmem:[%s1 + $0x1e8] sm:$0xff]
  %v88 = vld [vmem:[%s1 + $0x1f0] sm:$0xff]
  %v89 = vld [vmem:[%s1 + $0x1f8] sm:$0xff]
  %v90 = vld [vmem:[%s1 + $0x200] sm:$0xff]
  %v91 = vld [vmem:[%s1 + $0x208] sm:$0xff]
  %v92 = vld [vmem:[%s1 + $0x210] sm:$0xff]
  %v93 = vld [vmem:[%s1 + $0x218] sm:$0xff]
  %v94 = vld [vmem:[%s1 + $0x220] sm:$0xff]
  %v95 = vld [vmem:[%s1 + $0x228] sm:$0xff]
  %v96 = vld [vmem:[%s1 + $0x230] sm:$0xff]
  %v97 = vld [vmem:[%s1 + $0x238] sm:$0xff]
  %v98 = vld [vmem:[%s1 + $0x240] sm:$0xff]
  %v99 = vld [vmem:[%s1 + $0x248] sm:$0xff]
  %v100 = vld [vmem:[%s1 + $0x250] sm:$0xff]
  %v101 = vld [vmem:[%s1 + $0x258] sm:$0xff]
  %v102 = vld [vmem:[%s1 + $0x260] sm:$0xff]
  %v103 = vld [vmem:[%s1 + $0x268] sm:$0xff]
  %v104 = vld [vmem:[%s1 + $0x270] sm:$0xff]
  %v105 = vld [vmem:[%s1 + $0x278] sm:$0xff]
  %v106 = vld [vmem:[%s1 + $0x280] sm:$0xff]
  %v107 = vld [vmem:[%s1 + $0x288] sm:$0xff]
  %v108 = vld [vmem:[%s1 + $0x290] sm:$0xff]
  %v109 = vld [vmem:[%s1 + $0x298] sm:$0xff]
  %v110 = vld [vmem:[%s1 + $0x2a0] sm:$0xff]
  %v111 = vld [vmem:[%s1 + $0x2a8] sm:$0xff]
  %v112 = vld [vmem:[%s1 + $0x2b0] sm:$0xff]
  %v113 = vld [vmem:[%s1 + $0x2b8] sm:$0xff]
  %v114 = vld [vmem:[%s1 + $0x2c0] sm:$0xff]
  %v115 = vld [vmem:[%s1 + $0x2c8] sm:$0xff]
  %v116 = vld [vmem:[%s1 + $0x2d0] sm:$0xff]
  %v117 = vld [vmem:[%s1 + $0x2d8] sm:$0xff]
  %v118 = vld [vmem:[%s1 + $0x2e0] sm:$0xff]
  %v119 = vld [vmem:[%s1 + $0x2e8] sm:$0xff]
  %v120 = vld [vmem:[%s1 + $0x2f0] sm:$0xff]
  %v121 = vld [vmem:[%s1 + $0x2f8] sm:$0xff]
  %v122 = vld [vmem:[%s1 + $0x300] sm:$0xff]
  %v123 = vld [vmem:[%s1 + $0x308] sm:$0xff]
  %v124 = vld [vmem:[%s1 + $0x310] sm:$0xff]
  %v125 = vld [vmem:[%s1 + $0x318] sm:$0xff]
  %v126 = vld [vmem:[%s1 + $0x320] sm:$0xff]
  %v127 = vld [vmem:[%s1 + $0x328] sm:$0xff]
  %v128 = vld [vmem:[%s1 + $0x330] sm:$0xff]
  %v129 = vld [vmem:[%s1 + $0x338] sm:$0xff]
  %v130 = vld [vmem:[%s1 + $0x340] sm:$0xff]
  %v131 = vld [vmem:[%s1 + $0x348] sm:$0xff]
  %v132 = vld [vmem:[%s1 + $0x350] sm:$0xff]
  %v133 = vld [vmem:[%s1 + $0x358] sm:$0xff]
  %v134 = vld [vmem:[%s1 + $0x360] sm:$0xff]
  %v135 = vld [vmem:[%s1 + $0x368] sm:$0xff]
  %v136 = vld [vmem:[%s1 + $0x370] sm:$0xff]
  %v137 = vld [vmem:[%s1 + $0x378] sm:$0xff]
  %v138 = vld [vmem:[%s1 + $0x380] sm:$0xff]
  %v139 = vld [vmem:[%s1 + $0x388] sm:$0xff]
  %v140 = vld [vmem:[%s1 + $0x390] sm:$0xff]
  %v141 = vld [vmem:[%s1 + $0x398] sm:$0xff]
  %v142 = vld [vmem:[%s1 + $0x3a0] sm:$0xff]
  %v143 = vld [vmem:[%s1 + $0x3a8] sm:$0xff]
  %v144 = vld [vmem:[%s1 + $0x3b0] sm:$0xff]
  %v145 = vld [vmem:[%s1 + $0x3b8] sm:$0xff]
  %v146 = vld [vmem:[%s1 + $0x3c0] sm:$0xff]
  %v147 = vld [vmem:[%s1 + $0x3c8] sm:$0xff]
  %v148 = vld [vmem:[%s1 + $0x3d0] sm:$0xff]
  %v149 = vld [vmem:[%s1 + $0x3d8] sm:$0xff]
  %v150 = vld [vmem:[%s1 + $0x3e0] sm:$0xff]
  %v151 = vld [vmem:[%s1 + $0x3e8] sm:$0xff]
  %v152 = vld [vmem:[%s1 + $0x3f0] sm:$0xff]
  %v153 = vld [vmem:[%s1 + $0x3f8] sm:$0xff]
  %v154 = vld [vmem:[%s1 + $0x400] sm:$0xff]
  %v155 = vld [vmem:[%s1 + $0x408] sm:$0xff]
  %v156 = vld [vmem:[%s1 + $0x410] sm:$0xff]
  %v157 = vld [vmem:[%s1 + $0x418] sm:$0xff]
  %v158 = vld [vmem:[%s1 + $0x420] sm:$0xff]
  %v159 = vld [vmem:[%s1 + $0x428] sm:$0xff]
  %v160 = vld [vmem:[%s1 + $0x430] sm:$0xff]
  %v161 = vld [vmem:[%s1 + $0x438] sm:$0xff]
  %v162 = vld [vmem:[%s1 + $0x440] sm:$0xff]
  %v163 = vld [vmem:[%s1 + $0x448] sm:$0xff]
  %v164 = vld [vmem:[%s1 + $0x450] sm:$0xff]
  %v165 = vld [vmem:[%s1 + $0x458] sm:$0xff]
  %v166 = vld [vmem:[%s1 + $0x460] sm:$0xff]
  %v167 = vld [vmem:[%s1 + $0x468] sm:$0xff]
  %v168 = vld [vmem:[%s1 + $0x470] sm:$0xff]
  %v169 = vld [vmem:[%s1 + $0x478] sm:$0xff]
  %v170 = vld [vmem:[%s1 + $0x480] sm:$0xff]
  %v171 = vld [vmem:[%s1 + $0x488] sm:$0xff]
  %v172 = vld [vmem:[%s1 + $0x490] sm:$0xff]
  %v173 = vld [vmem:[%s1 + $0x498] sm:$0xff]
  %v174 = vld [vmem:[%s1 + $0x4a0] sm:$0xff]
  %v175 = vld [vmem:[%s1 + $0x4a8] sm:$0xff]
  %v176 = vld [vmem:[%s1 + $0x4b0] sm:$0xff]
  %v177 = vld [vmem:[%s1 + $0x4b8] sm:$0xff]
  %v178 = vld [vmem:[%s1 + $0x4c0] sm:$0xff]
  %v179 = vld [vmem:[%s1 + $0x4c8] sm:$0xff]
  %v180 = vld [vmem:[%s1 + $0x4d0] sm:$0xff]
  %v181 = vld [vmem:[%s1 + $0x4d8] sm:$0xff]
  %v182 = vld [vmem:[%s1 + $0x4e0] sm:$0xff]
  %v183 = vld [vmem:[%s1 + $0x4e8] sm:$0xff]
  %v184 = vld [vmem:[%s1 + $0x4f0] sm:$0xff]
  %v185 = vld [vmem:[%s1 + $0x4f8] sm:$0xff]
  %v186 = vld [vmem:[%s1 + $0x500] sm:$0xff]
  %v187 = vld [vmem:[%s1 + $0x508] sm:$0xff]
  %v188 = vld [vmem:[%s1 + $0x510] sm:$0xff]
  %v189 = vld [vmem:[%s1 + $0x518] sm:$0xff]
  %v190 = vld [vmem:[%s1 + $0x520] sm:$0xff]
  %v191 = vld [vmem:[%s1 + $0x528] sm:$0xff]
  %v192 = vld [vmem:[%s1 + $0x530] sm:$0xff]
  %v193 = vld [vmem:[%s1 + $0x538] sm:$0xff]
  %v194 = vld [vmem:[%s1 + $0x540] sm:$0xff]
  %v195 = vld [vmem:[%s1 + $0x548] sm:$0xff]
  %v196 = vld [vmem:[%s1 + $0x550] sm:$0xff]
  %v197 = vld [vmem:[%s1 + $0x558] sm:$0xff]
  %v198 = vld [vmem:[%s1 + $0x560] sm:$0xff]
  %v199 = vld [vmem:[%s1 + $0x568] sm:$0xff]
  %v200 = vld [vmem:[%s1 + $0x570] sm:$0xff]
  %v201 = vld [vmem:[%s1 + $0x578] sm:$0xff]
  %v202 = vld [vmem:[%s1 + $0x580] sm:$0xff]
  %v203 = vld [vmem:[%s1 + $0x588] sm:$0xff]
  %v204 = vld [vmem:[%s1 + $0x590] sm:$0xff]
  %v205 = vld [vmem:[%s1 + $0x598] sm:$0xff]
  %v206 = vld [vmem:[%s1 + $0x5a0] sm:$0xff]
  %v207 = vld [vmem:[%s1 + $0x5a8] sm:$0xff]
  %v208 = vld [vmem:[%s1 + $0x5b0] sm:$0xff]
  %v209 = vld [vmem:[%s1 + $0x5b8] sm:$0xff]
  %v210 = vld [vmem:[%s1 + $0x5c0] sm:$0xff]
  %v211 = vld [vmem:[%s1 + $0x5c8] sm:$0xff]
  %v212 = vld [vmem:[%s1 + $0x5d0] sm:$0xff]
  %v213 = vld [vmem:[%s1 + $0x5d8] sm:$0xff]
  %v214 = vld [vmem:[%s1 + $0x5e0] sm:$0xff]
  %v215 = vld [vmem:[%s1 + $0x5e8] sm:$0xff]
  %v216 = vld [vmem:[%s1 + $0x5f0] sm:$0xff]
  %v217 = vld [vmem:[%s1 + $0x5f8] sm:$0xff]
  %v218 = vld [vmem:[%s1 + $0x600] sm:$0xff]
  %v219 = vld [vmem:[%s1 + $0x608] sm:$0xff]
  %v220 = vld [vmem:[%s1 + $0x610] sm:$0xff]
  %v221 = vld [vmem:[%s1 + $0x618] sm:$0xff]
  %v222 = vld [vmem:[%s1 + $0x620] sm:$0xff]
  %v223 = vld [vmem:[%s1 + $0x628] sm:$0xff]
  %v224 = vld [vmem:[%s1 + $0x630] sm:$0xff]
  %v225 = vld [vmem:[%s1 + $0x638] sm:$0xff]
  %v226 = vld [vmem:[%s1 + $0x640] sm:$0xff]
  %v227 = vld [vmem:[%s1 + $0x648] sm:$0xff]
  %v228 = vld [vmem:[%s1 + $0x650] sm:$0xff]
  %v229 = vld [vmem:[%s1 + $0x658] sm:$0xff]
  %v230 = vld [vmem:[%s1 + $0x660] sm:$0xff]
  %v231 = vld [vmem:[%s1 + $0x668] sm:$0xff]
  %v232 = vld [vmem:[%s1 + $0x670] sm:$0xff]
  %v233 = vld [vmem:[%s1 + $0x678] sm:$0xff]
  %v234 = vld [vmem:[%s1 + $0x680] sm:$0xff]
  %v235 = vld [vmem:[%s1 + $0x688] sm:$0xff]
  %v236 = vld [vmem:[%s1 + $0x690] sm:$0xff]
  %v237 = vld [vmem:[%s1 + $0x698] sm:$0xff]
  %v238 = vld [vmem:[%s1 + $0x6a0] sm:$0xff]
  %v239 = vld [vmem:[%s1 + $0x6a8] sm:$0xff]
  %v240 = vld [vmem:[%s1 + $0x6b0] sm:$0xff]
  %v241 = vld [vmem:[%s1 + $0x6b8] sm:$0xff]
  %v242 = vld [vmem:[%s1 + $0x6c0] sm:$0xff]
  %v243 = vld [vmem:[%s1 + $0x6c8] sm:$0xff]
  %v244 = vld [vmem:[%s1 + $0x6d0] sm:$0xff]
  %v245 = vld [vmem:[%s1 + $0x6d8] sm:$0xff]
  %v246 = vld [vmem:[%s1 + $0x6e0] sm:$0xff]
  %v247 = vld [vmem:[%s1 + $0x6e8] sm:$0xff]
  %v248 = vld [vmem:[%s1 + $0x6f0] sm:$0xff]
  %v249 = vld [vmem:[%s1 + $0x6f8] sm:$0xff]
  %v250 = vld [vmem:[%s1 + $0x700] sm:$0xff]
  %v251 = vld [vmem:[%s1 + $0x708] sm:$0xff]
  %v252 = vld [vmem:[%s1 + $0x710] sm:$0xff]
  %v253 = vld [vmem:[%s1 + $0x718] sm:$0xff]
  %v254 = vld [vmem:[%s1 + $0x720] sm:$0xff]
  %v255 = vld [vmem:[%s1 + $0x728] sm:$0xff]
  %v256 = vld [vmem:[%s1 + $0x730] sm:$0xff]
  %v257 = vld [vmem:[%s1 + $0x738] sm:$0xff]
  %v258 = vld [vmem:[%s1 + $0x740] sm:$0xff]
  %v259 = vld [vmem:[%s1 + $0x748] sm:$0xff]
  %v260 = vld [vmem:[%s1 + $0x750] sm:$0xff]
  %v261 = vld [vmem:[%s1 + $0x758] sm:$0xff]
  %v262 = vld [vmem:[%s1 + $0x760] sm:$0xff]
  %v263 = vld [vmem:[%s1 + $0x768] sm:$0xff]
  %v264 = vld [vmem:[%s1 + $0x770] sm:$0xff]
  %v265 = vld [vmem:[%s1 + $0x778] sm:$0xff]
  %v266 = vld [vmem:[%s1 + $0x780] sm:$0xff]
  %v267 = vld [vmem:[%s1 + $0x788] sm:$0xff]
  %v268 = vld [vmem:[%s1 + $0x790] sm:$0xff]
  %v269 = vld [vmem:[%s1 + $0x798] sm:$0xff]
  %v270 = vld [vmem:[%s1 + $0x7a0] sm:$0xff]
  %v271 = vld [vmem:[%s1 + $0x7a8] sm:$0xff]
  %v272 = vld [vmem:[%s1 + $0x7b0] sm:$0xff]
  %v273 = vld [vmem:[%s1 + $0x7b8] sm:$0xff]
  %v274 = vld [vmem:[%s1 + $0x7c0] sm:$0xff]
  %v275 = vld [vmem:[%s1 + $0x7c8] sm:$0xff]
  %v276 = vld [vmem:[%s1 + $0x7d0] sm:$0xff]
  %v277 = vld [vmem:[%s1 + $0x7d8] sm:$0xff]
  %v278 = vld [vmem:[%s1 + $0x7e0] sm:$0xff]
  %v279 = vld [vmem:[%s1 + $0x7e8] sm:$0xff]
  %v280 = vld [vmem:[%s1 + $0x7f0] sm:$0xff]
  %v281 = vld [vmem:[%s1 + $0x7f8] sm:$0xff]
  %v282 = vld [vmem:[%s1 + $0x800] sm:$0xff]
  %v283 = vld [vmem:[%s1 + $0x808] sm:$0xff]
  %v284 = vld [vmem:[%s1 + $0x810] sm:$0xff]
  %v285 = vld [vmem:[%s1 + $0x818] sm:$0xff]
  %v286 = vld [vmem:[%s1 + $0x820] sm:$0xff]
  %v287 = vld [vmem:[%s1 + $0x828] sm:$0xff]
  %v288 = vld [vmem:[%s1 + $0x830] sm:$0xff]
  %v289 = vld [vmem:[%s1 + $0x838] sm:$0xff]
  %v290 = vld [vmem:[%s1 + $0x840] sm:$0xff]
  %v291 = vld [vmem:[%s1 + $0x848] sm:$0xff]
  %v292 = vld [vmem:[%s1 + $0x850] sm:$0xff]
  %v293 = vld [vmem:[%s1 + $0x858] sm:$0xff]
  %v294 = vld [vmem:[%s1 + $0x860] sm:$0xff]
  %v295 = vld [vmem:[%s1 + $0x868] sm:$0xff]
  %v296 = vld [vmem:[%s1 + $0x870] sm:$0xff]
  %v297 = vld [vmem:[%s1 + $0x878] sm:$0xff]
  %v298 = vld [vmem:[%s1 + $0x880] sm:$0xff]
  %v299 = vld [vmem:[%s1 + $0x888] sm:$0xff]
  %v300 = vld [vmem:[%s1 + $0x890] sm:$0xff]
  %v301 = vld [vmem:[%s1 + $0x898] sm:$0xff]
  %v302 = vld [vmem:[%s1 + $0x8a0] sm:$0xff]
  %v303 = vld [vmem:[%s1 + $0x8a8] sm:$0xff]
  %v304 = vld [vmem:[%s1 + $0x8b0] sm:$0xff]
  %v305 = vld [vmem:[%s1 + $0x8b8] sm:$0xff]
  %v306 = vld [vmem:[%s1 + $0x8c0] sm:$0xff]
  %v307 = vld [vmem:[%s1 + $0x8c8] sm:$0xff]
  %v308 = vld [vmem:[%s1 + $0x8d0] sm:$0xff]
  %v309 = vld [vmem:[%s1 + $0x8d8] sm:$0xff]
  %v310 = vld [vmem:[%s1 + $0x8e0] sm:$0xff]
  %v311 = vld [vmem:[%s1 + $0x8e8] sm:$0xff]
  %v312 = vld [vmem:[%s1 + $0x8f0] sm:$0xff]
  %v313 = vld [vmem:[%s1 + $0x8f8] sm:$0xff]
  %v314 = vld [vmem:[%s1 + $0x900] sm:$0xff]
  %v315 = vld [vmem:[%s1 + $0x908] sm:$0xff]
  %v316 = vld [vmem:[%s1 + $0x910] sm:$0xff]
  %v317 = vld [vmem:[%s1 + $0x918] sm:$0xff]
  %v318 = vld [vmem:[%s1 + $0x920] sm:$0xff]
  %v319 = vld [vmem:[%s1 + $0x928] sm:$0xff]
  %v320 = vld [vmem:[%s1 + $0x930] sm:$0xff]
  %v321 = vld [vmem:[%s1 + $0x938] sm:$0xff]
  %v322 = vld [vmem:[%s1 + $0x940] sm:$0xff]
  %v323 = vld [vmem:[%s1 + $0x948] sm:$0xff]
  %v324 = vld [vmem:[%s1 + $0x950] sm:$0xff]
  %v325 = vld [vmem:[%s1 + $0x958] sm:$0xff]
  %v326 = vld [vmem:[%s1 + $0x960] sm:$0xff]
  %v327 = vld [vmem:[%s1 + $0x968] sm:$0xff]
  %v328 = vld [vmem:[%s1 + $0x970] sm:$0xff]
  %v329 = vld [vmem:[%s1 + $0x978] sm:$0xff]
  %v330 = vld [vmem:[%s1 + $0x980] sm:$0xff]
  %v331 = vld [vmem:[%s1 + $0x988] sm:$0xff]
  %v332 = vld [vmem:[%s1 + $0x990] sm:$0xff]
  %v333 = vld [vmem:[%s1 + $0x998] sm:$0xff]
  %v334 = vld [vmem:[%s1 + $0x9a0] sm:$0xff]
  %v335 = vld [vmem:[%s1 + $0x9a8] sm:$0xff]
  %v336 = vld [vmem:[%s1 + $0x9b0] sm:$0xff]
  %v337 = vld [vmem:[%s1 + $0x9b8] sm:$0xff]
  %v338 = vld [vmem:[%s1 + $0x9c0] sm:$0xff]
  %v339 = vld [vmem:[%s1 + $0x9c8] sm:$0xff]
  %v340 = vld [vmem:[%s1 + $0x9d0] sm:$0xff]
  %v341 = vld [vmem:[%s1 + $0x9d8] sm:$0xff]
  %v342 = vld [vmem:[%s1 + $0x9e0] sm:$0xff]
  %v343 = vld [vmem:[%s1 + $0x9e8] sm:$0xff]
  %v344 = vld [vmem:[%s1 + $0x9f0] sm:$0xff]
  %v345 = vld [vmem:[%s1 + $0x9f8] sm:$0xff]
  %v346 = vld [vmem:[%s1 + $0xa00] sm:$0xff]
  %v347 = vld [vmem:[%s1 + $0xa08] sm:$0xff]
  %v348 = vld [vmem:[%s1 + $0xa10] sm:$0xff]
  %v349 = vld [vmem:[%s1 + $0xa18] sm:$0xff]
  %v350 = vld [vmem:[%s1 + $0xa20] sm:$0xff]
  %v351 = vld [vmem:[%s1 + $0xa28] sm:$0xff]
  %v352 = vld [vmem:[%s1 + $0xa30] sm:$0xff]
  %v353 = vld [vmem:[%s1 + $0xa38] sm:$0xff]
  %v354 = vld [vmem:[%s1 + $0xa40] sm:$0xff]
  %v355 = vld [vmem:[%s1 + $0xa48] sm:$0xff]
  %v356 = vld [vmem:[%s1 + $0xa50] sm:$0xff]
  %v357 = vld [vmem:[%s1 + $0xa58] sm:$0xff]
  %v358 = vld [vmem:[%s1 + $0xa60] sm:$0xff]
  %v359 = vld [vmem:[%s1 + $0xa68] sm:$0xff]
  %v360 = vld [vmem:[%s1 + $0xa70] sm:$0xff]
  %v361 = vld [vmem:[%s1 + $0xa78] sm:$0xff]
  %v362 = vld [vmem:[%s1 + $0xa80] sm:$0xff]
  %v363 = vld [vmem:[%s1 + $0xa88] sm:$0xff]
  %v364 = vld [vmem:[%s1 + $0xa90] sm:$0xff]
  %v365 = vld [vmem:[%s1 + $0xa98] sm:$0xff]
  %v366 = vld [vmem:[%s1 + $0xaa0] sm:$0xff]
  %v367 = vld [vmem:[%s1 + $0xaa8] sm:$0xff]
  %v368 = vld [vmem:[%s1 + $0xab0] sm:$0xff]
  %v369 = vld [vmem:[%s1 + $0xab8] sm:$0xff]
  %v370 = vld [vmem:[%s1 + $0xac0] sm:$0xff]
  %v371 = vld [vmem:[%s1 + $0xac8] sm:$0xff]
  %v372 = vld [vmem:[%s1 + $0xad0] sm:$0xff]
  %v373 = vld [vmem:[%s1 + $0xad8] sm:$0xff]
  %v374 = vld [vmem:[%s1 + $0xae0] sm:$0xff]
  %v375 = vld [vmem:[%s1 + $0xae8] sm:$0xff]
  %v376 = vld [vmem:[%s1 + $0xaf0] sm:$0xff]
  %v377 = vld [vmem:[%s1 + $0xaf8] sm:$0xff]
  %v378 = vld [vmem:[%s1 + $0xb00] sm:$0xff]
  %v379 = vld [vmem:[%s1 + $0xb08] sm:$0xff]
  %v380 = vld [vmem:[%s1 + $0xb10] sm:$0xff]
  %v381 = vld [vmem:[%s1 + $0xb18] sm:$0xff]
  %v382 = vld [vmem:[%s1 + $0xb20] sm:$0xff]
  %v383 = vld [vmem:[%s1 + $0xb28] sm:$0xff]
  %v384 = vld [vmem:[%s1 + $0xb30] sm:$0xff]
  %v385 = vld [vmem:[%s1 + $0xb38] sm:$0xff]
  %v386 = vld [vmem:[%s1 + $0xb40] sm:$0xff]
  %v387 = vld [vmem:[%s1 + $0xb48] sm:$0xff]
  %v388 = vld [vmem:[%s1 + $0xb50] sm:$0xff]
  %v389 = vld [vmem:[%s1 + $0xb58] sm:$0xff]
  %v390 = vld [vmem:[%s1 + $0xb60] sm:$0xff]
  %v391 = vld [vmem:[%s1 + $0xb68] sm:$0xff]
  %v392 = vld [vmem:[%s1 + $0xb70] sm:$0xff]
  %v393 = vld [vmem:[%s1 + $0xb78] sm:$0xff]
  %v394 = vld [vmem:[%s1 + $0xb80] sm:$0xff]
  %v395 = vld [vmem:[%s1 + $0xb88] sm:$0xff]
  %v396 = vld [vmem:[%s1 + $0xb90] sm:$0xff]
  %v397 = vld [vmem:[%s1 + $0xb98] sm:$0xff]
  %v398 = vld [vmem:[%s1 + $0xba0] sm:$0xff]
  %v399 = vld [vmem:[%s1 + $0xba8] sm:$0xff]
  %v400 = vld [vmem:[%s1 + $0xbb0] sm:$0xff]
  %v401 = vld [vmem:[%s1 + $0xbb8] sm:$0xff]
  %v402 = vld [vmem:[%s1 + $0xbc0] sm:$0xff]
  %v403 = vld [vmem:[%s1 + $0xbc8] sm:$0xff]
  %v404 = vld [vmem:[%s1 + $0xbd0] sm:$0xff]
  %v405 = vld [vmem:[%s1 + $0xbd8] sm:$0xff]
  %v406 = vld [vmem:[%s1 + $0xbe0] sm:$0xff]
  %v407 = vld [vmem:[%s1 + $0xbe8] sm:$0xff]
  %v408 = vld [vmem:[%s1 + $0xbf0] sm:$0xff]
  %v409 = vld [vmem:[%s1 + $0xbf8] sm:$0xff]
  %v410 = vld [vmem:[%s1 + $0xc00] sm:$0xff]
  %v411 = vld [vmem:[%s1 + $0xc08] sm:$0xff]
  %v412 = vld [vmem:[%s1 + $0xc10] sm:$0xff]
  %v413 = vld [vmem:[%s1 + $0xc18] sm:$0xff]
  %v414 = vld [vmem:[%s1 + $0xc20] sm:$0xff]
  %v415 = vld [vmem:[%s1 + $0xc28] sm:$0xff]
  %v416 = vld [vmem:[%s1 + $0xc30] sm:$0xff]
  %v417 = vld [vmem:[%s1 + $0xc38] sm:$0xff]
  %v418 = vld [vmem:[%s1 + $0xc40] sm:$0xff]
  %v419 = vld [vmem:[%s1 + $0xc48] sm:$0xff]
  %v420 = vld [vmem:[%s1 + $0xc50] sm:$0xff]
  %v421 = vld [vmem:[%s1 + $0xc58] sm:$0xff]
  %v422 = vld [vmem:[%s1 + $0xc60] sm:$0xff]
  %v423 = vld [vmem:[%s1 + $0xc68] sm:$0xff]
  %v424 = vld [vmem:[%s1 + $0xc70] sm:$0xff]
  %v425 = vld [vmem:[%s1 + $0xc78] sm:$0xff]
  %v426 = vld [vmem:[%s1 + $0xc80] sm:$0xff]
  %v427 = vld [vmem:[%s1 + $0xc88] sm:$0xff]
  %v428 = vld [vmem:[%s1 + $0xc90] sm:$0xff]
  %v429 = vld [vmem:[%s1 + $0xc98] sm:$0xff]
  %v430 = vld [vmem:[%s1 + $0xca0] sm:$0xff]
  %v431 = vld [vmem:[%s1 + $0xca8] sm:$0xff]
  %v432 = vld [vmem:[%s1 + $0xcb0] sm:$0xff]
  %v433 = vld [vmem:[%s1 + $0xcb8] sm:$0xff]
  %v434 = vld [vmem:[%s1 + $0xcc0] sm:$0xff]
  %v435 = vld [vmem:[%s1 + $0xcc8] sm:$0xff]
  %v436 = vld [vmem:[%s1 + $0xcd0] sm:$0xff]
  %v437 = vld [vmem:[%s1 + $0xcd8] sm:$0xff]
  %v438 = vld [vmem:[%s1 + $0xce0] sm:$0xff]
  %v439 = vld [vmem:[%s1 + $0xce8] sm:$0xff]
  %v440 = vld [vmem:[%s1 + $0xcf0] sm:$0xff]
  %v441 = vld [vmem:[%s1 + $0xcf8] sm:$0xff]
  %v442 = vld [vmem:[%s1 + $0xd00] sm:$0xff]
  %v443 = vld [vmem:[%s1 + $0xd08] sm:$0xff]
  %v444 = vld [vmem:[%s1 + $0xd10] sm:$0xff]
  %v445 = vld [vmem:[%s1 + $0xd18] sm:$0xff]
  %v446 = vld [vmem:[%s1 + $0xd20] sm:$0xff]
  %v447 = vld [vmem:[%s1 + $0xd28] sm:$0xff]
  %v448 = vld [vmem:[%s1 + $0xd30] sm:$0xff]
  %v449 = vld [vmem:[%s1 + $0xd38] sm:$0xff]
  %v450 = vld [vmem:[%s1 + $0xd40] sm:$0xff]
  %v451 = vld [vmem:[%s1 + $0xd48] sm:$0xff]
  %v452 = vld [vmem:[%s1 + $0xd50] sm:$0xff]
  %v453 = vld [vmem:[%s1 + $0xd58] sm:$0xff]
  %v454 = vld [vmem:[%s1 + $0xd60] sm:$0xff]
  %v455 = vld [vmem:[%s1 + $0xd68] sm:$0xff]
  %v456 = vld [vmem:[%s1 + $0xd70] sm:$0xff]
  %v457 = vld [vmem:[%s1 + $0xd78] sm:$0xff]
  %v458 = vld [vmem:[%s1 + $0xd80] sm:$0xff]
  %v459 = vld [vmem:[%s1 + $0xd88] sm:$0xff]
  %v460 = vld [vmem:[%s1 + $0xd90] sm:$0xff]
  %v461 = vld [vmem:[%s1 + $0xd98] sm:$0xff]
  %v462 = vld [vmem:[%s1 + $0xda0] sm:$0xff]
  %v463 = vld [vmem:[%s1 + $0xda8] sm:$0xff]
  %v464 = vld [vmem:[%s1 + $0xdb0] sm:$0xff]
  %v465 = vld [vmem:[%s1 + $0xdb8] sm:$0xff]
  %v466 = vld [vmem:[%s1 + $0xdc0] sm:$0xff]
  %v467 = vld [vmem:[%s1 + $0xdc8] sm:$0xff]
  %v468 = vld [vmem:[%s1 + $0xdd0] sm:$0xff]
  %v469 = vld [vmem:[%s1 + $0xdd8] sm:$0xff]
  %v470 = vld [vmem:[%s1 + $0xde0] sm:$0xff]
  %v471 = vld [vmem:[%s1 + $0xde8] sm:$0xff]
  %v472 = vld [vmem:[%s1 + $0xdf0] sm:$0xff]
  %v473 = vld [vmem:[%s1 + $0xdf8] sm:$0xff]
  %v474 = vld [vmem:[%s1 + $0xe00] sm:$0xff]
  %v475 = vld [vmem:[%s1 + $0xe08] sm:$0xff]
  %v476 = vld [vmem:[%s1 + $0xe10] sm:$0xff]
  %v477 = vld [vmem:[%s1 + $0xe18] sm:$0xff]
  %v478 = vld [vmem:[%s1 + $0xe20] sm:$0xff]
  %v479 = vld [vmem:[%s1 + $0xe28] sm:$0xff]
  %v480 = vld [vmem:[%s1 + $0xe30] sm:$0xff]
  %v481 = vld [vmem:[%s1 + $0xe38] sm:$0xff]
  %v482 = vld [vmem:[%s1 + $0xe40] sm:$0xff]
  %v483 = vld [vmem:[%s1 + $0xe48] sm:$0xff]
  %v484 = vld [vmem:[%s1 + $0xe50] sm:$0xff]
  %v485 = vld [vmem:[%s1 + $0xe58] sm:$0xff]
  %v486 = vld [vmem:[%s1 + $0xe60] sm:$0xff]
  %v487 = vld [vmem:[%s1 + $0xe68] sm:$0xff]
  %v488 = vld [vmem:[%s1 + $0xe70] sm:$0xff]
  %v489 = vld [vmem:[%s1 + $0xe78] sm:$0xff]
  %v490 = vld [vmem:[%s1 + $0xe80] sm:$0xff]
  %v491 = vld [vmem:[%s1 + $0xe88] sm:$0xff]
  %v492 = vld [vmem:[%s1 + $0xe90] sm:$0xff]
  %v493 = vld [vmem:[%s1 + $0xe98] sm:$0xff]
  %v494 = vld [vmem:[%s1 + $0xea0] sm:$0xff]
  %v495 = vld [vmem:[%s1 + $0xea8] sm:$0xff]
  %v496 = vld [vmem:[%s1 + $0xeb0] sm:$0xff]
  %v497 = vld [vmem:[%s1 + $0xeb8] sm:$0xff]
  %v498 = vld [vmem:[%s1 + $0xec0] sm:$0xff]
  %v499 = vld [vmem:[%s1 + $0xec8] sm:$0xff]
  %v500 = vld [vmem:[%s1 + $0xed0] sm:$0xff]
  %v501 = vld [vmem:[%s1 + $0xed8] sm:$0xff]
  %v502 = vld [vmem:[%s1 + $0xee0] sm:$0xff]
  %v503 = vld [vmem:[%s1 + $0xee8] sm:$0xff]
  %v504 = vld [vmem:[%s1 + $0xef0] sm:$0xff]
  %v505 = vld [vmem:[%s1 + $0xef8] sm:$0xff]
  %v506 = vld [vmem:[%s1 + $0xf00] sm:$0xff]
  %v507 = vld [vmem:[%s1 + $0xf08] sm:$0xff]
  %v508 = vld [vmem:[%s1 + $0xf10] sm:$0xff]
  %v509 = vld [vmem:[%s1 + $0xf18] sm:$0xff]
  %v510 = vld [vmem:[%s1 + $0xf20] sm:$0xff]
  %v511 = vld [vmem:[%s1 + $0xf28] sm:$0xff]
  %v512 = vld [vmem:[%s1 + $0xf30] sm:$0xff]
  %v513 = vld [vmem:[%s1 + $0xf38] sm:$0xff]
  %v514 = vld [vmem:[%s1 + $0xf40] sm:$0xff]
  %v515 = vld [vmem:[%s1 + $0xf48] sm:$0xff]
  %v516 = vld [vmem:[%s1 + $0xf50] sm:$0xff]
  %v517 = vld [vmem:[%s1 + $0xf58] sm:$0xff]
  %v518 = vld [vmem:[%s1 + $0xf60] sm:$0xff]
  %v519 = vld [vmem:[%s1 + $0xf68] sm:$0xff]
  %v520 = vld [vmem:[%s1 + $0xf70] sm:$0xff]
  %v521 = vld [vmem:[%s1 + $0xf78] sm:$0xff]
  %v522 = vld [vmem:[%s1 + $0xf80] sm:$0xff]
  %v523 = vld [vmem:[%s1 + $0xf88] sm:$0xff]
  %v524 = vld [vmem:[%s1 + $0xf90] sm:$0xff]
  %v525 = vld [vmem:[%s1 + $0xf98] sm:$0xff]
  %v526 = vld [vmem:[%s1 + $0xfa0] sm:$0xff]
  %v527 = vld [vmem:[%s1 + $0xfa8] sm:$0xff]
  %v528 = vld [vmem:[%s1 + $0xfb0] sm:$0xff]
  %v529 = vld [vmem:[%s1 + $0xfb8] sm:$0xff]
  %v530 = vld [vmem:[%s1 + $0xfc0] sm:$0xff]
  %v531 = vld [vmem:[%s1 + $0xfc8] sm:$0xff]
  %v532 = vld [vmem:[%s1 + $0xfd0] sm:$0xff]
  %v533 = vld [vmem:[%s1 + $0xfd8] sm:$0xff]
  %v534 = vld [vmem:[%s1 + $0xfe0] sm:$0xff]
  %v535 = vld [vmem:[%s1 + $0xfe8] sm:$0xff]
  %v536 = vld [vmem:[%s1 + $0xff0] sm:$0xff]
  %v537 = vld [vmem:[%s1 + $0xff8] sm:$0xff]
  %v538 = vld [vmem:[%s1 + $0x1000] sm:$0xff]
  %v539 = vld [vmem:[%s1 + $0x1008] sm:$0xff]
  %v540 = vld [vmem:[%s1 + $0x1010] sm:$0xff]
  %v541 = vld [vmem:[%s1 + $0x1018] sm:$0xff]
  %v542 = vld [vmem:[%s1 + $0x1020] sm:$0xff]
  %v543 = vld [vmem:[%s1 + $0x1028] sm:$0xff]
  %v544 = vld [vmem:[%s1 + $0x1030] sm:$0xff]
  %v545 = vld [vmem:[%s1 + $0x1038] sm:$0xff]
  %v546 = vld [vmem:[%s1 + $0x1040] sm:$0xff]
  %v547 = vld [vmem:[%s1 + $0x1048] sm:$0xff]
  %v548 = vld [vmem:[%s1 + $0x1050] sm:$0xff]
  %v549 = vld [vmem:[%s1 + $0x1058] sm:$0xff]
  %v550 = vld [vmem:[%s1 + $0x1060] sm:$0xff]
  %v551 = vld [vmem:[%s1 + $0x1068] sm:$0xff]
  %v552 = vld [vmem:[%s1 + $0x1070] sm:$0xff]
  %v553 = vld [vmem:[%s1 + $0x1078] sm:$0xff]
  %v554 = vld [vmem:[%s1 + $0x1080] sm:$0xff]
  %v555 = vld [vmem:[%s1 + $0x1088] sm:$0xff]
  %v556 = vld [vmem:[%s1 + $0x1090] sm:$0xff]
  %v557 = vld [vmem:[%s1 + $0x1098] sm:$0xff]
  %v558 = vld [vmem:[%s1 + $0x10a0] sm:$0xff]
  %v559 = vld [vmem:[%s1 + $0x10a8] sm:$0xff]
  %v560 = vld [vmem:[%s1 + $0x10b0] sm:$0xff]
  %v561 = vld [vmem:[%s1 + $0x10b8] sm:$0xff]
  %v562 = vld [vmem:[%s1 + $0x10c0] sm:$0xff]
  %v563 = vld [vmem:[%s1 + $0x10c8] sm:$0xff]
  %v564 = vld [vmem:[%s1 + $0x10d0] sm:$0xff]
  %v565 = vld [vmem:[%s1 + $0x10d8] sm:$0xff]
  %v566 = vld [vmem:[%s1 + $0x10e0] sm:$0xff]
  %v567 = vld [vmem:[%s1 + $0x10e8] sm:$0xff]
  %v568 = vld [vmem:[%s1 + $0x10f0] sm:$0xff]
  %v569 = vld [vmem:[%s1 + $0x10f8] sm:$0xff]
  %v570 = vld [vmem:[%s1 + $0x1100] sm:$0xff]
  %v571 = vld [vmem:[%s1 + $0x1108] sm:$0xff]
  %v572 = vld [vmem:[%s1 + $0x1110] sm:$0xff]
  %v573 = vld [vmem:[%s1 + $0x1118] sm:$0xff]
  %v574 = vld [vmem:[%s1 + $0x1120] sm:$0xff]
  %v575 = vld [vmem:[%s1 + $0x1128] sm:$0xff]
  %v576 = vld [vmem:[%s1 + $0x1130] sm:$0xff]
  %v577 = vld [vmem:[%s1 + $0x1138] sm:$0xff]
  %v578 = vld [vmem:[%s1 + $0x1140] sm:$0xff]
  %v579 = vld [vmem:[%s1 + $0x1148] sm:$0xff]
  %v580 = vld [vmem:[%s1 + $0x1150] sm:$0xff]
  %v581 = vld [vmem:[%s1 + $0x1158] sm:$0xff]
  %v582 = vld [vmem:[%s1 + $0x1160] sm:$0xff]
  %v583 = vld [vmem:[%s1 + $0x1168] sm:$0xff]
  %v584 = vld [vmem:[%s1 + $0x1170] sm:$0xff]
  %v585 = vld [vmem:[%s1 + $0x1178] sm:$0xff]
  %v586 = vld [vmem:[%s1 + $0x1180] sm:$0xff]
  %v587 = vld [vmem:[%s1 + $0x1188] sm:$0xff]
  %v588 = vld [vmem:[%s1 + $0x1190] sm:$0xff]
  %v589 = vld [vmem:[%s1 + $0x1198] sm:$0xff]
  %v590 = vld [vmem:[%s1 + $0x11a0] sm:$0xff]
  %v591 = vld [vmem:[%s1 + $0x11a8] sm:$0xff]
  %v592 = vld [vmem:[%s1 + $0x11b0] sm:$0xff]
  %v593 = vld [vmem:[%s1 + $0x11b8] sm:$0xff]
  %v594 = vld [vmem:[%s1 + $0x11c0] sm:$0xff]
  %v595 = vld [vmem:[%s1 + $0x11c8] sm:$0xff]
  %v596 = vld [vmem:[%s1 + $0x11d0] sm:$0xff]
  %v597 = vld [vmem:[%s1 + $0x11d8] sm:$0xff]
  %v598 = vld [vmem:[%s1 + $0x11e0] sm:$0xff]
  %v599 = vld [vmem:[%s1 + $0x11e8] sm:$0xff]
  %v600 = vld [vmem:[%s1 + $0x11f0] sm:$0xff]
  %v601 = vld [vmem:[%s1 + $0x11f8] sm:$0xff]
  %v602 = vld [vmem:[%s1 + $0x1200] sm:$0xff]
  %v603 = vld [vmem:[%s1 + $0x1208] sm:$0xff]
  %v604 = vld [vmem:[%s1 + $0x1210] sm:$0xff]
  %v605 = vld [vmem:[%s1 + $0x1218] sm:$0xff]
  %v606 = vld [vmem:[%s1 + $0x1220] sm:$0xff]
  %v607 = vld [vmem:[%s1 + $0x1228] sm:$0xff]
  %v608 = vld [vmem:[%s1 + $0x1230] sm:$0xff]
  %v609 = vld [vmem:[%s1 + $0x1238] sm:$0xff]
  %v610 = vld [vmem:[%s1 + $0x1240] sm:$0xff]
  %v611 = vld [vmem:[%s1 + $0x1248] sm:$0xff]
  %v612 = vld [vmem:[%s1 + $0x1250] sm:$0xff]
  %v613 = vld [vmem:[%s1 + $0x1258] sm:$0xff]
  %v614 = vld [vmem:[%s1 + $0x1260] sm:$0xff]
  %v615 = vld [vmem:[%s1 + $0x1268] sm:$0xff]
  %v616 = vld [vmem:[%s1 + $0x1270] sm:$0xff]
  %v617 = vld [vmem:[%s1 + $0x1278] sm:$0xff]
  %v618 = vld [vmem:[%s1 + $0x1280] sm:$0xff]
  %v619 = vld [vmem:[%s1 + $0x1288] sm:$0xff]
  %v620 = vld [vmem:[%s1 + $0x1290] sm:$0xff]
  %v621 = vld [vmem:[%s1 + $0x1298] sm:$0xff]
  %v622 = vld [vmem:[%s1 + $0x12a0] sm:$0xff]
  %v623 = vld [vmem:[%s1 + $0x12a8] sm:$0xff]
  %v624 = vld [vmem:[%s1 + $0x12b0] sm:$0xff]
  %v625 = vld [vmem:[%s1 + $0x12b8] sm:$0xff]
  %v626 = vld [vmem:[%s1 + $0x12c0] sm:$0xff]
  %v627 = vld [vmem:[%s1 + $0x12c8] sm:$0xff]
  %v628 = vld [vmem:[%s1 + $0x12d0] sm:$0xff]
  %v629 = vld [vmem:[%s1 + $0x12d8] sm:$0xff]
  %v630 = vld [vmem:[%s1 + $0x12e0] sm:$0xff]
  %v631 = vld [vmem:[%s1 + $0x12e8] sm:$0xff]
  %v632 = vld [vmem:[%s1 + $0x12f0] sm:$0xff]
  %v633 = vld [vmem:[%s1 + $0x12f8] sm:$0xff]
  %v634 = vld [vmem:[%s1 + $0x1300] sm:$0xff]
  %v635 = vld [vmem:[%s1 + $0x1308] sm:$0xff]
  %v636 = vld [vmem:[%s1 + $0x1310] sm:$0xff]
  %v637 = vld [vmem:[%s1 + $0x1318] sm:$0xff]
  %v638 = vld [vmem:[%s1 + $0x1320] sm:$0xff]
  %v639 = vld [vmem:[%s1 + $0x1328] sm:$0xff]
  %v640 = vld [vmem:[%s1 + $0x1330] sm:$0xff]
  %v641 = vld [vmem:[%s1 + $0x1338] sm:$0xff]
  %v642 = vld [vmem:[%s1 + $0x1340] sm:$0xff]
  %v643 = vld [vmem:[%s1 + $0x1348] sm:$0xff]
  %v644 = vld [vmem:[%s1 + $0x1350] sm:$0xff]
  %v645 = vld [vmem:[%s1 + $0x1358] sm:$0xff]
  %v646 = vld [vmem:[%s1 + $0x1360] sm:$0xff]
  %v647 = vld [vmem:[%s1 + $0x1368] sm:$0xff]
  %v648 = vld [vmem:[%s1 + $0x1370] sm:$0xff]
  %v649 = vld [vmem:[%s1 + $0x1378] sm:$0xff]
  %v650 = vld [vmem:[%s1 + $0x1380] sm:$0xff]
  %v651 = vld [vmem:[%s1 + $0x1388] sm:$0xff]
  %v652 = vld [vmem:[%s1 + $0x1390] sm:$0xff]
  %v653 = vld [vmem:[%s1 + $0x1398] sm:$0xff]
  %v654 = vld [vmem:[%s1 + $0x13a0] sm:$0xff]
  %v655 = vld [vmem:[%s1 + $0x13a8] sm:$0xff]
  %v656 = vld [vmem:[%s1 + $0x13b0] sm:$0xff]
  %v657 = vld [vmem:[%s1 + $0x13b8] sm:$0xff]
  %v658 = vld [vmem:[%s1 + $0x13c0] sm:$0xff]
  %v659 = vld [vmem:[%s1 + $0x13c8] sm:$0xff]
  %v660 = vld [vmem:[%s1 + $0x13d0] sm:$0xff]
  %v661 = vld [vmem:[%s1 + $0x13d8] sm:$0xff]
  %v662 = vld [vmem:[%s1 + $0x13e0] sm:$0xff]
  %v663 = vld [vmem:[%s1 + $0x13e8] sm:$0xff]
  %v664 = vld [vmem:[%s1 + $0x13f0] sm:$0xff]
  %v665 = vld [vmem:[%s1 + $0x13f8] sm:$0xff]
  %v666 = vld [vmem:[%s1 + $0x1400] sm:$0xff]
  %v667 = vld [vmem:[%s1 + $0x1408] sm:$0xff]
  %v668 = vld [vmem:[%s1 + $0x1410] sm:$0xff]
  %v669 = vld [vmem:[%s1 + $0x1418] sm:$0xff]
  %v670 = vld [vmem:[%s1 + $0x1420] sm:$0xff]
  %v671 = vld [vmem:[%s1 + $0x1428] sm:$0xff]
  %v672 = vld [vmem:[%s1 + $0x1430] sm:$0xff]
  %v673 = vld [vmem:[%s1 + $0x1438] sm:$0xff]
  %v674 = vld [vmem:[%s1 + $0x1440] sm:$0xff]
  %v675 = vld [vmem:[%s1 + $0x1448] sm:$0xff]
  %v676 = vld [vmem:[%s1 + $0x1450] sm:$0xff]
  %v677 = vld [vmem:[%s1 + $0x1458] sm:$0xff]
  %v678 = vld [vmem:[%s1 + $0x1460] sm:$0xff]
  %v679 = vld [vmem:[%s1 + $0x1468] sm:$0xff]
  %v680 = vld [vmem:[%s1 + $0x1470] sm:$0xff]
  %v681 = vld [vmem:[%s1 + $0x1478] sm:$0xff]
  %v682 = vld [vmem:[%s1 + $0x1480] sm:$0xff]
  %v683 = vld [vmem:[%s1 + $0x1488] sm:$0xff]
  %v684 = vld [vmem:[%s1 + $0x1490] sm:$0xff]
  %v685 = vld [vmem:[%s1 + $0x1498] sm:$0xff]
  %v686 = vld [vmem:[%s1 + $0x14a0] sm:$0xff]
  %v687 = vld [vmem:[%s1 + $0x14a8] sm:$0xff]
  %v688 = vld [vmem:[%s1 + $0x14b0] sm:$0xff]
  %v689 = vld [vmem:[%s1 + $0x14b8] sm:$0xff]
  %v690 = vld [vmem:[%s1 + $0x14c0] sm:$0xff]
  %v691 = vld [vmem:[%s1 + $0x14c8] sm:$0xff]
  %v692 = vld [vmem:[%s1 + $0x14d0] sm:$0xff]
  %v693 = vld [vmem:[%s1 + $0x14d8] sm:$0xff]
  %v694 = vld [vmem:[%s1 + $0x14e0] sm:$0xff]
  %v695 = vld [vmem:[%s1 + $0x14e8] sm:$0xff]
  %v696 = vld [vmem:[%s1 + $0x14f0] sm:$0xff]
  %v697 = vld [vmem:[%s1 + $0x14f8] sm:$0xff]
  %v698 = vld [vmem:[%s1 + $0x1500] sm:$0xff]
  %v699 = vld [vmem:[%s1 + $0x1508] sm:$0xff]
  %v700 = vld [vmem:[%s1 + $0x1510] sm:$0xff]
  %v701 = vld [vmem:[%s1 + $0x1518] sm:$0xff]
  %v702 = vld [vmem:[%s1 + $0x1520] sm:$0xff]
  %v703 = vld [vmem:[%s1 + $0x1528] sm:$0xff]
  %v704 = vld [vmem:[%s1 + $0x1530] sm:$0xff]
  %v705 = vld [vmem:[%s1 + $0x1538] sm:$0xff]
  %v706 = vld [vmem:[%s1 + $0x1540] sm:$0xff]
  %v707 = vld [vmem:[%s1 + $0x1548] sm:$0xff]
  %v708 = vld [vmem:[%s1 + $0x1550] sm:$0xff]
  %v709 = vld [vmem:[%s1 + $0x1558] sm:$0xff]
  %v710 = vld [vmem:[%s1 + $0x1560] sm:$0xff]
  %v711 = vld [vmem:[%s1 + $0x1568] sm:$0xff]
  %v712 = vld [vmem:[%s1 + $0x1570] sm:$0xff]
  %v713 = vld [vmem:[%s1 + $0x1578] sm:$0xff]
  %v714 = vld [vmem:[%s1 + $0x1580] sm:$0xff]
  %v715 = vld [vmem:[%s1 + $0x1588] sm:$0xff]
  %v716 = vld [vmem:[%s1 + $0x1590] sm:$0xff]
  %v717 = vld [vmem:[%s1 + $0x1598] sm:$0xff]
  %v718 = vld [vmem:[%s1 + $0x15a0] sm:$0xff]
  %v719 = vld [vmem:[%s1 + $0x15a8] sm:$0xff]
  %v720 = vld [vmem:[%s1 + $0x15b0] sm:$0xff]
  %v721 = vld [vmem:[%s1 + $0x15b8] sm:$0xff]
  %v722 = vld [vmem:[%s1 + $0x15c0] sm:$0xff]
  %v723 = vld [vmem:[%s1 + $0x15c8] sm:$0xff]
  %v724 = vld [vmem:[%s1 + $0x15d0] sm:$0xff]
  %v725 = vld [vmem:[%s1 + $0x15d8] sm:$0xff]
  %v726 = vld [vmem:[%s1 + $0x15e0] sm:$0xff]
  %v727 = vld [vmem:[%s1 + $0x15e8] sm:$0xff]
  %v728 = vld [vmem:[%s1 + $0x15f0] sm:$0xff]
  %v729 = vld [vmem:[%s1 + $0x15f8] sm:$0xff]
  %v730 = vld [vmem:[%s1 + $0x1600] sm:$0xff]
  %v731 = vld [vmem:[%s1 + $0x1608] sm:$0xff]
  %v732 = vld [vmem:[%s1 + $0x1610] sm:$0xff]
  %v733 = vld [vmem:[%s1 + $0x1618] sm:$0xff]
  %v734 = vld [vmem:[%s1 + $0x1620] sm:$0xff]
  %v735 = vld [vmem:[%s1 + $0x1628] sm:$0xff]
  %v736 = vld [vmem:[%s1 + $0x1630] sm:$0xff]
  %v737 = vld [vmem:[%s1 + $0x1638] sm:$0xff]
  %v738 = vld [vmem:[%s1 + $0x1640] sm:$0xff]
  %v739 = vld [vmem:[%s1 + $0x1648] sm:$0xff]
  %v740 = vld [vmem:[%s1 + $0x1650] sm:$0xff]
  %v741 = vld [vmem:[%s1 + $0x1658] sm:$0xff]
  %v742 = vld [vmem:[%s1 + $0x1660] sm:$0xff]
  %v743 = vld [vmem:[%s1 + $0x1668] sm:$0xff]
  %v744 = vld [vmem:[%s1 + $0x1670] sm:$0xff]
  %v745 = vld [vmem:[%s1 + $0x1678] sm:$0xff]
  %v746 = vld [vmem:[%s1 + $0x1680] sm:$0xff]
  %v747 = vld [vmem:[%s1 + $0x1688] sm:$0xff]
  %v748 = vld [vmem:[%s1 + $0x1690] sm:$0xff]
  %v749 = vld [vmem:[%s1 + $0x1698] sm:$0xff]
  %v750 = vld [vmem:[%s1 + $0x16a0] sm:$0xff]
  %v751 = vld [vmem:[%s1 + $0x16a8] sm:$0xff]
  %v752 = vld [vmem:[%s1 + $0x16b0] sm:$0xff]
  %v753 = vld [vmem:[%s1 + $0x16b8] sm:$0xff]
  %v754 = vld [vmem:[%s1 + $0x16c0] sm:$0xff]
  %v755 = vld [vmem:[%s1 + $0x16c8] sm:$0xff]
  %v756 = vld [vmem:[%s1 + $0x16d0] sm:$0xff]
  %v757 = vld [vmem:[%s1 + $0x16d8] sm:$0xff]
  %v758 = vld [vmem:[%s1 + $0x16e0] sm:$0xff]
  %v759 = vld [vmem:[%s1 + $0x16e8] sm:$0xff]
  %v760 = vld [vmem:[%s1 + $0x16f0] sm:$0xff]
  %v761 = vld [vmem:[%s1 + $0x16f8] sm:$0xff]
  %v762 = vld [vmem:[%s1 + $0x1700] sm:$0xff]
  %v763 = vld [vmem:[%s1 + $0x1708] sm:$0xff]
  %v764 = vld [vmem:[%s1 + $0x1710] sm:$0xff]
  %v765 = vld [vmem:[%s1 + $0x1718] sm:$0xff]
  %v766 = vld [vmem:[%s1 + $0x1720] sm:$0xff]
  %v767 = vld [vmem:[%s1 + $0x1728] sm:$0xff]
  %v768 = vld [vmem:[%s1 + $0x1730] sm:$0xff]
  %v769 = vld [vmem:[%s1 + $0x1738] sm:$0xff]
  %v770 = vld [vmem:[%s1 + $0x1740] sm:$0xff]
  %v771 = vld [vmem:[%s1 + $0x1748] sm:$0xff]
  %v772 = vld [vmem:[%s1 + $0x1750] sm:$0xff]
  %v773 = vld [vmem:[%s1 + $0x1758] sm:$0xff]
  %v774 = vld [vmem:[%s1 + $0x1760] sm:$0xff]
  %v775 = vld [vmem:[%s1 + $0x1768] sm:$0xff]
  %v776 = vld [vmem:[%s1 + $0x1770] sm:$0xff]
  %v777 = vld [vmem:[%s1 + $0x1778] sm:$0xff]
  %v778 = vld [vmem:[%s1 + $0x1780] sm:$0xff]
  %v779 = vld [vmem:[%s1 + $0x1788] sm:$0xff]
  %v780 = vld [vmem:[%s1 + $0x1790] sm:$0xff]
  %v781 = vld [vmem:[%s1 + $0x1798] sm:$0xff]
  %v782 = vld [vmem:[%s1 + $0x17a0] sm:$0xff]
  %v783 = vld [vmem:[%s1 + $0x17a8] sm:$0xff]
  %v784 = vld [vmem:[%s1 + $0x17b0] sm:$0xff]
  %v785 = vld [vmem:[%s1 + $0x17b8] sm:$0xff]
  %v786 = vld [vmem:[%s1 + $0x17c0] sm:$0xff]
  %v787 = vld [vmem:[%s1 + $0x17c8] sm:$0xff]
  %v788 = vld [vmem:[%s1 + $0x17d0] sm:$0xff]
  %v789 = vld [vmem:[%s1 + $0x17d8] sm:$0xff]
  %v790 = vld [vmem:[%s1 + $0x17e0] sm:$0xff]
  %v791 = vld [vmem:[%s1 + $0x17e8] sm:$0xff]
  %v792 = vld [vmem:[%s1 + $0x17f0] sm:$0xff]
  %v793 = vld [vmem:[%s1 + $0x17f8] sm:$0xff]
  %v794 = vld [vmem:[%s1 + $0x1800] sm:$0xff]
  %v795 = vld [vmem:[%s1 + $0x1808] sm:$0xff]
  %v796 = vld [vmem:[%s1 + $0x1810] sm:$0xff]
  %v797 = vld [vmem:[%s1 + $0x1818] sm:$0xff]
  %v798 = vld [vmem:[%s1 + $0x1820] sm:$0xff]
  %v799 = vld [vmem:[%s1 + $0x1828] sm:$0xff]
  %v800 = vld [vmem:[%s1 + $0x1830] sm:$0xff]
  %v801 = vld [vmem:[%s1 + $0x1838] sm:$0xff]
  %v802 = vld [vmem:[%s1 + $0x1840] sm:$0xff]
  %v803 = vld [vmem:[%s1 + $0x1848] sm:$0xff]
  %v804 = vld [vmem:[%s1 + $0x1850] sm:$0xff]
  %v805 = vld [vmem:[%s1 + $0x1858] sm:$0xff]
  %v806 = vld [vmem:[%s1 + $0x1860] sm:$0xff]
  %v807 = vld [vmem:[%s1 + $0x1868] sm:$0xff]
  %v808 = vld [vmem:[%s1 + $0x1870] sm:$0xff]
  %v809 = vld [vmem:[%s1 + $0x1878] sm:$0xff]
  %v810 = vld [vmem:[%s1 + $0x1880] sm:$0xff]
  %v811 = vld [vmem:[%s1 + $0x1888] sm:$0xff]
  %v812 = vld [vmem:[%s1 + $0x1890] sm:$0xff]
  %v813 = vld [vmem:[%s1 + $0x1898] sm:$0xff]
  %v814 = vld [vmem:[%s1 + $0x18a0] sm:$0xff]
  %v815 = vld [vmem:[%s1 + $0x18a8] sm:$0xff]
  %v816 = vld [vmem:[%s1 + $0x18b0] sm:$0xff]
  %v817 = vld [vmem:[%s1 + $0x18b8] sm:$0xff]
  %v818 = vld [vmem:[%s1 + $0x18c0] sm:$0xff]
  %v819 = vld [vmem:[%s1 + $0x18c8] sm:$0xff]
  %v820 = vld [vmem:[%s1 + $0x18d0] sm:$0xff]
  %v821 = vld [vmem:[%s1 + $0x18d8] sm:$0xff]
  %v822 = vld [vmem:[%s1 + $0x18e0] sm:$0xff]
  %v823 = vld [vmem:[%s1 + $0x18e8] sm:$0xff]
  %v824 = vld [vmem:[%s1 + $0x18f0] sm:$0xff]
  %v825 = vld [vmem:[%s1 + $0x18f8] sm:$0xff]
  %v826 = vld [vmem:[%s1 + $0x1900] sm:$0xff]
  %v827 = vld [vmem:[%s1 + $0x1908] sm:$0xff]
  %v828 = vld [vmem:[%s1 + $0x1910] sm:$0xff]
  %v829 = vld [vmem:[%s1 + $0x1918] sm:$0xff]
  %v830 = vld [vmem:[%s1 + $0x1920] sm:$0xff]
  %v831 = vld [vmem:[%s1 + $0x1928] sm:$0xff]
  %v832 = vld [vmem:[%s1 + $0x1930] sm:$0xff]
  %v833 = vld [vmem:[%s1 + $0x1938] sm:$0xff]
  %v834 = vld [vmem:[%s1 + $0x1940] sm:$0xff]
  %v835 = vld [vmem:[%s1 + $0x1948] sm:$0xff]
  %v836 = vld [vmem:[%s1 + $0x1950] sm:$0xff]
  %v837 = vld [vmem:[%s1 + $0x1958] sm:$0xff]
  %v838 = vld [vmem:[%s1 + $0x1960] sm:$0xff]
  %v839 = vld [vmem:[%s1 + $0x1968] sm:$0xff]
  %v840 = vld [vmem:[%s1 + $0x1970] sm:$0xff]
  %v841 = vld [vmem:[%s1 + $0x1978] sm:$0xff]
  %v842 = vld [vmem:[%s1 + $0x1980] sm:$0xff]
  %v843 = vld [vmem:[%s1 + $0x1988] sm:$0xff]
  %v844 = vld [vmem:[%s1 + $0x1990] sm:$0xff]
  %v845 = vld [vmem:[%s1 + $0x1998] sm:$0xff]
  %v846 = vld [vmem:[%s1 + $0x19a0] sm:$0xff]
  %v847 = vld [vmem:[%s1 + $0x19a8] sm:$0xff]
  %v848 = vld [vmem:[%s1 + $0x19b0] sm:$0xff]
  %v849 = vld [vmem:[%s1 + $0x19b8] sm:$0xff]
  %v850 = vld [vmem:[%s1 + $0x19c0] sm:$0xff]
  %v851 = vld [vmem:[%s1 + $0x19c8] sm:$0xff]
  %v852 = vld [vmem:[%s1 + $0x19d0] sm:$0xff]
  %v853 = vld [vmem:[%s1 + $0x19d8] sm:$0xff]
  %v854 = vld [vmem:[%s1 + $0x19e0] sm:$0xff]
  %v855 = vld [vmem:[%s1 + $0x19e8] sm:$0xff]
  %v856 = vld [vmem:[%s1 + $0x19f0] sm:$0xff]
  %v857 = vld [vmem:[%s1 + $0x19f8] sm:$0xff]
  %v858 = vld [vmem:[%s1 + $0x1a00] sm:$0xff]
  %v859 = vld [vmem:[%s1 + $0x1a08] sm:$0xff]
  %v860 = vld [vmem:[%s1 + $0x1a10] sm:$0xff]
  %v861 = vld [vmem:[%s1 + $0x1a18] sm:$0xff]
  %v862 = vld [vmem:[%s1 + $0x1a20] sm:$0xff]
  %v863 = vld [vmem:[%s1 + $0x1a28] sm:$0xff]
  %v864 = vld [vmem:[%s1 + $0x1a30] sm:$0xff]
  %v865 = vld [vmem:[%s1 + $0x1a38] sm:$0xff]
  %v866 = vld [vmem:[%s1 + $0x1a40] sm:$0xff]
  %v867 = vld [vmem:[%s1 + $0x1a48] sm:$0xff]
  %v868 = vld [vmem:[%s1 + $0x1a50] sm:$0xff]
  %v869 = vld [vmem:[%s1 + $0x1a58] sm:$0xff]
  %v870 = vld [vmem:[%s1 + $0x1a60] sm:$0xff]
  %v871 = vld [vmem:[%s1 + $0x1a68] sm:$0xff]
  %v872 = vld [vmem:[%s1 + $0x1a70] sm:$0xff]
  %v873 = vld [vmem:[%s1 + $0x1a78] sm:$0xff]
  %v874 = vld [vmem:[%s1 + $0x1a80] sm:$0xff]
  %v875 = vld [vmem:[%s1 + $0x1a88] sm:$0xff]
  %v876 = vld [vmem:[%s1 + $0x1a90] sm:$0xff]
  %v877 = vld [vmem:[%s1 + $0x1a98] sm:$0xff]
  %v878 = vld [vmem:[%s1 + $0x1aa0] sm:$0xff]
  %v879 = vld [vmem:[%s1 + $0x1aa8] sm:$0xff]
  %v880 = vld [vmem:[%s1 + $0x1ab0] sm:$0xff]
  %v881 = vld [vmem:[%s1 + $0x1ab8] sm:$0xff]
  %v882 = vld [vmem:[%s1 + $0x1ac0] sm:$0xff]
  %v883 = vld [vmem:[%s1 + $0x1ac8] sm:$0xff]
  %v884 = vld [vmem:[%s1 + $0x1ad0] sm:$0xff]
  %v885 = vld [vmem:[%s1 + $0x1ad8] sm:$0xff]
  %v886 = vld [vmem:[%s1 + $0x1ae0] sm:$0xff]
  %v887 = vld [vmem:[%s1 + $0x1ae8] sm:$0xff]
  %v888 = vld [vmem:[%s1 + $0x1af0] sm:$0xff]
  %v889 = vld [vmem:[%s1 + $0x1af8] sm:$0xff]
  %v890 = vld [vmem:[%s1 + $0x1b00] sm:$0xff]
  %v891 = vld [vmem:[%s1 + $0x1b08] sm:$0xff]
  %v892 = vld [vmem:[%s1 + $0x1b10] sm:$0xff]
  %v893 = vld [vmem:[%s1 + $0x1b18] sm:$0xff]
  %v894 = vld [vmem:[%s1 + $0x1b20] sm:$0xff]
  %v895 = vld [vmem:[%s1 + $0x1b28] sm:$0xff]
  %v896 = vld [vmem:[%s1 + $0x1b30] sm:$0xff]
  %v897 = vld [vmem:[%s1 + $0x1b38] sm:$0xff]
  %v898 = vld [vmem:[%s1 + $0x1b40] sm:$0xff]
  %v899 = vld [vmem:[%s1 + $0x1b48] sm:$0xff]
  %v900 = vld [vmem:[%s1 + $0x1b50] sm:$0xff]
  %v901 = vld [vmem:[%s1 + $0x1b58] sm:$0xff]
  %v902 = vld [vmem:[%s1 + $0x1b60] sm:$0xff]
  %v903 = vld [vmem:[%s1 + $0x1b68] sm:$0xff]
  %v904 = vld [vmem:[%s1 + $0x1b70] sm:$0xff]
  %v905 = vld [vmem:[%s1 + $0x1b78] sm:$0xff]
  %v906 = vld [vmem:[%s1 + $0x1b80] sm:$0xff]
  %v907 = vld [vmem:[%s1 + $0x1b88] sm:$0xff]
  %v908 = vld [vmem:[%s1 + $0x1b90] sm:$0xff]
  %v909 = vld [vmem:[%s1 + $0x1b98] sm:$0xff]
  %v910 = vld [vmem:[%s1 + $0x1ba0] sm:$0xff]
  %v911 = vld [vmem:[%s1 + $0x1ba8] sm:$0xff]
  %v912 = vld [vmem:[%s1 + $0x1bb0] sm:$0xff]
  %v913 = vld [vmem:[%s1 + $0x1bb8] sm:$0xff]
  %v914 = vld [vmem:[%s1 + $0x1bc0] sm:$0xff]
  %v915 = vld [vmem:[%s1 + $0x1bc8] sm:$0xff]
  %v916 = vld [vmem:[%s1 + $0x1bd0] sm:$0xff]
  %v917 = vld [vmem:[%s1 + $0x1bd8] sm:$0xff]
  %v918 = vld [vmem:[%s1 + $0x1be0] sm:$0xff]
  %v919 = vld [vmem:[%s1 + $0x1be8] sm:$0xff]
  %v920 = vld [vmem:[%s1 + $0x1bf0] sm:$0xff]
  %v921 = vld [vmem:[%s1 + $0x1bf8] sm:$0xff]
  %v922 = vld [vmem:[%s1 + $0x1c00] sm:$0xff]
  %v923 = vld [vmem:[%s1 + $0x1c08] sm:$0xff]
  %v924 = vld [vmem:[%s1 + $0x1c10] sm:$0xff]
  %v925 = vld [vmem:[%s1 + $0x1c18] sm:$0xff]
  %v926 = vld [vmem:[%s1 + $0x1c20] sm:$0xff]
  %v927 = vld [vmem:[%s1 + $0x1c28] sm:$0xff]
  %v928 = vld [vmem:[%s1 + $0x1c30] sm:$0xff]
  %v929 = vld [vmem:[%s1 + $0x1c38] sm:$0xff]
  %v930 = vld [vmem:[%s1 + $0x1c40] sm:$0xff]
  %v931 = vld [vmem:[%s1 + $0x1c48] sm:$0xff]
  %v932 = vld [vmem:[%s1 + $0x1c50] sm:$0xff]
  %v933 = vld [vmem:[%s1 + $0x1c58] sm:$0xff]
  %v934 = vld [vmem:[%s1 + $0x1c60] sm:$0xff]
  %v935 = vld [vmem:[%s1 + $0x1c68] sm:$0xff]
  %v936 = vld [vmem:[%s1 + $0x1c70] sm:$0xff]
  %v937 = vld [vmem:[%s1 + $0x1c78] sm:$0xff]
  %v938 = vld [vmem:[%s1 + $0x1c80] sm:$0xff]
  %v939 = vld [vmem:[%s1 + $0x1c88] sm:$0xff]
  %v940 = vld [vmem:[%s1 + $0x1c90] sm:$0xff]
  %v941 = vld [vmem:[%s1 + $0x1c98] sm:$0xff]
  %v942 = vld [vmem:[%s1 + $0x1ca0] sm:$0xff]
  %v943 = vld [vmem:[%s1 + $0x1ca8] sm:$0xff]
  %v944 = vld [vmem:[%s1 + $0x1cb0] sm:$0xff]
  %v945 = vld [vmem:[%s1 + $0x1cb8] sm:$0xff]
  %v946 = vld [vmem:[%s1 + $0x1cc0] sm:$0xff]
  %v947 = vld [vmem:[%s1 + $0x1cc8] sm:$0xff]
  %v948 = vld [vmem:[%s1 + $0x1cd0] sm:$0xff]
  %v949 = vld [vmem:[%s1 + $0x1cd8] sm:$0xff]
  %v950 = vld [vmem:[%s1 + $0x1ce0] sm:$0xff]
  %v951 = vld [vmem:[%s1 + $0x1ce8] sm:$0xff]
  %v952 = vld [vmem:[%s1 + $0x1cf0] sm:$0xff]
  %v953 = vld [vmem:[%s1 + $0x1cf8] sm:$0xff]
  %v954 = vld [vmem:[%s1 + $0x1d00] sm:$0xff]
  %v955 = vld [vmem:[%s1 + $0x1d08] sm:$0xff]
  %v956 = vld [vmem:[%s1 + $0x1d10] sm:$0xff]
  %v957 = vld [vmem:[%s1 + $0x1d18] sm:$0xff]
  %v958 = vld [vmem:[%s1 + $0x1d20] sm:$0xff]
  %v959 = vld [vmem:[%s1 + $0x1d28] sm:$0xff]
  %v960 = vld [vmem:[%s1 + $0x1d30] sm:$0xff]
  %v961 = vld [vmem:[%s1 + $0x1d38] sm:$0xff]
  %v962 = vld [vmem:[%s1 + $0x1d40] sm:$0xff]
  %v963 = vld [vmem:[%s1 + $0x1d48] sm:$0xff]
  %v964 = vld [vmem:[%s1 + $0x1d50] sm:$0xff]
  %v965 = vld [vmem:[%s1 + $0x1d58] sm:$0xff]
  %v966 = vld [vmem:[%s1 + $0x1d60] sm:$0xff]
  %v967 = vld [vmem:[%s1 + $0x1d68] sm:$0xff]
  %v968 = vld [vmem:[%s1 + $0x1d70] sm:$0xff]
  %v969 = vld [vmem:[%s1 + $0x1d78] sm:$0xff]
  %v970 = vld [vmem:[%s1 + $0x1d80] sm:$0xff]
  %v971 = vld [vmem:[%s1 + $0x1d88] sm:$0xff]
  %v972 = vld [vmem:[%s1 + $0x1d90] sm:$0xff]
  %v973 = vld [vmem:[%s1 + $0x1d98] sm:$0xff]
  %v974 = vld [vmem:[%s1 + $0x1da0] sm:$0xff]
  %v975 = vld [vmem:[%s1 + $0x1da8] sm:$0xff]
  %v976 = vld [vmem:[%s1 + $0x1db0] sm:$0xff]
  %v977 = vld [vmem:[%s1 + $0x1db8] sm:$0xff]
  %v978 = vld [vmem:[%s1 + $0x1dc0] sm:$0xff]
  %v979 = vld [vmem:[%s1 + $0x1dc8] sm:$0xff]
  %v980 = vld [vmem:[%s1 + $0x1dd0] sm:$0xff]
  %v981 = vld [vmem:[%s1 + $0x1dd8] sm:$0xff]
  %v982 = vld [vmem:[%s1 + $0x1de0] sm:$0xff]
  %v983 = vld [vmem:[%s1 + $0x1de8] sm:$0xff]
  %v984 = vld [vmem:[%s1 + $0x1df0] sm:$0xff]
  %v985 = vld [vmem:[%s1 + $0x1df8] sm:$0xff]
  %v986 = vld [vmem:[%s1 + $0x1e00] sm:$0xff]
  %v987 = vld [vmem:[%s1 + $0x1e08] sm:$0xff]
  %v988 = vld [vmem:[%s1 + $0x1e10] sm:$0xff]
  %v989 = vld [vmem:[%s1 + $0x1e18] sm:$0xff]
  %v990 = vld [vmem:[%s1 + $0x1e20] sm:$0xff]
  %v991 = vld [vmem:[%s1 + $0x1e28] sm:$0xff]
  %v992 = vld [vmem:[%s1 + $0x1e30] sm:$0xff]
  %v993 = vld [vmem:[%s1 + $0x1e38] sm:$0xff]
  %v994 = vld [vmem:[%s1 + $0x1e40] sm:$0xff]
  %v995 = vld [vmem:[%s1 + $0x1e48] sm:$0xff]
  %v996 = vld [vmem:[%s1 + $0x1e50] sm:$0xff]
  %v997 = vld [vmem:[%s1 + $0x1e58] sm:$0xff]
  %v998 = vld [vmem:[%s1 + $0x1e60] sm:$0xff]
  %v999 = vld [vmem:[%s1 + $0x1e68] sm:$0xff]
  %v1000 = vld [vmem:[%s1 + $0x1e70] sm:$0xff]
  %v1001 = vld [vmem:[%s1 + $0x1e78] sm:$0xff]
  %v1002 = vld [vmem:[%s1 + $0x1e80] sm:$0xff]
  %v1003 = vld [vmem:[%s1 + $0x1e88] sm:$0xff]
  %v1004 = vld [vmem:[%s1 + $0x1e90] sm:$0xff]
  %v1005 = vld [vmem:[%s1 + $0x1e98] sm:$0xff]
  %v1006 = vld [vmem:[%s1 + $0x1ea0] sm:$0xff]
  %v1007 = vld [vmem:[%s1 + $0x1ea8] sm:$0xff]
  %v1008 = vld [vmem:[%s1 + $0x1eb0] sm:$0xff]
  %v1009 = vld [vmem:[%s1 + $0x1eb8] sm:$0xff]
  %v1010 = vld [vmem:[%s1 + $0x1ec0] sm:$0xff]
  %v1011 = vld [vmem:[%s1 + $0x1ec8] sm:$0xff]
  %v1012 = vld [vmem:[%s1 + $0x1ed0] sm:$0xff]
  %v1013 = vld [vmem:[%s1 + $0x1ed8] sm:$0xff]
  %v1014 = vld [vmem:[%s1 + $0x1ee0] sm:$0xff]
  %v1015 = vld [vmem:[%s1 + $0x1ee8] sm:$0xff]
  %v1016 = vld [vmem:[%s1 + $0x1ef0] sm:$0xff]
  %v1017 = vld [vmem:[%s1 + $0x1ef8] sm:$0xff]
  %v1018 = vld [vmem:[%s1 + $0x1f00] sm:$0xff]
  %v1019 = vld [vmem:[%s1 + $0x1f08] sm:$0xff]
  %v1020 = vld [vmem:[%s1 + $0x1f10] sm:$0xff]
  %v1021 = vld [vmem:[%s1 + $0x1f18] sm:$0xff]
  %v1022 = vld [vmem:[%s1 + $0x1f20] sm:$0xff]
  %v1023 = vld [vmem:[%s1 + $0x1f28] sm:$0xff]
  %v1024 = vld [vmem:[%s1 + $0x1f30] sm:$0xff]
  %v1025 = vld [vmem:[%s1 + $0x1f38] sm:$0xff]
  %v1026 = vld [vmem:[%s1 + $0x1f40] sm:$0xff]
  %v1027 = vld [vmem:[%s1 + $0x1f48] sm:$0xff]
  %v1028 = vld [vmem:[%s1 + $0x1f50] sm:$0xff]
  %v1029 = vld [vmem:[%s1 + $0x1f58] sm:$0xff]
  %v1030 = vld [vmem:[%s1 + $0x1f60] sm:$0xff]
  %v1031 = vld [vmem:[%s1 + $0x1f68] sm:$0xff]
  %v1032 = vld [vmem:[%s1 + $0x1f70] sm:$0xff]
  %v1033 = vld [vmem:[%s1 + $0x1f78] sm:$0xff]
  %v1034 = vld [vmem:[%s1 + $0x1f80] sm:$0xff]
  %v1035 = vld [vmem:[%s1 + $0x1f88] sm:$0xff]
  %v1036 = vld [vmem:[%s1 + $0x1f90] sm:$0xff]
  %v1037 = vld [vmem:[%s1 + $0x1f98] sm:$0xff]
  %v1038 = vld [vmem:[%s1 + $0x1fa0] sm:$0xff]
  %v1039 = vld [vmem:[%s1 + $0x1fa8] sm:$0xff]
  %v1040 = vld [vmem:[%s1 + $0x1fb0] sm:$0xff]
  %v1041 = vld [vmem:[%s1 + $0x1fb8] sm:$0xff]
  %v1042 = vld [vmem:[%s1 + $0x1fc0] sm:$0xff]
  %v1043 = vld [vmem:[%s1 + $0x1fc8] sm:$0xff]
  %v1044 = vld [vmem:[%s1 + $0x1fd0] sm:$0xff]
  %v1045 = vld [vmem:[%s1 + $0x1fd8] sm:$0xff]
  %v1046 = vld [vmem:[%s1 + $0x1fe0] sm:$0xff]
  %v1047 = vld [vmem:[%s1 + $0x1fe8] sm:$0xff]
  %v1048 = vld [vmem:[%s1 + $0x1ff0] sm:$0xff]
  %v1049 = vld [vmem:[%s1 + $0x1ff8] sm:$0xff]
  %v1050 = vld [vmem:[%s1 + $0x2000] sm:$0xff]
  %v1051 = vld [vmem:[%s1 + $0x2008] sm:$0xff]
  %v1052 = vld [vmem:[%s1 + $0x2010] sm:$0xff]
  %v1053 = vld [vmem:[%s1 + $0x2018] sm:$0xff]
  %v1063 = vcombine.high %v17, %v17
  %v1065 = vunpack.c.l.s4 1983009808
  %v1066 = vunpack.c.0.s8 %v1065
  %v1067 = vlaneseq
  %v1068 = vshrl.u32 %v1067, 7
  %v1069 = vsub.s32 %v1066, %v1068
  %v1070 = vrot.slane %v17, %v1069
  %v1072 = vunpack.c.l.s4 1983009808
  %v1073 = vunpack.c.0.s8 %v1072
  %v1074 = vlaneseq
  %v1075 = vshrl.u32 %v1074, 7
  %v1076 = vsub.s32 %v1073, %v1075
  %v1077 = vrot.slane %v1063, %v1076
  %v1078 = vcombine.high %v1070, %v1070
  %v1079 = vcombine.high %v1077, %v1077
  %v1080 = vcombine.high %v18, %v18
  %v1082 = vunpack.c.l.s4 1983009808
  %v1083 = vunpack.c.0.s8 %v1082
  %v1084 = vlaneseq
  %v1085 = vshrl.u32 %v1084, 7
  %v1086 = vsub.s32 %v1083, %v1085
  %v1087 = vrot.slane %v18, %v1086
  %v1089 = vunpack.c.l.s4 1983009808
  %v1090 = vunpack.c.0.s8 %v1089
  %v1091 = vlaneseq
  %v1092 = vshrl.u32 %v1091, 7
  %v1093 = vsub.s32 %v1090, %v1092
  %v1094 = vrot.slane %v1080, %v1093
  %v1095 = vcombine.high %v1087, %v1087
  %v1096 = vcombine.high %v1094, %v1094
  %v1097 = vcombine.high %v19, %v19
  %v1099 = vunpack.c.l.s4 1983009808
  %v1100 = vunpack.c.0.s8 %v1099
  %v1101 = vlaneseq
  %v1102 = vshrl.u32 %v1101, 7
  %v1103 = vsub.s32 %v1100, %v1102
  %v1104 = vrot.slane %v19, %v1103
  %v1106 = vunpack.c.l.s4 1983009808
  %v1107 = vunpack.c.0.s8 %v1106
  %v1108 = vlaneseq
  %v1109 = vshrl.u32 %v1108, 7
  %v1110 = vsub.s32 %v1107, %v1109
  %v1111 = vrot.slane %v1097, %v1110
  %v1112 = vcombine.high %v1104, %v1104
  %v1113 = vcombine.high %v1111, %v1111
  %v1114 = vcombine.high %v20, %v20
  %v1116 = vunpack.c.l.s4 1983009808
  %v1117 = vunpack.c.0.s8 %v1116
  %v1118 = vlaneseq
  %v1119 = vshrl.u32 %v1118, 7
  %v1120 = vsub.s32 %v1117, %v1119
  %v1121 = vrot.slane %v20, %v1120
  %v1123 = vunpack.c.l.s4 1983009808
  %v1124 = vunpack.c.0.s8 %v1123
  %v1125 = vlaneseq
  %v1126 = vshrl.u32 %v1125, 7
  %v1127 = vsub.s32 %v1124, %v1126
  %v1128 = vrot.slane %v1114, %v1127
  %v1129 = vcombine.high %v1121, %v1121
  %v1130 = vcombine.high %v1128, %v1128
  %v1131 = vcombine.high %v21, %v21
  %v1133 = vunpack.c.l.s4 1983009808
  %v1134 = vunpack.c.0.s8 %v1133
  %v1135 = vlaneseq
  %v1136 = vshrl.u32 %v1135, 7
  %v1137 = vsub.s32 %v1134, %v1136
  %v1138 = vrot.slane %v21, %v1137
  %v1140 = vunpack.c.l.s4 1983009808
  %v1141 = vunpack.c.0.s8 %v1140
  %v1142 = vlaneseq
  %v1143 = vshrl.u32 %v1142, 7
  %v1144 = vsub.s32 %v1141, %v1143
  %v1145 = vrot.slane %v1131, %v1144
  %v1146 = vcombine.high %v1138, %v1138
  %v1147 = vcombine.high %v1145, %v1145
  %v1148 = vcombine.high %v22, %v22
  %v1150 = vunpack.c.l.s4 1983009808
  %v1151 = vunpack.c.0.s8 %v1150
  %v1152 = vlaneseq
  %v1153 = vshrl.u32 %v1152, 7
  %v1154 = vsub.s32 %v1151, %v1153
  %v1155 = vrot.slane %v22, %v1154
  %v1157 = vunpack.c.l.s4 1983009808
  %v1158 = vunpack.c.0.s8 %v1157
  %v1159 = vlaneseq
  %v1160 = vshrl.u32 %v1159, 7
  %v1161 = vsub.s32 %v1158, %v1160
  %v1162 = vrot.slane %v1148, %v1161
  %v1163 = vcombine.high %v1155, %v1155
  %v1164 = vcombine.high %v1162, %v1162
  %v1165 = vcombine.high %v23, %v23
  %v1167 = vunpack.c.l.s4 1983009808
  %v1168 = vunpack.c.0.s8 %v1167
  %v1169 = vlaneseq
  %v1170 = vshrl.u32 %v1169, 7
  %v1171 = vsub.s32 %v1168, %v1170
  %v1172 = vrot.slane %v23, %v1171
  %v1174 = vunpack.c.l.s4 1983009808
  %v1175 = vunpack.c.0.s8 %v1174
  %v1176 = vlaneseq
  %v1177 = vshrl.u32 %v1176, 7
  %v1178 = vsub.s32 %v1175, %v1177
  %v1179 = vrot.slane %v1165, %v1178
  %v1180 = vcombine.high %v1172, %v1172
  %v1181 = vcombine.high %v1179, %v1179
  %v1182 = vcombine.high %v24, %v24
  %v1184 = vunpack.c.l.s4 1983009808
  %v1185 = vunpack.c.0.s8 %v1184
  %v1186 = vlaneseq
  %v1187 = vshrl.u32 %v1186, 7
  %v1188 = vsub.s32 %v1185, %v1187
  %v1189 = vrot.slane %v24, %v1188
  %v1191 = vunpack.c.l.s4 1983009808
  %v1192 = vunpack.c.0.s8 %v1191
  %v1193 = vlaneseq
  %v1194 = vshrl.u32 %v1193, 7
  %v1195 = vsub.s32 %v1192, %v1194
  %v1196 = vrot.slane %v1182, %v1195
  %v1197 = vcombine.high %v1189, %v1189
  %v1198 = vcombine.high %v1196, %v1196
  %v1200 = vunpack.c.l.s4 1983009808
  %v1201 = vunpack.c.0.s8 %v1200
  %v1202 = vlaneseq
  %v1203 = vshrl.u32 %v1202, 7
  %v1204 = vsub.s32 %v1201, %v1203
  %v1205 = vrot.slane %v25, %v1204
  %vm1238 = vcmask 130048
  %v1239 = vsel %vm1238, %v1205, 0
  %1241 = vmatprep.subr.mxu0 %v27
  %1242 = vmatpush1.msra.mxu0 %v26
  %1243 = vmatprep.subr.mxu0 %v29
  %1244 = vmatpush1.msra.mxu0 %v28
  %1245 = vmatprep.subr.mxu0 %v31
  %1246 = vmatpush1.msra.mxu0 %v30
  %1247 = vmatprep.subr.mxu0 %v33
  %1248 = vmatpush1.msra.mxu0 %v32
  %1249 = vmatprep.subr.mxu0 %v35
  %1250 = vmatpush1.msra.mxu0 %v34
  %1251 = vmatprep.subr.mxu0 %v37
  %1252 = vmatpush1.msra.mxu0 %v36
  %1253 = vmatprep.subr.mxu0 %v39
  %1254 = vmatpush1.msra.mxu0 %v38
  %1255 = vmatprep.subr.mxu0 %v41
  %1256 = vmatpush1.msra.mxu0 %v40
  %1257 = vmatprep.subr.mxu0 %v43
  %1258 = vmatpush1.msra.mxu0 %v42
  %1259 = vmatprep.subr.mxu0 %v45
  %1260 = vmatpush1.msra.mxu0 %v44
  %1261 = vmatprep.subr.mxu0 %v47
  %1262 = vmatpush1.msra.mxu0 %v46
  %1263 = vmatprep.subr.mxu0 %v49
  %1264 = vmatpush1.msra.mxu0 %v48
  %1265 = vmatprep.subr.mxu0 %v51
  %1266 = vmatpush1.msra.mxu0 %v50
  %1267 = vmatprep.subr.mxu0 %v53
  %1268 = vmatpush1.msra.mxu0 %v52
  %1269 = vmatprep.subr.mxu0 %v55
  %1270 = vmatpush1.msra.mxu0 %v54
  %1271 = vmatprep.subr.mxu0 %v57
  %1272 = vmatpush1.msra.mxu0 %v56
  %1273 = vmatprep.subr.mxu0 %v59
  %1274 = vmatpush1.msra.mxu0 %v58
  %1275 = vmatprep.subr.mxu0 %v61
  %1276 = vmatpush1.msra.mxu0 %v60
  %1277 = vmatprep.subr.mxu0 %v63
  %1278 = vmatpush1.msra.mxu0 %v62
  %1279 = vmatprep.subr.mxu0 %v65
  %1280 = vmatpush1.msra.mxu0 %v64
  %1281 = vmatprep.subr.mxu0 %v67
  %1282 = vmatpush1.msra.mxu0 %v66
  %1283 = vmatprep.subr.mxu0 %v69
  %1284 = vmatpush1.msra.mxu0 %v68
  %1285 = vmatprep.subr.mxu0 %v71
  %1286 = vmatpush1.msra.mxu0 %v70
  %1287 = vmatprep.subr.mxu0 %v73
  %1288 = vmatpush1.msra.mxu0 %v72
  %1289 = vmatprep.subr.mxu0 %v75
  %1290 = vmatpush1.msra.mxu0 %v74
  %1291 = vmatprep.subr.mxu0 %v77
  %1292 = vmatpush1.msra.mxu0 %v76
  %1293 = vmatprep.subr.mxu0 %v79
  %1294 = vmatpush1.msra.mxu0 %v78
  %1295 = vmatprep.subr.mxu0 %v81
  %1296 = vmatpush1.msra.mxu0 %v80
  %1297 = vmatprep.subr.mxu0 %v83
  %1298 = vmatpush1.msra.mxu0 %v82
  %1299 = vmatprep.subr.mxu0 %v85
  %1300 = vmatpush1.msra.mxu0 %v84
  %1301 = vmatprep.subr.mxu0 %v87
  %1302 = vmatpush1.msra.mxu0 %v86
  %1303 = vmatprep.subr.mxu0 %v89
  %1304 = vmatpush1.msra.mxu0 %v88
  %1305 = vmatprep.mubr.f32.mxu0 %v1078
  %1306 = vmatmul.mubr.f32.gmra.mrb[0].mxu0 %v1070
  %v1307 = vpop.f32.mrb[0].mxu0
  %v1308 = vadd.f32 0.0, %v1307
  %v1309 = vpop.f32.mrb[0].mxu0
  %v1310 = vadd.f32 0.0, %v1309
  %1311 = vdwg.mxu0
  %1312 = vmatprep.subr.mxu0 %v91
  %1313 = vmatpush1.msra.mxu0 %v90
  %1314 = vmatprep.subr.mxu0 %v93
  %1315 = vmatpush1.msra.mxu0 %v92
  %1316 = vmatprep.subr.mxu0 %v95
  %1317 = vmatpush1.msra.mxu0 %v94
  %1318 = vmatprep.subr.mxu0 %v97
  %1319 = vmatpush1.msra.mxu0 %v96
  %1320 = vmatprep.subr.mxu0 %v99
  %1321 = vmatpush1.msra.mxu0 %v98
  %1322 = vmatprep.subr.mxu0 %v101
  %1323 = vmatpush1.msra.mxu0 %v100
  %1324 = vmatprep.subr.mxu0 %v103
  %1325 = vmatpush1.msra.mxu0 %v102
  %1326 = vmatprep.subr.mxu0 %v105
  %1327 = vmatpush1.msra.mxu0 %v104
  %1328 = vmatprep.subr.mxu0 %v107
  %1329 = vmatpush1.msra.mxu0 %v106
  %1330 = vmatprep.subr.mxu0 %v109
  %1331 = vmatpush1.msra.mxu0 %v108
  %1332 = vmatprep.subr.mxu0 %v111
  %1333 = vmatpush1.msra.mxu0 %v110
  %1334 = vmatprep.subr.mxu0 %v113
  %1335 = vmatpush1.msra.mxu0 %v112
  %1336 = vmatprep.subr.mxu0 %v115
  %1337 = vmatpush1.msra.mxu0 %v114
  %1338 = vmatprep.subr.mxu0 %v117
  %1339 = vmatpush1.msra.mxu0 %v116
  %1340 = vmatprep.subr.mxu0 %v119
  %1341 = vmatpush1.msra.mxu0 %v118
  %1342 = vmatprep.subr.mxu0 %v121
  %1343 = vmatpush1.msra.mxu0 %v120
  %1344 = vmatprep.subr.mxu0 %v123
  %1345 = vmatpush1.msra.mxu0 %v122
  %1346 = vmatprep.subr.mxu0 %v125
  %1347 = vmatpush1.msra.mxu0 %v124
  %1348 = vmatprep.subr.mxu0 %v127
  %1349 = vmatpush1.msra.mxu0 %v126
  %1350 = vmatprep.subr.mxu0 %v129
  %1351 = vmatpush1.msra.mxu0 %v128
  %1352 = vmatprep.subr.mxu0 %v131
  %1353 = vmatpush1.msra.mxu0 %v130
  %1354 = vmatprep.subr.mxu0 %v133
  %1355 = vmatpush1.msra.mxu0 %v132
  %1356 = vmatprep.subr.mxu0 %v135
  %1357 = vmatpush1.msra.mxu0 %v134
  %1358 = vmatprep.subr.mxu0 %v137
  %1359 = vmatpush1.msra.mxu0 %v136
  %1360 = vmatprep.subr.mxu0 %v139
  %1361 = vmatpush1.msra.mxu0 %v138
  %1362 = vmatprep.subr.mxu0 %v141
  %1363 = vmatpush1.msra.mxu0 %v140
  %1364 = vmatprep.subr.mxu0 %v143
  %1365 = vmatpush1.msra.mxu0 %v142
  %1366 = vmatprep.subr.mxu0 %v145
  %1367 = vmatpush1.msra.mxu0 %v144
  %1368 = vmatprep.subr.mxu0 %v147
  %1369 = vmatpush1.msra.mxu0 %v146
  %1370 = vmatprep.subr.mxu0 %v149
  %1371 = vmatpush1.msra.mxu0 %v148
  %1372 = vmatprep.subr.mxu0 %v151
  %1373 = vmatpush1.msra.mxu0 %v150
  %1374 = vmatprep.subr.mxu0 %v153
  %1375 = vmatpush1.msra.mxu0 %v152
  %1376 = vmatprep.mubr.f32.mxu0 %v1079
  %1377 = vmatmul.mubr.f32.gmra.mrb[0].mxu0 %v1077
  %v1378 = vpop.f32.mrb[0].mxu0
  %v1379 = vadd.f32 %v1308, %v1378
  %v1380 = vpop.f32.mrb[0].mxu0
  %v1381 = vadd.f32 %v1310, %v1380
  %1382 = vdwg.mxu0
  %1383 = vmatprep.subr.mxu0 %v155
  %1384 = vmatpush1.msra.mxu0 %v154
  %1385 = vmatprep.subr.mxu0 %v157
  %1386 = vmatpush1.msra.mxu0 %v156
  %1387 = vmatprep.subr.mxu0 %v159
  %1388 = vmatpush1.msra.mxu0 %v158
  %1389 = vmatprep.subr.mxu0 %v161
  %1390 = vmatpush1.msra.mxu0 %v160
  %1391 = vmatprep.subr.mxu0 %v163
  %1392 = vmatpush1.msra.mxu0 %v162
  %1393 = vmatprep.subr.mxu0 %v165
  %1394 = vmatpush1.msra.mxu0 %v164
  %1395 = vmatprep.subr.mxu0 %v167
  %1396 = vmatpush1.msra.mxu0 %v166
  %1397 = vmatprep.subr.mxu0 %v169
  %1398 = vmatpush1.msra.mxu0 %v168
  %1399 = vmatprep.subr.mxu0 %v171
  %1400 = vmatpush1.msra.mxu0 %v170
  %1401 = vmatprep.subr.mxu0 %v173
  %1402 = vmatpush1.msra.mxu0 %v172
  %1403 = vmatprep.subr.mxu0 %v175
  %1404 = vmatpush1.msra.mxu0 %v174
  %1405 = vmatprep.subr.mxu0 %v177
  %1406 = vmatpush1.msra.mxu0 %v176
  %1407 = vmatprep.subr.mxu0 %v179
  %1408 = vmatpush1.msra.mxu0 %v178
  %1409 = vmatprep.subr.mxu0 %v181
  %1410 = vmatpush1.msra.mxu0 %v180
  %1411 = vmatprep.subr.mxu0 %v183
  %1412 = vmatpush1.msra.mxu0 %v182
  %1413 = vmatprep.subr.mxu0 %v185
  %1414 = vmatpush1.msra.mxu0 %v184
  %1415 = vmatprep.subr.mxu0 %v187
  %1416 = vmatpush1.msra.mxu0 %v186
  %1417 = vmatprep.subr.mxu0 %v189
  %1418 = vmatpush1.msra.mxu0 %v188
  %1419 = vmatprep.subr.mxu0 %v191
  %1420 = vmatpush1.msra.mxu0 %v190
  %1421 = vmatprep.subr.mxu0 %v193
  %1422 = vmatpush1.msra.mxu0 %v192
  %1423 = vmatprep.subr.mxu0 %v195
  %1424 = vmatpush1.msra.mxu0 %v194
  %1425 = vmatprep.subr.mxu0 %v197
  %1426 = vmatpush1.msra.mxu0 %v196
  %1427 = vmatprep.subr.mxu0 %v199
  %1428 = vmatpush1.msra.mxu0 %v198
  %1429 = vmatprep.subr.mxu0 %v201
  %1430 = vmatpush1.msra.mxu0 %v200
  %1431 = vmatprep.subr.mxu0 %v203
  %1432 = vmatpush1.msra.mxu0 %v202
  %1433 = vmatprep.subr.mxu0 %v205
  %1434 = vmatpush1.msra.mxu0 %v204
  %1435 = vmatprep.subr.mxu0 %v207
  %1436 = vmatpush1.msra.mxu0 %v206
  %1437 = vmatprep.subr.mxu0 %v209
  %1438 = vmatpush1.msra.mxu0 %v208
  %1439 = vmatprep.subr.mxu0 %v211
  %1440 = vmatpush1.msra.mxu0 %v210
  %1441 = vmatprep.subr.mxu0 %v213
  %1442 = vmatpush1.msra.mxu0 %v212
  %1443 = vmatprep.subr.mxu0 %v215
  %1444 = vmatpush1.msra.mxu0 %v214
  %1445 = vmatprep.subr.mxu0 %v217
  %1446 = vmatpush1.msra.mxu0 %v216
  %1447 = vmatprep.mubr.f32.mxu0 %v1095
  %1448 = vmatmul.mubr.f32.gmra.mrb[0].mxu0 %v1087
  %v1449 = vpop.f32.mrb[0].mxu0
  %v1450 = vadd.f32 %v1379, %v1449
  %v1451 = vpop.f32.mrb[0].mxu0
  %v1452 = vadd.f32 %v1381, %v1451
  %1453 = vdwg.mxu0
  %1454 = vmatprep.subr.mxu0 %v219
  %1455 = vmatpush1.msra.mxu0 %v218
  %1456 = vmatprep.subr.mxu0 %v221
  %1457 = vmatpush1.msra.mxu0 %v220
  %1458 = vmatprep.subr.mxu0 %v223
  %1459 = vmatpush1.msra.mxu0 %v222
  %1460 = vmatprep.subr.mxu0 %v225
  %1461 = vmatpush1.msra.mxu0 %v224
  %1462 = vmatprep.subr.mxu0 %v227
  %1463 = vmatpush1.msra.mxu0 %v226
  %1464 = vmatprep.subr.mxu0 %v229
  %1465 = vmatpush1.msra.mxu0 %v228
  %1466 = vmatprep.subr.mxu0 %v231
  %1467 = vmatpush1.msra.mxu0 %v230
  %1468 = vmatprep.subr.mxu0 %v233
  %1469 = vmatpush1.msra.mxu0 %v232
  %1470 = vmatprep.subr.mxu0 %v235
  %1471 = vmatpush1.msra.mxu0 %v234
  %1472 = vmatprep.subr.mxu0 %v237
  %1473 = vmatpush1.msra.mxu0 %v236
  %1474 = vmatprep.subr.mxu0 %v239
  %1475 = vmatpush1.msra.mxu0 %v238
  %1476 = vmatprep.subr.mxu0 %v241
  %1477 = vmatpush1.msra.mxu0 %v240
  %1478 = vmatprep.subr.mxu0 %v243
  %1479 = vmatpush1.msra.mxu0 %v242
  %1480 = vmatprep.subr.mxu0 %v245
  %1481 = vmatpush1.msra.mxu0 %v244
  %1482 = vmatprep.subr.mxu0 %v247
  %1483 = vmatpush1.msra.mxu0 %v246
  %1484 = vmatprep.subr.mxu0 %v249
  %1485 = vmatpush1.msra.mxu0 %v248
  %1486 = vmatprep.subr.mxu0 %v251
  %1487 = vmatpush1.msra.mxu0 %v250
  %1488 = vmatprep.subr.mxu0 %v253
  %1489 = vmatpush1.msra.mxu0 %v252
  %1490 = vmatprep.subr.mxu0 %v255
  %1491 = vmatpush1.msra.mxu0 %v254
  %1492 = vmatprep.subr.mxu0 %v257
  %1493 = vmatpush1.msra.mxu0 %v256
  %1494 = vmatprep.subr.mxu0 %v259
  %1495 = vmatpush1.msra.mxu0 %v258
  %1496 = vmatprep.subr.mxu0 %v261
  %1497 = vmatpush1.msra.mxu0 %v260
  %1498 = vmatprep.subr.mxu0 %v263
  %1499 = vmatpush1.msra.mxu0 %v262
  %1500 = vmatprep.subr.mxu0 %v265
  %1501 = vmatpush1.msra.mxu0 %v264
  %1502 = vmatprep.subr.mxu0 %v267
  %1503 = vmatpush1.msra.mxu0 %v266
  %1504 = vmatprep.subr.mxu0 %v269
  %1505 = vmatpush1.msra.mxu0 %v268
  %1506 = vmatprep.subr.mxu0 %v271
  %1507 = vmatpush1.msra.mxu0 %v270
  %1508 = vmatprep.subr.mxu0 %v273
  %1509 = vmatpush1.msra.mxu0 %v272
  %1510 = vmatprep.subr.mxu0 %v275
  %1511 = vmatpush1.msra.mxu0 %v274
  %1512 = vmatprep.subr.mxu0 %v277
  %1513 = vmatpush1.msra.mxu0 %v276
  %1514 = vmatprep.subr.mxu0 %v279
  %1515 = vmatpush1.msra.mxu0 %v278
  %1516 = vmatprep.subr.mxu0 %v281
  %1517 = vmatpush1.msra.mxu0 %v280
  %1518 = vmatprep.mubr.f32.mxu0 %v1096
  %1519 = vmatmul.mubr.f32.gmra.mrb[0].mxu0 %v1094
  %v1520 = vpop.f32.mrb[0].mxu0
  %v1521 = vadd.f32 %v1450, %v1520
  %v1522 = vpop.f32.mrb[0].mxu0
  %v1523 = vadd.f32 %v1452, %v1522
  %1524 = vdwg.mxu0
  %1525 = vmatprep.subr.mxu0 %v283
  %1526 = vmatpush1.msra.mxu0 %v282
  %1527 = vmatprep.subr.mxu0 %v285
  %1528 = vmatpush1.msra.mxu0 %v284
  %1529 = vmatprep.subr.mxu0 %v287
  %1530 = vmatpush1.msra.mxu0 %v286
  %1531 = vmatprep.subr.mxu0 %v289
  %1532 = vmatpush1.msra.mxu0 %v288
  %1533 = vmatprep.subr.mxu0 %v291
  %1534 = vmatpush1.msra.mxu0 %v290
  %1535 = vmatprep.subr.mxu0 %v293
  %1536 = vmatpush1.msra.mxu0 %v292
  %1537 = vmatprep.subr.mxu0 %v295
  %1538 = vmatpush1.msra.mxu0 %v294
  %1539 = vmatprep.subr.mxu0 %v297
  %1540 = vmatpush1.msra.mxu0 %v296
  %1541 = vmatprep.subr.mxu0 %v299
  %1542 = vmatpush1.msra.mxu0 %v298
  %1543 = vmatprep.subr.mxu0 %v301
  %1544 = vmatpush1.msra.mxu0 %v300
  %1545 = vmatprep.subr.mxu0 %v303
  %1546 = vmatpush1.msra.mxu0 %v302
  %1547 = vmatprep.subr.mxu0 %v305
  %1548 = vmatpush1.msra.mxu0 %v304
  %1549 = vmatprep.subr.mxu0 %v307
  %1550 = vmatpush1.msra.mxu0 %v306
  %1551 = vmatprep.subr.mxu0 %v309
  %1552 = vmatpush1.msra.mxu0 %v308
  %1553 = vmatprep.subr.mxu0 %v311
  %1554 = vmatpush1.msra.mxu0 %v310
  %1555 = vmatprep.subr.mxu0 %v313
  %1556 = vmatpush1.msra.mxu0 %v312
  %1557 = vmatprep.subr.mxu0 %v315
  %1558 = vmatpush1.msra.mxu0 %v314
  %1559 = vmatprep.subr.mxu0 %v317
  %1560 = vmatpush1.msra.mxu0 %v316
  %1561 = vmatprep.subr.mxu0 %v319
  %1562 = vmatpush1.msra.mxu0 %v318
  %1563 = vmatprep.subr.mxu0 %v321
  %1564 = vmatpush1.msra.mxu0 %v320
  %1565 = vmatprep.subr.mxu0 %v323
  %1566 = vmatpush1.msra.mxu0 %v322
  %1567 = vmatprep.subr.mxu0 %v325
  %1568 = vmatpush1.msra.mxu0 %v324
  %1569 = vmatprep.subr.mxu0 %v327
  %1570 = vmatpush1.msra.mxu0 %v326
  %1571 = vmatprep.subr.mxu0 %v329
  %1572 = vmatpush1.msra.mxu0 %v328
  %1573 = vmatprep.subr.mxu0 %v331
  %1574 = vmatpush1.msra.mxu0 %v330
  %1575 = vmatprep.subr.mxu0 %v333
  %1576 = vmatpush1.msra.mxu0 %v332
  %1577 = vmatprep.subr.mxu0 %v335
  %1578 = vmatpush1.msra.mxu0 %v334
  %1579 = vmatprep.subr.mxu0 %v337
  %1580 = vmatpush1.msra.mxu0 %v336
  %1581 = vmatprep.subr.mxu0 %v339
  %1582 = vmatpush1.msra.mxu0 %v338
  %1583 = vmatprep.subr.mxu0 %v341
  %1584 = vmatpush1.msra.mxu0 %v340
  %1585 = vmatprep.subr.mxu0 %v343
  %1586 = vmatpush1.msra.mxu0 %v342
  %1587 = vmatprep.subr.mxu0 %v345
  %1588 = vmatpush1.msra.mxu0 %v344
  %1589 = vmatprep.mubr.f32.mxu0 %v1112
  %1590 = vmatmul.mubr.f32.gmra.mrb[0].mxu0 %v1104
  %v1591 = vpop.f32.mrb[0].mxu0
  %v1592 = vadd.f32 %v1521, %v1591
  %v1593 = vpop.f32.mrb[0].mxu0
  %v1594 = vadd.f32 %v1523, %v1593
  %1595 = vdwg.mxu0
  %1596 = vmatprep.subr.mxu0 %v347
  %1597 = vmatpush1.msra.mxu0 %v346
  %1598 = vmatprep.subr.mxu0 %v349
  %1599 = vmatpush1.msra.mxu0 %v348
  %1600 = vmatprep.subr.mxu0 %v351
  %1601 = vmatpush1.msra.mxu0 %v350
  %1602 = vmatprep.subr.mxu0 %v353
  %1603 = vmatpush1.msra.mxu0 %v352
  %1604 = vmatprep.subr.mxu0 %v355
  %1605 = vmatpush1.msra.mxu0 %v354
  %1606 = vmatprep.subr.mxu0 %v357
  %1607 = vmatpush1.msra.mxu0 %v356
  %1608 = vmatprep.subr.mxu0 %v359
  %1609 = vmatpush1.msra.mxu0 %v358
  %1610 = vmatprep.subr.mxu0 %v361
  %1611 = vmatpush1.msra.mxu0 %v360
  %1612 = vmatprep.subr.mxu0 %v363
  %1613 = vmatpush1.msra.mxu0 %v362
  %1614 = vmatprep.subr.mxu0 %v365
  %1615 = vmatpush1.msra.mxu0 %v364
  %1616 = vmatprep.subr.mxu0 %v367
  %1617 = vmatpush1.msra.mxu0 %v366
  %1618 = vmatprep.subr.mxu0 %v369
  %1619 = vmatpush1.msra.mxu0 %v368
  %1620 = vmatprep.subr.mxu0 %v371
  %1621 = vmatpush1.msra.mxu0 %v370
  %1622 = vmatprep.subr.mxu0 %v373
  %1623 = vmatpush1.msra.mxu0 %v372
  %1624 = vmatprep.subr.mxu0 %v375
  %1625 = vmatpush1.msra.mxu0 %v374
  %1626 = vmatprep.subr.mxu0 %v377
  %1627 = vmatpush1.msra.mxu0 %v376
  %1628 = vmatprep.subr.mxu0 %v379
  %1629 = vmatpush1.msra.mxu0 %v378
  %1630 = vmatprep.subr.mxu0 %v381
  %1631 = vmatpush1.msra.mxu0 %v380
  %1632 = vmatprep.subr.mxu0 %v383
  %1633 = vmatpush1.msra.mxu0 %v382
  %1634 = vmatprep.subr.mxu0 %v385
  %1635 = vmatpush1.msra.mxu0 %v384
  %1636 = vmatprep.subr.mxu0 %v387
  %1637 = vmatpush1.msra.mxu0 %v386
  %1638 = vmatprep.subr.mxu0 %v389
  %1639 = vmatpush1.msra.mxu0 %v388
  %1640 = vmatprep.subr.mxu0 %v391
  %1641 = vmatpush1.msra.mxu0 %v390
  %1642 = vmatprep.subr.mxu0 %v393
  %1643 = vmatpush1.msra.mxu0 %v392
  %1644 = vmatprep.subr.mxu0 %v395
  %1645 = vmatpush1.msra.mxu0 %v394
  %1646 = vmatprep.subr.mxu0 %v397
  %1647 = vmatpush1.msra.mxu0 %v396
  %1648 = vmatprep.subr.mxu0 %v399
  %1649 = vmatpush1.msra.mxu0 %v398
  %1650 = vmatprep.subr.mxu0 %v401
  %1651 = vmatpush1.msra.mxu0 %v400
  %1652 = vmatprep.subr.mxu0 %v403
  %1653 = vmatpush1.msra.mxu0 %v402
  %1654 = vmatprep.subr.mxu0 %v405
  %1655 = vmatpush1.msra.mxu0 %v404
  %1656 = vmatprep.subr.mxu0 %v407
  %1657 = vmatpush1.msra.mxu0 %v406
  %1658 = vmatprep.subr.mxu0 %v409
  %1659 = vmatpush1.msra.mxu0 %v408
  %1660 = vmatprep.mubr.f32.mxu0 %v1113
  %1661 = vmatmul.mubr.f32.gmra.mrb[0].mxu0 %v1111
  %v1662 = vpop.f32.mrb[0].mxu0
  %v1663 = vadd.f32 %v1592, %v1662
  %v1664 = vpop.f32.mrb[0].mxu0
  %v1665 = vadd.f32 %v1594, %v1664
  %1666 = vdwg.mxu0
  %1667 = vmatprep.subr.mxu0 %v411
  %1668 = vmatpush1.msra.mxu0 %v410
  %1669 = vmatprep.subr.mxu0 %v413
  %1670 = vmatpush1.msra.mxu0 %v412
  %1671 = vmatprep.subr.mxu0 %v415
  %1672 = vmatpush1.msra.mxu0 %v414
  %1673 = vmatprep.subr.mxu0 %v417
  %1674 = vmatpush1.msra.mxu0 %v416
  %1675 = vmatprep.subr.mxu0 %v419
  %1676 = vmatpush1.msra.mxu0 %v418
  %1677 = vmatprep.subr.mxu0 %v421
  %1678 = vmatpush1.msra.mxu0 %v420
  %1679 = vmatprep.subr.mxu0 %v423
  %1680 = vmatpush1.msra.mxu0 %v422
  %1681 = vmatprep.subr.mxu0 %v425
  %1682 = vmatpush1.msra.mxu0 %v424
  %1683 = vmatprep.subr.mxu0 %v427
  %1684 = vmatpush1.msra.mxu0 %v426
  %1685 = vmatprep.subr.mxu0 %v429
  %1686 = vmatpush1.msra.mxu0 %v428
  %1687 = vmatprep.subr.mxu0 %v431
  %1688 = vmatpush1.msra.mxu0 %v430
  %1689 = vmatprep.subr.mxu0 %v433
  %1690 = vmatpush1.msra.mxu0 %v432
  %1691 = vmatprep.subr.mxu0 %v435
  %1692 = vmatpush1.msra.mxu0 %v434
  %1693 = vmatprep.subr.mxu0 %v437
  %1694 = vmatpush1.msra.mxu0 %v436
  %1695 = vmatprep.subr.mxu0 %v439
  %1696 = vmatpush1.msra.mxu0 %v438
  %1697 = vmatprep.subr.mxu0 %v441
  %1698 = vmatpush1.msra.mxu0 %v440
  %1699 = vmatprep.subr.mxu0 %v443
  %1700 = vmatpush1.msra.mxu0 %v442
  %1701 = vmatprep.subr.mxu0 %v445
  %1702 = vmatpush1.msra.mxu0 %v444
  %1703 = vmatprep.subr.mxu0 %v447
  %1704 = vmatpush1.msra.mxu0 %v446
  %1705 = vmatprep.subr.mxu0 %v449
  %1706 = vmatpush1.msra.mxu0 %v448
  %1707 = vmatprep.subr.mxu0 %v451
  %1708 = vmatpush1.msra.mxu0 %v450
  %1709 = vmatprep.subr.mxu0 %v453
  %1710 = vmatpush1.msra.mxu0 %v452
  %1711 = vmatprep.subr.mxu0 %v455
  %1712 = vmatpush1.msra.mxu0 %v454
  %1713 = vmatprep.subr.mxu0 %v457
  %1714 = vmatpush1.msra.mxu0 %v456
  %1715 = vmatprep.subr.mxu0 %v459
  %1716 = vmatpush1.msra.mxu0 %v458
  %1717 = vmatprep.subr.mxu0 %v461
  %1718 = vmatpush1.msra.mxu0 %v460
  %1719 = vmatprep.subr.mxu0 %v463
  %1720 = vmatpush1.msra.mxu0 %v462
  %1721 = vmatprep.subr.mxu0 %v465
  %1722 = vmatpush1.msra.mxu0 %v464
  %1723 = vmatprep.subr.mxu0 %v467
  %1724 = vmatpush1.msra.mxu0 %v466
  %1725 = vmatprep.subr.mxu0 %v469
  %1726 = vmatpush1.msra.mxu0 %v468
  %1727 = vmatprep.subr.mxu0 %v471
  %1728 = vmatpush1.msra.mxu0 %v470
  %1729 = vmatprep.subr.mxu0 %v473
  %1730 = vmatpush1.msra.mxu0 %v472
  %1731 = vmatprep.mubr.f32.mxu0 %v1129
  %1732 = vmatmul.mubr.f32.gmra.mrb[0].mxu0 %v1121
  %v1733 = vpop.f32.mrb[0].mxu0
  %v1734 = vadd.f32 %v1663, %v1733
  %v1735 = vpop.f32.mrb[0].mxu0
  %v1736 = vadd.f32 %v1665, %v1735
  %1737 = vdwg.mxu0
  %1738 = vmatprep.subr.mxu0 %v475
  %1739 = vmatpush1.msra.mxu0 %v474
  %1740 = vmatprep.subr.mxu0 %v477
  %1741 = vmatpush1.msra.mxu0 %v476
  %1742 = vmatprep.subr.mxu0 %v479
  %1743 = vmatpush1.msra.mxu0 %v478
  %1744 = vmatprep.subr.mxu0 %v481
  %1745 = vmatpush1.msra.mxu0 %v480
  %1746 = vmatprep.subr.mxu0 %v483
  %1747 = vmatpush1.msra.mxu0 %v482
  %1748 = vmatprep.subr.mxu0 %v485
  %1749 = vmatpush1.msra.mxu0 %v484
  %1750 = vmatprep.subr.mxu0 %v487
  %1751 = vmatpush1.msra.mxu0 %v486
  %1752 = vmatprep.subr.mxu0 %v489
  %1753 = vmatpush1.msra.mxu0 %v488
  %1754 = vmatprep.subr.mxu0 %v491
  %1755 = vmatpush1.msra.mxu0 %v490
  %1756 = vmatprep.subr.mxu0 %v493
  %1757 = vmatpush1.msra.mxu0 %v492
  %1758 = vmatprep.subr.mxu0 %v495
  %1759 = vmatpush1.msra.mxu0 %v494
  %1760 = vmatprep.subr.mxu0 %v497
  %1761 = vmatpush1.msra.mxu0 %v496
  %1762 = vmatprep.subr.mxu0 %v499
  %1763 = vmatpush1.msra.mxu0 %v498
  %1764 = vmatprep.subr.mxu0 %v501
  %1765 = vmatpush1.msra.mxu0 %v500
  %1766 = vmatprep.subr.mxu0 %v503
  %1767 = vmatpush1.msra.mxu0 %v502
  %1768 = vmatprep.subr.mxu0 %v505
  %1769 = vmatpush1.msra.mxu0 %v504
  %1770 = vmatprep.subr.mxu0 %v507
  %1771 = vmatpush1.msra.mxu0 %v506
  %1772 = vmatprep.subr.mxu0 %v509
  %1773 = vmatpush1.msra.mxu0 %v508
  %1774 = vmatprep.subr.mxu0 %v511
  %1775 = vmatpush1.msra.mxu0 %v510
  %1776 = vmatprep.subr.mxu0 %v513
  %1777 = vmatpush1.msra.mxu0 %v512
  %1778 = vmatprep.subr.mxu0 %v515
  %1779 = vmatpush1.msra.mxu0 %v514
  %1780 = vmatprep.subr.mxu0 %v517
  %1781 = vmatpush1.msra.mxu0 %v516
  %1782 = vmatprep.subr.mxu0 %v519
  %1783 = vmatpush1.msra.mxu0 %v518
  %1784 = vmatprep.subr.mxu0 %v521
  %1785 = vmatpush1.msra.mxu0 %v520
  %1786 = vmatprep.subr.mxu0 %v523
  %1787 = vmatpush1.msra.mxu0 %v522
  %1788 = vmatprep.subr.mxu0 %v525
  %1789 = vmatpush1.msra.mxu0 %v524
  %1790 = vmatprep.subr.mxu0 %v527
  %1791 = vmatpush1.msra.mxu0 %v526
  %1792 = vmatprep.subr.mxu0 %v529
  %1793 = vmatpush1.msra.mxu0 %v528
  %1794 = vmatprep.subr.mxu0 %v531
  %1795 = vmatpush1.msra.mxu0 %v530
  %1796 = vmatprep.subr.mxu0 %v533
  %1797 = vmatpush1.msra.mxu0 %v532
  %1798 = vmatprep.subr.mxu0 %v535
  %1799 = vmatpush1.msra.mxu0 %v534
  %1800 = vmatprep.subr.mxu0 %v537
  %1801 = vmatpush1.msra.mxu0 %v536
  %1802 = vmatprep.mubr.f32.mxu0 %v1130
  %1803 = vmatmul.mubr.f32.gmra.mrb[0].mxu0 %v1128
  %v1804 = vpop.f32.mrb[0].mxu0
  %v1805 = vadd.f32 %v1734, %v1804
  %v1806 = vpop.f32.mrb[0].mxu0
  %v1807 = vadd.f32 %v1736, %v1806
  %1808 = vdwg.mxu0
  %1809 = vmatprep.subr.mxu0 %v539
  %1810 = vmatpush1.msra.mxu0 %v538
  %1811 = vmatprep.subr.mxu0 %v541
  %1812 = vmatpush1.msra.mxu0 %v540
  %1813 = vmatprep.subr.mxu0 %v543
  %1814 = vmatpush1.msra.mxu0 %v542
  %1815 = vmatprep.subr.mxu0 %v545
  %1816 = vmatpush1.msra.mxu0 %v544
  %1817 = vmatprep.subr.mxu0 %v547
  %1818 = vmatpush1.msra.mxu0 %v546
  %1819 = vmatprep.subr.mxu0 %v549
  %1820 = vmatpush1.msra.mxu0 %v548
  %1821 = vmatprep.subr.mxu0 %v551
  %1822 = vmatpush1.msra.mxu0 %v550
  %1823 = vmatprep.subr.mxu0 %v553
  %1824 = vmatpush1.msra.mxu0 %v552
  %1825 = vmatprep.subr.mxu0 %v555
  %1826 = vmatpush1.msra.mxu0 %v554
  %1827 = vmatprep.subr.mxu0 %v557
  %1828 = vmatpush1.msra.mxu0 %v556
  %1829 = vmatprep.subr.mxu0 %v559
  %1830 = vmatpush1.msra.mxu0 %v558
  %1831 = vmatprep.subr.mxu0 %v561
  %1832 = vmatpush1.msra.mxu0 %v560
  %1833 = vmatprep.subr.mxu0 %v563
  %1834 = vmatpush1.msra.mxu0 %v562
  %1835 = vmatprep.subr.mxu0 %v565
  %1836 = vmatpush1.msra.mxu0 %v564
  %1837 = vmatprep.subr.mxu0 %v567
  %1838 = vmatpush1.msra.mxu0 %v566
  %1839 = vmatprep.subr.mxu0 %v569
  %1840 = vmatpush1.msra.mxu0 %v568
  %1841 = vmatprep.subr.mxu0 %v571
  %1842 = vmatpush1.msra.mxu0 %v570
  %1843 = vmatprep.subr.mxu0 %v573
  %1844 = vmatpush1.msra.mxu0 %v572
  %1845 = vmatprep.subr.mxu0 %v575
  %1846 = vmatpush1.msra.mxu0 %v574
  %1847 = vmatprep.subr.mxu0 %v577
  %1848 = vmatpush1.msra.mxu0 %v576
  %1849 = vmatprep.subr.mxu0 %v579
  %1850 = vmatpush1.msra.mxu0 %v578
  %1851 = vmatprep.subr.mxu0 %v581
  %1852 = vmatpush1.msra.mxu0 %v580
  %1853 = vmatprep.subr.mxu0 %v583
  %1854 = vmatpush1.msra.mxu0 %v582
  %1855 = vmatprep.subr.mxu0 %v585
  %1856 = vmatpush1.msra.mxu0 %v584
  %1857 = vmatprep.subr.mxu0 %v587
  %1858 = vmatpush1.msra.mxu0 %v586
  %1859 = vmatprep.subr.mxu0 %v589
  %1860 = vmatpush1.msra.mxu0 %v588
  %1861 = vmatprep.subr.mxu0 %v591
  %1862 = vmatpush1.msra.mxu0 %v590
  %1863 = vmatprep.subr.mxu0 %v593
  %1864 = vmatpush1.msra.mxu0 %v592
  %1865 = vmatprep.subr.mxu0 %v595
  %1866 = vmatpush1.msra.mxu0 %v594
  %1867 = vmatprep.subr.mxu0 %v597
  %1868 = vmatpush1.msra.mxu0 %v596
  %1869 = vmatprep.subr.mxu0 %v599
  %1870 = vmatpush1.msra.mxu0 %v598
  %1871 = vmatprep.subr.mxu0 %v601
  %1872 = vmatpush1.msra.mxu0 %v600
  %1873 = vmatprep.mubr.f32.mxu0 %v1146
  %1874 = vmatmul.mubr.f32.gmra.mrb[0].mxu0 %v1138
  %v1875 = vpop.f32.mrb[0].mxu0
  %v1876 = vadd.f32 %v1805, %v1875
  %v1877 = vpop.f32.mrb[0].mxu0
  %v1878 = vadd.f32 %v1807, %v1877
  %1879 = vdwg.mxu0
  %1880 = vmatprep.subr.mxu0 %v603
  %1881 = vmatpush1.msra.mxu0 %v602
  %1882 = vmatprep.subr.mxu0 %v605
  %1883 = vmatpush1.msra.mxu0 %v604
  %1884 = vmatprep.subr.mxu0 %v607
  %1885 = vmatpush1.msra.mxu0 %v606
  %1886 = vmatprep.subr.mxu0 %v609
  %1887 = vmatpush1.msra.mxu0 %v608
  %1888 = vmatprep.subr.mxu0 %v611
  %1889 = vmatpush1.msra.mxu0 %v610
  %1890 = vmatprep.subr.mxu0 %v613
  %1891 = vmatpush1.msra.mxu0 %v612
  %1892 = vmatprep.subr.mxu0 %v615
  %1893 = vmatpush1.msra.mxu0 %v614
  %1894 = vmatprep.subr.mxu0 %v617
  %1895 = vmatpush1.msra.mxu0 %v616
  %1896 = vmatprep.subr.mxu0 %v619
  %1897 = vmatpush1.msra.mxu0 %v618
  %1898 = vmatprep.subr.mxu0 %v621
  %1899 = vmatpush1.msra.mxu0 %v620
  %1900 = vmatprep.subr.mxu0 %v623
  %1901 = vmatpush1.msra.mxu0 %v622
  %1902 = vmatprep.subr.mxu0 %v625
  %1903 = vmatpush1.msra.mxu0 %v624
  %1904 = vmatprep.subr.mxu0 %v627
  %1905 = vmatpush1.msra.mxu0 %v626
  %1906 = vmatprep.subr.mxu0 %v629
  %1907 = vmatpush1.msra.mxu0 %v628
  %1908 = vmatprep.subr.mxu0 %v631
  %1909 = vmatpush1.msra.mxu0 %v630
  %1910 = vmatprep.subr.mxu0 %v633
  %1911 = vmatpush1.msra.mxu0 %v632
  %1912 = vmatprep.subr.mxu0 %v635
  %1913 = vmatpush1.msra.mxu0 %v634
  %1914 = vmatprep.subr.mxu0 %v637
  %1915 = vmatpush1.msra.mxu0 %v636
  %1916 = vmatprep.subr.mxu0 %v639
  %1917 = vmatpush1.msra.mxu0 %v638
  %1918 = vmatprep.subr.mxu0 %v641
  %1919 = vmatpush1.msra.mxu0 %v640
  %1920 = vmatprep.subr.mxu0 %v643
  %1921 = vmatpush1.msra.mxu0 %v642
  %1922 = vmatprep.subr.mxu0 %v645
  %1923 = vmatpush1.msra.mxu0 %v644
  %1924 = vmatprep.subr.mxu0 %v647
  %1925 = vmatpush1.msra.mxu0 %v646
  %1926 = vmatprep.subr.mxu0 %v649
  %1927 = vmatpush1.msra.mxu0 %v648
  %1928 = vmatprep.subr.mxu0 %v651
  %1929 = vmatpush1.msra.mxu0 %v650
  %1930 = vmatprep.subr.mxu0 %v653
  %1931 = vmatpush1.msra.mxu0 %v652
  %1932 = vmatprep.subr.mxu0 %v655
  %1933 = vmatpush1.msra.mxu0 %v654
  %1934 = vmatprep.subr.mxu0 %v657
  %1935 = vmatpush1.msra.mxu0 %v656
  %1936 = vmatprep.subr.mxu0 %v659
  %1937 = vmatpush1.msra.mxu0 %v658
  %1938 = vmatprep.subr.mxu0 %v661
  %1939 = vmatpush1.msra.mxu0 %v660
  %1940 = vmatprep.subr.mxu0 %v663
  %1941 = vmatpush1.msra.mxu0 %v662
  %1942 = vmatprep.subr.mxu0 %v665
  %1943 = vmatpush1.msra.mxu0 %v664
  %1944 = vmatprep.mubr.f32.mxu0 %v1147
  %1945 = vmatmul.mubr.f32.gmra.mrb[0].mxu0 %v1145
  %v1946 = vpop.f32.mrb[0].mxu0
  %v1947 = vadd.f32 %v1876, %v1946
  %v1948 = vpop.f32.mrb[0].mxu0
  %v1949 = vadd.f32 %v1878, %v1948
  %1950 = vdwg.mxu0
  %1951 = vmatprep.subr.mxu0 %v667
  %1952 = vmatpush1.msra.mxu0 %v666
  %1953 = vmatprep.subr.mxu0 %v669
  %1954 = vmatpush1.msra.mxu0 %v668
  %1955 = vmatprep.subr.mxu0 %v671
  %1956 = vmatpush1.msra.mxu0 %v670
  %1957 = vmatprep.subr.mxu0 %v673
  %1958 = vmatpush1.msra.mxu0 %v672
  %1959 = vmatprep.subr.mxu0 %v675
  %1960 = vmatpush1.msra.mxu0 %v674
  %1961 = vmatprep.subr.mxu0 %v677
  %1962 = vmatpush1.msra.mxu0 %v676
  %1963 = vmatprep.subr.mxu0 %v679
  %1964 = vmatpush1.msra.mxu0 %v678
  %1965 = vmatprep.subr.mxu0 %v681
  %1966 = vmatpush1.msra.mxu0 %v680
  %1967 = vmatprep.subr.mxu0 %v683
  %1968 = vmatpush1.msra.mxu0 %v682
  %1969 = vmatprep.subr.mxu0 %v685
  %1970 = vmatpush1.msra.mxu0 %v684
  %1971 = vmatprep.subr.mxu0 %v687
  %1972 = vmatpush1.msra.mxu0 %v686
  %1973 = vmatprep.subr.mxu0 %v689
  %1974 = vmatpush1.msra.mxu0 %v688
  %1975 = vmatprep.subr.mxu0 %v691
  %1976 = vmatpush1.msra.mxu0 %v690
  %1977 = vmatprep.subr.mxu0 %v693
  %1978 = vmatpush1.msra.mxu0 %v692
  %1979 = vmatprep.subr.mxu0 %v695
  %1980 = vmatpush1.msra.mxu0 %v694
  %1981 = vmatprep.subr.mxu0 %v697
  %1982 = vmatpush1.msra.mxu0 %v696
  %1983 = vmatprep.subr.mxu0 %v699
  %1984 = vmatpush1.msra.mxu0 %v698
  %1985 = vmatprep.subr.mxu0 %v701
  %1986 = vmatpush1.msra.mxu0 %v700
  %1987 = vmatprep.subr.mxu0 %v703
  %1988 = vmatpush1.msra.mxu0 %v702
  %1989 = vmatprep.subr.mxu0 %v705
  %1990 = vmatpush1.msra.mxu0 %v704
  %1991 = vmatprep.subr.mxu0 %v707
  %1992 = vmatpush1.msra.mxu0 %v706
  %1993 = vmatprep.subr.mxu0 %v709
  %1994 = vmatpush1.msra.mxu0 %v708
  %1995 = vmatprep.subr.mxu0 %v711
  %1996 = vmatpush1.msra.mxu0 %v710
  %1997 = vmatprep.subr.mxu0 %v713
  %1998 = vmatpush1.msra.mxu0 %v712
  %1999 = vmatprep.subr.mxu0 %v715
  %2000 = vmatpush1.msra.mxu0 %v714
  %2001 = vmatprep.subr.mxu0 %v717
  %2002 = vmatpush1.msra.mxu0 %v716
  %2003 = vmatprep.subr.mxu0 %v719
  %2004 = vmatpush1.msra.mxu0 %v718
  %2005 = vmatprep.subr.mxu0 %v721
  %2006 = vmatpush1.msra.mxu0 %v720
  %2007 = vmatprep.subr.mxu0 %v723
  %2008 = vmatpush1.msra.mxu0 %v722
  %2009 = vmatprep.subr.mxu0 %v725
  %2010 = vmatpush1.msra.mxu0 %v724
  %2011 = vmatprep.subr.mxu0 %v727
  %2012 = vmatpush1.msra.mxu0 %v726
  %2013 = vmatprep.subr.mxu0 %v729
  %2014 = vmatpush1.msra.mxu0 %v728
  %2015 = vmatprep.mubr.f32.mxu0 %v1163
  %2016 = vmatmul.mubr.f32.gmra.mrb[0].mxu0 %v1155
  %v2017 = vpop.f32.mrb[0].mxu0
  %v2018 = vadd.f32 %v1947, %v2017
  %v2019 = vpop.f32.mrb[0].mxu0
  %v2020 = vadd.f32 %v1949, %v2019
  %2021 = vdwg.mxu0
  %2022 = vmatprep.subr.mxu0 %v731
  %2023 = vmatpush1.msra.mxu0 %v730
  %2024 = vmatprep.subr.mxu0 %v733
  %2025 = vmatpush1.msra.mxu0 %v732
  %2026 = vmatprep.subr.mxu0 %v735
  %2027 = vmatpush1.msra.mxu0 %v734
  %2028 = vmatprep.subr.mxu0 %v737
  %2029 = vmatpush1.msra.mxu0 %v736
  %2030 = vmatprep.subr.mxu0 %v739
  %2031 = vmatpush1.msra.mxu0 %v738
  %2032 = vmatprep.subr.mxu0 %v741
  %2033 = vmatpush1.msra.mxu0 %v740
  %2034 = vmatprep.subr.mxu0 %v743
  %2035 = vmatpush1.msra.mxu0 %v742
  %2036 = vmatprep.subr.mxu0 %v745
  %2037 = vmatpush1.msra.mxu0 %v744
  %2038 = vmatprep.subr.mxu0 %v747
  %2039 = vmatpush1.msra.mxu0 %v746
  %2040 = vmatprep.subr.mxu0 %v749
  %2041 = vmatpush1.msra.mxu0 %v748
  %2042 = vmatprep.subr.mxu0 %v751
  %2043 = vmatpush1.msra.mxu0 %v750
  %2044 = vmatprep.subr.mxu0 %v753
  %2045 = vmatpush1.msra.mxu0 %v752
  %2046 = vmatprep.subr.mxu0 %v755
  %2047 = vmatpush1.msra.mxu0 %v754
  %2048 = vmatprep.subr.mxu0 %v757
  %2049 = vmatpush1.msra.mxu0 %v756
  %2050 = vmatprep.subr.mxu0 %v759
  %2051 = vmatpush1.msra.mxu0 %v758
  %2052 = vmatprep.subr.mxu0 %v761
  %2053 = vmatpush1.msra.mxu0 %v760
  %2054 = vmatprep.subr.mxu0 %v763
  %2055 = vmatpush1.msra.mxu0 %v762
  %2056 = vmatprep.subr.mxu0 %v765
  %2057 = vmatpush1.msra.mxu0 %v764
  %2058 = vmatprep.subr.mxu0 %v767
  %2059 = vmatpush1.msra.mxu0 %v766
  %2060 = vmatprep.subr.mxu0 %v769
  %2061 = vmatpush1.msra.mxu0 %v768
  %2062 = vmatprep.subr.mxu0 %v771
  %2063 = vmatpush1.msra.mxu0 %v770
  %2064 = vmatprep.subr.mxu0 %v773
  %2065 = vmatpush1.msra.mxu0 %v772
  %2066 = vmatprep.subr.mxu0 %v775
  %2067 = vmatpush1.msra.mxu0 %v774
  %2068 = vmatprep.subr.mxu0 %v777
  %2069 = vmatpush1.msra.mxu0 %v776
  %2070 = vmatprep.subr.mxu0 %v779
  %2071 = vmatpush1.msra.mxu0 %v778
  %2072 = vmatprep.subr.mxu0 %v781
  %2073 = vmatpush1.msra.mxu0 %v780
  %2074 = vmatprep.subr.mxu0 %v783
  %2075 = vmatpush1.msra.mxu0 %v782
  %2076 = vmatprep.subr.mxu0 %v785
  %2077 = vmatpush1.msra.mxu0 %v784
  %2078 = vmatprep.subr.mxu0 %v787
  %2079 = vmatpush1.msra.mxu0 %v786
  %2080 = vmatprep.subr.mxu0 %v789
  %2081 = vmatpush1.msra.mxu0 %v788
  %2082 = vmatprep.subr.mxu0 %v791
  %2083 = vmatpush1.msra.mxu0 %v790
  %2084 = vmatprep.subr.mxu0 %v793
  %2085 = vmatpush1.msra.mxu0 %v792
  %2086 = vmatprep.mubr.f32.mxu0 %v1164
  %2087 = vmatmul.mubr.f32.gmra.mrb[0].mxu0 %v1162
  %v2088 = vpop.f32.mrb[0].mxu0
  %v2089 = vadd.f32 %v2018, %v2088
  %v2090 = vpop.f32.mrb[0].mxu0
  %v2091 = vadd.f32 %v2020, %v2090
  %2092 = vdwg.mxu0
  %2093 = vmatprep.subr.mxu0 %v795
  %2094 = vmatpush1.msra.mxu0 %v794
  %2095 = vmatprep.subr.mxu0 %v797
  %2096 = vmatpush1.msra.mxu0 %v796
  %2097 = vmatprep.subr.mxu0 %v799
  %2098 = vmatpush1.msra.mxu0 %v798
  %2099 = vmatprep.subr.mxu0 %v801
  %2100 = vmatpush1.msra.mxu0 %v800
  %2101 = vmatprep.subr.mxu0 %v803
  %2102 = vmatpush1.msra.mxu0 %v802
  %2103 = vmatprep.subr.mxu0 %v805
  %2104 = vmatpush1.msra.mxu0 %v804
  %2105 = vmatprep.subr.mxu0 %v807
  %2106 = vmatpush1.msra.mxu0 %v806
  %2107 = vmatprep.subr.mxu0 %v809
  %2108 = vmatpush1.msra.mxu0 %v808
  %2109 = vmatprep.subr.mxu0 %v811
  %2110 = vmatpush1.msra.mxu0 %v810
  %2111 = vmatprep.subr.mxu0 %v813
  %2112 = vmatpush1.msra.mxu0 %v812
  %2113 = vmatprep.subr.mxu0 %v815
  %2114 = vmatpush1.msra.mxu0 %v814
  %2115 = vmatprep.subr.mxu0 %v817
  %2116 = vmatpush1.msra.mxu0 %v816
  %2117 = vmatprep.subr.mxu0 %v819
  %2118 = vmatpush1.msra.mxu0 %v818
  %2119 = vmatprep.subr.mxu0 %v821
  %2120 = vmatpush1.msra.mxu0 %v820
  %2121 = vmatprep.subr.mxu0 %v823
  %2122 = vmatpush1.msra.mxu0 %v822
  %2123 = vmatprep.subr.mxu0 %v825
  %2124 = vmatpush1.msra.mxu0 %v824
  %2125 = vmatprep.subr.mxu0 %v827
  %2126 = vmatpush1.msra.mxu0 %v826
  %2127 = vmatprep.subr.mxu0 %v829
  %2128 = vmatpush1.msra.mxu0 %v828
  %2129 = vmatprep.subr.mxu0 %v831
  %2130 = vmatpush1.msra.mxu0 %v830
  %2131 = vmatprep.subr.mxu0 %v833
  %2132 = vmatpush1.msra.mxu0 %v832
  %2133 = vmatprep.subr.mxu0 %v835
  %2134 = vmatpush1.msra.mxu0 %v834
  %2135 = vmatprep.subr.mxu0 %v837
  %2136 = vmatpush1.msra.mxu0 %v836
  %2137 = vmatprep.subr.mxu0 %v839
  %2138 = vmatpush1.msra.mxu0 %v838
  %2139 = vmatprep.subr.mxu0 %v841
  %2140 = vmatpush1.msra.mxu0 %v840
  %2141 = vmatprep.subr.mxu0 %v843
  %2142 = vmatpush1.msra.mxu0 %v842
  %2143 = vmatprep.subr.mxu0 %v845
  %2144 = vmatpush1.msra.mxu0 %v844
  %2145 = vmatprep.subr.mxu0 %v847
  %2146 = vmatpush1.msra.mxu0 %v846
  %2147 = vmatprep.subr.mxu0 %v849
  %2148 = vmatpush1.msra.mxu0 %v848
  %2149 = vmatprep.subr.mxu0 %v851
  %2150 = vmatpush1.msra.mxu0 %v850
  %2151 = vmatprep.subr.mxu0 %v853
  %2152 = vmatpush1.msra.mxu0 %v852
  %2153 = vmatprep.subr.mxu0 %v855
  %2154 = vmatpush1.msra.mxu0 %v854
  %2155 = vmatprep.subr.mxu0 %v857
  %2156 = vmatpush1.msra.mxu0 %v856
  %2157 = vmatprep.mubr.f32.mxu0 %v1180
  %2158 = vmatmul.mubr.f32.gmra.mrb[0].mxu0 %v1172
  %v2159 = vpop.f32.mrb[0].mxu0
  %v2160 = vadd.f32 %v2089, %v2159
  %v2161 = vpop.f32.mrb[0].mxu0
  %v2162 = vadd.f32 %v2091, %v2161
  %2163 = vdwg.mxu0
  %2164 = vmatprep.subr.mxu0 %v859
  %2165 = vmatpush1.msra.mxu0 %v858
  %2166 = vmatprep.subr.mxu0 %v861
  %2167 = vmatpush1.msra.mxu0 %v860
  %2168 = vmatprep.subr.mxu0 %v863
  %2169 = vmatpush1.msra.mxu0 %v862
  %2170 = vmatprep.subr.mxu0 %v865
  %2171 = vmatpush1.msra.mxu0 %v864
  %2172 = vmatprep.subr.mxu0 %v867
  %2173 = vmatpush1.msra.mxu0 %v866
  %2174 = vmatprep.subr.mxu0 %v869
  %2175 = vmatpush1.msra.mxu0 %v868
  %2176 = vmatprep.subr.mxu0 %v871
  %2177 = vmatpush1.msra.mxu0 %v870
  %2178 = vmatprep.subr.mxu0 %v873
  %2179 = vmatpush1.msra.mxu0 %v872
  %2180 = vmatprep.subr.mxu0 %v875
  %2181 = vmatpush1.msra.mxu0 %v874
  %2182 = vmatprep.subr.mxu0 %v877
  %2183 = vmatpush1.msra.mxu0 %v876
  %2184 = vmatprep.subr.mxu0 %v879
  %2185 = vmatpush1.msra.mxu0 %v878
  %2186 = vmatprep.subr.mxu0 %v881
  %2187 = vmatpush1.msra.mxu0 %v880
  %2188 = vmatprep.subr.mxu0 %v883
  %2189 = vmatpush1.msra.mxu0 %v882
  %2190 = vmatprep.subr.mxu0 %v885
  %2191 = vmatpush1.msra.mxu0 %v884
  %2192 = vmatprep.subr.mxu0 %v887
  %2193 = vmatpush1.msra.mxu0 %v886
  %2194 = vmatprep.subr.mxu0 %v889
  %2195 = vmatpush1.msra.mxu0 %v888
  %2196 = vmatprep.subr.mxu0 %v891
  %2197 = vmatpush1.msra.mxu0 %v890
  %2198 = vmatprep.subr.mxu0 %v893
  %2199 = vmatpush1.msra.mxu0 %v892
  %2200 = vmatprep.subr.mxu0 %v895
  %2201 = vmatpush1.msra.mxu0 %v894
  %2202 = vmatprep.subr.mxu0 %v897
  %2203 = vmatpush1.msra.mxu0 %v896
  %2204 = vmatprep.subr.mxu0 %v899
  %2205 = vmatpush1.msra.mxu0 %v898
  %2206 = vmatprep.subr.mxu0 %v901
  %2207 = vmatpush1.msra.mxu0 %v900
  %2208 = vmatprep.subr.mxu0 %v903
  %2209 = vmatpush1.msra.mxu0 %v902
  %2210 = vmatprep.subr.mxu0 %v905
  %2211 = vmatpush1.msra.mxu0 %v904
  %2212 = vmatprep.subr.mxu0 %v907
  %2213 = vmatpush1.msra.mxu0 %v906
  %2214 = vmatprep.subr.mxu0 %v909
  %2215 = vmatpush1.msra.mxu0 %v908
  %2216 = vmatprep.subr.mxu0 %v911
  %2217 = vmatpush1.msra.mxu0 %v910
  %2218 = vmatprep.subr.mxu0 %v913
  %2219 = vmatpush1.msra.mxu0 %v912
  %2220 = vmatprep.subr.mxu0 %v915
  %2221 = vmatpush1.msra.mxu0 %v914
  %2222 = vmatprep.subr.mxu0 %v917
  %2223 = vmatpush1.msra.mxu0 %v916
  %2224 = vmatprep.subr.mxu0 %v919
  %2225 = vmatpush1.msra.mxu0 %v918
  %2226 = vmatprep.subr.mxu0 %v921
  %2227 = vmatpush1.msra.mxu0 %v920
  %2228 = vmatprep.mubr.f32.mxu0 %v1181
  %2229 = vmatmul.mubr.f32.gmra.mrb[0].mxu0 %v1179
  %v2230 = vpop.f32.mrb[0].mxu0
  %v2231 = vadd.f32 %v2160, %v2230
  %v2232 = vpop.f32.mrb[0].mxu0
  %v2233 = vadd.f32 %v2162, %v2232
  %2234 = vdwg.mxu0
  %2235 = vmatprep.subr.mxu0 %v923
  %2236 = vmatpush1.msra.mxu0 %v922
  %2237 = vmatprep.subr.mxu0 %v925
  %2238 = vmatpush1.msra.mxu0 %v924
  %2239 = vmatprep.subr.mxu0 %v927
  %2240 = vmatpush1.msra.mxu0 %v926
  %2241 = vmatprep.subr.mxu0 %v929
  %2242 = vmatpush1.msra.mxu0 %v928
  %2243 = vmatprep.subr.mxu0 %v931
  %2244 = vmatpush1.msra.mxu0 %v930
  %2245 = vmatprep.subr.mxu0 %v933
  %2246 = vmatpush1.msra.mxu0 %v932
  %2247 = vmatprep.subr.mxu0 %v935
  %2248 = vmatpush1.msra.mxu0 %v934
  %2249 = vmatprep.subr.mxu0 %v937
  %2250 = vmatpush1.msra.mxu0 %v936
  %2251 = vmatprep.subr.mxu0 %v939
  %2252 = vmatpush1.msra.mxu0 %v938
  %2253 = vmatprep.subr.mxu0 %v941
  %2254 = vmatpush1.msra.mxu0 %v940
  %2255 = vmatprep.subr.mxu0 %v943
  %2256 = vmatpush1.msra.mxu0 %v942
  %2257 = vmatprep.subr.mxu0 %v945
  %2258 = vmatpush1.msra.mxu0 %v944
  %2259 = vmatprep.subr.mxu0 %v947
  %2260 = vmatpush1.msra.mxu0 %v946
  %2261 = vmatprep.subr.mxu0 %v949
  %2262 = vmatpush1.msra.mxu0 %v948
  %2263 = vmatprep.subr.mxu0 %v951
  %2264 = vmatpush1.msra.mxu0 %v950
  %2265 = vmatprep.subr.mxu0 %v953
  %2266 = vmatpush1.msra.mxu0 %v952
  %2267 = vmatprep.subr.mxu0 %v955
  %2268 = vmatpush1.msra.mxu0 %v954
  %2269 = vmatprep.subr.mxu0 %v957
  %2270 = vmatpush1.msra.mxu0 %v956
  %2271 = vmatprep.subr.mxu0 %v959
  %2272 = vmatpush1.msra.mxu0 %v958
  %2273 = vmatprep.subr.mxu0 %v961
  %2274 = vmatpush1.msra.mxu0 %v960
  %2275 = vmatprep.subr.mxu0 %v963
  %2276 = vmatpush1.msra.mxu0 %v962
  %2277 = vmatprep.subr.mxu0 %v965
  %2278 = vmatpush1.msra.mxu0 %v964
  %2279 = vmatprep.subr.mxu0 %v967
  %2280 = vmatpush1.msra.mxu0 %v966
  %2281 = vmatprep.subr.mxu0 %v969
  %2282 = vmatpush1.msra.mxu0 %v968
  %2283 = vmatprep.subr.mxu0 %v971
  %2284 = vmatpush1.msra.mxu0 %v970
  %2285 = vmatprep.subr.mxu0 %v973
  %2286 = vmatpush1.msra.mxu0 %v972
  %2287 = vmatprep.subr.mxu0 %v975
  %2288 = vmatpush1.msra.mxu0 %v974
  %2289 = vmatprep.subr.mxu0 %v977
  %2290 = vmatpush1.msra.mxu0 %v976
  %2291 = vmatprep.subr.mxu0 %v979
  %2292 = vmatpush1.msra.mxu0 %v978
  %2293 = vmatprep.subr.mxu0 %v981
  %2294 = vmatpush1.msra.mxu0 %v980
  %2295 = vmatprep.subr.mxu0 %v983
  %2296 = vmatpush1.msra.mxu0 %v982
  %2297 = vmatprep.subr.mxu0 %v985
  %2298 = vmatpush1.msra.mxu0 %v984
  %2299 = vmatprep.mubr.f32.mxu0 %v1197
  %2300 = vmatmul.mubr.f32.gmra.mrb[0].mxu0 %v1189
  %v2301 = vpop.f32.mrb[0].mxu0
  %v2302 = vadd.f32 %v2231, %v2301
  %v2303 = vpop.f32.mrb[0].mxu0
  %v2304 = vadd.f32 %v2233, %v2303
  %2305 = vdwg.mxu0
  %2306 = vmatprep.subr.mxu0 %v987
  %2307 = vmatpush1.msra.mxu0 %v986
  %2308 = vmatprep.subr.mxu0 %v989
  %2309 = vmatpush1.msra.mxu0 %v988
  %2310 = vmatprep.subr.mxu0 %v991
  %2311 = vmatpush1.msra.mxu0 %v990
  %2312 = vmatprep.subr.mxu0 %v993
  %2313 = vmatpush1.msra.mxu0 %v992
  %2314 = vmatprep.subr.mxu0 %v995
  %2315 = vmatpush1.msra.mxu0 %v994
  %2316 = vmatprep.subr.mxu0 %v997
  %2317 = vmatpush1.msra.mxu0 %v996
  %2318 = vmatprep.subr.mxu0 %v999
  %2319 = vmatpush1.msra.mxu0 %v998
  %2320 = vmatprep.subr.mxu0 %v1001
  %2321 = vmatpush1.msra.mxu0 %v1000
  %2322 = vmatprep.subr.mxu0 %v1003
  %2323 = vmatpush1.msra.mxu0 %v1002
  %2324 = vmatprep.subr.mxu0 %v1005
  %2325 = vmatpush1.msra.mxu0 %v1004
  %2326 = vmatprep.subr.mxu0 %v1007
  %2327 = vmatpush1.msra.mxu0 %v1006
  %2328 = vmatprep.subr.mxu0 %v1009
  %2329 = vmatpush1.msra.mxu0 %v1008
  %2330 = vmatprep.subr.mxu0 %v1011
  %2331 = vmatpush1.msra.mxu0 %v1010
  %2332 = vmatprep.subr.mxu0 %v1013
  %2333 = vmatpush1.msra.mxu0 %v1012
  %2334 = vmatprep.subr.mxu0 %v1015
  %2335 = vmatpush1.msra.mxu0 %v1014
  %2336 = vmatprep.subr.mxu0 %v1017
  %2337 = vmatpush1.msra.mxu0 %v1016
  %2338 = vmatprep.subr.mxu0 %v1019
  %2339 = vmatpush1.msra.mxu0 %v1018
  %2340 = vmatprep.subr.mxu0 %v1021
  %2341 = vmatpush1.msra.mxu0 %v1020
  %2342 = vmatprep.subr.mxu0 %v1023
  %2343 = vmatpush1.msra.mxu0 %v1022
  %2344 = vmatprep.subr.mxu0 %v1025
  %2345 = vmatpush1.msra.mxu0 %v1024
  %2346 = vmatprep.subr.mxu0 %v1027
  %2347 = vmatpush1.msra.mxu0 %v1026
  %2348 = vmatprep.subr.mxu0 %v1029
  %2349 = vmatpush1.msra.mxu0 %v1028
  %2350 = vmatprep.subr.mxu0 %v1031
  %2351 = vmatpush1.msra.mxu0 %v1030
  %2352 = vmatprep.subr.mxu0 %v1033
  %2353 = vmatpush1.msra.mxu0 %v1032
  %2354 = vmatprep.subr.mxu0 %v1035
  %2355 = vmatpush1.msra.mxu0 %v1034
  %2356 = vmatprep.subr.mxu0 %v1037
  %2357 = vmatpush1.msra.mxu0 %v1036
  %2358 = vmatprep.subr.mxu0 %v1039
  %2359 = vmatpush1.msra.mxu0 %v1038
  %2360 = vmatprep.subr.mxu0 %v1041
  %2361 = vmatpush1.msra.mxu0 %v1040
  %2362 = vmatprep.subr.mxu0 %v1043
  %2363 = vmatpush1.msra.mxu0 %v1042
  %2364 = vmatprep.subr.mxu0 %v1045
  %2365 = vmatpush1.msra.mxu0 %v1044
  %2366 = vmatprep.subr.mxu0 %v1047
  %2367 = vmatpush1.msra.mxu0 %v1046
  %2368 = vmatprep.subr.mxu0 %v1049
  %2369 = vmatpush1.msra.mxu0 %v1048
  %2370 = vmatprep.mubr.f32.mxu0 %v1198
  %2371 = vmatmul.mubr.f32.gmra.mrb[0].mxu0 %v1196
  %v2372 = vpop.f32.mrb[0].mxu0
  %v2373 = vadd.f32 %v2302, %v2372
  %v2374 = vpop.f32.mrb[0].mxu0
  %v2375 = vadd.f32 %v2304, %v2374
  %2376 = vdwg.mxu0
  %2377 = vmatprep.subr.mxu0 %v1051
  %2378 = vmatpush1.msra.mxu0 %v1050
  %2379 = vmatprep.subr.mxu0 %v1053
  %2380 = vmatpush1.msra.mxu0 %v1052
  %2381 = vmatprep.subr.mxu0 0.0
  %2382 = vmatpush1.msra.mxu0 0.0
  %2383 = vmatprep.subr.mxu0 0.0
  %2384 = vmatpush1.msra.mxu0 0.0
  %2385 = vmatprep.subr.mxu0 0.0
  %2386 = vmatpush1.msra.mxu0 0.0
  %2387 = vmatprep.subr.mxu0 0.0
  %2388 = vmatpush1.msra.mxu0 0.0
  %2389 = vmatprep.subr.mxu0 0.0
  %2390 = vmatpush1.msra.mxu0 0.0
  %2391 = vmatprep.subr.mxu0 0.0
  %2392 = vmatpush1.msra.mxu0 0.0
  %2393 = vmatprep.subr.mxu0 0.0
  %2394 = vmatpush1.msra.mxu0 0.0
  %2395 = vmatprep.subr.mxu0 0.0
  %2396 = vmatpush1.msra.mxu0 0.0
  %2397 = vmatprep.subr.mxu0 0.0
  %2398 = vmatpush1.msra.mxu0 0.0
  %2399 = vmatprep.subr.mxu0 0.0
  %2400 = vmatpush1.msra.mxu0 0.0
  %2401 = vmatprep.subr.mxu0 0.0
  %2402 = vmatpush1.msra.mxu0 0.0
  %2403 = vmatprep.subr.mxu0 0.0
  %2404 = vmatpush1.msra.mxu0 0.0
  %2405 = vmatprep.subr.mxu0 0.0
  %2406 = vmatpush1.msra.mxu0 0.0
  %2407 = vmatprep.subr.mxu0 0.0
  %2408 = vmatpush1.msra.mxu0 0.0
  %2409 = vmatprep.subr.mxu0 0.0
  %2410 = vmatpush1.msra.mxu0 0.0
  %2411 = vmatprep.subr.mxu0 0.0
  %2412 = vmatpush1.msra.mxu0 0.0
  %2413 = vmatprep.subr.mxu0 0.0
  %2414 = vmatpush1.msra.mxu0 0.0
  %2415 = vmatprep.subr.mxu0 0.0
  %2416 = vmatpush1.msra.mxu0 0.0
  %2417 = vmatprep.subr.mxu0 0.0
  %2418 = vmatpush1.msra.mxu0 0.0
  %2419 = vmatprep.subr.mxu0 0.0
  %2420 = vmatpush1.msra.mxu0 0.0
  %2421 = vmatprep.subr.mxu0 0.0
  %2422 = vmatpush1.msra.mxu0 0.0
  %2423 = vmatprep.subr.mxu0 0.0
  %2424 = vmatpush1.msra.mxu0 0.0
  %2425 = vmatprep.subr.mxu0 0.0
  %2426 = vmatpush1.msra.mxu0 0.0
  %2427 = vmatprep.subr.mxu0 0.0
  %2428 = vmatpush1.msra.mxu0 0.0
  %2429 = vmatprep.subr.mxu0 0.0
  %2430 = vmatpush1.msra.mxu0 0.0
  %2431 = vmatprep.subr.mxu0 0.0
  %2432 = vmatpush1.msra.mxu0 0.0
  %2433 = vmatprep.subr.mxu0 0.0
  %2434 = vmatpush1.msra.mxu0 0.0
  %2435 = vmatprep.subr.mxu0 0.0
  %2436 = vmatpush1.msra.mxu0 0.0
  %2437 = vmatprep.subr.mxu0 0.0
  %2438 = vmatpush1.msra.mxu0 0.0
  %2439 = vmatprep.subr.mxu0 0.0
  %2440 = vmatpush1.msra.mxu0 0.0
  %2441 = vmatprep.mubr.f32.mxu0 0.0
  %2442 = vmatmul.mubr.f32.gmra.mrb[0].mxu0 %v1239
  %v2443 = vpop.f32.mrb[0].mxu0
  %v2444 = vadd.f32 %v2373, %v2443
  %v2445 = vpop.f32.mrb[0].mxu0
  %v2446 = vadd.f32 %v2375, %v2445
  %2447 = vdwg.mxu0
  %v2448 = vld [vmem:[%s2] sm:$0x3]
  %v2450 = vlaneseq
  %v2451 = vshrl.u32 %v2450, 7
  %v2452 = vsub.s32 0, %v2451
  %v2453 = vrot.slane %v2448, %v2452
  %v2454 = vlaneseq
  %v2455 = vshrl.u32 %v2454, 7
  %v2456 = vsub.s32 1, %v2455
  %v2457 = vrot.slane %v2448, %v2456
  %v2460 = vmul.f32 %v2444, %v2453
  %v2461 = vmul.f32 %v2446, %v2457
  %v2462 = vld [vmem:[%s3] sm:$0x3]
  %v2464 = vlaneseq
  %v2465 = vshrl.u32 %v2464, 7
  %v2466 = vsub.s32 0, %v2465
  %v2467 = vrot.slane %v2462, %v2466
  %v2468 = vlaneseq
  %v2469 = vshrl.u32 %v2468, 7
  %v2470 = vsub.s32 1, %v2469
  %v2471 = vrot.slane %v2462, %v2470
  %v2474 = vadd.f32 %v2460, %v2467
  %v2475 = vadd.f32 %v2461, %v2471
  %v2476 = vmax.f32 %v2474, 0.0
  %v2477 = vmax.f32 %v2475, 0.0
  %v2480 = vcombine.low %v2476, %v2477
  %v2482 = vunpack.c.l.s4 1983009808
  %v2483 = vunpack.c.0.s8 %v2482
  %v2484 = vlaneseq
  %v2485 = vshrl.u32 %v2484, 7
  %v2486 = vsub.s32 %v2483, %v2485
  %v2487 = vrot.slane %v2480, %v2486
  %2489 = vst [vmem:[%s4] sm:$0xf] %v2487
  // Predicated region
  $region18: #{model_forward_pallas.10} parent=0 // pred_check
    _
  $region19: #{model_forward_pallas.10} parent=0 // pred_check_branch
    %2491 = sbr.rel (0) target = $region21
  $region20: #{model_forward_pallas.10} parent=0 // pred_region
    _
  $region21: #{model_forward_pallas.10} parent=0 // pred_fallthru
    _
  // Predicated region
  $region22: #{model_forward_pallas.10} parent=0 // pred_check
    _
  $region23: #{model_forward_pallas.10} parent=0 // pred_check_branch
    %2493 = sbr.rel (0) target = $region25
  $region24: #{model_forward_pallas.10} parent=0 // pred_region
    _
  $region25: #{model_forward_pallas.10} parent=0 // pred_fallthru
    _

</llo_original>
